<compile_context>
chip_gen: v7x
topology: tpu7x:2x2x1
jax: 0.10.0
libtpu: 0.0.40
codegen_flags: <defaults>
</compile_context>

<pallas_src>
import functools

import jax
import jax.numpy as jnp
from jax import lax
from jax.experimental import pallas as pl
from jax.experimental.pallas import tpu as pltpu


# ------------------------------ helpers --------------------------------------

def _round_up(v, m):
    return ((v + m - 1) // m) * m


def _pick_t_tile(T, Bp, target_rows=256, cap=64):
    """Time-tile size: aim for T_TILE*Bp >= target_rows so the hoisted input
    projection fills a 256-row MXU (v6e/v7x; 128 already fills v5e), capped so
    the act/gx scratch stays small, never longer than the sequence."""
    want = -(-target_rows // Bp)          # ceil(target_rows / Bp)
    return max(1, min(T, want, cap))


# ------------------------------ Pallas kernel --------------------------------

def fused_lstm_fc_kernel(x_ref, w_ih0_ref, w_ihr_ref, w_hh_ref, b_ref,
                         w_fc_ref, b_fc_ref, o_ref,
                         h_scr, c_scr, act_scr, gx_scr, *, seq_len):
    """One time tile for ALL LSTM layers; FC head only on the last tile.

    x_ref:     (T_TILE, Bp, Dp) bf16  padded, time-major input tile (streamed)
    w_ih0_ref: (Dp, 4P)        bf16  layer-0 input->gates weights (resident)
    w_ihr_ref: (max(L-1,1), P, 4P) bf16  layers>=1 input->gates weights
    w_hh_ref:  (L, P, 4P)      bf16  hidden->gates weights (resident)
    b_ref:     (L, 1, 4P)      f32   fused bias (b_ih + b_hh)
    w_fc_ref:  (P, Cp) bf16, b_fc_ref: (1, Cp) f32
    o_ref:     (Bp, Cp) f32    logits; same output block every grid step
    h_scr, c_scr: (L, Bp, P) f32     recurrent state, persists across the grid
    act_scr:   (T_TILE, Bp, P) bf16  current layer's outputs within the tile
    gx_scr:    (T_TILE, Bp, 4P) f32  hoisted input projection for the tile
    """
    t_idx = pl.program_id(0)
    T_TILE, Bp, Dp = x_ref.shape
    L, P, _ = w_hh_ref.shape
    bf16 = jnp.bfloat16

    needs_mask = (seq_len % T_TILE) != 0          # static Python bool
    base_t = t_idx * T_TILE

    @pl.when(t_idx == 0)
    def _init():
        h_scr[...] = jnp.zeros_like(h_scr)
        c_scr[...] = jnp.zeros_like(c_scr)

    for layer in range(L):                         # static loop: weights resident
        # Hoisted input projection: ONE big MXU matmul (bf16 x bf16 -> f32) for
        # the whole tile instead of T tiny matmuls inside the recurrence.
        if layer == 0:
            inp = x_ref[...].reshape(T_TILE * Bp, Dp)          # bf16
            w_in = w_ih0_ref[...]                              # (Dp, 4P) bf16
        else:
            inp = act_scr[...].reshape(T_TILE * Bp, P)         # bf16
            w_in = w_ihr_ref[layer - 1]                        # (P, 4P) bf16
        gx = (jnp.dot(inp, w_in, preferred_element_type=jnp.float32)
              + b_ref[layer])
        gx_scr[...] = gx.reshape(T_TILE, Bp, 4 * P)

        w_hh = w_hh_ref[layer]                     # (P, 4P) bf16, hoisted

        def step(s, carry):
            h_prev = h_scr[layer]                  # (Bp, P) f32
            c_prev = c_scr[layer]
            gates = gx_scr[s] + jnp.dot(h_prev.astype(bf16), w_hh,
                                        preferred_element_type=jnp.float32)
            # Lane-aligned whole-vreg gate slices (P is a multiple of 128).
            # sigmoid(x) = 0.5*tanh(0.5x) + 0.5: single EUP op per gate.
            i_g = 0.5 * jnp.tanh(0.5 * gates[:, 0 * P:1 * P]) + 0.5
            f_g = 0.5 * jnp.tanh(0.5 * gates[:, 1 * P:2 * P]) + 0.5
            g_g = jnp.tanh(gates[:, 2 * P:3 * P])
            o_g = 0.5 * jnp.tanh(0.5 * gates[:, 3 * P:4 * P]) + 0.5
            c_new = f_g * c_prev + i_g * g_g
            h_new = o_g * jnp.tanh(c_new)
            if needs_mask:                          # tail of a padded sequence
                valid = (base_t + s) < seq_len
                c_new = jnp.where(valid, c_new, c_prev)
                h_new = jnp.where(valid, h_new, h_prev)
            c_scr[layer] = c_new
            h_scr[layer] = h_new
            if layer < L - 1:                       # top layer never feeds anyone
                act_scr[s] = h_new.astype(bf16)
            return carry

        lax.fori_loop(0, T_TILE, step, 0, unroll=True)

    # FC head only after the final tile (output block index is constant, so
    # only this value ever reaches HBM; earlier steps skip the matmul).
    @pl.when(t_idx == pl.num_programs(0) - 1)
    def _fc():
        o_ref[...] = (jnp.dot(h_scr[L - 1].astype(bf16), w_fc_ref[...],
                              preferred_element_type=jnp.float32)
                      + b_fc_ref[...])


# --------------------------------- wrapper ------------------------------------

@functools.partial(jax.jit, static_argnames=("hidden_size", "num_layers",
                                              "weights_resident_in_vmem"))
def rnn_forward(x, params, *, hidden_size, num_layers,
                weights_resident_in_vmem=True):
    """Equivalent of RNN.forward: multi-layer LSTM (zero init state) + Linear
    on the last time step.

    x: (B, T, input_size) float32   (batch_first, like the PyTorch module)
    returns: (B, num_classes) float32
    """
    B, T, D = x.shape
    H = hidden_size
    L = num_layers
    C = params["w_fc"].shape[1]
    f32, bf16 = jnp.float32, jnp.bfloat16

    P = _round_up(H, 128)              # padded hidden width (lane multiple)
    Dp = _round_up(D, 128)             # padded input width (separate from P)
    Cp = _round_up(C, 128)
    Bp = _round_up(B, 8)
    t_tile = _pick_t_tile(T, Bp)
    n_t = -(-T // t_tile)
    T_pad = n_t * t_tile

    # ---- pad + pack parameters: gate g occupies columns [g*P, g*P + H) ------
    w_ih0 = jnp.zeros((Dp, 4 * P), f32)
    w_ihr = jnp.zeros((max(L - 1, 1), P, 4 * P), f32)
    w_hh_all = jnp.zeros((L, P, 4 * P), f32)
    b_all = jnp.zeros((L, 1, 4 * P), f32)
    for l in range(L):
        w_ih = params[f"w_ih_{l}"]          # (d_in, 4H)
        w_hh = params[f"w_hh_{l}"]          # (H, 4H)
        b = params[f"b_{l}"]                # (1, 4H)
        for g in range(4):
            col = slice(g * P, g * P + H)
            if l == 0:
                w_ih0 = w_ih0.at[:D, col].set(w_ih[:, g * H:(g + 1) * H])
            else:
                w_ihr = w_ihr.at[l - 1, :H, col].set(w_ih[:, g * H:(g + 1) * H])
            w_hh_all = w_hh_all.at[l, :H, col].set(w_hh[:, g * H:(g + 1) * H])
            b_all = b_all.at[l, :, col].set(b[:, g * H:(g + 1) * H])
    # bf16 matmul operands (MXU-native on v5e/v6e/v7x); bias stays f32.
    w_ih0 = w_ih0.astype(bf16)
    w_ihr = w_ihr.astype(bf16)
    w_hh_all = w_hh_all.astype(bf16)
    w_fc_p = jnp.zeros((P, Cp), f32).at[:H, :C].set(params["w_fc"]).astype(bf16)
    b_fc_p = jnp.zeros((1, Cp), f32).at[:, :C].set(params["b_fc"])

    # ---- pad + time-major-ize the input (bf16 halves the streamed DMA bytes)
    x_p = jnp.zeros((T_pad, Bp, Dp), bf16).at[:T, :B, :D].set(
        jnp.transpose(x, (1, 0, 2)).astype(bf16))

    # ---- VMEM budget estimate (weights counted twice to also cover the
    #      double-buffered fallback path); clamp under v7x's 64 MiB physical.
    w_bytes = ((Dp * 4 * P + max(L - 1, 1) * P * 4 * P + L * P * 4 * P) * 2
               + L * 4 * P * 4 + P * Cp * 2 + Cp * 4)
    stream_bytes = 2 * t_tile * Bp * Dp * 2 + 2 * Bp * Cp * 4
    scratch_bytes = (2 * L * Bp * P * 4 + t_tile * Bp * P * 2
                     + t_tile * Bp * 4 * P * 4)
    est = 2 * w_bytes + stream_bytes + scratch_bytes
    vmem_limit = int(min(max(2 * est, 32 * 1024 * 1024), 56 * 1024 * 1024))

    if weights_resident_in_vmem:
        # Whole-array VMEM placement: single-buffered, copied in once.
        def w_spec(shape):
            del shape
            return pl.BlockSpec(memory_space=pltpu.MemorySpace.VMEM)
    else:
        # Fallback: blocked specs with constant index maps (double-buffered).
        def w_spec(shape):
            return pl.BlockSpec(shape, lambda t, _s=shape: (0,) * len(_s))

    kernel = functools.partial(fused_lstm_fc_kernel, seq_len=T)

    out_p = pl.pallas_call(
        kernel,
        out_shape=jax.ShapeDtypeStruct((Bp, Cp), f32),
        grid=(n_t,),
        in_specs=[
            pl.BlockSpec((t_tile, Bp, Dp), lambda t: (t, 0, 0)),  # streamed x
            w_spec((Dp, 4 * P)),                                  # W_ih layer 0
            w_spec((max(L - 1, 1), P, 4 * P)),                    # W_ih layers>=1
            w_spec((L, P, 4 * P)),                                # W_hh
            w_spec((L, 1, 4 * P)),                                # bias
            w_spec((P, Cp)),                                      # W_fc
            w_spec((1, Cp)),                                      # b_fc
        ],
        out_specs=pl.BlockSpec((Bp, Cp), lambda t: (0, 0)),
        scratch_shapes=[
            pltpu.VMEM((L, Bp, P), f32),           # h state (carried over grid)
            pltpu.VMEM((L, Bp, P), f32),           # c state (carried over grid)
            pltpu.VMEM((t_tile, Bp, P), bf16),     # per-layer activation tile
            pltpu.VMEM((t_tile, Bp, 4 * P), f32),  # hoisted input projection
        ],
        compiler_params=pltpu.CompilerParams(
            dimension_semantics=("arbitrary",),    # time recurrence is sequential
            vmem_limit_bytes=vmem_limit,
        ),
    )(x_p, w_ih0, w_ihr, w_hh_all, b_all, w_fc_p, b_fc_p)

    return out_p[:B, :C]


# ----------------------------- parameter init ---------------------------------

def init_params(key, input_size, hidden_size, num_layers, num_classes):
    H = hidden_size
    bound = 1.0 / jnp.sqrt(jnp.float32(H))
    params = {}
    for layer in range(num_layers):
        d_in = input_size if layer == 0 else H
        key, k1, k2, k3, k4 = jax.random.split(key, 5)
        # Stored pre-transposed: (in, 4H) so kernels do plain x @ W.
        params[f"w_ih_{layer}"] = jax.random.uniform(
            k1, (d_in, 4 * H), jnp.float32, -bound, bound)
        params[f"w_hh_{layer}"] = jax.random.uniform(
            k2, (H, 4 * H), jnp.float32, -bound, bound)
        b_ih = jax.random.uniform(k3, (4 * H,), jnp.float32, -bound, bound)
        b_hh = jax.random.uniform(k4, (4 * H,), jnp.float32, -bound, bound)
        params[f"b_{layer}"] = (b_ih + b_hh)[None, :]
    key, k5, k6 = jax.random.split(key, 3)
    fc_bound = 1.0 / jnp.sqrt(jnp.float32(H))
    params["w_fc"] = jax.random.uniform(
        k5, (H, num_classes), jnp.float32, -fc_bound, fc_bound)
    params["b_fc"] = jax.random.uniform(
        k6, (1, num_classes), jnp.float32, -fc_bound, fc_bound)
    return params


# ---------------------------- pure-JAX reference -------------------------------

def rnn_reference(x, params, *, hidden_size, num_layers):
    B, T, _ = x.shape
    H = hidden_size
    seq = x
    for layer in range(num_layers):
        w_ih = params[f"w_ih_{layer}"]
        w_hh = params[f"w_hh_{layer}"]
        b = params[f"b_{layer}"]
        h = jnp.zeros((B, H), jnp.float32)
        c = jnp.zeros((B, H), jnp.float32)
        outs = []
        for t in range(T):
            gates = seq[:, t, :] @ w_ih + h @ w_hh + b
            i_g = jax.nn.sigmoid(gates[:, 0 * H:1 * H])
            f_g = jax.nn.sigmoid(gates[:, 1 * H:2 * H])
            g_g = jnp.tanh(gates[:, 2 * H:3 * H])
            o_g = jax.nn.sigmoid(gates[:, 3 * H:4 * H])
            c = f_g * c + i_g * g_g
            h = o_g * jnp.tanh(c)
            outs.append(h)
        seq = jnp.stack(outs, axis=1)
    return seq[:, -1, :] @ params["w_fc"] + params["b_fc"]


# ------------------------------------ main -------------------------------------

if __name__ == "__main__":
    input_size, hidden_size, num_layers, num_classes = 16, 32, 2, 10
    batch, seq_len = 2, 8

    key = jax.random.PRNGKey(0)
    key, xk = jax.random.split(key)
    x = jax.random.normal(xk, (batch, seq_len, input_size), jnp.float32)
    params = init_params(key, input_size, hidden_size, num_layers, num_classes)

    try:
        out = jax.block_until_ready(
            rnn_forward(x, params, hidden_size=hidden_size,
                        num_layers=num_layers, weights_resident_in_vmem=True))
    except Exception:
        # Fallback: blocked (double-buffered) weight specs — always supported.
        out = jax.block_until_ready(
            rnn_forward(x, params, hidden_size=hidden_size,
                        num_layers=num_layers, weights_resident_in_vmem=False))

    ref = rnn_reference(x, params, hidden_size=hidden_size, num_layers=num_layers)
    assert out.shape == (batch, num_classes)
    # bf16 MXU operands (f32 accumulation) => small numeric drift vs f32 ref.
    max_err = float(jnp.max(jnp.abs(out - ref)))
    assert jnp.allclose(out, ref, atol=3e-2, rtol=3e-2), (
        f"mismatch vs reference, max abs err {max_err}")

    print("KERNEL_OK")
</pallas_src>

<mosaic_0001>
module attributes {stable_mosaic.version = 11 : i64} {
  func.func @fused_lstm_fc_kernel(%arg0: i32, %arg1: memref<8x8x128xbf16, #tpu.memory_space<vmem>>, %arg2: memref<128x512xbf16, #tpu.memory_space<vmem>>, %arg3: memref<1x128x512xbf16, #tpu.memory_space<vmem>>, %arg4: memref<2x128x512xbf16, #tpu.memory_space<vmem>>, %arg5: memref<2x1x512xf32, #tpu.memory_space<vmem>>, %arg6: memref<128x128xbf16, #tpu.memory_space<vmem>>, %arg7: memref<1x128xf32, #tpu.memory_space<vmem>>, %arg8: memref<8x128xf32, #tpu.memory_space<vmem>>, %arg9: memref<2x8x128xf32, #tpu.memory_space<vmem>>, %arg10: memref<2x8x128xf32, #tpu.memory_space<vmem>>, %arg11: memref<8x8x128xbf16, #tpu.memory_space<vmem>>, %arg12: memref<8x8x512xf32, #tpu.memory_space<vmem>>) attributes {dimension_semantics = [#tpu.dimension_semantics<arbitrary>], iteration_bounds = array<i64: 1>, scalar_prefetch = 0 : i64, scratch_operands = 4 : i64, tpu.core_type = #tpu.core_type<tc>, window_params = [{transform_indices = @transform_0, window_bounds = array<i64: 8, 8, 128>}, {pipeline_mode = #tpu.pipeline_mode<synchronous>, transform_indices = @transform_1, window_bounds = array<i64: 128, 512>}, {pipeline_mode = #tpu.pipeline_mode<synchronous>, transform_indices = @transform_2, window_bounds = array<i64: 1, 128, 512>}, {pipeline_mode = #tpu.pipeline_mode<synchronous>, transform_indices = @transform_3, window_bounds = array<i64: 2, 128, 512>}, {pipeline_mode = #tpu.pipeline_mode<synchronous>, transform_indices = @transform_4, window_bounds = array<i64: 2, 1, 512>}, {pipeline_mode = #tpu.pipeline_mode<synchronous>, transform_indices = @transform_5, window_bounds = array<i64: 128, 128>}, {pipeline_mode = #tpu.pipeline_mode<synchronous>, transform_indices = @transform_6, window_bounds = array<i64: 1, 128>}, {pipeline_mode = #tpu.pipeline_mode<synchronous>, transform_indices = @transform_7, window_bounds = array<i64: 8, 128>}]} {
    %c0_i32 = arith.constant 0 : i32
    %0 = arith.cmpi eq, %arg0, %c0_i32 : i32
    %1 = arith.extui %0 : i1 to i32
    %c0_i32_0 = arith.constant 0 : i32
    %2 = arith.cmpi ne, %1, %c0_i32_0 : i32
    scf.if %2 {
      %cst_441 = arith.constant 0.000000e+00 : f32
      %823 = vector.broadcast %cst_441 : f32 to vector<2x8x128xf32>
      %c0_442 = arith.constant 0 : index
      %c0_443 = arith.constant 0 : index
      %c0_444 = arith.constant 0 : index
      %824 = vector.load %arg9[%c0_442, %c0_443, %c0_444] : memref<2x8x128xf32, #tpu.memory_space<vmem>>, vector<2x8x128xf32>
      tpu.vector_store %arg9[%c0_442, %c0_443, %c0_444], %823 {strides = array<i32>} : memref<2x8x128xf32, #tpu.memory_space<vmem>>, vector<2x8x128xf32>,
      %cst_445 = arith.constant 0.000000e+00 : f32
      %825 = vector.broadcast %cst_445 : f32 to vector<2x8x128xf32>
      %c0_446 = arith.constant 0 : index
      %c0_447 = arith.constant 0 : index
      %c0_448 = arith.constant 0 : index
      %826 = vector.load %arg10[%c0_446, %c0_447, %c0_448] : memref<2x8x128xf32, #tpu.memory_space<vmem>>, vector<2x8x128xf32>
      tpu.vector_store %arg10[%c0_446, %c0_447, %c0_448], %825 {strides = array<i32>} : memref<2x8x128xf32, #tpu.memory_space<vmem>>, vector<2x8x128xf32>,
    } else {
    }
    %c0 = arith.constant 0 : index
    %c0_1 = arith.constant 0 : index
    %c0_2 = arith.constant 0 : index
    %3 = vector.load %arg1[%c0, %c0_1, %c0_2] : memref<8x8x128xbf16, #tpu.memory_space<vmem>>, vector<8x8x128xbf16>
    %4 = vector.shape_cast %3 : vector<8x8x128xbf16> to vector<64x128xbf16>
    %c0_3 = arith.constant 0 : index
    %c0_4 = arith.constant 0 : index
    %5 = vector.load %arg2[%c0_3, %c0_4] : memref<128x512xbf16, #tpu.memory_space<vmem>>, vector<128x512xbf16>
    %cst = arith.constant dense<0.000000e+00> : vector<64x512xf32>
    %6 = tpu.matmul %4, %5, %cst {dimension_numbers = #tpu.dot_dimension_numbers<[1], [0], [0], [1], [0, 0, 1, 1], [], []>} : vector<64x128xbf16>, vector<128x512xbf16>, vector<64x512xf32> -> vector<64x512xf32>
    %c0_5 = arith.constant 0 : index
    %c0_6 = arith.constant 0 : index
    %c0_7 = arith.constant 0 : index
    %7 = vector.load %arg5[%c0_5, %c0_6, %c0_7] : memref<2x1x512xf32, #tpu.memory_space<vmem>>, vector<1x1x512xf32>
    %8 = vector.shape_cast %7 : vector<1x1x512xf32> to vector<1x512xf32>
    %9 = vector.broadcast %8 : vector<1x512xf32> to vector<64x512xf32>
    %10 = arith.addf %6, %9 : vector<64x512xf32>
    %11 = vector.shape_cast %10 : vector<64x512xf32> to vector<8x8x512xf32>
    %c0_8 = arith.constant 0 : index
    %c0_9 = arith.constant 0 : index
    %c0_10 = arith.constant 0 : index
    %12 = vector.load %arg12[%c0_8, %c0_9, %c0_10] : memref<8x8x512xf32, #tpu.memory_space<vmem>>, vector<8x8x512xf32>
    tpu.vector_store %arg12[%c0_8, %c0_9, %c0_10], %11 {strides = array<i32>} : memref<8x8x512xf32, #tpu.memory_space<vmem>>, vector<8x8x512xf32>,
    %c0_11 = arith.constant 0 : index
    %c0_12 = arith.constant 0 : index
    %c0_13 = arith.constant 0 : index
    %13 = vector.load %arg4[%c0_11, %c0_12, %c0_13] : memref<2x128x512xbf16, #tpu.memory_space<vmem>>, vector<1x128x512xbf16>
    %14 = vector.shape_cast %13 : vector<1x128x512xbf16> to vector<128x512xbf16>
    %c0_i32_14 = arith.constant 0 : i32
    %c0_15 = arith.constant 0 : index
    %c0_16 = arith.constant 0 : index
    %c0_17 = arith.constant 0 : index
    %15 = vector.load %arg9[%c0_15, %c0_16, %c0_17] : memref<2x8x128xf32, #tpu.memory_space<vmem>>, vector<1x8x128xf32>
    %16 = vector.shape_cast %15 : vector<1x8x128xf32> to vector<8x128xf32>
    %c0_18 = arith.constant 0 : index
    %c0_19 = arith.constant 0 : index
    %c0_20 = arith.constant 0 : index
    %17 = vector.load %arg10[%c0_18, %c0_19, %c0_20] : memref<2x8x128xf32, #tpu.memory_space<vmem>>, vector<1x8x128xf32>
    %18 = vector.shape_cast %17 : vector<1x8x128xf32> to vector<8x128xf32>
    %19 = arith.index_cast %c0_i32_14 : i32 to index
    %c0_21 = arith.constant 0 : index
    %c0_22 = arith.constant 0 : index
    %20 = vector.load %arg12[%19, %c0_21, %c0_22] : memref<8x8x512xf32, #tpu.memory_space<vmem>>, vector<1x8x512xf32>
    %21 = vector.shape_cast %20 : vector<1x8x512xf32> to vector<8x512xf32>
    %22 = arith.truncf %16 : vector<8x128xf32> to vector<8x128xbf16>
    %cst_23 = arith.constant dense<0.000000e+00> : vector<8x512xf32>
    %23 = tpu.matmul %22, %14, %cst_23 {dimension_numbers = #tpu.dot_dimension_numbers<[1], [0], [0], [1], [0, 0, 1, 1], [], []>} : vector<8x128xbf16>, vector<128x512xbf16>, vector<8x512xf32> -> vector<8x512xf32>
    %24 = arith.addf %21, %23 : vector<8x512xf32>
    %25 = vector.extract_strided_slice %24 {offsets = [0, 0], sizes = [8, 128], strides = [1, 1]} : vector<8x512xf32> to vector<8x128xf32>
    %cst_24 = arith.constant 5.000000e-01 : f32
    %26 = vector.broadcast %cst_24 : f32 to vector<8x128xf32>
    %27 = arith.mulf %26, %25 : vector<8x128xf32>
    %28 = math.tanh %27 : vector<8x128xf32>
    %cst_25 = arith.constant 5.000000e-01 : f32
    %29 = vector.broadcast %cst_25 : f32 to vector<8x128xf32>
    %30 = arith.mulf %29, %28 : vector<8x128xf32>
    %cst_26 = arith.constant 5.000000e-01 : f32
    %31 = vector.broadcast %cst_26 : f32 to vector<8x128xf32>
    %32 = arith.addf %30, %31 : vector<8x128xf32>
    %33 = vector.extract_strided_slice %24 {offsets = [0, 128], sizes = [8, 128], strides = [1, 1]} : vector<8x512xf32> to vector<8x128xf32>
    %cst_27 = arith.constant 5.000000e-01 : f32
    %34 = vector.broadcast %cst_27 : f32 to vector<8x128xf32>
    %35 = arith.mulf %34, %33 : vector<8x128xf32>
    %36 = math.tanh %35 : vector<8x128xf32>
    %cst_28 = arith.constant 5.000000e-01 : f32
    %37 = vector.broadcast %cst_28 : f32 to vector<8x128xf32>
    %38 = arith.mulf %37, %36 : vector<8x128xf32>
    %cst_29 = arith.constant 5.000000e-01 : f32
    %39 = vector.broadcast %cst_29 : f32 to vector<8x128xf32>
    %40 = arith.addf %38, %39 : vector<8x128xf32>
    %41 = vector.extract_strided_slice %24 {offsets = [0, 256], sizes = [8, 128], strides = [1, 1]} : vector<8x512xf32> to vector<8x128xf32>
    %42 = math.tanh %41 : vector<8x128xf32>
    %43 = vector.extract_strided_slice %24 {offsets = [0, 384], sizes = [8, 128], strides = [1, 1]} : vector<8x512xf32> to vector<8x128xf32>
    %cst_30 = arith.constant 5.000000e-01 : f32
    %44 = vector.broadcast %cst_30 : f32 to vector<8x128xf32>
    %45 = arith.mulf %44, %43 : vector<8x128xf32>
    %46 = math.tanh %45 : vector<8x128xf32>
    %cst_31 = arith.constant 5.000000e-01 : f32
    %47 = vector.broadcast %cst_31 : f32 to vector<8x128xf32>
    %48 = arith.mulf %47, %46 : vector<8x128xf32>
    %cst_32 = arith.constant 5.000000e-01 : f32
    %49 = vector.broadcast %cst_32 : f32 to vector<8x128xf32>
    %50 = arith.addf %48, %49 : vector<8x128xf32>
    %51 = arith.mulf %40, %18 : vector<8x128xf32>
    %52 = arith.mulf %32, %42 : vector<8x128xf32>
    %53 = arith.addf %51, %52 : vector<8x128xf32>
    %54 = math.tanh %53 : vector<8x128xf32>
    %55 = arith.mulf %50, %54 : vector<8x128xf32>
    %c0_33 = arith.constant 0 : index
    %c0_34 = arith.constant 0 : index
    %c0_35 = arith.constant 0 : index
    %56 = vector.load %arg10[%c0_33, %c0_34, %c0_35] : memref<2x8x128xf32, #tpu.memory_space<vmem>>, vector<1x8x128xf32>
    %57 = vector.shape_cast %56 : vector<1x8x128xf32> to vector<8x128xf32>
    %58 = vector.shape_cast %53 : vector<8x128xf32> to vector<1x8x128xf32>
    tpu.vector_store %arg10[%c0_33, %c0_34, %c0_35], %58 {strides = array<i32>} : memref<2x8x128xf32, #tpu.memory_space<vmem>>, vector<1x8x128xf32>,
    %c0_36 = arith.constant 0 : index
    %c0_37 = arith.constant 0 : index
    %c0_38 = arith.constant 0 : index
    %59 = vector.load %arg9[%c0_36, %c0_37, %c0_38] : memref<2x8x128xf32, #tpu.memory_space<vmem>>, vector<1x8x128xf32>
    %60 = vector.shape_cast %59 : vector<1x8x128xf32> to vector<8x128xf32>
    %61 = vector.shape_cast %55 : vector<8x128xf32> to vector<1x8x128xf32>
    tpu.vector_store %arg9[%c0_36, %c0_37, %c0_38], %61 {strides = array<i32>} : memref<2x8x128xf32, #tpu.memory_space<vmem>>, vector<1x8x128xf32>,
    %62 = arith.truncf %55 : vector<8x128xf32> to vector<8x128xbf16>
    %63 = arith.index_cast %c0_i32_14 : i32 to index
    %c0_39 = arith.constant 0 : index
    %c0_40 = arith.constant 0 : index
    %64 = vector.load %arg11[%63, %c0_39, %c0_40] : memref<8x8x128xbf16, #tpu.memory_space<vmem>>, vector<1x8x128xbf16>
    %65 = vector.shape_cast %64 : vector<1x8x128xbf16> to vector<8x128xbf16>
    %66 = vector.shape_cast %62 : vector<8x128xbf16> to vector<1x8x128xbf16>
    tpu.vector_store %arg11[%63, %c0_39, %c0_40], %66 {strides = array<i32>} : memref<8x8x128xbf16, #tpu.memory_space<vmem>>, vector<1x8x128xbf16>,
    %c1_i32 = arith.constant 1 : i32
    %c0_41 = arith.constant 0 : index
    %c0_42 = arith.constant 0 : index
    %c0_43 = arith.constant 0 : index
    %67 = vector.load %arg9[%c0_41, %c0_42, %c0_43] : memref<2x8x128xf32, #tpu.memory_space<vmem>>, vector<1x8x128xf32>
    %68 = vector.shape_cast %67 : vector<1x8x128xf32> to vector<8x128xf32>
    %c0_44 = arith.constant 0 : index
    %c0_45 = arith.constant 0 : index
    %c0_46 = arith.constant 0 : index
    %69 = vector.load %arg10[%c0_44, %c0_45, %c0_46] : memref<2x8x128xf32, #tpu.memory_space<vmem>>, vector<1x8x128xf32>
    %70 = vector.shape_cast %69 : vector<1x8x128xf32> to vector<8x128xf32>
    %71 = arith.index_cast %c1_i32 : i32 to index
    %c0_47 = arith.constant 0 : index
    %c0_48 = arith.constant 0 : index
    %72 = vector.load %arg12[%71, %c0_47, %c0_48] : memref<8x8x512xf32, #tpu.memory_space<vmem>>, vector<1x8x512xf32>
    %73 = vector.shape_cast %72 : vector<1x8x512xf32> to vector<8x512xf32>
    %74 = arith.truncf %68 : vector<8x128xf32> to vector<8x128xbf16>
    %cst_49 = arith.constant dense<0.000000e+00> : vector<8x512xf32>
    %75 = tpu.matmul %74, %14, %cst_49 {dimension_numbers = #tpu.dot_dimension_numbers<[1], [0], [0], [1], [0, 0, 1, 1], [], []>} : vector<8x128xbf16>, vector<128x512xbf16>, vector<8x512xf32> -> vector<8x512xf32>
    %76 = arith.addf %73, %75 : vector<8x512xf32>
    %77 = vector.extract_strided_slice %76 {offsets = [0, 0], sizes = [8, 128], strides = [1, 1]} : vector<8x512xf32> to vector<8x128xf32>
    %cst_50 = arith.constant 5.000000e-01 : f32
    %78 = vector.broadcast %cst_50 : f32 to vector<8x128xf32>
    %79 = arith.mulf %78, %77 : vector<8x128xf32>
    %80 = math.tanh %79 : vector<8x128xf32>
    %cst_51 = arith.constant 5.000000e-01 : f32
    %81 = vector.broadcast %cst_51 : f32 to vector<8x128xf32>
    %82 = arith.mulf %81, %80 : vector<8x128xf32>
    %cst_52 = arith.constant 5.000000e-01 : f32
    %83 = vector.broadcast %cst_52 : f32 to vector<8x128xf32>
    %84 = arith.addf %82, %83 : vector<8x128xf32>
    %85 = vector.extract_strided_slice %76 {offsets = [0, 128], sizes = [8, 128], strides = [1, 1]} : vector<8x512xf32> to vector<8x128xf32>
    %cst_53 = arith.constant 5.000000e-01 : f32
    %86 = vector.broadcast %cst_53 : f32 to vector<8x128xf32>
    %87 = arith.mulf %86, %85 : vector<8x128xf32>
    %88 = math.tanh %87 : vector<8x128xf32>
    %cst_54 = arith.constant 5.000000e-01 : f32
    %89 = vector.broadcast %cst_54 : f32 to vector<8x128xf32>
    %90 = arith.mulf %89, %88 : vector<8x128xf32>
    %cst_55 = arith.constant 5.000000e-01 : f32
    %91 = vector.broadcast %cst_55 : f32 to vector<8x128xf32>
    %92 = arith.addf %90, %91 : vector<8x128xf32>
    %93 = vector.extract_strided_slice %76 {offsets = [0, 256], sizes = [8, 128], strides = [1, 1]} : vector<8x512xf32> to vector<8x128xf32>
    %94 = math.tanh %93 : vector<8x128xf32>
    %95 = vector.extract_strided_slice %76 {offsets = [0, 384], sizes = [8, 128], strides = [1, 1]} : vector<8x512xf32> to vector<8x128xf32>
    %cst_56 = arith.constant 5.000000e-01 : f32
    %96 = vector.broadcast %cst_56 : f32 to vector<8x128xf32>
    %97 = arith.mulf %96, %95 : vector<8x128xf32>
    %98 = math.tanh %97 : vector<8x128xf32>
    %cst_57 = arith.constant 5.000000e-01 : f32
    %99 = vector.broadcast %cst_57 : f32 to vector<8x128xf32>
    %100 = arith.mulf %99, %98 : vector<8x128xf32>
    %cst_58 = arith.constant 5.000000e-01 : f32
    %101 = vector.broadcast %cst_58 : f32 to vector<8x128xf32>
    %102 = arith.addf %100, %101 : vector<8x128xf32>
    %103 = arith.mulf %92, %70 : vector<8x128xf32>
    %104 = arith.mulf %84, %94 : vector<8x128xf32>
    %105 = arith.addf %103, %104 : vector<8x128xf32>
    %106 = math.tanh %105 : vector<8x128xf32>
    %107 = arith.mulf %102, %106 : vector<8x128xf32>
    %c0_59 = arith.constant 0 : index
    %c0_60 = arith.constant 0 : index
    %c0_61 = arith.constant 0 : index
    %108 = vector.load %arg10[%c0_59, %c0_60, %c0_61] : memref<2x8x128xf32, #tpu.memory_space<vmem>>, vector<1x8x128xf32>
    %109 = vector.shape_cast %108 : vector<1x8x128xf32> to vector<8x128xf32>
    %110 = vector.shape_cast %105 : vector<8x128xf32> to vector<1x8x128xf32>
    tpu.vector_store %arg10[%c0_59, %c0_60, %c0_61], %110 {strides = array<i32>} : memref<2x8x128xf32, #tpu.memory_space<vmem>>, vector<1x8x128xf32>,
    %c0_62 = arith.constant 0 : index
    %c0_63 = arith.constant 0 : index
    %c0_64 = arith.constant 0 : index
    %111 = vector.load %arg9[%c0_62, %c0_63, %c0_64] : memref<2x8x128xf32, #tpu.memory_space<vmem>>, vector<1x8x128xf32>
    %112 = vector.shape_cast %111 : vector<1x8x128xf32> to vector<8x128xf32>
    %113 = vector.shape_cast %107 : vector<8x128xf32> to vector<1x8x128xf32>
    tpu.vector_store %arg9[%c0_62, %c0_63, %c0_64], %113 {strides = array<i32>} : memref<2x8x128xf32, #tpu.memory_space<vmem>>, vector<1x8x128xf32>,
    %114 = arith.truncf %107 : vector<8x128xf32> to vector<8x128xbf16>
    %115 = arith.index_cast %c1_i32 : i32 to index
    %c0_65 = arith.constant 0 : index
    %c0_66 = arith.constant 0 : index
    %116 = vector.load %arg11[%115, %c0_65, %c0_66] : memref<8x8x128xbf16, #tpu.memory_space<vmem>>, vector<1x8x128xbf16>
    %117 = vector.shape_cast %116 : vector<1x8x128xbf16> to vector<8x128xbf16>
    %118 = vector.shape_cast %114 : vector<8x128xbf16> to vector<1x8x128xbf16>
    tpu.vector_store %arg11[%115, %c0_65, %c0_66], %118 {strides = array<i32>} : memref<8x8x128xbf16, #tpu.memory_space<vmem>>, vector<1x8x128xbf16>,
    %c2_i32 = arith.constant 2 : i32
    %c0_67 = arith.constant 0 : index
    %c0_68 = arith.constant 0 : index
    %c0_69 = arith.constant 0 : index
    %119 = vector.load %arg9[%c0_67, %c0_68, %c0_69] : memref<2x8x128xf32, #tpu.memory_space<vmem>>, vector<1x8x128xf32>
    %120 = vector.shape_cast %119 : vector<1x8x128xf32> to vector<8x128xf32>
    %c0_70 = arith.constant 0 : index
    %c0_71 = arith.constant 0 : index
    %c0_72 = arith.constant 0 : index
    %121 = vector.load %arg10[%c0_70, %c0_71, %c0_72] : memref<2x8x128xf32, #tpu.memory_space<vmem>>, vector<1x8x128xf32>
    %122 = vector.shape_cast %121 : vector<1x8x128xf32> to vector<8x128xf32>
    %123 = arith.index_cast %c2_i32 : i32 to index
    %c0_73 = arith.constant 0 : index
    %c0_74 = arith.constant 0 : index
    %124 = vector.load %arg12[%123, %c0_73, %c0_74] : memref<8x8x512xf32, #tpu.memory_space<vmem>>, vector<1x8x512xf32>
    %125 = vector.shape_cast %124 : vector<1x8x512xf32> to vector<8x512xf32>
    %126 = arith.truncf %120 : vector<8x128xf32> to vector<8x128xbf16>
    %cst_75 = arith.constant dense<0.000000e+00> : vector<8x512xf32>
    %127 = tpu.matmul %126, %14, %cst_75 {dimension_numbers = #tpu.dot_dimension_numbers<[1], [0], [0], [1], [0, 0, 1, 1], [], []>} : vector<8x128xbf16>, vector<128x512xbf16>, vector<8x512xf32> -> vector<8x512xf32>
    %128 = arith.addf %125, %127 : vector<8x512xf32>
    %129 = vector.extract_strided_slice %128 {offsets = [0, 0], sizes = [8, 128], strides = [1, 1]} : vector<8x512xf32> to vector<8x128xf32>
    %cst_76 = arith.constant 5.000000e-01 : f32
    %130 = vector.broadcast %cst_76 : f32 to vector<8x128xf32>
    %131 = arith.mulf %130, %129 : vector<8x128xf32>
    %132 = math.tanh %131 : vector<8x128xf32>
    %cst_77 = arith.constant 5.000000e-01 : f32
    %133 = vector.broadcast %cst_77 : f32 to vector<8x128xf32>
    %134 = arith.mulf %133, %132 : vector<8x128xf32>
    %cst_78 = arith.constant 5.000000e-01 : f32
    %135 = vector.broadcast %cst_78 : f32 to vector<8x128xf32>
    %136 = arith.addf %134, %135 : vector<8x128xf32>
    %137 = vector.extract_strided_slice %128 {offsets = [0, 128], sizes = [8, 128], strides = [1, 1]} : vector<8x512xf32> to vector<8x128xf32>
    %cst_79 = arith.constant 5.000000e-01 : f32
    %138 = vector.broadcast %cst_79 : f32 to vector<8x128xf32>
    %139 = arith.mulf %138, %137 : vector<8x128xf32>
    %140 = math.tanh %139 : vector<8x128xf32>
    %cst_80 = arith.constant 5.000000e-01 : f32
    %141 = vector.broadcast %cst_80 : f32 to vector<8x128xf32>
    %142 = arith.mulf %141, %140 : vector<8x128xf32>
    %cst_81 = arith.constant 5.000000e-01 : f32
    %143 = vector.broadcast %cst_81 : f32 to vector<8x128xf32>
    %144 = arith.addf %142, %143 : vector<8x128xf32>
    %145 = vector.extract_strided_slice %128 {offsets = [0, 256], sizes = [8, 128], strides = [1, 1]} : vector<8x512xf32> to vector<8x128xf32>
    %146 = math.tanh %145 : vector<8x128xf32>
    %147 = vector.extract_strided_slice %128 {offsets = [0, 384], sizes = [8, 128], strides = [1, 1]} : vector<8x512xf32> to vector<8x128xf32>
    %cst_82 = arith.constant 5.000000e-01 : f32
    %148 = vector.broadcast %cst_82 : f32 to vector<8x128xf32>
    %149 = arith.mulf %148, %147 : vector<8x128xf32>
    %150 = math.tanh %149 : vector<8x128xf32>
    %cst_83 = arith.constant 5.000000e-01 : f32
    %151 = vector.broadcast %cst_83 : f32 to vector<8x128xf32>
    %152 = arith.mulf %151, %150 : vector<8x128xf32>
    %cst_84 = arith.constant 5.000000e-01 : f32
    %153 = vector.broadcast %cst_84 : f32 to vector<8x128xf32>
    %154 = arith.addf %152, %153 : vector<8x128xf32>
    %155 = arith.mulf %144, %122 : vector<8x128xf32>
    %156 = arith.mulf %136, %146 : vector<8x128xf32>
    %157 = arith.addf %155, %156 : vector<8x128xf32>
    %158 = math.tanh %157 : vector<8x128xf32>
    %159 = arith.mulf %154, %158 : vector<8x128xf32>
    %c0_85 = arith.constant 0 : index
    %c0_86 = arith.constant 0 : index
    %c0_87 = arith.constant 0 : index
    %160 = vector.load %arg10[%c0_85, %c0_86, %c0_87] : memref<2x8x128xf32, #tpu.memory_space<vmem>>, vector<1x8x128xf32>
    %161 = vector.shape_cast %160 : vector<1x8x128xf32> to vector<8x128xf32>
    %162 = vector.shape_cast %157 : vector<8x128xf32> to vector<1x8x128xf32>
    tpu.vector_store %arg10[%c0_85, %c0_86, %c0_87], %162 {strides = array<i32>} : memref<2x8x128xf32, #tpu.memory_space<vmem>>, vector<1x8x128xf32>,
    %c0_88 = arith.constant 0 : index
    %c0_89 = arith.constant 0 : index
    %c0_90 = arith.constant 0 : index
    %163 = vector.load %arg9[%c0_88, %c0_89, %c0_90] : memref<2x8x128xf32, #tpu.memory_space<vmem>>, vector<1x8x128xf32>
    %164 = vector.shape_cast %163 : vector<1x8x128xf32> to vector<8x128xf32>
    %165 = vector.shape_cast %159 : vector<8x128xf32> to vector<1x8x128xf32>
    tpu.vector_store %arg9[%c0_88, %c0_89, %c0_90], %165 {strides = array<i32>} : memref<2x8x128xf32, #tpu.memory_space<vmem>>, vector<1x8x128xf32>,
    %166 = arith.truncf %159 : vector<8x128xf32> to vector<8x128xbf16>
    %167 = arith.index_cast %c2_i32 : i32 to index
    %c0_91 = arith.constant 0 : index
    %c0_92 = arith.constant 0 : index
    %168 = vector.load %arg11[%167, %c0_91, %c0_92] : memref<8x8x128xbf16, #tpu.memory_space<vmem>>, vector<1x8x128xbf16>
    %169 = vector.shape_cast %168 : vector<1x8x128xbf16> to vector<8x128xbf16>
    %170 = vector.shape_cast %166 : vector<8x128xbf16> to vector<1x8x128xbf16>
    tpu.vector_store %arg11[%167, %c0_91, %c0_92], %170 {strides = array<i32>} : memref<8x8x128xbf16, #tpu.memory_space<vmem>>, vector<1x8x128xbf16>,
    %c3_i32 = arith.constant 3 : i32
    %c0_93 = arith.constant 0 : index
    %c0_94 = arith.constant 0 : index
    %c0_95 = arith.constant 0 : index
    %171 = vector.load %arg9[%c0_93, %c0_94, %c0_95] : memref<2x8x128xf32, #tpu.memory_space<vmem>>, vector<1x8x128xf32>
    %172 = vector.shape_cast %171 : vector<1x8x128xf32> to vector<8x128xf32>
    %c0_96 = arith.constant 0 : index
    %c0_97 = arith.constant 0 : index
    %c0_98 = arith.constant 0 : index
    %173 = vector.load %arg10[%c0_96, %c0_97, %c0_98] : memref<2x8x128xf32, #tpu.memory_space<vmem>>, vector<1x8x128xf32>
    %174 = vector.shape_cast %173 : vector<1x8x128xf32> to vector<8x128xf32>
    %175 = arith.index_cast %c3_i32 : i32 to index
    %c0_99 = arith.constant 0 : index
    %c0_100 = arith.constant 0 : index
    %176 = vector.load %arg12[%175, %c0_99, %c0_100] : memref<8x8x512xf32, #tpu.memory_space<vmem>>, vector<1x8x512xf32>
    %177 = vector.shape_cast %176 : vector<1x8x512xf32> to vector<8x512xf32>
    %178 = arith.truncf %172 : vector<8x128xf32> to vector<8x128xbf16>
    %cst_101 = arith.constant dense<0.000000e+00> : vector<8x512xf32>
    %179 = tpu.matmul %178, %14, %cst_101 {dimension_numbers = #tpu.dot_dimension_numbers<[1], [0], [0], [1], [0, 0, 1, 1], [], []>} : vector<8x128xbf16>, vector<128x512xbf16>, vector<8x512xf32> -> vector<8x512xf32>
    %180 = arith.addf %177, %179 : vector<8x512xf32>
    %181 = vector.extract_strided_slice %180 {offsets = [0, 0], sizes = [8, 128], strides = [1, 1]} : vector<8x512xf32> to vector<8x128xf32>
    %cst_102 = arith.constant 5.000000e-01 : f32
    %182 = vector.broadcast %cst_102 : f32 to vector<8x128xf32>
    %183 = arith.mulf %182, %181 : vector<8x128xf32>
    %184 = math.tanh %183 : vector<8x128xf32>
    %cst_103 = arith.constant 5.000000e-01 : f32
    %185 = vector.broadcast %cst_103 : f32 to vector<8x128xf32>
    %186 = arith.mulf %185, %184 : vector<8x128xf32>
    %cst_104 = arith.constant 5.000000e-01 : f32
    %187 = vector.broadcast %cst_104 : f32 to vector<8x128xf32>
    %188 = arith.addf %186, %187 : vector<8x128xf32>
    %189 = vector.extract_strided_slice %180 {offsets = [0, 128], sizes = [8, 128], strides = [1, 1]} : vector<8x512xf32> to vector<8x128xf32>
    %cst_105 = arith.constant 5.000000e-01 : f32
    %190 = vector.broadcast %cst_105 : f32 to vector<8x128xf32>
    %191 = arith.mulf %190, %189 : vector<8x128xf32>
    %192 = math.tanh %191 : vector<8x128xf32>
    %cst_106 = arith.constant 5.000000e-01 : f32
    %193 = vector.broadcast %cst_106 : f32 to vector<8x128xf32>
    %194 = arith.mulf %193, %192 : vector<8x128xf32>
    %cst_107 = arith.constant 5.000000e-01 : f32
    %195 = vector.broadcast %cst_107 : f32 to vector<8x128xf32>
    %196 = arith.addf %194, %195 : vector<8x128xf32>
    %197 = vector.extract_strided_slice %180 {offsets = [0, 256], sizes = [8, 128], strides = [1, 1]} : vector<8x512xf32> to vector<8x128xf32>
    %198 = math.tanh %197 : vector<8x128xf32>
    %199 = vector.extract_strided_slice %180 {offsets = [0, 384], sizes = [8, 128], strides = [1, 1]} : vector<8x512xf32> to vector<8x128xf32>
    %cst_108 = arith.constant 5.000000e-01 : f32
    %200 = vector.broadcast %cst_108 : f32 to vector<8x128xf32>
    %201 = arith.mulf %200, %199 : vector<8x128xf32>
    %202 = math.tanh %201 : vector<8x128xf32>
    %cst_109 = arith.constant 5.000000e-01 : f32
    %203 = vector.broadcast %cst_109 : f32 to vector<8x128xf32>
    %204 = arith.mulf %203, %202 : vector<8x128xf32>
    %cst_110 = arith.constant 5.000000e-01 : f32
    %205 = vector.broadcast %cst_110 : f32 to vector<8x128xf32>
    %206 = arith.addf %204, %205 : vector<8x128xf32>
    %207 = arith.mulf %196, %174 : vector<8x128xf32>
    %208 = arith.mulf %188, %198 : vector<8x128xf32>
    %209 = arith.addf %207, %208 : vector<8x128xf32>
    %210 = math.tanh %209 : vector<8x128xf32>
    %211 = arith.mulf %206, %210 : vector<8x128xf32>
    %c0_111 = arith.constant 0 : index
    %c0_112 = arith.constant 0 : index
    %c0_113 = arith.constant 0 : index
    %212 = vector.load %arg10[%c0_111, %c0_112, %c0_113] : memref<2x8x128xf32, #tpu.memory_space<vmem>>, vector<1x8x128xf32>
    %213 = vector.shape_cast %212 : vector<1x8x128xf32> to vector<8x128xf32>
    %214 = vector.shape_cast %209 : vector<8x128xf32> to vector<1x8x128xf32>
    tpu.vector_store %arg10[%c0_111, %c0_112, %c0_113], %214 {strides = array<i32>} : memref<2x8x128xf32, #tpu.memory_space<vmem>>, vector<1x8x128xf32>,
    %c0_114 = arith.constant 0 : index
    %c0_115 = arith.constant 0 : index
    %c0_116 = arith.constant 0 : index
    %215 = vector.load %arg9[%c0_114, %c0_115, %c0_116] : memref<2x8x128xf32, #tpu.memory_space<vmem>>, vector<1x8x128xf32>
    %216 = vector.shape_cast %215 : vector<1x8x128xf32> to vector<8x128xf32>
    %217 = vector.shape_cast %211 : vector<8x128xf32> to vector<1x8x128xf32>
    tpu.vector_store %arg9[%c0_114, %c0_115, %c0_116], %217 {strides = array<i32>} : memref<2x8x128xf32, #tpu.memory_space<vmem>>, vector<1x8x128xf32>,
    %218 = arith.truncf %211 : vector<8x128xf32> to vector<8x128xbf16>
    %219 = arith.index_cast %c3_i32 : i32 to index
    %c0_117 = arith.constant 0 : index
    %c0_118 = arith.constant 0 : index
    %220 = vector.load %arg11[%219, %c0_117, %c0_118] : memref<8x8x128xbf16, #tpu.memory_space<vmem>>, vector<1x8x128xbf16>
    %221 = vector.shape_cast %220 : vector<1x8x128xbf16> to vector<8x128xbf16>
    %222 = vector.shape_cast %218 : vector<8x128xbf16> to vector<1x8x128xbf16>
    tpu.vector_store %arg11[%219, %c0_117, %c0_118], %222 {strides = array<i32>} : memref<8x8x128xbf16, #tpu.memory_space<vmem>>, vector<1x8x128xbf16>,
    %c4_i32 = arith.constant 4 : i32
    %c0_119 = arith.constant 0 : index
    %c0_120 = arith.constant 0 : index
    %c0_121 = arith.constant 0 : index
    %223 = vector.load %arg9[%c0_119, %c0_120, %c0_121] : memref<2x8x128xf32, #tpu.memory_space<vmem>>, vector<1x8x128xf32>
    %224 = vector.shape_cast %223 : vector<1x8x128xf32> to vector<8x128xf32>
    %c0_122 = arith.constant 0 : index
    %c0_123 = arith.constant 0 : index
    %c0_124 = arith.constant 0 : index
    %225 = vector.load %arg10[%c0_122, %c0_123, %c0_124] : memref<2x8x128xf32, #tpu.memory_space<vmem>>, vector<1x8x128xf32>
    %226 = vector.shape_cast %225 : vector<1x8x128xf32> to vector<8x128xf32>
    %227 = arith.index_cast %c4_i32 : i32 to index
    %c0_125 = arith.constant 0 : index
    %c0_126 = arith.constant 0 : index
    %228 = vector.load %arg12[%227, %c0_125, %c0_126] : memref<8x8x512xf32, #tpu.memory_space<vmem>>, vector<1x8x512xf32>
    %229 = vector.shape_cast %228 : vector<1x8x512xf32> to vector<8x512xf32>
    %230 = arith.truncf %224 : vector<8x128xf32> to vector<8x128xbf16>
    %cst_127 = arith.constant dense<0.000000e+00> : vector<8x512xf32>
    %231 = tpu.matmul %230, %14, %cst_127 {dimension_numbers = #tpu.dot_dimension_numbers<[1], [0], [0], [1], [0, 0, 1, 1], [], []>} : vector<8x128xbf16>, vector<128x512xbf16>, vector<8x512xf32> -> vector<8x512xf32>
    %232 = arith.addf %229, %231 : vector<8x512xf32>
    %233 = vector.extract_strided_slice %232 {offsets = [0, 0], sizes = [8, 128], strides = [1, 1]} : vector<8x512xf32> to vector<8x128xf32>
    %cst_128 = arith.constant 5.000000e-01 : f32
    %234 = vector.broadcast %cst_128 : f32 to vector<8x128xf32>
    %235 = arith.mulf %234, %233 : vector<8x128xf32>
    %236 = math.tanh %235 : vector<8x128xf32>
    %cst_129 = arith.constant 5.000000e-01 : f32
    %237 = vector.broadcast %cst_129 : f32 to vector<8x128xf32>
    %238 = arith.mulf %237, %236 : vector<8x128xf32>
    %cst_130 = arith.constant 5.000000e-01 : f32
    %239 = vector.broadcast %cst_130 : f32 to vector<8x128xf32>
    %240 = arith.addf %238, %239 : vector<8x128xf32>
    %241 = vector.extract_strided_slice %232 {offsets = [0, 128], sizes = [8, 128], strides = [1, 1]} : vector<8x512xf32> to vector<8x128xf32>
    %cst_131 = arith.constant 5.000000e-01 : f32
    %242 = vector.broadcast %cst_131 : f32 to vector<8x128xf32>
    %243 = arith.mulf %242, %241 : vector<8x128xf32>
    %244 = math.tanh %243 : vector<8x128xf32>
    %cst_132 = arith.constant 5.000000e-01 : f32
    %245 = vector.broadcast %cst_132 : f32 to vector<8x128xf32>
    %246 = arith.mulf %245, %244 : vector<8x128xf32>
    %cst_133 = arith.constant 5.000000e-01 : f32
    %247 = vector.broadcast %cst_133 : f32 to vector<8x128xf32>
    %248 = arith.addf %246, %247 : vector<8x128xf32>
    %249 = vector.extract_strided_slice %232 {offsets = [0, 256], sizes = [8, 128], strides = [1, 1]} : vector<8x512xf32> to vector<8x128xf32>
    %250 = math.tanh %249 : vector<8x128xf32>
    %251 = vector.extract_strided_slice %232 {offsets = [0, 384], sizes = [8, 128], strides = [1, 1]} : vector<8x512xf32> to vector<8x128xf32>
    %cst_134 = arith.constant 5.000000e-01 : f32
    %252 = vector.broadcast %cst_134 : f32 to vector<8x128xf32>
    %253 = arith.mulf %252, %251 : vector<8x128xf32>
    %254 = math.tanh %253 : vector<8x128xf32>
    %cst_135 = arith.constant 5.000000e-01 : f32
    %255 = vector.broadcast %cst_135 : f32 to vector<8x128xf32>
    %256 = arith.mulf %255, %254 : vector<8x128xf32>
    %cst_136 = arith.constant 5.000000e-01 : f32
    %257 = vector.broadcast %cst_136 : f32 to vector<8x128xf32>
    %258 = arith.addf %256, %257 : vector<8x128xf32>
    %259 = arith.mulf %248, %226 : vector<8x128xf32>
    %260 = arith.mulf %240, %250 : vector<8x128xf32>
    %261 = arith.addf %259, %260 : vector<8x128xf32>
    %262 = math.tanh %261 : vector<8x128xf32>
    %263 = arith.mulf %258, %262 : vector<8x128xf32>
    %c0_137 = arith.constant 0 : index
    %c0_138 = arith.constant 0 : index
    %c0_139 = arith.constant 0 : index
    %264 = vector.load %arg10[%c0_137, %c0_138, %c0_139] : memref<2x8x128xf32, #tpu.memory_space<vmem>>, vector<1x8x128xf32>
    %265 = vector.shape_cast %264 : vector<1x8x128xf32> to vector<8x128xf32>
    %266 = vector.shape_cast %261 : vector<8x128xf32> to vector<1x8x128xf32>
    tpu.vector_store %arg10[%c0_137, %c0_138, %c0_139], %266 {strides = array<i32>} : memref<2x8x128xf32, #tpu.memory_space<vmem>>, vector<1x8x128xf32>,
    %c0_140 = arith.constant 0 : index
    %c0_141 = arith.constant 0 : index
    %c0_142 = arith.constant 0 : index
    %267 = vector.load %arg9[%c0_140, %c0_141, %c0_142] : memref<2x8x128xf32, #tpu.memory_space<vmem>>, vector<1x8x128xf32>
    %268 = vector.shape_cast %267 : vector<1x8x128xf32> to vector<8x128xf32>
    %269 = vector.shape_cast %263 : vector<8x128xf32> to vector<1x8x128xf32>
    tpu.vector_store %arg9[%c0_140, %c0_141, %c0_142], %269 {strides = array<i32>} : memref<2x8x128xf32, #tpu.memory_space<vmem>>, vector<1x8x128xf32>,
    %270 = arith.truncf %263 : vector<8x128xf32> to vector<8x128xbf16>
    %271 = arith.index_cast %c4_i32 : i32 to index
    %c0_143 = arith.constant 0 : index
    %c0_144 = arith.constant 0 : index
    %272 = vector.load %arg11[%271, %c0_143, %c0_144] : memref<8x8x128xbf16, #tpu.memory_space<vmem>>, vector<1x8x128xbf16>
    %273 = vector.shape_cast %272 : vector<1x8x128xbf16> to vector<8x128xbf16>
    %274 = vector.shape_cast %270 : vector<8x128xbf16> to vector<1x8x128xbf16>
    tpu.vector_store %arg11[%271, %c0_143, %c0_144], %274 {strides = array<i32>} : memref<8x8x128xbf16, #tpu.memory_space<vmem>>, vector<1x8x128xbf16>,
    %c5_i32 = arith.constant 5 : i32
    %c0_145 = arith.constant 0 : index
    %c0_146 = arith.constant 0 : index
    %c0_147 = arith.constant 0 : index
    %275 = vector.load %arg9[%c0_145, %c0_146, %c0_147] : memref<2x8x128xf32, #tpu.memory_space<vmem>>, vector<1x8x128xf32>
    %276 = vector.shape_cast %275 : vector<1x8x128xf32> to vector<8x128xf32>
    %c0_148 = arith.constant 0 : index
    %c0_149 = arith.constant 0 : index
    %c0_150 = arith.constant 0 : index
    %277 = vector.load %arg10[%c0_148, %c0_149, %c0_150] : memref<2x8x128xf32, #tpu.memory_space<vmem>>, vector<1x8x128xf32>
    %278 = vector.shape_cast %277 : vector<1x8x128xf32> to vector<8x128xf32>
    %279 = arith.index_cast %c5_i32 : i32 to index
    %c0_151 = arith.constant 0 : index
    %c0_152 = arith.constant 0 : index
    %280 = vector.load %arg12[%279, %c0_151, %c0_152] : memref<8x8x512xf32, #tpu.memory_space<vmem>>, vector<1x8x512xf32>
    %281 = vector.shape_cast %280 : vector<1x8x512xf32> to vector<8x512xf32>
    %282 = arith.truncf %276 : vector<8x128xf32> to vector<8x128xbf16>
    %cst_153 = arith.constant dense<0.000000e+00> : vector<8x512xf32>
    %283 = tpu.matmul %282, %14, %cst_153 {dimension_numbers = #tpu.dot_dimension_numbers<[1], [0], [0], [1], [0, 0, 1, 1], [], []>} : vector<8x128xbf16>, vector<128x512xbf16>, vector<8x512xf32> -> vector<8x512xf32>
    %284 = arith.addf %281, %283 : vector<8x512xf32>
    %285 = vector.extract_strided_slice %284 {offsets = [0, 0], sizes = [8, 128], strides = [1, 1]} : vector<8x512xf32> to vector<8x128xf32>
    %cst_154 = arith.constant 5.000000e-01 : f32
    %286 = vector.broadcast %cst_154 : f32 to vector<8x128xf32>
    %287 = arith.mulf %286, %285 : vector<8x128xf32>
    %288 = math.tanh %287 : vector<8x128xf32>
    %cst_155 = arith.constant 5.000000e-01 : f32
    %289 = vector.broadcast %cst_155 : f32 to vector<8x128xf32>
    %290 = arith.mulf %289, %288 : vector<8x128xf32>
    %cst_156 = arith.constant 5.000000e-01 : f32
    %291 = vector.broadcast %cst_156 : f32 to vector<8x128xf32>
    %292 = arith.addf %290, %291 : vector<8x128xf32>
    %293 = vector.extract_strided_slice %284 {offsets = [0, 128], sizes = [8, 128], strides = [1, 1]} : vector<8x512xf32> to vector<8x128xf32>
    %cst_157 = arith.constant 5.000000e-01 : f32
    %294 = vector.broadcast %cst_157 : f32 to vector<8x128xf32>
    %295 = arith.mulf %294, %293 : vector<8x128xf32>
    %296 = math.tanh %295 : vector<8x128xf32>
    %cst_158 = arith.constant 5.000000e-01 : f32
    %297 = vector.broadcast %cst_158 : f32 to vector<8x128xf32>
    %298 = arith.mulf %297, %296 : vector<8x128xf32>
    %cst_159 = arith.constant 5.000000e-01 : f32
    %299 = vector.broadcast %cst_159 : f32 to vector<8x128xf32>
    %300 = arith.addf %298, %299 : vector<8x128xf32>
    %301 = vector.extract_strided_slice %284 {offsets = [0, 256], sizes = [8, 128], strides = [1, 1]} : vector<8x512xf32> to vector<8x128xf32>
    %302 = math.tanh %301 : vector<8x128xf32>
    %303 = vector.extract_strided_slice %284 {offsets = [0, 384], sizes = [8, 128], strides = [1, 1]} : vector<8x512xf32> to vector<8x128xf32>
    %cst_160 = arith.constant 5.000000e-01 : f32
    %304 = vector.broadcast %cst_160 : f32 to vector<8x128xf32>
    %305 = arith.mulf %304, %303 : vector<8x128xf32>
    %306 = math.tanh %305 : vector<8x128xf32>
    %cst_161 = arith.constant 5.000000e-01 : f32
    %307 = vector.broadcast %cst_161 : f32 to vector<8x128xf32>
    %308 = arith.mulf %307, %306 : vector<8x128xf32>
    %cst_162 = arith.constant 5.000000e-01 : f32
    %309 = vector.broadcast %cst_162 : f32 to vector<8x128xf32>
    %310 = arith.addf %308, %309 : vector<8x128xf32>
    %311 = arith.mulf %300, %278 : vector<8x128xf32>
    %312 = arith.mulf %292, %302 : vector<8x128xf32>
    %313 = arith.addf %311, %312 : vector<8x128xf32>
    %314 = math.tanh %313 : vector<8x128xf32>
    %315 = arith.mulf %310, %314 : vector<8x128xf32>
    %c0_163 = arith.constant 0 : index
    %c0_164 = arith.constant 0 : index
    %c0_165 = arith.constant 0 : index
    %316 = vector.load %arg10[%c0_163, %c0_164, %c0_165] : memref<2x8x128xf32, #tpu.memory_space<vmem>>, vector<1x8x128xf32>
    %317 = vector.shape_cast %316 : vector<1x8x128xf32> to vector<8x128xf32>
    %318 = vector.shape_cast %313 : vector<8x128xf32> to vector<1x8x128xf32>
    tpu.vector_store %arg10[%c0_163, %c0_164, %c0_165], %318 {strides = array<i32>} : memref<2x8x128xf32, #tpu.memory_space<vmem>>, vector<1x8x128xf32>,
    %c0_166 = arith.constant 0 : index
    %c0_167 = arith.constant 0 : index
    %c0_168 = arith.constant 0 : index
    %319 = vector.load %arg9[%c0_166, %c0_167, %c0_168] : memref<2x8x128xf32, #tpu.memory_space<vmem>>, vector<1x8x128xf32>
    %320 = vector.shape_cast %319 : vector<1x8x128xf32> to vector<8x128xf32>
    %321 = vector.shape_cast %315 : vector<8x128xf32> to vector<1x8x128xf32>
    tpu.vector_store %arg9[%c0_166, %c0_167, %c0_168], %321 {strides = array<i32>} : memref<2x8x128xf32, #tpu.memory_space<vmem>>, vector<1x8x128xf32>,
    %322 = arith.truncf %315 : vector<8x128xf32> to vector<8x128xbf16>
    %323 = arith.index_cast %c5_i32 : i32 to index
    %c0_169 = arith.constant 0 : index
    %c0_170 = arith.constant 0 : index
    %324 = vector.load %arg11[%323, %c0_169, %c0_170] : memref<8x8x128xbf16, #tpu.memory_space<vmem>>, vector<1x8x128xbf16>
    %325 = vector.shape_cast %324 : vector<1x8x128xbf16> to vector<8x128xbf16>
    %326 = vector.shape_cast %322 : vector<8x128xbf16> to vector<1x8x128xbf16>
    tpu.vector_store %arg11[%323, %c0_169, %c0_170], %326 {strides = array<i32>} : memref<8x8x128xbf16, #tpu.memory_space<vmem>>, vector<1x8x128xbf16>,
    %c6_i32 = arith.constant 6 : i32
    %c0_171 = arith.constant 0 : index
    %c0_172 = arith.constant 0 : index
    %c0_173 = arith.constant 0 : index
    %327 = vector.load %arg9[%c0_171, %c0_172, %c0_173] : memref<2x8x128xf32, #tpu.memory_space<vmem>>, vector<1x8x128xf32>
    %328 = vector.shape_cast %327 : vector<1x8x128xf32> to vector<8x128xf32>
    %c0_174 = arith.constant 0 : index
    %c0_175 = arith.constant 0 : index
    %c0_176 = arith.constant 0 : index
    %329 = vector.load %arg10[%c0_174, %c0_175, %c0_176] : memref<2x8x128xf32, #tpu.memory_space<vmem>>, vector<1x8x128xf32>
    %330 = vector.shape_cast %329 : vector<1x8x128xf32> to vector<8x128xf32>
    %331 = arith.index_cast %c6_i32 : i32 to index
    %c0_177 = arith.constant 0 : index
    %c0_178 = arith.constant 0 : index
    %332 = vector.load %arg12[%331, %c0_177, %c0_178] : memref<8x8x512xf32, #tpu.memory_space<vmem>>, vector<1x8x512xf32>
    %333 = vector.shape_cast %332 : vector<1x8x512xf32> to vector<8x512xf32>
    %334 = arith.truncf %328 : vector<8x128xf32> to vector<8x128xbf16>
    %cst_179 = arith.constant dense<0.000000e+00> : vector<8x512xf32>
    %335 = tpu.matmul %334, %14, %cst_179 {dimension_numbers = #tpu.dot_dimension_numbers<[1], [0], [0], [1], [0, 0, 1, 1], [], []>} : vector<8x128xbf16>, vector<128x512xbf16>, vector<8x512xf32> -> vector<8x512xf32>
    %336 = arith.addf %333, %335 : vector<8x512xf32>
    %337 = vector.extract_strided_slice %336 {offsets = [0, 0], sizes = [8, 128], strides = [1, 1]} : vector<8x512xf32> to vector<8x128xf32>
    %cst_180 = arith.constant 5.000000e-01 : f32
    %338 = vector.broadcast %cst_180 : f32 to vector<8x128xf32>
    %339 = arith.mulf %338, %337 : vector<8x128xf32>
    %340 = math.tanh %339 : vector<8x128xf32>
    %cst_181 = arith.constant 5.000000e-01 : f32
    %341 = vector.broadcast %cst_181 : f32 to vector<8x128xf32>
    %342 = arith.mulf %341, %340 : vector<8x128xf32>
    %cst_182 = arith.constant 5.000000e-01 : f32
    %343 = vector.broadcast %cst_182 : f32 to vector<8x128xf32>
    %344 = arith.addf %342, %343 : vector<8x128xf32>
    %345 = vector.extract_strided_slice %336 {offsets = [0, 128], sizes = [8, 128], strides = [1, 1]} : vector<8x512xf32> to vector<8x128xf32>
    %cst_183 = arith.constant 5.000000e-01 : f32
    %346 = vector.broadcast %cst_183 : f32 to vector<8x128xf32>
    %347 = arith.mulf %346, %345 : vector<8x128xf32>
    %348 = math.tanh %347 : vector<8x128xf32>
    %cst_184 = arith.constant 5.000000e-01 : f32
    %349 = vector.broadcast %cst_184 : f32 to vector<8x128xf32>
    %350 = arith.mulf %349, %348 : vector<8x128xf32>
    %cst_185 = arith.constant 5.000000e-01 : f32
    %351 = vector.broadcast %cst_185 : f32 to vector<8x128xf32>
    %352 = arith.addf %350, %351 : vector<8x128xf32>
    %353 = vector.extract_strided_slice %336 {offsets = [0, 256], sizes = [8, 128], strides = [1, 1]} : vector<8x512xf32> to vector<8x128xf32>
    %354 = math.tanh %353 : vector<8x128xf32>
    %355 = vector.extract_strided_slice %336 {offsets = [0, 384], sizes = [8, 128], strides = [1, 1]} : vector<8x512xf32> to vector<8x128xf32>
    %cst_186 = arith.constant 5.000000e-01 : f32
    %356 = vector.broadcast %cst_186 : f32 to vector<8x128xf32>
    %357 = arith.mulf %356, %355 : vector<8x128xf32>
    %358 = math.tanh %357 : vector<8x128xf32>
    %cst_187 = arith.constant 5.000000e-01 : f32
    %359 = vector.broadcast %cst_187 : f32 to vector<8x128xf32>
    %360 = arith.mulf %359, %358 : vector<8x128xf32>
    %cst_188 = arith.constant 5.000000e-01 : f32
    %361 = vector.broadcast %cst_188 : f32 to vector<8x128xf32>
    %362 = arith.addf %360, %361 : vector<8x128xf32>
    %363 = arith.mulf %352, %330 : vector<8x128xf32>
    %364 = arith.mulf %344, %354 : vector<8x128xf32>
    %365 = arith.addf %363, %364 : vector<8x128xf32>
    %366 = math.tanh %365 : vector<8x128xf32>
    %367 = arith.mulf %362, %366 : vector<8x128xf32>
    %c0_189 = arith.constant 0 : index
    %c0_190 = arith.constant 0 : index
    %c0_191 = arith.constant 0 : index
    %368 = vector.load %arg10[%c0_189, %c0_190, %c0_191] : memref<2x8x128xf32, #tpu.memory_space<vmem>>, vector<1x8x128xf32>
    %369 = vector.shape_cast %368 : vector<1x8x128xf32> to vector<8x128xf32>
    %370 = vector.shape_cast %365 : vector<8x128xf32> to vector<1x8x128xf32>
    tpu.vector_store %arg10[%c0_189, %c0_190, %c0_191], %370 {strides = array<i32>} : memref<2x8x128xf32, #tpu.memory_space<vmem>>, vector<1x8x128xf32>,
    %c0_192 = arith.constant 0 : index
    %c0_193 = arith.constant 0 : index
    %c0_194 = arith.constant 0 : index
    %371 = vector.load %arg9[%c0_192, %c0_193, %c0_194] : memref<2x8x128xf32, #tpu.memory_space<vmem>>, vector<1x8x128xf32>
    %372 = vector.shape_cast %371 : vector<1x8x128xf32> to vector<8x128xf32>
    %373 = vector.shape_cast %367 : vector<8x128xf32> to vector<1x8x128xf32>
    tpu.vector_store %arg9[%c0_192, %c0_193, %c0_194], %373 {strides = array<i32>} : memref<2x8x128xf32, #tpu.memory_space<vmem>>, vector<1x8x128xf32>,
    %374 = arith.truncf %367 : vector<8x128xf32> to vector<8x128xbf16>
    %375 = arith.index_cast %c6_i32 : i32 to index
    %c0_195 = arith.constant 0 : index
    %c0_196 = arith.constant 0 : index
    %376 = vector.load %arg11[%375, %c0_195, %c0_196] : memref<8x8x128xbf16, #tpu.memory_space<vmem>>, vector<1x8x128xbf16>
    %377 = vector.shape_cast %376 : vector<1x8x128xbf16> to vector<8x128xbf16>
    %378 = vector.shape_cast %374 : vector<8x128xbf16> to vector<1x8x128xbf16>
    tpu.vector_store %arg11[%375, %c0_195, %c0_196], %378 {strides = array<i32>} : memref<8x8x128xbf16, #tpu.memory_space<vmem>>, vector<1x8x128xbf16>,
    %c7_i32 = arith.constant 7 : i32
    %c0_197 = arith.constant 0 : index
    %c0_198 = arith.constant 0 : index
    %c0_199 = arith.constant 0 : index
    %379 = vector.load %arg9[%c0_197, %c0_198, %c0_199] : memref<2x8x128xf32, #tpu.memory_space<vmem>>, vector<1x8x128xf32>
    %380 = vector.shape_cast %379 : vector<1x8x128xf32> to vector<8x128xf32>
    %c0_200 = arith.constant 0 : index
    %c0_201 = arith.constant 0 : index
    %c0_202 = arith.constant 0 : index
    %381 = vector.load %arg10[%c0_200, %c0_201, %c0_202] : memref<2x8x128xf32, #tpu.memory_space<vmem>>, vector<1x8x128xf32>
    %382 = vector.shape_cast %381 : vector<1x8x128xf32> to vector<8x128xf32>
    %383 = arith.index_cast %c7_i32 : i32 to index
    %c0_203 = arith.constant 0 : index
    %c0_204 = arith.constant 0 : index
    %384 = vector.load %arg12[%383, %c0_203, %c0_204] : memref<8x8x512xf32, #tpu.memory_space<vmem>>, vector<1x8x512xf32>
    %385 = vector.shape_cast %384 : vector<1x8x512xf32> to vector<8x512xf32>
    %386 = arith.truncf %380 : vector<8x128xf32> to vector<8x128xbf16>
    %cst_205 = arith.constant dense<0.000000e+00> : vector<8x512xf32>
    %387 = tpu.matmul %386, %14, %cst_205 {dimension_numbers = #tpu.dot_dimension_numbers<[1], [0], [0], [1], [0, 0, 1, 1], [], []>} : vector<8x128xbf16>, vector<128x512xbf16>, vector<8x512xf32> -> vector<8x512xf32>
    %388 = arith.addf %385, %387 : vector<8x512xf32>
    %389 = vector.extract_strided_slice %388 {offsets = [0, 0], sizes = [8, 128], strides = [1, 1]} : vector<8x512xf32> to vector<8x128xf32>
    %cst_206 = arith.constant 5.000000e-01 : f32
    %390 = vector.broadcast %cst_206 : f32 to vector<8x128xf32>
    %391 = arith.mulf %390, %389 : vector<8x128xf32>
    %392 = math.tanh %391 : vector<8x128xf32>
    %cst_207 = arith.constant 5.000000e-01 : f32
    %393 = vector.broadcast %cst_207 : f32 to vector<8x128xf32>
    %394 = arith.mulf %393, %392 : vector<8x128xf32>
    %cst_208 = arith.constant 5.000000e-01 : f32
    %395 = vector.broadcast %cst_208 : f32 to vector<8x128xf32>
    %396 = arith.addf %394, %395 : vector<8x128xf32>
    %397 = vector.extract_strided_slice %388 {offsets = [0, 128], sizes = [8, 128], strides = [1, 1]} : vector<8x512xf32> to vector<8x128xf32>
    %cst_209 = arith.constant 5.000000e-01 : f32
    %398 = vector.broadcast %cst_209 : f32 to vector<8x128xf32>
    %399 = arith.mulf %398, %397 : vector<8x128xf32>
    %400 = math.tanh %399 : vector<8x128xf32>
    %cst_210 = arith.constant 5.000000e-01 : f32
    %401 = vector.broadcast %cst_210 : f32 to vector<8x128xf32>
    %402 = arith.mulf %401, %400 : vector<8x128xf32>
    %cst_211 = arith.constant 5.000000e-01 : f32
    %403 = vector.broadcast %cst_211 : f32 to vector<8x128xf32>
    %404 = arith.addf %402, %403 : vector<8x128xf32>
    %405 = vector.extract_strided_slice %388 {offsets = [0, 256], sizes = [8, 128], strides = [1, 1]} : vector<8x512xf32> to vector<8x128xf32>
    %406 = math.tanh %405 : vector<8x128xf32>
    %407 = vector.extract_strided_slice %388 {offsets = [0, 384], sizes = [8, 128], strides = [1, 1]} : vector<8x512xf32> to vector<8x128xf32>
    %cst_212 = arith.constant 5.000000e-01 : f32
    %408 = vector.broadcast %cst_212 : f32 to vector<8x128xf32>
    %409 = arith.mulf %408, %407 : vector<8x128xf32>
    %410 = math.tanh %409 : vector<8x128xf32>
    %cst_213 = arith.constant 5.000000e-01 : f32
    %411 = vector.broadcast %cst_213 : f32 to vector<8x128xf32>
    %412 = arith.mulf %411, %410 : vector<8x128xf32>
    %cst_214 = arith.constant 5.000000e-01 : f32
    %413 = vector.broadcast %cst_214 : f32 to vector<8x128xf32>
    %414 = arith.addf %412, %413 : vector<8x128xf32>
    %415 = arith.mulf %404, %382 : vector<8x128xf32>
    %416 = arith.mulf %396, %406 : vector<8x128xf32>
    %417 = arith.addf %415, %416 : vector<8x128xf32>
    %418 = math.tanh %417 : vector<8x128xf32>
    %419 = arith.mulf %414, %418 : vector<8x128xf32>
    %c0_215 = arith.constant 0 : index
    %c0_216 = arith.constant 0 : index
    %c0_217 = arith.constant 0 : index
    %420 = vector.load %arg10[%c0_215, %c0_216, %c0_217] : memref<2x8x128xf32, #tpu.memory_space<vmem>>, vector<1x8x128xf32>
    %421 = vector.shape_cast %420 : vector<1x8x128xf32> to vector<8x128xf32>
    %422 = vector.shape_cast %417 : vector<8x128xf32> to vector<1x8x128xf32>
    tpu.vector_store %arg10[%c0_215, %c0_216, %c0_217], %422 {strides = array<i32>} : memref<2x8x128xf32, #tpu.memory_space<vmem>>, vector<1x8x128xf32>,
    %c0_218 = arith.constant 0 : index
    %c0_219 = arith.constant 0 : index
    %c0_220 = arith.constant 0 : index
    %423 = vector.load %arg9[%c0_218, %c0_219, %c0_220] : memref<2x8x128xf32, #tpu.memory_space<vmem>>, vector<1x8x128xf32>
    %424 = vector.shape_cast %423 : vector<1x8x128xf32> to vector<8x128xf32>
    %425 = vector.shape_cast %419 : vector<8x128xf32> to vector<1x8x128xf32>
    tpu.vector_store %arg9[%c0_218, %c0_219, %c0_220], %425 {strides = array<i32>} : memref<2x8x128xf32, #tpu.memory_space<vmem>>, vector<1x8x128xf32>,
    %426 = arith.truncf %419 : vector<8x128xf32> to vector<8x128xbf16>
    %427 = arith.index_cast %c7_i32 : i32 to index
    %c0_221 = arith.constant 0 : index
    %c0_222 = arith.constant 0 : index
    %428 = vector.load %arg11[%427, %c0_221, %c0_222] : memref<8x8x128xbf16, #tpu.memory_space<vmem>>, vector<1x8x128xbf16>
    %429 = vector.shape_cast %428 : vector<1x8x128xbf16> to vector<8x128xbf16>
    %430 = vector.shape_cast %426 : vector<8x128xbf16> to vector<1x8x128xbf16>
    tpu.vector_store %arg11[%427, %c0_221, %c0_222], %430 {strides = array<i32>} : memref<8x8x128xbf16, #tpu.memory_space<vmem>>, vector<1x8x128xbf16>,
    %c8_i32 = arith.constant 8 : i32
    %c0_223 = arith.constant 0 : index
    %c0_224 = arith.constant 0 : index
    %c0_225 = arith.constant 0 : index
    %431 = vector.load %arg11[%c0_223, %c0_224, %c0_225] : memref<8x8x128xbf16, #tpu.memory_space<vmem>>, vector<8x8x128xbf16>
    %432 = vector.shape_cast %431 : vector<8x8x128xbf16> to vector<64x128xbf16>
    %c0_226 = arith.constant 0 : index
    %c0_227 = arith.constant 0 : index
    %c0_228 = arith.constant 0 : index
    %433 = vector.load %arg3[%c0_226, %c0_227, %c0_228] : memref<1x128x512xbf16, #tpu.memory_space<vmem>>, vector<1x128x512xbf16>
    %434 = vector.shape_cast %433 : vector<1x128x512xbf16> to vector<128x512xbf16>
    %cst_229 = arith.constant dense<0.000000e+00> : vector<64x512xf32>
    %435 = tpu.matmul %432, %434, %cst_229 {dimension_numbers = #tpu.dot_dimension_numbers<[1], [0], [0], [1], [0, 0, 1, 1], [], []>} : vector<64x128xbf16>, vector<128x512xbf16>, vector<64x512xf32> -> vector<64x512xf32>
    %c1 = arith.constant 1 : index
    %c0_230 = arith.constant 0 : index
    %c0_231 = arith.constant 0 : index
    %436 = vector.load %arg5[%c1, %c0_230, %c0_231] : memref<2x1x512xf32, #tpu.memory_space<vmem>>, vector<1x1x512xf32>
    %437 = vector.shape_cast %436 : vector<1x1x512xf32> to vector<1x512xf32>
    %438 = vector.broadcast %437 : vector<1x512xf32> to vector<64x512xf32>
    %439 = arith.addf %435, %438 : vector<64x512xf32>
    %440 = vector.shape_cast %439 : vector<64x512xf32> to vector<8x8x512xf32>
    %c0_232 = arith.constant 0 : index
    %c0_233 = arith.constant 0 : index
    %c0_234 = arith.constant 0 : index
    %441 = vector.load %arg12[%c0_232, %c0_233, %c0_234] : memref<8x8x512xf32, #tpu.memory_space<vmem>>, vector<8x8x512xf32>
    tpu.vector_store %arg12[%c0_232, %c0_233, %c0_234], %440 {strides = array<i32>} : memref<8x8x512xf32, #tpu.memory_space<vmem>>, vector<8x8x512xf32>,
    %c1_235 = arith.constant 1 : index
    %c0_236 = arith.constant 0 : index
    %c0_237 = arith.constant 0 : index
    %442 = vector.load %arg4[%c1_235, %c0_236, %c0_237] : memref<2x128x512xbf16, #tpu.memory_space<vmem>>, vector<1x128x512xbf16>
    %443 = vector.shape_cast %442 : vector<1x128x512xbf16> to vector<128x512xbf16>
    %c0_i32_238 = arith.constant 0 : i32
    %c1_239 = arith.constant 1 : index
    %c0_240 = arith.constant 0 : index
    %c0_241 = arith.constant 0 : index
    %444 = vector.load %arg9[%c1_239, %c0_240, %c0_241] : memref<2x8x128xf32, #tpu.memory_space<vmem>>, vector<1x8x128xf32>
    %445 = vector.shape_cast %444 : vector<1x8x128xf32> to vector<8x128xf32>
    %c1_242 = arith.constant 1 : index
    %c0_243 = arith.constant 0 : index
    %c0_244 = arith.constant 0 : index
    %446 = vector.load %arg10[%c1_242, %c0_243, %c0_244] : memref<2x8x128xf32, #tpu.memory_space<vmem>>, vector<1x8x128xf32>
    %447 = vector.shape_cast %446 : vector<1x8x128xf32> to vector<8x128xf32>
    %448 = arith.index_cast %c0_i32_238 : i32 to index
    %c0_245 = arith.constant 0 : index
    %c0_246 = arith.constant 0 : index
    %449 = vector.load %arg12[%448, %c0_245, %c0_246] : memref<8x8x512xf32, #tpu.memory_space<vmem>>, vector<1x8x512xf32>
    %450 = vector.shape_cast %449 : vector<1x8x512xf32> to vector<8x512xf32>
    %451 = arith.truncf %445 : vector<8x128xf32> to vector<8x128xbf16>
    %cst_247 = arith.constant dense<0.000000e+00> : vector<8x512xf32>
    %452 = tpu.matmul %451, %443, %cst_247 {dimension_numbers = #tpu.dot_dimension_numbers<[1], [0], [0], [1], [0, 0, 1, 1], [], []>} : vector<8x128xbf16>, vector<128x512xbf16>, vector<8x512xf32> -> vector<8x512xf32>
    %453 = arith.addf %450, %452 : vector<8x512xf32>
    %454 = vector.extract_strided_slice %453 {offsets = [0, 0], sizes = [8, 128], strides = [1, 1]} : vector<8x512xf32> to vector<8x128xf32>
    %cst_248 = arith.constant 5.000000e-01 : f32
    %455 = vector.broadcast %cst_248 : f32 to vector<8x128xf32>
    %456 = arith.mulf %455, %454 : vector<8x128xf32>
    %457 = math.tanh %456 : vector<8x128xf32>
    %cst_249 = arith.constant 5.000000e-01 : f32
    %458 = vector.broadcast %cst_249 : f32 to vector<8x128xf32>
    %459 = arith.mulf %458, %457 : vector<8x128xf32>
    %cst_250 = arith.constant 5.000000e-01 : f32
    %460 = vector.broadcast %cst_250 : f32 to vector<8x128xf32>
    %461 = arith.addf %459, %460 : vector<8x128xf32>
    %462 = vector.extract_strided_slice %453 {offsets = [0, 128], sizes = [8, 128], strides = [1, 1]} : vector<8x512xf32> to vector<8x128xf32>
    %cst_251 = arith.constant 5.000000e-01 : f32
    %463 = vector.broadcast %cst_251 : f32 to vector<8x128xf32>
    %464 = arith.mulf %463, %462 : vector<8x128xf32>
    %465 = math.tanh %464 : vector<8x128xf32>
    %cst_252 = arith.constant 5.000000e-01 : f32
    %466 = vector.broadcast %cst_252 : f32 to vector<8x128xf32>
    %467 = arith.mulf %466, %465 : vector<8x128xf32>
    %cst_253 = arith.constant 5.000000e-01 : f32
    %468 = vector.broadcast %cst_253 : f32 to vector<8x128xf32>
    %469 = arith.addf %467, %468 : vector<8x128xf32>
    %470 = vector.extract_strided_slice %453 {offsets = [0, 256], sizes = [8, 128], strides = [1, 1]} : vector<8x512xf32> to vector<8x128xf32>
    %471 = math.tanh %470 : vector<8x128xf32>
    %472 = vector.extract_strided_slice %453 {offsets = [0, 384], sizes = [8, 128], strides = [1, 1]} : vector<8x512xf32> to vector<8x128xf32>
    %cst_254 = arith.constant 5.000000e-01 : f32
    %473 = vector.broadcast %cst_254 : f32 to vector<8x128xf32>
    %474 = arith.mulf %473, %472 : vector<8x128xf32>
    %475 = math.tanh %474 : vector<8x128xf32>
    %cst_255 = arith.constant 5.000000e-01 : f32
    %476 = vector.broadcast %cst_255 : f32 to vector<8x128xf32>
    %477 = arith.mulf %476, %475 : vector<8x128xf32>
    %cst_256 = arith.constant 5.000000e-01 : f32
    %478 = vector.broadcast %cst_256 : f32 to vector<8x128xf32>
    %479 = arith.addf %477, %478 : vector<8x128xf32>
    %480 = arith.mulf %469, %447 : vector<8x128xf32>
    %481 = arith.mulf %461, %471 : vector<8x128xf32>
    %482 = arith.addf %480, %481 : vector<8x128xf32>
    %483 = math.tanh %482 : vector<8x128xf32>
    %484 = arith.mulf %479, %483 : vector<8x128xf32>
    %c1_257 = arith.constant 1 : index
    %c0_258 = arith.constant 0 : index
    %c0_259 = arith.constant 0 : index
    %485 = vector.load %arg10[%c1_257, %c0_258, %c0_259] : memref<2x8x128xf32, #tpu.memory_space<vmem>>, vector<1x8x128xf32>
    %486 = vector.shape_cast %485 : vector<1x8x128xf32> to vector<8x128xf32>
    %487 = vector.shape_cast %482 : vector<8x128xf32> to vector<1x8x128xf32>
    tpu.vector_store %arg10[%c1_257, %c0_258, %c0_259], %487 {strides = array<i32>} : memref<2x8x128xf32, #tpu.memory_space<vmem>>, vector<1x8x128xf32>,
    %c1_260 = arith.constant 1 : index
    %c0_261 = arith.constant 0 : index
    %c0_262 = arith.constant 0 : index
    %488 = vector.load %arg9[%c1_260, %c0_261, %c0_262] : memref<2x8x128xf32, #tpu.memory_space<vmem>>, vector<1x8x128xf32>
    %489 = vector.shape_cast %488 : vector<1x8x128xf32> to vector<8x128xf32>
    %490 = vector.shape_cast %484 : vector<8x128xf32> to vector<1x8x128xf32>
    tpu.vector_store %arg9[%c1_260, %c0_261, %c0_262], %490 {strides = array<i32>} : memref<2x8x128xf32, #tpu.memory_space<vmem>>, vector<1x8x128xf32>,
    %c1_i32_263 = arith.constant 1 : i32
    %c1_264 = arith.constant 1 : index
    %c0_265 = arith.constant 0 : index
    %c0_266 = arith.constant 0 : index
    %491 = vector.load %arg9[%c1_264, %c0_265, %c0_266] : memref<2x8x128xf32, #tpu.memory_space<vmem>>, vector<1x8x128xf32>
    %492 = vector.shape_cast %491 : vector<1x8x128xf32> to vector<8x128xf32>
    %c1_267 = arith.constant 1 : index
    %c0_268 = arith.constant 0 : index
    %c0_269 = arith.constant 0 : index
    %493 = vector.load %arg10[%c1_267, %c0_268, %c0_269] : memref<2x8x128xf32, #tpu.memory_space<vmem>>, vector<1x8x128xf32>
    %494 = vector.shape_cast %493 : vector<1x8x128xf32> to vector<8x128xf32>
    %495 = arith.index_cast %c1_i32_263 : i32 to index
    %c0_270 = arith.constant 0 : index
    %c0_271 = arith.constant 0 : index
    %496 = vector.load %arg12[%495, %c0_270, %c0_271] : memref<8x8x512xf32, #tpu.memory_space<vmem>>, vector<1x8x512xf32>
    %497 = vector.shape_cast %496 : vector<1x8x512xf32> to vector<8x512xf32>
    %498 = arith.truncf %492 : vector<8x128xf32> to vector<8x128xbf16>
    %cst_272 = arith.constant dense<0.000000e+00> : vector<8x512xf32>
    %499 = tpu.matmul %498, %443, %cst_272 {dimension_numbers = #tpu.dot_dimension_numbers<[1], [0], [0], [1], [0, 0, 1, 1], [], []>} : vector<8x128xbf16>, vector<128x512xbf16>, vector<8x512xf32> -> vector<8x512xf32>
    %500 = arith.addf %497, %499 : vector<8x512xf32>
    %501 = vector.extract_strided_slice %500 {offsets = [0, 0], sizes = [8, 128], strides = [1, 1]} : vector<8x512xf32> to vector<8x128xf32>
    %cst_273 = arith.constant 5.000000e-01 : f32
    %502 = vector.broadcast %cst_273 : f32 to vector<8x128xf32>
    %503 = arith.mulf %502, %501 : vector<8x128xf32>
    %504 = math.tanh %503 : vector<8x128xf32>
    %cst_274 = arith.constant 5.000000e-01 : f32
    %505 = vector.broadcast %cst_274 : f32 to vector<8x128xf32>
    %506 = arith.mulf %505, %504 : vector<8x128xf32>
    %cst_275 = arith.constant 5.000000e-01 : f32
    %507 = vector.broadcast %cst_275 : f32 to vector<8x128xf32>
    %508 = arith.addf %506, %507 : vector<8x128xf32>
    %509 = vector.extract_strided_slice %500 {offsets = [0, 128], sizes = [8, 128], strides = [1, 1]} : vector<8x512xf32> to vector<8x128xf32>
    %cst_276 = arith.constant 5.000000e-01 : f32
    %510 = vector.broadcast %cst_276 : f32 to vector<8x128xf32>
    %511 = arith.mulf %510, %509 : vector<8x128xf32>
    %512 = math.tanh %511 : vector<8x128xf32>
    %cst_277 = arith.constant 5.000000e-01 : f32
    %513 = vector.broadcast %cst_277 : f32 to vector<8x128xf32>
    %514 = arith.mulf %513, %512 : vector<8x128xf32>
    %cst_278 = arith.constant 5.000000e-01 : f32
    %515 = vector.broadcast %cst_278 : f32 to vector<8x128xf32>
    %516 = arith.addf %514, %515 : vector<8x128xf32>
    %517 = vector.extract_strided_slice %500 {offsets = [0, 256], sizes = [8, 128], strides = [1, 1]} : vector<8x512xf32> to vector<8x128xf32>
    %518 = math.tanh %517 : vector<8x128xf32>
    %519 = vector.extract_strided_slice %500 {offsets = [0, 384], sizes = [8, 128], strides = [1, 1]} : vector<8x512xf32> to vector<8x128xf32>
    %cst_279 = arith.constant 5.000000e-01 : f32
    %520 = vector.broadcast %cst_279 : f32 to vector<8x128xf32>
    %521 = arith.mulf %520, %519 : vector<8x128xf32>
    %522 = math.tanh %521 : vector<8x128xf32>
    %cst_280 = arith.constant 5.000000e-01 : f32
    %523 = vector.broadcast %cst_280 : f32 to vector<8x128xf32>
    %524 = arith.mulf %523, %522 : vector<8x128xf32>
    %cst_281 = arith.constant 5.000000e-01 : f32
    %525 = vector.broadcast %cst_281 : f32 to vector<8x128xf32>
    %526 = arith.addf %524, %525 : vector<8x128xf32>
    %527 = arith.mulf %516, %494 : vector<8x128xf32>
    %528 = arith.mulf %508, %518 : vector<8x128xf32>
    %529 = arith.addf %527, %528 : vector<8x128xf32>
    %530 = math.tanh %529 : vector<8x128xf32>
    %531 = arith.mulf %526, %530 : vector<8x128xf32>
    %c1_282 = arith.constant 1 : index
    %c0_283 = arith.constant 0 : index
    %c0_284 = arith.constant 0 : index
    %532 = vector.load %arg10[%c1_282, %c0_283, %c0_284] : memref<2x8x128xf32, #tpu.memory_space<vmem>>, vector<1x8x128xf32>
    %533 = vector.shape_cast %532 : vector<1x8x128xf32> to vector<8x128xf32>
    %534 = vector.shape_cast %529 : vector<8x128xf32> to vector<1x8x128xf32>
    tpu.vector_store %arg10[%c1_282, %c0_283, %c0_284], %534 {strides = array<i32>} : memref<2x8x128xf32, #tpu.memory_space<vmem>>, vector<1x8x128xf32>,
    %c1_285 = arith.constant 1 : index
    %c0_286 = arith.constant 0 : index
    %c0_287 = arith.constant 0 : index
    %535 = vector.load %arg9[%c1_285, %c0_286, %c0_287] : memref<2x8x128xf32, #tpu.memory_space<vmem>>, vector<1x8x128xf32>
    %536 = vector.shape_cast %535 : vector<1x8x128xf32> to vector<8x128xf32>
    %537 = vector.shape_cast %531 : vector<8x128xf32> to vector<1x8x128xf32>
    tpu.vector_store %arg9[%c1_285, %c0_286, %c0_287], %537 {strides = array<i32>} : memref<2x8x128xf32, #tpu.memory_space<vmem>>, vector<1x8x128xf32>,
    %c2_i32_288 = arith.constant 2 : i32
    %c1_289 = arith.constant 1 : index
    %c0_290 = arith.constant 0 : index
    %c0_291 = arith.constant 0 : index
    %538 = vector.load %arg9[%c1_289, %c0_290, %c0_291] : memref<2x8x128xf32, #tpu.memory_space<vmem>>, vector<1x8x128xf32>
    %539 = vector.shape_cast %538 : vector<1x8x128xf32> to vector<8x128xf32>
    %c1_292 = arith.constant 1 : index
    %c0_293 = arith.constant 0 : index
    %c0_294 = arith.constant 0 : index
    %540 = vector.load %arg10[%c1_292, %c0_293, %c0_294] : memref<2x8x128xf32, #tpu.memory_space<vmem>>, vector<1x8x128xf32>
    %541 = vector.shape_cast %540 : vector<1x8x128xf32> to vector<8x128xf32>
    %542 = arith.index_cast %c2_i32_288 : i32 to index
    %c0_295 = arith.constant 0 : index
    %c0_296 = arith.constant 0 : index
    %543 = vector.load %arg12[%542, %c0_295, %c0_296] : memref<8x8x512xf32, #tpu.memory_space<vmem>>, vector<1x8x512xf32>
    %544 = vector.shape_cast %543 : vector<1x8x512xf32> to vector<8x512xf32>
    %545 = arith.truncf %539 : vector<8x128xf32> to vector<8x128xbf16>
    %cst_297 = arith.constant dense<0.000000e+00> : vector<8x512xf32>
    %546 = tpu.matmul %545, %443, %cst_297 {dimension_numbers = #tpu.dot_dimension_numbers<[1], [0], [0], [1], [0, 0, 1, 1], [], []>} : vector<8x128xbf16>, vector<128x512xbf16>, vector<8x512xf32> -> vector<8x512xf32>
    %547 = arith.addf %544, %546 : vector<8x512xf32>
    %548 = vector.extract_strided_slice %547 {offsets = [0, 0], sizes = [8, 128], strides = [1, 1]} : vector<8x512xf32> to vector<8x128xf32>
    %cst_298 = arith.constant 5.000000e-01 : f32
    %549 = vector.broadcast %cst_298 : f32 to vector<8x128xf32>
    %550 = arith.mulf %549, %548 : vector<8x128xf32>
    %551 = math.tanh %550 : vector<8x128xf32>
    %cst_299 = arith.constant 5.000000e-01 : f32
    %552 = vector.broadcast %cst_299 : f32 to vector<8x128xf32>
    %553 = arith.mulf %552, %551 : vector<8x128xf32>
    %cst_300 = arith.constant 5.000000e-01 : f32
    %554 = vector.broadcast %cst_300 : f32 to vector<8x128xf32>
    %555 = arith.addf %553, %554 : vector<8x128xf32>
    %556 = vector.extract_strided_slice %547 {offsets = [0, 128], sizes = [8, 128], strides = [1, 1]} : vector<8x512xf32> to vector<8x128xf32>
    %cst_301 = arith.constant 5.000000e-01 : f32
    %557 = vector.broadcast %cst_301 : f32 to vector<8x128xf32>
    %558 = arith.mulf %557, %556 : vector<8x128xf32>
    %559 = math.tanh %558 : vector<8x128xf32>
    %cst_302 = arith.constant 5.000000e-01 : f32
    %560 = vector.broadcast %cst_302 : f32 to vector<8x128xf32>
    %561 = arith.mulf %560, %559 : vector<8x128xf32>
    %cst_303 = arith.constant 5.000000e-01 : f32
    %562 = vector.broadcast %cst_303 : f32 to vector<8x128xf32>
    %563 = arith.addf %561, %562 : vector<8x128xf32>
    %564 = vector.extract_strided_slice %547 {offsets = [0, 256], sizes = [8, 128], strides = [1, 1]} : vector<8x512xf32> to vector<8x128xf32>
    %565 = math.tanh %564 : vector<8x128xf32>
    %566 = vector.extract_strided_slice %547 {offsets = [0, 384], sizes = [8, 128], strides = [1, 1]} : vector<8x512xf32> to vector<8x128xf32>
    %cst_304 = arith.constant 5.000000e-01 : f32
    %567 = vector.broadcast %cst_304 : f32 to vector<8x128xf32>
    %568 = arith.mulf %567, %566 : vector<8x128xf32>
    %569 = math.tanh %568 : vector<8x128xf32>
    %cst_305 = arith.constant 5.000000e-01 : f32
    %570 = vector.broadcast %cst_305 : f32 to vector<8x128xf32>
    %571 = arith.mulf %570, %569 : vector<8x128xf32>
    %cst_306 = arith.constant 5.000000e-01 : f32
    %572 = vector.broadcast %cst_306 : f32 to vector<8x128xf32>
    %573 = arith.addf %571, %572 : vector<8x128xf32>
    %574 = arith.mulf %563, %541 : vector<8x128xf32>
    %575 = arith.mulf %555, %565 : vector<8x128xf32>
    %576 = arith.addf %574, %575 : vector<8x128xf32>
    %577 = math.tanh %576 : vector<8x128xf32>
    %578 = arith.mulf %573, %577 : vector<8x128xf32>
    %c1_307 = arith.constant 1 : index
    %c0_308 = arith.constant 0 : index
    %c0_309 = arith.constant 0 : index
    %579 = vector.load %arg10[%c1_307, %c0_308, %c0_309] : memref<2x8x128xf32, #tpu.memory_space<vmem>>, vector<1x8x128xf32>
    %580 = vector.shape_cast %579 : vector<1x8x128xf32> to vector<8x128xf32>
    %581 = vector.shape_cast %576 : vector<8x128xf32> to vector<1x8x128xf32>
    tpu.vector_store %arg10[%c1_307, %c0_308, %c0_309], %581 {strides = array<i32>} : memref<2x8x128xf32, #tpu.memory_space<vmem>>, vector<1x8x128xf32>,
    %c1_310 = arith.constant 1 : index
    %c0_311 = arith.constant 0 : index
    %c0_312 = arith.constant 0 : index
    %582 = vector.load %arg9[%c1_310, %c0_311, %c0_312] : memref<2x8x128xf32, #tpu.memory_space<vmem>>, vector<1x8x128xf32>
    %583 = vector.shape_cast %582 : vector<1x8x128xf32> to vector<8x128xf32>
    %584 = vector.shape_cast %578 : vector<8x128xf32> to vector<1x8x128xf32>
    tpu.vector_store %arg9[%c1_310, %c0_311, %c0_312], %584 {strides = array<i32>} : memref<2x8x128xf32, #tpu.memory_space<vmem>>, vector<1x8x128xf32>,
    %c3_i32_313 = arith.constant 3 : i32
    %c1_314 = arith.constant 1 : index
    %c0_315 = arith.constant 0 : index
    %c0_316 = arith.constant 0 : index
    %585 = vector.load %arg9[%c1_314, %c0_315, %c0_316] : memref<2x8x128xf32, #tpu.memory_space<vmem>>, vector<1x8x128xf32>
    %586 = vector.shape_cast %585 : vector<1x8x128xf32> to vector<8x128xf32>
    %c1_317 = arith.constant 1 : index
    %c0_318 = arith.constant 0 : index
    %c0_319 = arith.constant 0 : index
    %587 = vector.load %arg10[%c1_317, %c0_318, %c0_319] : memref<2x8x128xf32, #tpu.memory_space<vmem>>, vector<1x8x128xf32>
    %588 = vector.shape_cast %587 : vector<1x8x128xf32> to vector<8x128xf32>
    %589 = arith.index_cast %c3_i32_313 : i32 to index
    %c0_320 = arith.constant 0 : index
    %c0_321 = arith.constant 0 : index
    %590 = vector.load %arg12[%589, %c0_320, %c0_321] : memref<8x8x512xf32, #tpu.memory_space<vmem>>, vector<1x8x512xf32>
    %591 = vector.shape_cast %590 : vector<1x8x512xf32> to vector<8x512xf32>
    %592 = arith.truncf %586 : vector<8x128xf32> to vector<8x128xbf16>
    %cst_322 = arith.constant dense<0.000000e+00> : vector<8x512xf32>
    %593 = tpu.matmul %592, %443, %cst_322 {dimension_numbers = #tpu.dot_dimension_numbers<[1], [0], [0], [1], [0, 0, 1, 1], [], []>} : vector<8x128xbf16>, vector<128x512xbf16>, vector<8x512xf32> -> vector<8x512xf32>
    %594 = arith.addf %591, %593 : vector<8x512xf32>
    %595 = vector.extract_strided_slice %594 {offsets = [0, 0], sizes = [8, 128], strides = [1, 1]} : vector<8x512xf32> to vector<8x128xf32>
    %cst_323 = arith.constant 5.000000e-01 : f32
    %596 = vector.broadcast %cst_323 : f32 to vector<8x128xf32>
    %597 = arith.mulf %596, %595 : vector<8x128xf32>
    %598 = math.tanh %597 : vector<8x128xf32>
    %cst_324 = arith.constant 5.000000e-01 : f32
    %599 = vector.broadcast %cst_324 : f32 to vector<8x128xf32>
    %600 = arith.mulf %599, %598 : vector<8x128xf32>
    %cst_325 = arith.constant 5.000000e-01 : f32
    %601 = vector.broadcast %cst_325 : f32 to vector<8x128xf32>
    %602 = arith.addf %600, %601 : vector<8x128xf32>
    %603 = vector.extract_strided_slice %594 {offsets = [0, 128], sizes = [8, 128], strides = [1, 1]} : vector<8x512xf32> to vector<8x128xf32>
    %cst_326 = arith.constant 5.000000e-01 : f32
    %604 = vector.broadcast %cst_326 : f32 to vector<8x128xf32>
    %605 = arith.mulf %604, %603 : vector<8x128xf32>
    %606 = math.tanh %605 : vector<8x128xf32>
    %cst_327 = arith.constant 5.000000e-01 : f32
    %607 = vector.broadcast %cst_327 : f32 to vector<8x128xf32>
    %608 = arith.mulf %607, %606 : vector<8x128xf32>
    %cst_328 = arith.constant 5.000000e-01 : f32
    %609 = vector.broadcast %cst_328 : f32 to vector<8x128xf32>
    %610 = arith.addf %608, %609 : vector<8x128xf32>
    %611 = vector.extract_strided_slice %594 {offsets = [0, 256], sizes = [8, 128], strides = [1, 1]} : vector<8x512xf32> to vector<8x128xf32>
    %612 = math.tanh %611 : vector<8x128xf32>
    %613 = vector.extract_strided_slice %594 {offsets = [0, 384], sizes = [8, 128], strides = [1, 1]} : vector<8x512xf32> to vector<8x128xf32>
    %cst_329 = arith.constant 5.000000e-01 : f32
    %614 = vector.broadcast %cst_329 : f32 to vector<8x128xf32>
    %615 = arith.mulf %614, %613 : vector<8x128xf32>
    %616 = math.tanh %615 : vector<8x128xf32>
    %cst_330 = arith.constant 5.000000e-01 : f32
    %617 = vector.broadcast %cst_330 : f32 to vector<8x128xf32>
    %618 = arith.mulf %617, %616 : vector<8x128xf32>
    %cst_331 = arith.constant 5.000000e-01 : f32
    %619 = vector.broadcast %cst_331 : f32 to vector<8x128xf32>
    %620 = arith.addf %618, %619 : vector<8x128xf32>
    %621 = arith.mulf %610, %588 : vector<8x128xf32>
    %622 = arith.mulf %602, %612 : vector<8x128xf32>
    %623 = arith.addf %621, %622 : vector<8x128xf32>
    %624 = math.tanh %623 : vector<8x128xf32>
    %625 = arith.mulf %620, %624 : vector<8x128xf32>
    %c1_332 = arith.constant 1 : index
    %c0_333 = arith.constant 0 : index
    %c0_334 = arith.constant 0 : index
    %626 = vector.load %arg10[%c1_332, %c0_333, %c0_334] : memref<2x8x128xf32, #tpu.memory_space<vmem>>, vector<1x8x128xf32>
    %627 = vector.shape_cast %626 : vector<1x8x128xf32> to vector<8x128xf32>
    %628 = vector.shape_cast %623 : vector<8x128xf32> to vector<1x8x128xf32>
    tpu.vector_store %arg10[%c1_332, %c0_333, %c0_334], %628 {strides = array<i32>} : memref<2x8x128xf32, #tpu.memory_space<vmem>>, vector<1x8x128xf32>,
    %c1_335 = arith.constant 1 : index
    %c0_336 = arith.constant 0 : index
    %c0_337 = arith.constant 0 : index
    %629 = vector.load %arg9[%c1_335, %c0_336, %c0_337] : memref<2x8x128xf32, #tpu.memory_space<vmem>>, vector<1x8x128xf32>
    %630 = vector.shape_cast %629 : vector<1x8x128xf32> to vector<8x128xf32>
    %631 = vector.shape_cast %625 : vector<8x128xf32> to vector<1x8x128xf32>
    tpu.vector_store %arg9[%c1_335, %c0_336, %c0_337], %631 {strides = array<i32>} : memref<2x8x128xf32, #tpu.memory_space<vmem>>, vector<1x8x128xf32>,
    %c4_i32_338 = arith.constant 4 : i32
    %c1_339 = arith.constant 1 : index
    %c0_340 = arith.constant 0 : index
    %c0_341 = arith.constant 0 : index
    %632 = vector.load %arg9[%c1_339, %c0_340, %c0_341] : memref<2x8x128xf32, #tpu.memory_space<vmem>>, vector<1x8x128xf32>
    %633 = vector.shape_cast %632 : vector<1x8x128xf32> to vector<8x128xf32>
    %c1_342 = arith.constant 1 : index
    %c0_343 = arith.constant 0 : index
    %c0_344 = arith.constant 0 : index
    %634 = vector.load %arg10[%c1_342, %c0_343, %c0_344] : memref<2x8x128xf32, #tpu.memory_space<vmem>>, vector<1x8x128xf32>
    %635 = vector.shape_cast %634 : vector<1x8x128xf32> to vector<8x128xf32>
    %636 = arith.index_cast %c4_i32_338 : i32 to index
    %c0_345 = arith.constant 0 : index
    %c0_346 = arith.constant 0 : index
    %637 = vector.load %arg12[%636, %c0_345, %c0_346] : memref<8x8x512xf32, #tpu.memory_space<vmem>>, vector<1x8x512xf32>
    %638 = vector.shape_cast %637 : vector<1x8x512xf32> to vector<8x512xf32>
    %639 = arith.truncf %633 : vector<8x128xf32> to vector<8x128xbf16>
    %cst_347 = arith.constant dense<0.000000e+00> : vector<8x512xf32>
    %640 = tpu.matmul %639, %443, %cst_347 {dimension_numbers = #tpu.dot_dimension_numbers<[1], [0], [0], [1], [0, 0, 1, 1], [], []>} : vector<8x128xbf16>, vector<128x512xbf16>, vector<8x512xf32> -> vector<8x512xf32>
    %641 = arith.addf %638, %640 : vector<8x512xf32>
    %642 = vector.extract_strided_slice %641 {offsets = [0, 0], sizes = [8, 128], strides = [1, 1]} : vector<8x512xf32> to vector<8x128xf32>
    %cst_348 = arith.constant 5.000000e-01 : f32
    %643 = vector.broadcast %cst_348 : f32 to vector<8x128xf32>
    %644 = arith.mulf %643, %642 : vector<8x128xf32>
    %645 = math.tanh %644 : vector<8x128xf32>
    %cst_349 = arith.constant 5.000000e-01 : f32
    %646 = vector.broadcast %cst_349 : f32 to vector<8x128xf32>
    %647 = arith.mulf %646, %645 : vector<8x128xf32>
    %cst_350 = arith.constant 5.000000e-01 : f32
    %648 = vector.broadcast %cst_350 : f32 to vector<8x128xf32>
    %649 = arith.addf %647, %648 : vector<8x128xf32>
    %650 = vector.extract_strided_slice %641 {offsets = [0, 128], sizes = [8, 128], strides = [1, 1]} : vector<8x512xf32> to vector<8x128xf32>
    %cst_351 = arith.constant 5.000000e-01 : f32
    %651 = vector.broadcast %cst_351 : f32 to vector<8x128xf32>
    %652 = arith.mulf %651, %650 : vector<8x128xf32>
    %653 = math.tanh %652 : vector<8x128xf32>
    %cst_352 = arith.constant 5.000000e-01 : f32
    %654 = vector.broadcast %cst_352 : f32 to vector<8x128xf32>
    %655 = arith.mulf %654, %653 : vector<8x128xf32>
    %cst_353 = arith.constant 5.000000e-01 : f32
    %656 = vector.broadcast %cst_353 : f32 to vector<8x128xf32>
    %657 = arith.addf %655, %656 : vector<8x128xf32>
    %658 = vector.extract_strided_slice %641 {offsets = [0, 256], sizes = [8, 128], strides = [1, 1]} : vector<8x512xf32> to vector<8x128xf32>
    %659 = math.tanh %658 : vector<8x128xf32>
    %660 = vector.extract_strided_slice %641 {offsets = [0, 384], sizes = [8, 128], strides = [1, 1]} : vector<8x512xf32> to vector<8x128xf32>
    %cst_354 = arith.constant 5.000000e-01 : f32
    %661 = vector.broadcast %cst_354 : f32 to vector<8x128xf32>
    %662 = arith.mulf %661, %660 : vector<8x128xf32>
    %663 = math.tanh %662 : vector<8x128xf32>
    %cst_355 = arith.constant 5.000000e-01 : f32
    %664 = vector.broadcast %cst_355 : f32 to vector<8x128xf32>
    %665 = arith.mulf %664, %663 : vector<8x128xf32>
    %cst_356 = arith.constant 5.000000e-01 : f32
    %666 = vector.broadcast %cst_356 : f32 to vector<8x128xf32>
    %667 = arith.addf %665, %666 : vector<8x128xf32>
    %668 = arith.mulf %657, %635 : vector<8x128xf32>
    %669 = arith.mulf %649, %659 : vector<8x128xf32>
    %670 = arith.addf %668, %669 : vector<8x128xf32>
    %671 = math.tanh %670 : vector<8x128xf32>
    %672 = arith.mulf %667, %671 : vector<8x128xf32>
    %c1_357 = arith.constant 1 : index
    %c0_358 = arith.constant 0 : index
    %c0_359 = arith.constant 0 : index
    %673 = vector.load %arg10[%c1_357, %c0_358, %c0_359] : memref<2x8x128xf32, #tpu.memory_space<vmem>>, vector<1x8x128xf32>
    %674 = vector.shape_cast %673 : vector<1x8x128xf32> to vector<8x128xf32>
    %675 = vector.shape_cast %670 : vector<8x128xf32> to vector<1x8x128xf32>
    tpu.vector_store %arg10[%c1_357, %c0_358, %c0_359], %675 {strides = array<i32>} : memref<2x8x128xf32, #tpu.memory_space<vmem>>, vector<1x8x128xf32>,
    %c1_360 = arith.constant 1 : index
    %c0_361 = arith.constant 0 : index
    %c0_362 = arith.constant 0 : index
    %676 = vector.load %arg9[%c1_360, %c0_361, %c0_362] : memref<2x8x128xf32, #tpu.memory_space<vmem>>, vector<1x8x128xf32>
    %677 = vector.shape_cast %676 : vector<1x8x128xf32> to vector<8x128xf32>
    %678 = vector.shape_cast %672 : vector<8x128xf32> to vector<1x8x128xf32>
    tpu.vector_store %arg9[%c1_360, %c0_361, %c0_362], %678 {strides = array<i32>} : memref<2x8x128xf32, #tpu.memory_space<vmem>>, vector<1x8x128xf32>,
    %c5_i32_363 = arith.constant 5 : i32
    %c1_364 = arith.constant 1 : index
    %c0_365 = arith.constant 0 : index
    %c0_366 = arith.constant 0 : index
    %679 = vector.load %arg9[%c1_364, %c0_365, %c0_366] : memref<2x8x128xf32, #tpu.memory_space<vmem>>, vector<1x8x128xf32>
    %680 = vector.shape_cast %679 : vector<1x8x128xf32> to vector<8x128xf32>
    %c1_367 = arith.constant 1 : index
    %c0_368 = arith.constant 0 : index
    %c0_369 = arith.constant 0 : index
    %681 = vector.load %arg10[%c1_367, %c0_368, %c0_369] : memref<2x8x128xf32, #tpu.memory_space<vmem>>, vector<1x8x128xf32>
    %682 = vector.shape_cast %681 : vector<1x8x128xf32> to vector<8x128xf32>
    %683 = arith.index_cast %c5_i32_363 : i32 to index
    %c0_370 = arith.constant 0 : index
    %c0_371 = arith.constant 0 : index
    %684 = vector.load %arg12[%683, %c0_370, %c0_371] : memref<8x8x512xf32, #tpu.memory_space<vmem>>, vector<1x8x512xf32>
    %685 = vector.shape_cast %684 : vector<1x8x512xf32> to vector<8x512xf32>
    %686 = arith.truncf %680 : vector<8x128xf32> to vector<8x128xbf16>
    %cst_372 = arith.constant dense<0.000000e+00> : vector<8x512xf32>
    %687 = tpu.matmul %686, %443, %cst_372 {dimension_numbers = #tpu.dot_dimension_numbers<[1], [0], [0], [1], [0, 0, 1, 1], [], []>} : vector<8x128xbf16>, vector<128x512xbf16>, vector<8x512xf32> -> vector<8x512xf32>
    %688 = arith.addf %685, %687 : vector<8x512xf32>
    %689 = vector.extract_strided_slice %688 {offsets = [0, 0], sizes = [8, 128], strides = [1, 1]} : vector<8x512xf32> to vector<8x128xf32>
    %cst_373 = arith.constant 5.000000e-01 : f32
    %690 = vector.broadcast %cst_373 : f32 to vector<8x128xf32>
    %691 = arith.mulf %690, %689 : vector<8x128xf32>
    %692 = math.tanh %691 : vector<8x128xf32>
    %cst_374 = arith.constant 5.000000e-01 : f32
    %693 = vector.broadcast %cst_374 : f32 to vector<8x128xf32>
    %694 = arith.mulf %693, %692 : vector<8x128xf32>
    %cst_375 = arith.constant 5.000000e-01 : f32
    %695 = vector.broadcast %cst_375 : f32 to vector<8x128xf32>
    %696 = arith.addf %694, %695 : vector<8x128xf32>
    %697 = vector.extract_strided_slice %688 {offsets = [0, 128], sizes = [8, 128], strides = [1, 1]} : vector<8x512xf32> to vector<8x128xf32>
    %cst_376 = arith.constant 5.000000e-01 : f32
    %698 = vector.broadcast %cst_376 : f32 to vector<8x128xf32>
    %699 = arith.mulf %698, %697 : vector<8x128xf32>
    %700 = math.tanh %699 : vector<8x128xf32>
    %cst_377 = arith.constant 5.000000e-01 : f32
    %701 = vector.broadcast %cst_377 : f32 to vector<8x128xf32>
    %702 = arith.mulf %701, %700 : vector<8x128xf32>
    %cst_378 = arith.constant 5.000000e-01 : f32
    %703 = vector.broadcast %cst_378 : f32 to vector<8x128xf32>
    %704 = arith.addf %702, %703 : vector<8x128xf32>
    %705 = vector.extract_strided_slice %688 {offsets = [0, 256], sizes = [8, 128], strides = [1, 1]} : vector<8x512xf32> to vector<8x128xf32>
    %706 = math.tanh %705 : vector<8x128xf32>
    %707 = vector.extract_strided_slice %688 {offsets = [0, 384], sizes = [8, 128], strides = [1, 1]} : vector<8x512xf32> to vector<8x128xf32>
    %cst_379 = arith.constant 5.000000e-01 : f32
    %708 = vector.broadcast %cst_379 : f32 to vector<8x128xf32>
    %709 = arith.mulf %708, %707 : vector<8x128xf32>
    %710 = math.tanh %709 : vector<8x128xf32>
    %cst_380 = arith.constant 5.000000e-01 : f32
    %711 = vector.broadcast %cst_380 : f32 to vector<8x128xf32>
    %712 = arith.mulf %711, %710 : vector<8x128xf32>
    %cst_381 = arith.constant 5.000000e-01 : f32
    %713 = vector.broadcast %cst_381 : f32 to vector<8x128xf32>
    %714 = arith.addf %712, %713 : vector<8x128xf32>
    %715 = arith.mulf %704, %682 : vector<8x128xf32>
    %716 = arith.mulf %696, %706 : vector<8x128xf32>
    %717 = arith.addf %715, %716 : vector<8x128xf32>
    %718 = math.tanh %717 : vector<8x128xf32>
    %719 = arith.mulf %714, %718 : vector<8x128xf32>
    %c1_382 = arith.constant 1 : index
    %c0_383 = arith.constant 0 : index
    %c0_384 = arith.constant 0 : index
    %720 = vector.load %arg10[%c1_382, %c0_383, %c0_384] : memref<2x8x128xf32, #tpu.memory_space<vmem>>, vector<1x8x128xf32>
    %721 = vector.shape_cast %720 : vector<1x8x128xf32> to vector<8x128xf32>
    %722 = vector.shape_cast %717 : vector<8x128xf32> to vector<1x8x128xf32>
    tpu.vector_store %arg10[%c1_382, %c0_383, %c0_384], %722 {strides = array<i32>} : memref<2x8x128xf32, #tpu.memory_space<vmem>>, vector<1x8x128xf32>,
    %c1_385 = arith.constant 1 : index
    %c0_386 = arith.constant 0 : index
    %c0_387 = arith.constant 0 : index
    %723 = vector.load %arg9[%c1_385, %c0_386, %c0_387] : memref<2x8x128xf32, #tpu.memory_space<vmem>>, vector<1x8x128xf32>
    %724 = vector.shape_cast %723 : vector<1x8x128xf32> to vector<8x128xf32>
    %725 = vector.shape_cast %719 : vector<8x128xf32> to vector<1x8x128xf32>
    tpu.vector_store %arg9[%c1_385, %c0_386, %c0_387], %725 {strides = array<i32>} : memref<2x8x128xf32, #tpu.memory_space<vmem>>, vector<1x8x128xf32>,
    %c6_i32_388 = arith.constant 6 : i32
    %c1_389 = arith.constant 1 : index
    %c0_390 = arith.constant 0 : index
    %c0_391 = arith.constant 0 : index
    %726 = vector.load %arg9[%c1_389, %c0_390, %c0_391] : memref<2x8x128xf32, #tpu.memory_space<vmem>>, vector<1x8x128xf32>
    %727 = vector.shape_cast %726 : vector<1x8x128xf32> to vector<8x128xf32>
    %c1_392 = arith.constant 1 : index
    %c0_393 = arith.constant 0 : index
    %c0_394 = arith.constant 0 : index
    %728 = vector.load %arg10[%c1_392, %c0_393, %c0_394] : memref<2x8x128xf32, #tpu.memory_space<vmem>>, vector<1x8x128xf32>
    %729 = vector.shape_cast %728 : vector<1x8x128xf32> to vector<8x128xf32>
    %730 = arith.index_cast %c6_i32_388 : i32 to index
    %c0_395 = arith.constant 0 : index
    %c0_396 = arith.constant 0 : index
    %731 = vector.load %arg12[%730, %c0_395, %c0_396] : memref<8x8x512xf32, #tpu.memory_space<vmem>>, vector<1x8x512xf32>
    %732 = vector.shape_cast %731 : vector<1x8x512xf32> to vector<8x512xf32>
    %733 = arith.truncf %727 : vector<8x128xf32> to vector<8x128xbf16>
    %cst_397 = arith.constant dense<0.000000e+00> : vector<8x512xf32>
    %734 = tpu.matmul %733, %443, %cst_397 {dimension_numbers = #tpu.dot_dimension_numbers<[1], [0], [0], [1], [0, 0, 1, 1], [], []>} : vector<8x128xbf16>, vector<128x512xbf16>, vector<8x512xf32> -> vector<8x512xf32>
    %735 = arith.addf %732, %734 : vector<8x512xf32>
    %736 = vector.extract_strided_slice %735 {offsets = [0, 0], sizes = [8, 128], strides = [1, 1]} : vector<8x512xf32> to vector<8x128xf32>
    %cst_398 = arith.constant 5.000000e-01 : f32
    %737 = vector.broadcast %cst_398 : f32 to vector<8x128xf32>
    %738 = arith.mulf %737, %736 : vector<8x128xf32>
    %739 = math.tanh %738 : vector<8x128xf32>
    %cst_399 = arith.constant 5.000000e-01 : f32
    %740 = vector.broadcast %cst_399 : f32 to vector<8x128xf32>
    %741 = arith.mulf %740, %739 : vector<8x128xf32>
    %cst_400 = arith.constant 5.000000e-01 : f32
    %742 = vector.broadcast %cst_400 : f32 to vector<8x128xf32>
    %743 = arith.addf %741, %742 : vector<8x128xf32>
    %744 = vector.extract_strided_slice %735 {offsets = [0, 128], sizes = [8, 128], strides = [1, 1]} : vector<8x512xf32> to vector<8x128xf32>
    %cst_401 = arith.constant 5.000000e-01 : f32
    %745 = vector.broadcast %cst_401 : f32 to vector<8x128xf32>
    %746 = arith.mulf %745, %744 : vector<8x128xf32>
    %747 = math.tanh %746 : vector<8x128xf32>
    %cst_402 = arith.constant 5.000000e-01 : f32
    %748 = vector.broadcast %cst_402 : f32 to vector<8x128xf32>
    %749 = arith.mulf %748, %747 : vector<8x128xf32>
    %cst_403 = arith.constant 5.000000e-01 : f32
    %750 = vector.broadcast %cst_403 : f32 to vector<8x128xf32>
    %751 = arith.addf %749, %750 : vector<8x128xf32>
    %752 = vector.extract_strided_slice %735 {offsets = [0, 256], sizes = [8, 128], strides = [1, 1]} : vector<8x512xf32> to vector<8x128xf32>
    %753 = math.tanh %752 : vector<8x128xf32>
    %754 = vector.extract_strided_slice %735 {offsets = [0, 384], sizes = [8, 128], strides = [1, 1]} : vector<8x512xf32> to vector<8x128xf32>
    %cst_404 = arith.constant 5.000000e-01 : f32
    %755 = vector.broadcast %cst_404 : f32 to vector<8x128xf32>
    %756 = arith.mulf %755, %754 : vector<8x128xf32>
    %757 = math.tanh %756 : vector<8x128xf32>
    %cst_405 = arith.constant 5.000000e-01 : f32
    %758 = vector.broadcast %cst_405 : f32 to vector<8x128xf32>
    %759 = arith.mulf %758, %757 : vector<8x128xf32>
    %cst_406 = arith.constant 5.000000e-01 : f32
    %760 = vector.broadcast %cst_406 : f32 to vector<8x128xf32>
    %761 = arith.addf %759, %760 : vector<8x128xf32>
    %762 = arith.mulf %751, %729 : vector<8x128xf32>
    %763 = arith.mulf %743, %753 : vector<8x128xf32>
    %764 = arith.addf %762, %763 : vector<8x128xf32>
    %765 = math.tanh %764 : vector<8x128xf32>
    %766 = arith.mulf %761, %765 : vector<8x128xf32>
    %c1_407 = arith.constant 1 : index
    %c0_408 = arith.constant 0 : index
    %c0_409 = arith.constant 0 : index
    %767 = vector.load %arg10[%c1_407, %c0_408, %c0_409] : memref<2x8x128xf32, #tpu.memory_space<vmem>>, vector<1x8x128xf32>
    %768 = vector.shape_cast %767 : vector<1x8x128xf32> to vector<8x128xf32>
    %769 = vector.shape_cast %764 : vector<8x128xf32> to vector<1x8x128xf32>
    tpu.vector_store %arg10[%c1_407, %c0_408, %c0_409], %769 {strides = array<i32>} : memref<2x8x128xf32, #tpu.memory_space<vmem>>, vector<1x8x128xf32>,
    %c1_410 = arith.constant 1 : index
    %c0_411 = arith.constant 0 : index
    %c0_412 = arith.constant 0 : index
    %770 = vector.load %arg9[%c1_410, %c0_411, %c0_412] : memref<2x8x128xf32, #tpu.memory_space<vmem>>, vector<1x8x128xf32>
    %771 = vector.shape_cast %770 : vector<1x8x128xf32> to vector<8x128xf32>
    %772 = vector.shape_cast %766 : vector<8x128xf32> to vector<1x8x128xf32>
    tpu.vector_store %arg9[%c1_410, %c0_411, %c0_412], %772 {strides = array<i32>} : memref<2x8x128xf32, #tpu.memory_space<vmem>>, vector<1x8x128xf32>,
    %c7_i32_413 = arith.constant 7 : i32
    %c1_414 = arith.constant 1 : index
    %c0_415 = arith.constant 0 : index
    %c0_416 = arith.constant 0 : index
    %773 = vector.load %arg9[%c1_414, %c0_415, %c0_416] : memref<2x8x128xf32, #tpu.memory_space<vmem>>, vector<1x8x128xf32>
    %774 = vector.shape_cast %773 : vector<1x8x128xf32> to vector<8x128xf32>
    %c1_417 = arith.constant 1 : index
    %c0_418 = arith.constant 0 : index
    %c0_419 = arith.constant 0 : index
    %775 = vector.load %arg10[%c1_417, %c0_418, %c0_419] : memref<2x8x128xf32, #tpu.memory_space<vmem>>, vector<1x8x128xf32>
    %776 = vector.shape_cast %775 : vector<1x8x128xf32> to vector<8x128xf32>
    %777 = arith.index_cast %c7_i32_413 : i32 to index
    %c0_420 = arith.constant 0 : index
    %c0_421 = arith.constant 0 : index
    %778 = vector.load %arg12[%777, %c0_420, %c0_421] : memref<8x8x512xf32, #tpu.memory_space<vmem>>, vector<1x8x512xf32>
    %779 = vector.shape_cast %778 : vector<1x8x512xf32> to vector<8x512xf32>
    %780 = arith.truncf %774 : vector<8x128xf32> to vector<8x128xbf16>
    %cst_422 = arith.constant dense<0.000000e+00> : vector<8x512xf32>
    %781 = tpu.matmul %780, %443, %cst_422 {dimension_numbers = #tpu.dot_dimension_numbers<[1], [0], [0], [1], [0, 0, 1, 1], [], []>} : vector<8x128xbf16>, vector<128x512xbf16>, vector<8x512xf32> -> vector<8x512xf32>
    %782 = arith.addf %779, %781 : vector<8x512xf32>
    %783 = vector.extract_strided_slice %782 {offsets = [0, 0], sizes = [8, 128], strides = [1, 1]} : vector<8x512xf32> to vector<8x128xf32>
    %cst_423 = arith.constant 5.000000e-01 : f32
    %784 = vector.broadcast %cst_423 : f32 to vector<8x128xf32>
    %785 = arith.mulf %784, %783 : vector<8x128xf32>
    %786 = math.tanh %785 : vector<8x128xf32>
    %cst_424 = arith.constant 5.000000e-01 : f32
    %787 = vector.broadcast %cst_424 : f32 to vector<8x128xf32>
    %788 = arith.mulf %787, %786 : vector<8x128xf32>
    %cst_425 = arith.constant 5.000000e-01 : f32
    %789 = vector.broadcast %cst_425 : f32 to vector<8x128xf32>
    %790 = arith.addf %788, %789 : vector<8x128xf32>
    %791 = vector.extract_strided_slice %782 {offsets = [0, 128], sizes = [8, 128], strides = [1, 1]} : vector<8x512xf32> to vector<8x128xf32>
    %cst_426 = arith.constant 5.000000e-01 : f32
    %792 = vector.broadcast %cst_426 : f32 to vector<8x128xf32>
    %793 = arith.mulf %792, %791 : vector<8x128xf32>
    %794 = math.tanh %793 : vector<8x128xf32>
    %cst_427 = arith.constant 5.000000e-01 : f32
    %795 = vector.broadcast %cst_427 : f32 to vector<8x128xf32>
    %796 = arith.mulf %795, %794 : vector<8x128xf32>
    %cst_428 = arith.constant 5.000000e-01 : f32
    %797 = vector.broadcast %cst_428 : f32 to vector<8x128xf32>
    %798 = arith.addf %796, %797 : vector<8x128xf32>
    %799 = vector.extract_strided_slice %782 {offsets = [0, 256], sizes = [8, 128], strides = [1, 1]} : vector<8x512xf32> to vector<8x128xf32>
    %800 = math.tanh %799 : vector<8x128xf32>
    %801 = vector.extract_strided_slice %782 {offsets = [0, 384], sizes = [8, 128], strides = [1, 1]} : vector<8x512xf32> to vector<8x128xf32>
    %cst_429 = arith.constant 5.000000e-01 : f32
    %802 = vector.broadcast %cst_429 : f32 to vector<8x128xf32>
    %803 = arith.mulf %802, %801 : vector<8x128xf32>
    %804 = math.tanh %803 : vector<8x128xf32>
    %cst_430 = arith.constant 5.000000e-01 : f32
    %805 = vector.broadcast %cst_430 : f32 to vector<8x128xf32>
    %806 = arith.mulf %805, %804 : vector<8x128xf32>
    %cst_431 = arith.constant 5.000000e-01 : f32
    %807 = vector.broadcast %cst_431 : f32 to vector<8x128xf32>
    %808 = arith.addf %806, %807 : vector<8x128xf32>
    %809 = arith.mulf %798, %776 : vector<8x128xf32>
    %810 = arith.mulf %790, %800 : vector<8x128xf32>
    %811 = arith.addf %809, %810 : vector<8x128xf32>
    %812 = math.tanh %811 : vector<8x128xf32>
    %813 = arith.mulf %808, %812 : vector<8x128xf32>
    %c1_432 = arith.constant 1 : index
    %c0_433 = arith.constant 0 : index
    %c0_434 = arith.constant 0 : index
    %814 = vector.load %arg10[%c1_432, %c0_433, %c0_434] : memref<2x8x128xf32, #tpu.memory_space<vmem>>, vector<1x8x128xf32>
    %815 = vector.shape_cast %814 : vector<1x8x128xf32> to vector<8x128xf32>
    %816 = vector.shape_cast %811 : vector<8x128xf32> to vector<1x8x128xf32>
    tpu.vector_store %arg10[%c1_432, %c0_433, %c0_434], %816 {strides = array<i32>} : memref<2x8x128xf32, #tpu.memory_space<vmem>>, vector<1x8x128xf32>,
    %c1_435 = arith.constant 1 : index
    %c0_436 = arith.constant 0 : index
    %c0_437 = arith.constant 0 : index
    %817 = vector.load %arg9[%c1_435, %c0_436, %c0_437] : memref<2x8x128xf32, #tpu.memory_space<vmem>>, vector<1x8x128xf32>
    %818 = vector.shape_cast %817 : vector<1x8x128xf32> to vector<8x128xf32>
    %819 = vector.shape_cast %813 : vector<8x128xf32> to vector<1x8x128xf32>
    tpu.vector_store %arg9[%c1_435, %c0_436, %c0_437], %819 {strides = array<i32>} : memref<2x8x128xf32, #tpu.memory_space<vmem>>, vector<1x8x128xf32>,
    %c8_i32_438 = arith.constant 8 : i32
    %c0_i32_439 = arith.constant 0 : i32
    %820 = arith.cmpi eq, %arg0, %c0_i32_439 : i32
    %821 = arith.extui %820 : i1 to i32
    %c0_i32_440 = arith.constant 0 : i32
    %822 = arith.cmpi ne, %821, %c0_i32_440 : i32
    scf.if %822 {
      %c1_441 = arith.constant 1 : index
      %c0_442 = arith.constant 0 : index
      %c0_443 = arith.constant 0 : index
      %823 = vector.load %arg9[%c1_441, %c0_442, %c0_443] : memref<2x8x128xf32, #tpu.memory_space<vmem>>, vector<1x8x128xf32>
      %824 = vector.shape_cast %823 : vector<1x8x128xf32> to vector<8x128xf32>
      %825 = arith.truncf %824 : vector<8x128xf32> to vector<8x128xbf16>
      %c0_444 = arith.constant 0 : index
      %c0_445 = arith.constant 0 : index
      %826 = vector.load %arg6[%c0_444, %c0_445] : memref<128x128xbf16, #tpu.memory_space<vmem>>, vector<128x128xbf16>
      %cst_446 = arith.constant dense<0.000000e+00> : vector<8x128xf32>
      %827 = tpu.matmul %825, %826, %cst_446 {dimension_numbers = #tpu.dot_dimension_numbers<[1], [0], [0], [1], [0, 0, 1, 1], [], []>} : vector<8x128xbf16>, vector<128x128xbf16>, vector<8x128xf32> -> vector<8x128xf32>
      %c0_447 = arith.constant 0 : index
      %c0_448 = arith.constant 0 : index
      %828 = vector.load %arg7[%c0_447, %c0_448] : memref<1x128xf32, #tpu.memory_space<vmem>>, vector<1x128xf32>
      %829 = vector.broadcast %828 : vector<1x128xf32> to vector<8x128xf32>
      %830 = arith.addf %827, %829 : vector<8x128xf32>
      %c0_449 = arith.constant 0 : index
      %c0_450 = arith.constant 0 : index
      %831 = vector.load %arg8[%c0_449, %c0_450] : memref<8x128xf32, #tpu.memory_space<vmem>>, vector<8x128xf32>
      tpu.vector_store %arg8[%c0_449, %c0_450], %830 {strides = array<i32>} : memref<8x128xf32, #tpu.memory_space<vmem>>, vector<8x128xf32>,
    } else {
    }
    return
  }
  func.func @transform_0(%arg0: i32) -> (i32, i32, i32) {
    %c0_i32 = arith.constant 0 : i32
    %c0_i32_0 = arith.constant 0 : i32
    %c0_i32_1 = arith.constant 0 : i32
    return %arg0, %c0_i32, %c0_i32_0 : i32, i32, i32
  }
  func.func @transform_1(%arg0: i32) -> (i32, i32) {
    %c0_i32 = arith.constant 0 : i32
    %c0_i32_0 = arith.constant 0 : i32
    %c0_i32_1 = arith.constant 0 : i32
    return %c0_i32, %c0_i32_0 : i32, i32
  }
  func.func @transform_2(%arg0: i32) -> (i32, i32, i32) {
    %c0_i32 = arith.constant 0 : i32
    %c0_i32_0 = arith.constant 0 : i32
    %c0_i32_1 = arith.constant 0 : i32
    %c0_i32_2 = arith.constant 0 : i32
    return %c0_i32, %c0_i32_0, %c0_i32_1 : i32, i32, i32
  }
  func.func @transform_3(%arg0: i32) -> (i32, i32, i32) {
    %c0_i32 = arith.constant 0 : i32
    %c0_i32_0 = arith.constant 0 : i32
    %c0_i32_1 = arith.constant 0 : i32
    %c0_i32_2 = arith.constant 0 : i32
    return %c0_i32, %c0_i32_0, %c0_i32_1 : i32, i32, i32
  }
  func.func @transform_4(%arg0: i32) -> (i32, i32, i32) {
    %c0_i32 = arith.constant 0 : i32
    %c0_i32_0 = arith.constant 0 : i32
    %c0_i32_1 = arith.constant 0 : i32
    %c0_i32_2 = arith.constant 0 : i32
    return %c0_i32, %c0_i32_0, %c0_i32_1 : i32, i32, i32
  }
  func.func @transform_5(%arg0: i32) -> (i32, i32) {
    %c0_i32 = arith.constant 0 : i32
    %c0_i32_0 = arith.constant 0 : i32
    %c0_i32_1 = arith.constant 0 : i32
    return %c0_i32, %c0_i32_0 : i32, i32
  }
  func.func @transform_6(%arg0: i32) -> (i32, i32) {
    %c0_i32 = arith.constant 0 : i32
    %c0_i32_0 = arith.constant 0 : i32
    %c0_i32_1 = arith.constant 0 : i32
    return %c0_i32, %c0_i32_0 : i32, i32
  }
  func.func @transform_7(%arg0: i32) -> (i32, i32) {
    %c0_i32 = arith.constant 0 : i32
    %c0_i32_0 = arith.constant 0 : i32
    %c0_i32_1 = arith.constant 0 : i32
    return %c0_i32, %c0_i32_0 : i32, i32
  }
}

module attributes {stable_mosaic.version = 11 : i64} {
  func.func @fused_lstm_fc_kernel(%arg0: i32, %arg1: memref<8x8x128xbf16, #tpu.memory_space<vmem>>, %arg2: memref<128x512xbf16, #tpu.memory_space<vmem>>, %arg3: memref<1x128x512xbf16, #tpu.memory_space<vmem>>, %arg4: memref<2x128x512xbf16, #tpu.memory_space<vmem>>, %arg5: memref<2x1x512xf32, #tpu.memory_space<vmem>>, %arg6: memref<128x128xbf16, #tpu.memory_space<vmem>>, %arg7: memref<1x128xf32, #tpu.memory_space<vmem>>, %arg8: memref<8x128xf32, #tpu.memory_space<vmem>>, %arg9: memref<2x8x128xf32, #tpu.memory_space<vmem>>, %arg10: memref<2x8x128xf32, #tpu.memory_space<vmem>>, %arg11: memref<8x8x128xbf16, #tpu.memory_space<vmem>>, %arg12: memref<8x8x512xf32, #tpu.memory_space<vmem>>) attributes {dimension_semantics = [#tpu.dimension_semantics<arbitrary>], iteration_bounds = array<i64: 1>, scalar_prefetch = 0 : i64, scratch_operands = 4 : i64, tpu.core_type = #tpu.core_type<tc>, window_params = [{transform_indices = @transform_0, window_bounds = array<i64: 8, 8, 128>}, {pipeline_mode = #tpu.pipeline_mode<synchronous>, transform_indices = @transform_1, window_bounds = array<i64: 128, 512>}, {pipeline_mode = #tpu.pipeline_mode<synchronous>, transform_indices = @transform_2, window_bounds = array<i64: 1, 128, 512>}, {pipeline_mode = #tpu.pipeline_mode<synchronous>, transform_indices = @transform_3, window_bounds = array<i64: 2, 128, 512>}, {pipeline_mode = #tpu.pipeline_mode<synchronous>, transform_indices = @transform_4, window_bounds = array<i64: 2, 1, 512>}, {pipeline_mode = #tpu.pipeline_mode<synchronous>, transform_indices = @transform_5, window_bounds = array<i64: 128, 128>}, {pipeline_mode = #tpu.pipeline_mode<synchronous>, transform_indices = @transform_6, window_bounds = array<i64: 1, 128>}, {pipeline_mode = #tpu.pipeline_mode<synchronous>, transform_indices = @transform_7, window_bounds = array<i64: 8, 128>}]} {
    %c0_i32 = arith.constant 0 : i32
    %0 = arith.cmpi eq, %arg0, %c0_i32 : i32
    %1 = arith.extui %0 : i1 to i32
    %c0_i32_0 = arith.constant 0 : i32
    %2 = arith.cmpi ne, %1, %c0_i32_0 : i32
    scf.if %2 {
      %cst_441 = arith.constant 0.000000e+00 : f32
      %823 = vector.broadcast %cst_441 : f32 to vector<2x8x128xf32>
      %c0_442 = arith.constant 0 : index
      %c0_443 = arith.constant 0 : index
      %c0_444 = arith.constant 0 : index
      %824 = vector.load %arg9[%c0_442, %c0_443, %c0_444] : memref<2x8x128xf32, #tpu.memory_space<vmem>>, vector<2x8x128xf32>
      tpu.vector_store %arg9[%c0_442, %c0_443, %c0_444], %823 {strides = array<i32>} : memref<2x8x128xf32, #tpu.memory_space<vmem>>, vector<2x8x128xf32>,
      %cst_445 = arith.constant 0.000000e+00 : f32
      %825 = vector.broadcast %cst_445 : f32 to vector<2x8x128xf32>
      %c0_446 = arith.constant 0 : index
      %c0_447 = arith.constant 0 : index
      %c0_448 = arith.constant 0 : index
      %826 = vector.load %arg10[%c0_446, %c0_447, %c0_448] : memref<2x8x128xf32, #tpu.memory_space<vmem>>, vector<2x8x128xf32>
      tpu.vector_store %arg10[%c0_446, %c0_447, %c0_448], %825 {strides = array<i32>} : memref<2x8x128xf32, #tpu.memory_space<vmem>>, vector<2x8x128xf32>,
    } else {
    }
    %c0 = arith.constant 0 : index
    %c0_1 = arith.constant 0 : index
    %c0_2 = arith.constant 0 : index
    %3 = vector.load %arg1[%c0, %c0_1, %c0_2] : memref<8x8x128xbf16, #tpu.memory_space<vmem>>, vector<8x8x128xbf16>
    %4 = vector.shape_cast %3 : vector<8x8x128xbf16> to vector<64x128xbf16>
    %c0_3 = arith.constant 0 : index
    %c0_4 = arith.constant 0 : index
    %5 = vector.load %arg2[%c0_3, %c0_4] : memref<128x512xbf16, #tpu.memory_space<vmem>>, vector<128x512xbf16>
    %cst = arith.constant dense<0.000000e+00> : vector<64x512xf32>
    %6 = tpu.matmul %4, %5, %cst {dimension_numbers = #tpu.dot_dimension_numbers<[1], [0], [0], [1], [0, 0, 1, 1], [], []>} : vector<64x128xbf16>, vector<128x512xbf16>, vector<64x512xf32> -> vector<64x512xf32>
    %c0_5 = arith.constant 0 : index
    %c0_6 = arith.constant 0 : index
    %c0_7 = arith.constant 0 : index
    %7 = vector.load %arg5[%c0_5, %c0_6, %c0_7] : memref<2x1x512xf32, #tpu.memory_space<vmem>>, vector<1x1x512xf32>
    %8 = vector.shape_cast %7 : vector<1x1x512xf32> to vector<1x512xf32>
    %9 = vector.broadcast %8 : vector<1x512xf32> to vector<64x512xf32>
    %10 = arith.addf %6, %9 : vector<64x512xf32>
    %11 = vector.shape_cast %10 : vector<64x512xf32> to vector<8x8x512xf32>
    %c0_8 = arith.constant 0 : index
    %c0_9 = arith.constant 0 : index
    %c0_10 = arith.constant 0 : index
    %12 = vector.load %arg12[%c0_8, %c0_9, %c0_10] : memref<8x8x512xf32, #tpu.memory_space<vmem>>, vector<8x8x512xf32>
    tpu.vector_store %arg12[%c0_8, %c0_9, %c0_10], %11 {strides = array<i32>} : memref<8x8x512xf32, #tpu.memory_space<vmem>>, vector<8x8x512xf32>,
    %c0_11 = arith.constant 0 : index
    %c0_12 = arith.constant 0 : index
    %c0_13 = arith.constant 0 : index
    %13 = vector.load %arg4[%c0_11, %c0_12, %c0_13] : memref<2x128x512xbf16, #tpu.memory_space<vmem>>, vector<1x128x512xbf16>
    %14 = vector.shape_cast %13 : vector<1x128x512xbf16> to vector<128x512xbf16>
    %c0_i32_14 = arith.constant 0 : i32
    %c0_15 = arith.constant 0 : index
    %c0_16 = arith.constant 0 : index
    %c0_17 = arith.constant 0 : index
    %15 = vector.load %arg9[%c0_15, %c0_16, %c0_17] : memref<2x8x128xf32, #tpu.memory_space<vmem>>, vector<1x8x128xf32>
    %16 = vector.shape_cast %15 : vector<1x8x128xf32> to vector<8x128xf32>
    %c0_18 = arith.constant 0 : index
    %c0_19 = arith.constant 0 : index
    %c0_20 = arith.constant 0 : index
    %17 = vector.load %arg10[%c0_18, %c0_19, %c0_20] : memref<2x8x128xf32, #tpu.memory_space<vmem>>, vector<1x8x128xf32>
    %18 = vector.shape_cast %17 : vector<1x8x128xf32> to vector<8x128xf32>
    %19 = arith.index_cast %c0_i32_14 : i32 to index
    %c0_21 = arith.constant 0 : index
    %c0_22 = arith.constant 0 : index
    %20 = vector.load %arg12[%19, %c0_21, %c0_22] : memref<8x8x512xf32, #tpu.memory_space<vmem>>, vector<1x8x512xf32>
    %21 = vector.shape_cast %20 : vector<1x8x512xf32> to vector<8x512xf32>
    %22 = arith.truncf %16 : vector<8x128xf32> to vector<8x128xbf16>
    %cst_23 = arith.constant dense<0.000000e+00> : vector<8x512xf32>
    %23 = tpu.matmul %22, %14, %cst_23 {dimension_numbers = #tpu.dot_dimension_numbers<[1], [0], [0], [1], [0, 0, 1, 1], [], []>} : vector<8x128xbf16>, vector<128x512xbf16>, vector<8x512xf32> -> vector<8x512xf32>
    %24 = arith.addf %21, %23 : vector<8x512xf32>
    %25 = vector.extract_strided_slice %24 {offsets = [0, 0], sizes = [8, 128], strides = [1, 1]} : vector<8x512xf32> to vector<8x128xf32>
    %cst_24 = arith.constant 5.000000e-01 : f32
    %26 = vector.broadcast %cst_24 : f32 to vector<8x128xf32>
    %27 = arith.mulf %26, %25 : vector<8x128xf32>
    %28 = math.tanh %27 : vector<8x128xf32>
    %cst_25 = arith.constant 5.000000e-01 : f32
    %29 = vector.broadcast %cst_25 : f32 to vector<8x128xf32>
    %30 = arith.mulf %29, %28 : vector<8x128xf32>
    %cst_26 = arith.constant 5.000000e-01 : f32
    %31 = vector.broadcast %cst_26 : f32 to vector<8x128xf32>
    %32 = arith.addf %30, %31 : vector<8x128xf32>
    %33 = vector.extract_strided_slice %24 {offsets = [0, 128], sizes = [8, 128], strides = [1, 1]} : vector<8x512xf32> to vector<8x128xf32>
    %cst_27 = arith.constant 5.000000e-01 : f32
    %34 = vector.broadcast %cst_27 : f32 to vector<8x128xf32>
    %35 = arith.mulf %34, %33 : vector<8x128xf32>
    %36 = math.tanh %35 : vector<8x128xf32>
    %cst_28 = arith.constant 5.000000e-01 : f32
    %37 = vector.broadcast %cst_28 : f32 to vector<8x128xf32>
    %38 = arith.mulf %37, %36 : vector<8x128xf32>
    %cst_29 = arith.constant 5.000000e-01 : f32
    %39 = vector.broadcast %cst_29 : f32 to vector<8x128xf32>
    %40 = arith.addf %38, %39 : vector<8x128xf32>
    %41 = vector.extract_strided_slice %24 {offsets = [0, 256], sizes = [8, 128], strides = [1, 1]} : vector<8x512xf32> to vector<8x128xf32>
    %42 = math.tanh %41 : vector<8x128xf32>
    %43 = vector.extract_strided_slice %24 {offsets = [0, 384], sizes = [8, 128], strides = [1, 1]} : vector<8x512xf32> to vector<8x128xf32>
    %cst_30 = arith.constant 5.000000e-01 : f32
    %44 = vector.broadcast %cst_30 : f32 to vector<8x128xf32>
    %45 = arith.mulf %44, %43 : vector<8x128xf32>
    %46 = math.tanh %45 : vector<8x128xf32>
    %cst_31 = arith.constant 5.000000e-01 : f32
    %47 = vector.broadcast %cst_31 : f32 to vector<8x128xf32>
    %48 = arith.mulf %47, %46 : vector<8x128xf32>
    %cst_32 = arith.constant 5.000000e-01 : f32
    %49 = vector.broadcast %cst_32 : f32 to vector<8x128xf32>
    %50 = arith.addf %48, %49 : vector<8x128xf32>
    %51 = arith.mulf %40, %18 : vector<8x128xf32>
    %52 = arith.mulf %32, %42 : vector<8x128xf32>
    %53 = arith.addf %51, %52 : vector<8x128xf32>
    %54 = math.tanh %53 : vector<8x128xf32>
    %55 = arith.mulf %50, %54 : vector<8x128xf32>
    %c0_33 = arith.constant 0 : index
    %c0_34 = arith.constant 0 : index
    %c0_35 = arith.constant 0 : index
    %56 = vector.load %arg10[%c0_33, %c0_34, %c0_35] : memref<2x8x128xf32, #tpu.memory_space<vmem>>, vector<1x8x128xf32>
    %57 = vector.shape_cast %56 : vector<1x8x128xf32> to vector<8x128xf32>
    %58 = vector.shape_cast %53 : vector<8x128xf32> to vector<1x8x128xf32>
    tpu.vector_store %arg10[%c0_33, %c0_34, %c0_35], %58 {strides = array<i32>} : memref<2x8x128xf32, #tpu.memory_space<vmem>>, vector<1x8x128xf32>,
    %c0_36 = arith.constant 0 : index
    %c0_37 = arith.constant 0 : index
    %c0_38 = arith.constant 0 : index
    %59 = vector.load %arg9[%c0_36, %c0_37, %c0_38] : memref<2x8x128xf32, #tpu.memory_space<vmem>>, vector<1x8x128xf32>
    %60 = vector.shape_cast %59 : vector<1x8x128xf32> to vector<8x128xf32>
    %61 = vector.shape_cast %55 : vector<8x128xf32> to vector<1x8x128xf32>
    tpu.vector_store %arg9[%c0_36, %c0_37, %c0_38], %61 {strides = array<i32>} : memref<2x8x128xf32, #tpu.memory_space<vmem>>, vector<1x8x128xf32>,
    %62 = arith.truncf %55 : vector<8x128xf32> to vector<8x128xbf16>
    %63 = arith.index_cast %c0_i32_14 : i32 to index
    %c0_39 = arith.constant 0 : index
    %c0_40 = arith.constant 0 : index
    %64 = vector.load %arg11[%63, %c0_39, %c0_40] : memref<8x8x128xbf16, #tpu.memory_space<vmem>>, vector<1x8x128xbf16>
    %65 = vector.shape_cast %64 : vector<1x8x128xbf16> to vector<8x128xbf16>
    %66 = vector.shape_cast %62 : vector<8x128xbf16> to vector<1x8x128xbf16>
    tpu.vector_store %arg11[%63, %c0_39, %c0_40], %66 {strides = array<i32>} : memref<8x8x128xbf16, #tpu.memory_space<vmem>>, vector<1x8x128xbf16>,
    %c1_i32 = arith.constant 1 : i32
    %c0_41 = arith.constant 0 : index
    %c0_42 = arith.constant 0 : index
    %c0_43 = arith.constant 0 : index
    %67 = vector.load %arg9[%c0_41, %c0_42, %c0_43] : memref<2x8x128xf32, #tpu.memory_space<vmem>>, vector<1x8x128xf32>
    %68 = vector.shape_cast %67 : vector<1x8x128xf32> to vector<8x128xf32>
    %c0_44 = arith.constant 0 : index
    %c0_45 = arith.constant 0 : index
    %c0_46 = arith.constant 0 : index
    %69 = vector.load %arg10[%c0_44, %c0_45, %c0_46] : memref<2x8x128xf32, #tpu.memory_space<vmem>>, vector<1x8x128xf32>
    %70 = vector.shape_cast %69 : vector<1x8x128xf32> to vector<8x128xf32>
    %71 = arith.index_cast %c1_i32 : i32 to index
    %c0_47 = arith.constant 0 : index
    %c0_48 = arith.constant 0 : index
    %72 = vector.load %arg12[%71, %c0_47, %c0_48] : memref<8x8x512xf32, #tpu.memory_space<vmem>>, vector<1x8x512xf32>
    %73 = vector.shape_cast %72 : vector<1x8x512xf32> to vector<8x512xf32>
    %74 = arith.truncf %68 : vector<8x128xf32> to vector<8x128xbf16>
    %cst_49 = arith.constant dense<0.000000e+00> : vector<8x512xf32>
    %75 = tpu.matmul %74, %14, %cst_49 {dimension_numbers = #tpu.dot_dimension_numbers<[1], [0], [0], [1], [0, 0, 1, 1], [], []>} : vector<8x128xbf16>, vector<128x512xbf16>, vector<8x512xf32> -> vector<8x512xf32>
    %76 = arith.addf %73, %75 : vector<8x512xf32>
    %77 = vector.extract_strided_slice %76 {offsets = [0, 0], sizes = [8, 128], strides = [1, 1]} : vector<8x512xf32> to vector<8x128xf32>
    %cst_50 = arith.constant 5.000000e-01 : f32
    %78 = vector.broadcast %cst_50 : f32 to vector<8x128xf32>
    %79 = arith.mulf %78, %77 : vector<8x128xf32>
    %80 = math.tanh %79 : vector<8x128xf32>
    %cst_51 = arith.constant 5.000000e-01 : f32
    %81 = vector.broadcast %cst_51 : f32 to vector<8x128xf32>
    %82 = arith.mulf %81, %80 : vector<8x128xf32>
    %cst_52 = arith.constant 5.000000e-01 : f32
    %83 = vector.broadcast %cst_52 : f32 to vector<8x128xf32>
    %84 = arith.addf %82, %83 : vector<8x128xf32>
    %85 = vector.extract_strided_slice %76 {offsets = [0, 128], sizes = [8, 128], strides = [1, 1]} : vector<8x512xf32> to vector<8x128xf32>
    %cst_53 = arith.constant 5.000000e-01 : f32
    %86 = vector.broadcast %cst_53 : f32 to vector<8x128xf32>
    %87 = arith.mulf %86, %85 : vector<8x128xf32>
    %88 = math.tanh %87 : vector<8x128xf32>
    %cst_54 = arith.constant 5.000000e-01 : f32
    %89 = vector.broadcast %cst_54 : f32 to vector<8x128xf32>
    %90 = arith.mulf %89, %88 : vector<8x128xf32>
    %cst_55 = arith.constant 5.000000e-01 : f32
    %91 = vector.broadcast %cst_55 : f32 to vector<8x128xf32>
    %92 = arith.addf %90, %91 : vector<8x128xf32>
    %93 = vector.extract_strided_slice %76 {offsets = [0, 256], sizes = [8, 128], strides = [1, 1]} : vector<8x512xf32> to vector<8x128xf32>
    %94 = math.tanh %93 : vector<8x128xf32>
    %95 = vector.extract_strided_slice %76 {offsets = [0, 384], sizes = [8, 128], strides = [1, 1]} : vector<8x512xf32> to vector<8x128xf32>
    %cst_56 = arith.constant 5.000000e-01 : f32
    %96 = vector.broadcast %cst_56 : f32 to vector<8x128xf32>
    %97 = arith.mulf %96, %95 : vector<8x128xf32>
    %98 = math.tanh %97 : vector<8x128xf32>
    %cst_57 = arith.constant 5.000000e-01 : f32
    %99 = vector.broadcast %cst_57 : f32 to vector<8x128xf32>
    %100 = arith.mulf %99, %98 : vector<8x128xf32>
    %cst_58 = arith.constant 5.000000e-01 : f32
    %101 = vector.broadcast %cst_58 : f32 to vector<8x128xf32>
    %102 = arith.addf %100, %101 : vector<8x128xf32>
    %103 = arith.mulf %92, %70 : vector<8x128xf32>
    %104 = arith.mulf %84, %94 : vector<8x128xf32>
    %105 = arith.addf %103, %104 : vector<8x128xf32>
    %106 = math.tanh %105 : vector<8x128xf32>
    %107 = arith.mulf %102, %106 : vector<8x128xf32>
    %c0_59 = arith.constant 0 : index
    %c0_60 = arith.constant 0 : index
    %c0_61 = arith.constant 0 : index
    %108 = vector.load %arg10[%c0_59, %c0_60, %c0_61] : memref<2x8x128xf32, #tpu.memory_space<vmem>>, vector<1x8x128xf32>
    %109 = vector.shape_cast %108 : vector<1x8x128xf32> to vector<8x128xf32>
    %110 = vector.shape_cast %105 : vector<8x128xf32> to vector<1x8x128xf32>
    tpu.vector_store %arg10[%c0_59, %c0_60, %c0_61], %110 {strides = array<i32>} : memref<2x8x128xf32, #tpu.memory_space<vmem>>, vector<1x8x128xf32>,
    %c0_62 = arith.constant 0 : index
    %c0_63 = arith.constant 0 : index
    %c0_64 = arith.constant 0 : index
    %111 = vector.load %arg9[%c0_62, %c0_63, %c0_64] : memref<2x8x128xf32, #tpu.memory_space<vmem>>, vector<1x8x128xf32>
    %112 = vector.shape_cast %111 : vector<1x8x128xf32> to vector<8x128xf32>
    %113 = vector.shape_cast %107 : vector<8x128xf32> to vector<1x8x128xf32>
    tpu.vector_store %arg9[%c0_62, %c0_63, %c0_64], %113 {strides = array<i32>} : memref<2x8x128xf32, #tpu.memory_space<vmem>>, vector<1x8x128xf32>,
    %114 = arith.truncf %107 : vector<8x128xf32> to vector<8x128xbf16>
    %115 = arith.index_cast %c1_i32 : i32 to index
    %c0_65 = arith.constant 0 : index
    %c0_66 = arith.constant 0 : index
    %116 = vector.load %arg11[%115, %c0_65, %c0_66] : memref<8x8x128xbf16, #tpu.memory_space<vmem>>, vector<1x8x128xbf16>
    %117 = vector.shape_cast %116 : vector<1x8x128xbf16> to vector<8x128xbf16>
    %118 = vector.shape_cast %114 : vector<8x128xbf16> to vector<1x8x128xbf16>
    tpu.vector_store %arg11[%115, %c0_65, %c0_66], %118 {strides = array<i32>} : memref<8x8x128xbf16, #tpu.memory_space<vmem>>, vector<1x8x128xbf16>,
    %c2_i32 = arith.constant 2 : i32
    %c0_67 = arith.constant 0 : index
    %c0_68 = arith.constant 0 : index
    %c0_69 = arith.constant 0 : index
    %119 = vector.load %arg9[%c0_67, %c0_68, %c0_69] : memref<2x8x128xf32, #tpu.memory_space<vmem>>, vector<1x8x128xf32>
    %120 = vector.shape_cast %119 : vector<1x8x128xf32> to vector<8x128xf32>
    %c0_70 = arith.constant 0 : index
    %c0_71 = arith.constant 0 : index
    %c0_72 = arith.constant 0 : index
    %121 = vector.load %arg10[%c0_70, %c0_71, %c0_72] : memref<2x8x128xf32, #tpu.memory_space<vmem>>, vector<1x8x128xf32>
    %122 = vector.shape_cast %121 : vector<1x8x128xf32> to vector<8x128xf32>
    %123 = arith.index_cast %c2_i32 : i32 to index
    %c0_73 = arith.constant 0 : index
    %c0_74 = arith.constant 0 : index
    %124 = vector.load %arg12[%123, %c0_73, %c0_74] : memref<8x8x512xf32, #tpu.memory_space<vmem>>, vector<1x8x512xf32>
    %125 = vector.shape_cast %124 : vector<1x8x512xf32> to vector<8x512xf32>
    %126 = arith.truncf %120 : vector<8x128xf32> to vector<8x128xbf16>
    %cst_75 = arith.constant dense<0.000000e+00> : vector<8x512xf32>
    %127 = tpu.matmul %126, %14, %cst_75 {dimension_numbers = #tpu.dot_dimension_numbers<[1], [0], [0], [1], [0, 0, 1, 1], [], []>} : vector<8x128xbf16>, vector<128x512xbf16>, vector<8x512xf32> -> vector<8x512xf32>
    %128 = arith.addf %125, %127 : vector<8x512xf32>
    %129 = vector.extract_strided_slice %128 {offsets = [0, 0], sizes = [8, 128], strides = [1, 1]} : vector<8x512xf32> to vector<8x128xf32>
    %cst_76 = arith.constant 5.000000e-01 : f32
    %130 = vector.broadcast %cst_76 : f32 to vector<8x128xf32>
    %131 = arith.mulf %130, %129 : vector<8x128xf32>
    %132 = math.tanh %131 : vector<8x128xf32>
    %cst_77 = arith.constant 5.000000e-01 : f32
    %133 = vector.broadcast %cst_77 : f32 to vector<8x128xf32>
    %134 = arith.mulf %133, %132 : vector<8x128xf32>
    %cst_78 = arith.constant 5.000000e-01 : f32
    %135 = vector.broadcast %cst_78 : f32 to vector<8x128xf32>
    %136 = arith.addf %134, %135 : vector<8x128xf32>
    %137 = vector.extract_strided_slice %128 {offsets = [0, 128], sizes = [8, 128], strides = [1, 1]} : vector<8x512xf32> to vector<8x128xf32>
    %cst_79 = arith.constant 5.000000e-01 : f32
    %138 = vector.broadcast %cst_79 : f32 to vector<8x128xf32>
    %139 = arith.mulf %138, %137 : vector<8x128xf32>
    %140 = math.tanh %139 : vector<8x128xf32>
    %cst_80 = arith.constant 5.000000e-01 : f32
    %141 = vector.broadcast %cst_80 : f32 to vector<8x128xf32>
    %142 = arith.mulf %141, %140 : vector<8x128xf32>
    %cst_81 = arith.constant 5.000000e-01 : f32
    %143 = vector.broadcast %cst_81 : f32 to vector<8x128xf32>
    %144 = arith.addf %142, %143 : vector<8x128xf32>
    %145 = vector.extract_strided_slice %128 {offsets = [0, 256], sizes = [8, 128], strides = [1, 1]} : vector<8x512xf32> to vector<8x128xf32>
    %146 = math.tanh %145 : vector<8x128xf32>
    %147 = vector.extract_strided_slice %128 {offsets = [0, 384], sizes = [8, 128], strides = [1, 1]} : vector<8x512xf32> to vector<8x128xf32>
    %cst_82 = arith.constant 5.000000e-01 : f32
    %148 = vector.broadcast %cst_82 : f32 to vector<8x128xf32>
    %149 = arith.mulf %148, %147 : vector<8x128xf32>
    %150 = math.tanh %149 : vector<8x128xf32>
    %cst_83 = arith.constant 5.000000e-01 : f32
    %151 = vector.broadcast %cst_83 : f32 to vector<8x128xf32>
    %152 = arith.mulf %151, %150 : vector<8x128xf32>
    %cst_84 = arith.constant 5.000000e-01 : f32
    %153 = vector.broadcast %cst_84 : f32 to vector<8x128xf32>
    %154 = arith.addf %152, %153 : vector<8x128xf32>
    %155 = arith.mulf %144, %122 : vector<8x128xf32>
    %156 = arith.mulf %136, %146 : vector<8x128xf32>
    %157 = arith.addf %155, %156 : vector<8x128xf32>
    %158 = math.tanh %157 : vector<8x128xf32>
    %159 = arith.mulf %154, %158 : vector<8x128xf32>
    %c0_85 = arith.constant 0 : index
    %c0_86 = arith.constant 0 : index
    %c0_87 = arith.constant 0 : index
    %160 = vector.load %arg10[%c0_85, %c0_86, %c0_87] : memref<2x8x128xf32, #tpu.memory_space<vmem>>, vector<1x8x128xf32>
    %161 = vector.shape_cast %160 : vector<1x8x128xf32> to vector<8x128xf32>
    %162 = vector.shape_cast %157 : vector<8x128xf32> to vector<1x8x128xf32>
    tpu.vector_store %arg10[%c0_85, %c0_86, %c0_87], %162 {strides = array<i32>} : memref<2x8x128xf32, #tpu.memory_space<vmem>>, vector<1x8x128xf32>,
    %c0_88 = arith.constant 0 : index
    %c0_89 = arith.constant 0 : index
    %c0_90 = arith.constant 0 : index
    %163 = vector.load %arg9[%c0_88, %c0_89, %c0_90] : memref<2x8x128xf32, #tpu.memory_space<vmem>>, vector<1x8x128xf32>
    %164 = vector.shape_cast %163 : vector<1x8x128xf32> to vector<8x128xf32>
    %165 = vector.shape_cast %159 : vector<8x128xf32> to vector<1x8x128xf32>
    tpu.vector_store %arg9[%c0_88, %c0_89, %c0_90], %165 {strides = array<i32>} : memref<2x8x128xf32, #tpu.memory_space<vmem>>, vector<1x8x128xf32>,
    %166 = arith.truncf %159 : vector<8x128xf32> to vector<8x128xbf16>
    %167 = arith.index_cast %c2_i32 : i32 to index
    %c0_91 = arith.constant 0 : index
    %c0_92 = arith.constant 0 : index
    %168 = vector.load %arg11[%167, %c0_91, %c0_92] : memref<8x8x128xbf16, #tpu.memory_space<vmem>>, vector<1x8x128xbf16>
    %169 = vector.shape_cast %168 : vector<1x8x128xbf16> to vector<8x128xbf16>
    %170 = vector.shape_cast %166 : vector<8x128xbf16> to vector<1x8x128xbf16>
    tpu.vector_store %arg11[%167, %c0_91, %c0_92], %170 {strides = array<i32>} : memref<8x8x128xbf16, #tpu.memory_space<vmem>>, vector<1x8x128xbf16>,
    %c3_i32 = arith.constant 3 : i32
    %c0_93 = arith.constant 0 : index
    %c0_94 = arith.constant 0 : index
    %c0_95 = arith.constant 0 : index
    %171 = vector.load %arg9[%c0_93, %c0_94, %c0_95] : memref<2x8x128xf32, #tpu.memory_space<vmem>>, vector<1x8x128xf32>
    %172 = vector.shape_cast %171 : vector<1x8x128xf32> to vector<8x128xf32>
    %c0_96 = arith.constant 0 : index
    %c0_97 = arith.constant 0 : index
    %c0_98 = arith.constant 0 : index
    %173 = vector.load %arg10[%c0_96, %c0_97, %c0_98] : memref<2x8x128xf32, #tpu.memory_space<vmem>>, vector<1x8x128xf32>
    %174 = vector.shape_cast %173 : vector<1x8x128xf32> to vector<8x128xf32>
    %175 = arith.index_cast %c3_i32 : i32 to index
    %c0_99 = arith.constant 0 : index
    %c0_100 = arith.constant 0 : index
    %176 = vector.load %arg12[%175, %c0_99, %c0_100] : memref<8x8x512xf32, #tpu.memory_space<vmem>>, vector<1x8x512xf32>
    %177 = vector.shape_cast %176 : vector<1x8x512xf32> to vector<8x512xf32>
    %178 = arith.truncf %172 : vector<8x128xf32> to vector<8x128xbf16>
    %cst_101 = arith.constant dense<0.000000e+00> : vector<8x512xf32>
    %179 = tpu.matmul %178, %14, %cst_101 {dimension_numbers = #tpu.dot_dimension_numbers<[1], [0], [0], [1], [0, 0, 1, 1], [], []>} : vector<8x128xbf16>, vector<128x512xbf16>, vector<8x512xf32> -> vector<8x512xf32>
    %180 = arith.addf %177, %179 : vector<8x512xf32>
    %181 = vector.extract_strided_slice %180 {offsets = [0, 0], sizes = [8, 128], strides = [1, 1]} : vector<8x512xf32> to vector<8x128xf32>
    %cst_102 = arith.constant 5.000000e-01 : f32
    %182 = vector.broadcast %cst_102 : f32 to vector<8x128xf32>
    %183 = arith.mulf %182, %181 : vector<8x128xf32>
    %184 = math.tanh %183 : vector<8x128xf32>
    %cst_103 = arith.constant 5.000000e-01 : f32
    %185 = vector.broadcast %cst_103 : f32 to vector<8x128xf32>
    %186 = arith.mulf %185, %184 : vector<8x128xf32>
    %cst_104 = arith.constant 5.000000e-01 : f32
    %187 = vector.broadcast %cst_104 : f32 to vector<8x128xf32>
    %188 = arith.addf %186, %187 : vector<8x128xf32>
    %189 = vector.extract_strided_slice %180 {offsets = [0, 128], sizes = [8, 128], strides = [1, 1]} : vector<8x512xf32> to vector<8x128xf32>
    %cst_105 = arith.constant 5.000000e-01 : f32
    %190 = vector.broadcast %cst_105 : f32 to vector<8x128xf32>
    %191 = arith.mulf %190, %189 : vector<8x128xf32>
    %192 = math.tanh %191 : vector<8x128xf32>
    %cst_106 = arith.constant 5.000000e-01 : f32
    %193 = vector.broadcast %cst_106 : f32 to vector<8x128xf32>
    %194 = arith.mulf %193, %192 : vector<8x128xf32>
    %cst_107 = arith.constant 5.000000e-01 : f32
    %195 = vector.broadcast %cst_107 : f32 to vector<8x128xf32>
    %196 = arith.addf %194, %195 : vector<8x128xf32>
    %197 = vector.extract_strided_slice %180 {offsets = [0, 256], sizes = [8, 128], strides = [1, 1]} : vector<8x512xf32> to vector<8x128xf32>
    %198 = math.tanh %197 : vector<8x128xf32>
    %199 = vector.extract_strided_slice %180 {offsets = [0, 384], sizes = [8, 128], strides = [1, 1]} : vector<8x512xf32> to vector<8x128xf32>
    %cst_108 = arith.constant 5.000000e-01 : f32
    %200 = vector.broadcast %cst_108 : f32 to vector<8x128xf32>
    %201 = arith.mulf %200, %199 : vector<8x128xf32>
    %202 = math.tanh %201 : vector<8x128xf32>
    %cst_109 = arith.constant 5.000000e-01 : f32
    %203 = vector.broadcast %cst_109 : f32 to vector<8x128xf32>
    %204 = arith.mulf %203, %202 : vector<8x128xf32>
    %cst_110 = arith.constant 5.000000e-01 : f32
    %205 = vector.broadcast %cst_110 : f32 to vector<8x128xf32>
    %206 = arith.addf %204, %205 : vector<8x128xf32>
    %207 = arith.mulf %196, %174 : vector<8x128xf32>
    %208 = arith.mulf %188, %198 : vector<8x128xf32>
    %209 = arith.addf %207, %208 : vector<8x128xf32>
    %210 = math.tanh %209 : vector<8x128xf32>
    %211 = arith.mulf %206, %210 : vector<8x128xf32>
    %c0_111 = arith.constant 0 : index
    %c0_112 = arith.constant 0 : index
    %c0_113 = arith.constant 0 : index
    %212 = vector.load %arg10[%c0_111, %c0_112, %c0_113] : memref<2x8x128xf32, #tpu.memory_space<vmem>>, vector<1x8x128xf32>
    %213 = vector.shape_cast %212 : vector<1x8x128xf32> to vector<8x128xf32>
    %214 = vector.shape_cast %209 : vector<8x128xf32> to vector<1x8x128xf32>
    tpu.vector_store %arg10[%c0_111, %c0_112, %c0_113], %214 {strides = array<i32>} : memref<2x8x128xf32, #tpu.memory_space<vmem>>, vector<1x8x128xf32>,
    %c0_114 = arith.constant 0 : index
    %c0_115 = arith.constant 0 : index
    %c0_116 = arith.constant 0 : index
    %215 = vector.load %arg9[%c0_114, %c0_115, %c0_116] : memref<2x8x128xf32, #tpu.memory_space<vmem>>, vector<1x8x128xf32>
    %216 = vector.shape_cast %215 : vector<1x8x128xf32> to vector<8x128xf32>
    %217 = vector.shape_cast %211 : vector<8x128xf32> to vector<1x8x128xf32>
    tpu.vector_store %arg9[%c0_114, %c0_115, %c0_116], %217 {strides = array<i32>} : memref<2x8x128xf32, #tpu.memory_space<vmem>>, vector<1x8x128xf32>,
    %218 = arith.truncf %211 : vector<8x128xf32> to vector<8x128xbf16>
    %219 = arith.index_cast %c3_i32 : i32 to index
    %c0_117 = arith.constant 0 : index
    %c0_118 = arith.constant 0 : index
    %220 = vector.load %arg11[%219, %c0_117, %c0_118] : memref<8x8x128xbf16, #tpu.memory_space<vmem>>, vector<1x8x128xbf16>
    %221 = vector.shape_cast %220 : vector<1x8x128xbf16> to vector<8x128xbf16>
    %222 = vector.shape_cast %218 : vector<8x128xbf16> to vector<1x8x128xbf16>
    tpu.vector_store %arg11[%219, %c0_117, %c0_118], %222 {strides = array<i32>} : memref<8x8x128xbf16, #tpu.memory_space<vmem>>, vector<1x8x128xbf16>,
    %c4_i32 = arith.constant 4 : i32
    %c0_119 = arith.constant 0 : index
    %c0_120 = arith.constant 0 : index
    %c0_121 = arith.constant 0 : index
    %223 = vector.load %arg9[%c0_119, %c0_120, %c0_121] : memref<2x8x128xf32, #tpu.memory_space<vmem>>, vector<1x8x128xf32>
    %224 = vector.shape_cast %223 : vector<1x8x128xf32> to vector<8x128xf32>
    %c0_122 = arith.constant 0 : index
    %c0_123 = arith.constant 0 : index
    %c0_124 = arith.constant 0 : index
    %225 = vector.load %arg10[%c0_122, %c0_123, %c0_124] : memref<2x8x128xf32, #tpu.memory_space<vmem>>, vector<1x8x128xf32>
    %226 = vector.shape_cast %225 : vector<1x8x128xf32> to vector<8x128xf32>
    %227 = arith.index_cast %c4_i32 : i32 to index
    %c0_125 = arith.constant 0 : index
    %c0_126 = arith.constant 0 : index
    %228 = vector.load %arg12[%227, %c0_125, %c0_126] : memref<8x8x512xf32, #tpu.memory_space<vmem>>, vector<1x8x512xf32>
    %229 = vector.shape_cast %228 : vector<1x8x512xf32> to vector<8x512xf32>
    %230 = arith.truncf %224 : vector<8x128xf32> to vector<8x128xbf16>
    %cst_127 = arith.constant dense<0.000000e+00> : vector<8x512xf32>
    %231 = tpu.matmul %230, %14, %cst_127 {dimension_numbers = #tpu.dot_dimension_numbers<[1], [0], [0], [1], [0, 0, 1, 1], [], []>} : vector<8x128xbf16>, vector<128x512xbf16>, vector<8x512xf32> -> vector<8x512xf32>
    %232 = arith.addf %229, %231 : vector<8x512xf32>
    %233 = vector.extract_strided_slice %232 {offsets = [0, 0], sizes = [8, 128], strides = [1, 1]} : vector<8x512xf32> to vector<8x128xf32>
    %cst_128 = arith.constant 5.000000e-01 : f32
    %234 = vector.broadcast %cst_128 : f32 to vector<8x128xf32>
    %235 = arith.mulf %234, %233 : vector<8x128xf32>
    %236 = math.tanh %235 : vector<8x128xf32>
    %cst_129 = arith.constant 5.000000e-01 : f32
    %237 = vector.broadcast %cst_129 : f32 to vector<8x128xf32>
    %238 = arith.mulf %237, %236 : vector<8x128xf32>
    %cst_130 = arith.constant 5.000000e-01 : f32
    %239 = vector.broadcast %cst_130 : f32 to vector<8x128xf32>
    %240 = arith.addf %238, %239 : vector<8x128xf32>
    %241 = vector.extract_strided_slice %232 {offsets = [0, 128], sizes = [8, 128], strides = [1, 1]} : vector<8x512xf32> to vector<8x128xf32>
    %cst_131 = arith.constant 5.000000e-01 : f32
    %242 = vector.broadcast %cst_131 : f32 to vector<8x128xf32>
    %243 = arith.mulf %242, %241 : vector<8x128xf32>
    %244 = math.tanh %243 : vector<8x128xf32>
    %cst_132 = arith.constant 5.000000e-01 : f32
    %245 = vector.broadcast %cst_132 : f32 to vector<8x128xf32>
    %246 = arith.mulf %245, %244 : vector<8x128xf32>
    %cst_133 = arith.constant 5.000000e-01 : f32
    %247 = vector.broadcast %cst_133 : f32 to vector<8x128xf32>
    %248 = arith.addf %246, %247 : vector<8x128xf32>
    %249 = vector.extract_strided_slice %232 {offsets = [0, 256], sizes = [8, 128], strides = [1, 1]} : vector<8x512xf32> to vector<8x128xf32>
    %250 = math.tanh %249 : vector<8x128xf32>
    %251 = vector.extract_strided_slice %232 {offsets = [0, 384], sizes = [8, 128], strides = [1, 1]} : vector<8x512xf32> to vector<8x128xf32>
    %cst_134 = arith.constant 5.000000e-01 : f32
    %252 = vector.broadcast %cst_134 : f32 to vector<8x128xf32>
    %253 = arith.mulf %252, %251 : vector<8x128xf32>
    %254 = math.tanh %253 : vector<8x128xf32>
    %cst_135 = arith.constant 5.000000e-01 : f32
    %255 = vector.broadcast %cst_135 : f32 to vector<8x128xf32>
    %256 = arith.mulf %255, %254 : vector<8x128xf32>
    %cst_136 = arith.constant 5.000000e-01 : f32
    %257 = vector.broadcast %cst_136 : f32 to vector<8x128xf32>
    %258 = arith.addf %256, %257 : vector<8x128xf32>
    %259 = arith.mulf %248, %226 : vector<8x128xf32>
    %260 = arith.mulf %240, %250 : vector<8x128xf32>
    %261 = arith.addf %259, %260 : vector<8x128xf32>
    %262 = math.tanh %261 : vector<8x128xf32>
    %263 = arith.mulf %258, %262 : vector<8x128xf32>
    %c0_137 = arith.constant 0 : index
    %c0_138 = arith.constant 0 : index
    %c0_139 = arith.constant 0 : index
    %264 = vector.load %arg10[%c0_137, %c0_138, %c0_139] : memref<2x8x128xf32, #tpu.memory_space<vmem>>, vector<1x8x128xf32>
    %265 = vector.shape_cast %264 : vector<1x8x128xf32> to vector<8x128xf32>
    %266 = vector.shape_cast %261 : vector<8x128xf32> to vector<1x8x128xf32>
    tpu.vector_store %arg10[%c0_137, %c0_138, %c0_139], %266 {strides = array<i32>} : memref<2x8x128xf32, #tpu.memory_space<vmem>>, vector<1x8x128xf32>,
    %c0_140 = arith.constant 0 : index
    %c0_141 = arith.constant 0 : index
    %c0_142 = arith.constant 0 : index
    %267 = vector.load %arg9[%c0_140, %c0_141, %c0_142] : memref<2x8x128xf32, #tpu.memory_space<vmem>>, vector<1x8x128xf32>
    %268 = vector.shape_cast %267 : vector<1x8x128xf32> to vector<8x128xf32>
    %269 = vector.shape_cast %263 : vector<8x128xf32> to vector<1x8x128xf32>
    tpu.vector_store %arg9[%c0_140, %c0_141, %c0_142], %269 {strides = array<i32>} : memref<2x8x128xf32, #tpu.memory_space<vmem>>, vector<1x8x128xf32>,
    %270 = arith.truncf %263 : vector<8x128xf32> to vector<8x128xbf16>
    %271 = arith.index_cast %c4_i32 : i32 to index
    %c0_143 = arith.constant 0 : index
    %c0_144 = arith.constant 0 : index
    %272 = vector.load %arg11[%271, %c0_143, %c0_144] : memref<8x8x128xbf16, #tpu.memory_space<vmem>>, vector<1x8x128xbf16>
    %273 = vector.shape_cast %272 : vector<1x8x128xbf16> to vector<8x128xbf16>
    %274 = vector.shape_cast %270 : vector<8x128xbf16> to vector<1x8x128xbf16>
    tpu.vector_store %arg11[%271, %c0_143, %c0_144], %274 {strides = array<i32>} : memref<8x8x128xbf16, #tpu.memory_space<vmem>>, vector<1x8x128xbf16>,
    %c5_i32 = arith.constant 5 : i32
    %c0_145 = arith.constant 0 : index
    %c0_146 = arith.constant 0 : index
    %c0_147 = arith.constant 0 : index
    %275 = vector.load %arg9[%c0_145, %c0_146, %c0_147] : memref<2x8x128xf32, #tpu.memory_space<vmem>>, vector<1x8x128xf32>
    %276 = vector.shape_cast %275 : vector<1x8x128xf32> to vector<8x128xf32>
    %c0_148 = arith.constant 0 : index
    %c0_149 = arith.constant 0 : index
    %c0_150 = arith.constant 0 : index
    %277 = vector.load %arg10[%c0_148, %c0_149, %c0_150] : memref<2x8x128xf32, #tpu.memory_space<vmem>>, vector<1x8x128xf32>
    %278 = vector.shape_cast %277 : vector<1x8x128xf32> to vector<8x128xf32>
    %279 = arith.index_cast %c5_i32 : i32 to index
    %c0_151 = arith.constant 0 : index
    %c0_152 = arith.constant 0 : index
    %280 = vector.load %arg12[%279, %c0_151, %c0_152] : memref<8x8x512xf32, #tpu.memory_space<vmem>>, vector<1x8x512xf32>
    %281 = vector.shape_cast %280 : vector<1x8x512xf32> to vector<8x512xf32>
    %282 = arith.truncf %276 : vector<8x128xf32> to vector<8x128xbf16>
    %cst_153 = arith.constant dense<0.000000e+00> : vector<8x512xf32>
    %283 = tpu.matmul %282, %14, %cst_153 {dimension_numbers = #tpu.dot_dimension_numbers<[1], [0], [0], [1], [0, 0, 1, 1], [], []>} : vector<8x128xbf16>, vector<128x512xbf16>, vector<8x512xf32> -> vector<8x512xf32>
    %284 = arith.addf %281, %283 : vector<8x512xf32>
    %285 = vector.extract_strided_slice %284 {offsets = [0, 0], sizes = [8, 128], strides = [1, 1]} : vector<8x512xf32> to vector<8x128xf32>
    %cst_154 = arith.constant 5.000000e-01 : f32
    %286 = vector.broadcast %cst_154 : f32 to vector<8x128xf32>
    %287 = arith.mulf %286, %285 : vector<8x128xf32>
    %288 = math.tanh %287 : vector<8x128xf32>
    %cst_155 = arith.constant 5.000000e-01 : f32
    %289 = vector.broadcast %cst_155 : f32 to vector<8x128xf32>
    %290 = arith.mulf %289, %288 : vector<8x128xf32>
    %cst_156 = arith.constant 5.000000e-01 : f32
    %291 = vector.broadcast %cst_156 : f32 to vector<8x128xf32>
    %292 = arith.addf %290, %291 : vector<8x128xf32>
    %293 = vector.extract_strided_slice %284 {offsets = [0, 128], sizes = [8, 128], strides = [1, 1]} : vector<8x512xf32> to vector<8x128xf32>
    %cst_157 = arith.constant 5.000000e-01 : f32
    %294 = vector.broadcast %cst_157 : f32 to vector<8x128xf32>
    %295 = arith.mulf %294, %293 : vector<8x128xf32>
    %296 = math.tanh %295 : vector<8x128xf32>
    %cst_158 = arith.constant 5.000000e-01 : f32
    %297 = vector.broadcast %cst_158 : f32 to vector<8x128xf32>
    %298 = arith.mulf %297, %296 : vector<8x128xf32>
    %cst_159 = arith.constant 5.000000e-01 : f32
    %299 = vector.broadcast %cst_159 : f32 to vector<8x128xf32>
    %300 = arith.addf %298, %299 : vector<8x128xf32>
    %301 = vector.extract_strided_slice %284 {offsets = [0, 256], sizes = [8, 128], strides = [1, 1]} : vector<8x512xf32> to vector<8x128xf32>
    %302 = math.tanh %301 : vector<8x128xf32>
    %303 = vector.extract_strided_slice %284 {offsets = [0, 384], sizes = [8, 128], strides = [1, 1]} : vector<8x512xf32> to vector<8x128xf32>
    %cst_160 = arith.constant 5.000000e-01 : f32
    %304 = vector.broadcast %cst_160 : f32 to vector<8x128xf32>
    %305 = arith.mulf %304, %303 : vector<8x128xf32>
    %306 = math.tanh %305 : vector<8x128xf32>
    %cst_161 = arith.constant 5.000000e-01 : f32
    %307 = vector.broadcast %cst_161 : f32 to vector<8x128xf32>
    %308 = arith.mulf %307, %306 : vector<8x128xf32>
    %cst_162 = arith.constant 5.000000e-01 : f32
    %309 = vector.broadcast %cst_162 : f32 to vector<8x128xf32>
    %310 = arith.addf %308, %309 : vector<8x128xf32>
    %311 = arith.mulf %300, %278 : vector<8x128xf32>
    %312 = arith.mulf %292, %302 : vector<8x128xf32>
    %313 = arith.addf %311, %312 : vector<8x128xf32>
    %314 = math.tanh %313 : vector<8x128xf32>
    %315 = arith.mulf %310, %314 : vector<8x128xf32>
    %c0_163 = arith.constant 0 : index
    %c0_164 = arith.constant 0 : index
    %c0_165 = arith.constant 0 : index
    %316 = vector.load %arg10[%c0_163, %c0_164, %c0_165] : memref<2x8x128xf32, #tpu.memory_space<vmem>>, vector<1x8x128xf32>
    %317 = vector.shape_cast %316 : vector<1x8x128xf32> to vector<8x128xf32>
    %318 = vector.shape_cast %313 : vector<8x128xf32> to vector<1x8x128xf32>
    tpu.vector_store %arg10[%c0_163, %c0_164, %c0_165], %318 {strides = array<i32>} : memref<2x8x128xf32, #tpu.memory_space<vmem>>, vector<1x8x128xf32>,
    %c0_166 = arith.constant 0 : index
    %c0_167 = arith.constant 0 : index
    %c0_168 = arith.constant 0 : index
    %319 = vector.load %arg9[%c0_166, %c0_167, %c0_168] : memref<2x8x128xf32, #tpu.memory_space<vmem>>, vector<1x8x128xf32>
    %320 = vector.shape_cast %319 : vector<1x8x128xf32> to vector<8x128xf32>
    %321 = vector.shape_cast %315 : vector<8x128xf32> to vector<1x8x128xf32>
    tpu.vector_store %arg9[%c0_166, %c0_167, %c0_168], %321 {strides = array<i32>} : memref<2x8x128xf32, #tpu.memory_space<vmem>>, vector<1x8x128xf32>,
    %322 = arith.truncf %315 : vector<8x128xf32> to vector<8x128xbf16>
    %323 = arith.index_cast %c5_i32 : i32 to index
    %c0_169 = arith.constant 0 : index
    %c0_170 = arith.constant 0 : index
    %324 = vector.load %arg11[%323, %c0_169, %c0_170] : memref<8x8x128xbf16, #tpu.memory_space<vmem>>, vector<1x8x128xbf16>
    %325 = vector.shape_cast %324 : vector<1x8x128xbf16> to vector<8x128xbf16>
    %326 = vector.shape_cast %322 : vector<8x128xbf16> to vector<1x8x128xbf16>
    tpu.vector_store %arg11[%323, %c0_169, %c0_170], %326 {strides = array<i32>} : memref<8x8x128xbf16, #tpu.memory_space<vmem>>, vector<1x8x128xbf16>,
    %c6_i32 = arith.constant 6 : i32
    %c0_171 = arith.constant 0 : index
    %c0_172 = arith.constant 0 : index
    %c0_173 = arith.constant 0 : index
    %327 = vector.load %arg9[%c0_171, %c0_172, %c0_173] : memref<2x8x128xf32, #tpu.memory_space<vmem>>, vector<1x8x128xf32>
    %328 = vector.shape_cast %327 : vector<1x8x128xf32> to vector<8x128xf32>
    %c0_174 = arith.constant 0 : index
    %c0_175 = arith.constant 0 : index
    %c0_176 = arith.constant 0 : index
    %329 = vector.load %arg10[%c0_174, %c0_175, %c0_176] : memref<2x8x128xf32, #tpu.memory_space<vmem>>, vector<1x8x128xf32>
    %330 = vector.shape_cast %329 : vector<1x8x128xf32> to vector<8x128xf32>
    %331 = arith.index_cast %c6_i32 : i32 to index
    %c0_177 = arith.constant 0 : index
    %c0_178 = arith.constant 0 : index
    %332 = vector.load %arg12[%331, %c0_177, %c0_178] : memref<8x8x512xf32, #tpu.memory_space<vmem>>, vector<1x8x512xf32>
    %333 = vector.shape_cast %332 : vector<1x8x512xf32> to vector<8x512xf32>
    %334 = arith.truncf %328 : vector<8x128xf32> to vector<8x128xbf16>
    %cst_179 = arith.constant dense<0.000000e+00> : vector<8x512xf32>
    %335 = tpu.matmul %334, %14, %cst_179 {dimension_numbers = #tpu.dot_dimension_numbers<[1], [0], [0], [1], [0, 0, 1, 1], [], []>} : vector<8x128xbf16>, vector<128x512xbf16>, vector<8x512xf32> -> vector<8x512xf32>
    %336 = arith.addf %333, %335 : vector<8x512xf32>
    %337 = vector.extract_strided_slice %336 {offsets = [0, 0], sizes = [8, 128], strides = [1, 1]} : vector<8x512xf32> to vector<8x128xf32>
    %cst_180 = arith.constant 5.000000e-01 : f32
    %338 = vector.broadcast %cst_180 : f32 to vector<8x128xf32>
    %339 = arith.mulf %338, %337 : vector<8x128xf32>
    %340 = math.tanh %339 : vector<8x128xf32>
    %cst_181 = arith.constant 5.000000e-01 : f32
    %341 = vector.broadcast %cst_181 : f32 to vector<8x128xf32>
    %342 = arith.mulf %341, %340 : vector<8x128xf32>
    %cst_182 = arith.constant 5.000000e-01 : f32
    %343 = vector.broadcast %cst_182 : f32 to vector<8x128xf32>
    %344 = arith.addf %342, %343 : vector<8x128xf32>
    %345 = vector.extract_strided_slice %336 {offsets = [0, 128], sizes = [8, 128], strides = [1, 1]} : vector<8x512xf32> to vector<8x128xf32>
    %cst_183 = arith.constant 5.000000e-01 : f32
    %346 = vector.broadcast %cst_183 : f32 to vector<8x128xf32>
    %347 = arith.mulf %346, %345 : vector<8x128xf32>
    %348 = math.tanh %347 : vector<8x128xf32>
    %cst_184 = arith.constant 5.000000e-01 : f32
    %349 = vector.broadcast %cst_184 : f32 to vector<8x128xf32>
    %350 = arith.mulf %349, %348 : vector<8x128xf32>
    %cst_185 = arith.constant 5.000000e-01 : f32
    %351 = vector.broadcast %cst_185 : f32 to vector<8x128xf32>
    %352 = arith.addf %350, %351 : vector<8x128xf32>
    %353 = vector.extract_strided_slice %336 {offsets = [0, 256], sizes = [8, 128], strides = [1, 1]} : vector<8x512xf32> to vector<8x128xf32>
    %354 = math.tanh %353 : vector<8x128xf32>
    %355 = vector.extract_strided_slice %336 {offsets = [0, 384], sizes = [8, 128], strides = [1, 1]} : vector<8x512xf32> to vector<8x128xf32>
    %cst_186 = arith.constant 5.000000e-01 : f32
    %356 = vector.broadcast %cst_186 : f32 to vector<8x128xf32>
    %357 = arith.mulf %356, %355 : vector<8x128xf32>
    %358 = math.tanh %357 : vector<8x128xf32>
    %cst_187 = arith.constant 5.000000e-01 : f32
    %359 = vector.broadcast %cst_187 : f32 to vector<8x128xf32>
    %360 = arith.mulf %359, %358 : vector<8x128xf32>
    %cst_188 = arith.constant 5.000000e-01 : f32
    %361 = vector.broadcast %cst_188 : f32 to vector<8x128xf32>
    %362 = arith.addf %360, %361 : vector<8x128xf32>
    %363 = arith.mulf %352, %330 : vector<8x128xf32>
    %364 = arith.mulf %344, %354 : vector<8x128xf32>
    %365 = arith.addf %363, %364 : vector<8x128xf32>
    %366 = math.tanh %365 : vector<8x128xf32>
    %367 = arith.mulf %362, %366 : vector<8x128xf32>
    %c0_189 = arith.constant 0 : index
    %c0_190 = arith.constant 0 : index
    %c0_191 = arith.constant 0 : index
    %368 = vector.load %arg10[%c0_189, %c0_190, %c0_191] : memref<2x8x128xf32, #tpu.memory_space<vmem>>, vector<1x8x128xf32>
    %369 = vector.shape_cast %368 : vector<1x8x128xf32> to vector<8x128xf32>
    %370 = vector.shape_cast %365 : vector<8x128xf32> to vector<1x8x128xf32>
    tpu.vector_store %arg10[%c0_189, %c0_190, %c0_191], %370 {strides = array<i32>} : memref<2x8x128xf32, #tpu.memory_space<vmem>>, vector<1x8x128xf32>,
    %c0_192 = arith.constant 0 : index
    %c0_193 = arith.constant 0 : index
    %c0_194 = arith.constant 0 : index
    %371 = vector.load %arg9[%c0_192, %c0_193, %c0_194] : memref<2x8x128xf32, #tpu.memory_space<vmem>>, vector<1x8x128xf32>
    %372 = vector.shape_cast %371 : vector<1x8x128xf32> to vector<8x128xf32>
    %373 = vector.shape_cast %367 : vector<8x128xf32> to vector<1x8x128xf32>
    tpu.vector_store %arg9[%c0_192, %c0_193, %c0_194], %373 {strides = array<i32>} : memref<2x8x128xf32, #tpu.memory_space<vmem>>, vector<1x8x128xf32>,
    %374 = arith.truncf %367 : vector<8x128xf32> to vector<8x128xbf16>
    %375 = arith.index_cast %c6_i32 : i32 to index
    %c0_195 = arith.constant 0 : index
    %c0_196 = arith.constant 0 : index
    %376 = vector.load %arg11[%375, %c0_195, %c0_196] : memref<8x8x128xbf16, #tpu.memory_space<vmem>>, vector<1x8x128xbf16>
    %377 = vector.shape_cast %376 : vector<1x8x128xbf16> to vector<8x128xbf16>
    %378 = vector.shape_cast %374 : vector<8x128xbf16> to vector<1x8x128xbf16>
    tpu.vector_store %arg11[%375, %c0_195, %c0_196], %378 {strides = array<i32>} : memref<8x8x128xbf16, #tpu.memory_space<vmem>>, vector<1x8x128xbf16>,
    %c7_i32 = arith.constant 7 : i32
    %c0_197 = arith.constant 0 : index
    %c0_198 = arith.constant 0 : index
    %c0_199 = arith.constant 0 : index
    %379 = vector.load %arg9[%c0_197, %c0_198, %c0_199] : memref<2x8x128xf32, #tpu.memory_space<vmem>>, vector<1x8x128xf32>
    %380 = vector.shape_cast %379 : vector<1x8x128xf32> to vector<8x128xf32>
    %c0_200 = arith.constant 0 : index
    %c0_201 = arith.constant 0 : index
    %c0_202 = arith.constant 0 : index
    %381 = vector.load %arg10[%c0_200, %c0_201, %c0_202] : memref<2x8x128xf32, #tpu.memory_space<vmem>>, vector<1x8x128xf32>
    %382 = vector.shape_cast %381 : vector<1x8x128xf32> to vector<8x128xf32>
    %383 = arith.index_cast %c7_i32 : i32 to index
    %c0_203 = arith.constant 0 : index
    %c0_204 = arith.constant 0 : index
    %384 = vector.load %arg12[%383, %c0_203, %c0_204] : memref<8x8x512xf32, #tpu.memory_space<vmem>>, vector<1x8x512xf32>
    %385 = vector.shape_cast %384 : vector<1x8x512xf32> to vector<8x512xf32>
    %386 = arith.truncf %380 : vector<8x128xf32> to vector<8x128xbf16>
    %cst_205 = arith.constant dense<0.000000e+00> : vector<8x512xf32>
    %387 = tpu.matmul %386, %14, %cst_205 {dimension_numbers = #tpu.dot_dimension_numbers<[1], [0], [0], [1], [0, 0, 1, 1], [], []>} : vector<8x128xbf16>, vector<128x512xbf16>, vector<8x512xf32> -> vector<8x512xf32>
    %388 = arith.addf %385, %387 : vector<8x512xf32>
    %389 = vector.extract_strided_slice %388 {offsets = [0, 0], sizes = [8, 128], strides = [1, 1]} : vector<8x512xf32> to vector<8x128xf32>
    %cst_206 = arith.constant 5.000000e-01 : f32
    %390 = vector.broadcast %cst_206 : f32 to vector<8x128xf32>
    %391 = arith.mulf %390, %389 : vector<8x128xf32>
    %392 = math.tanh %391 : vector<8x128xf32>
    %cst_207 = arith.constant 5.000000e-01 : f32
    %393 = vector.broadcast %cst_207 : f32 to vector<8x128xf32>
    %394 = arith.mulf %393, %392 : vector<8x128xf32>
    %cst_208 = arith.constant 5.000000e-01 : f32
    %395 = vector.broadcast %cst_208 : f32 to vector<8x128xf32>
    %396 = arith.addf %394, %395 : vector<8x128xf32>
    %397 = vector.extract_strided_slice %388 {offsets = [0, 128], sizes = [8, 128], strides = [1, 1]} : vector<8x512xf32> to vector<8x128xf32>
    %cst_209 = arith.constant 5.000000e-01 : f32
    %398 = vector.broadcast %cst_209 : f32 to vector<8x128xf32>
    %399 = arith.mulf %398, %397 : vector<8x128xf32>
    %400 = math.tanh %399 : vector<8x128xf32>
    %cst_210 = arith.constant 5.000000e-01 : f32
    %401 = vector.broadcast %cst_210 : f32 to vector<8x128xf32>
    %402 = arith.mulf %401, %400 : vector<8x128xf32>
    %cst_211 = arith.constant 5.000000e-01 : f32
    %403 = vector.broadcast %cst_211 : f32 to vector<8x128xf32>
    %404 = arith.addf %402, %403 : vector<8x128xf32>
    %405 = vector.extract_strided_slice %388 {offsets = [0, 256], sizes = [8, 128], strides = [1, 1]} : vector<8x512xf32> to vector<8x128xf32>
    %406 = math.tanh %405 : vector<8x128xf32>
    %407 = vector.extract_strided_slice %388 {offsets = [0, 384], sizes = [8, 128], strides = [1, 1]} : vector<8x512xf32> to vector<8x128xf32>
    %cst_212 = arith.constant 5.000000e-01 : f32
    %408 = vector.broadcast %cst_212 : f32 to vector<8x128xf32>
    %409 = arith.mulf %408, %407 : vector<8x128xf32>
    %410 = math.tanh %409 : vector<8x128xf32>
    %cst_213 = arith.constant 5.000000e-01 : f32
    %411 = vector.broadcast %cst_213 : f32 to vector<8x128xf32>
    %412 = arith.mulf %411, %410 : vector<8x128xf32>
    %cst_214 = arith.constant 5.000000e-01 : f32
    %413 = vector.broadcast %cst_214 : f32 to vector<8x128xf32>
    %414 = arith.addf %412, %413 : vector<8x128xf32>
    %415 = arith.mulf %404, %382 : vector<8x128xf32>
    %416 = arith.mulf %396, %406 : vector<8x128xf32>
    %417 = arith.addf %415, %416 : vector<8x128xf32>
    %418 = math.tanh %417 : vector<8x128xf32>
    %419 = arith.mulf %414, %418 : vector<8x128xf32>
    %c0_215 = arith.constant 0 : index
    %c0_216 = arith.constant 0 : index
    %c0_217 = arith.constant 0 : index
    %420 = vector.load %arg10[%c0_215, %c0_216, %c0_217] : memref<2x8x128xf32, #tpu.memory_space<vmem>>, vector<1x8x128xf32>
    %421 = vector.shape_cast %420 : vector<1x8x128xf32> to vector<8x128xf32>
    %422 = vector.shape_cast %417 : vector<8x128xf32> to vector<1x8x128xf32>
    tpu.vector_store %arg10[%c0_215, %c0_216, %c0_217], %422 {strides = array<i32>} : memref<2x8x128xf32, #tpu.memory_space<vmem>>, vector<1x8x128xf32>,
    %c0_218 = arith.constant 0 : index
    %c0_219 = arith.constant 0 : index
    %c0_220 = arith.constant 0 : index
    %423 = vector.load %arg9[%c0_218, %c0_219, %c0_220] : memref<2x8x128xf32, #tpu.memory_space<vmem>>, vector<1x8x128xf32>
    %424 = vector.shape_cast %423 : vector<1x8x128xf32> to vector<8x128xf32>
    %425 = vector.shape_cast %419 : vector<8x128xf32> to vector<1x8x128xf32>
    tpu.vector_store %arg9[%c0_218, %c0_219, %c0_220], %425 {strides = array<i32>} : memref<2x8x128xf32, #tpu.memory_space<vmem>>, vector<1x8x128xf32>,
    %426 = arith.truncf %419 : vector<8x128xf32> to vector<8x128xbf16>
    %427 = arith.index_cast %c7_i32 : i32 to index
    %c0_221 = arith.constant 0 : index
    %c0_222 = arith.constant 0 : index
    %428 = vector.load %arg11[%427, %c0_221, %c0_222] : memref<8x8x128xbf16, #tpu.memory_space<vmem>>, vector<1x8x128xbf16>
    %429 = vector.shape_cast %428 : vector<1x8x128xbf16> to vector<8x128xbf16>
    %430 = vector.shape_cast %426 : vector<8x128xbf16> to vector<1x8x128xbf16>
    tpu.vector_store %arg11[%427, %c0_221, %c0_222], %430 {strides = array<i32>} : memref<8x8x128xbf16, #tpu.memory_space<vmem>>, vector<1x8x128xbf16>,
    %c8_i32 = arith.constant 8 : i32
    %c0_223 = arith.constant 0 : index
    %c0_224 = arith.constant 0 : index
    %c0_225 = arith.constant 0 : index
    %431 = vector.load %arg11[%c0_223, %c0_224, %c0_225] : memref<8x8x128xbf16, #tpu.memory_space<vmem>>, vector<8x8x128xbf16>
    %432 = vector.shape_cast %431 : vector<8x8x128xbf16> to vector<64x128xbf16>
    %c0_226 = arith.constant 0 : index
    %c0_227 = arith.constant 0 : index
    %c0_228 = arith.constant 0 : index
    %433 = vector.load %arg3[%c0_226, %c0_227, %c0_228] : memref<1x128x512xbf16, #tpu.memory_space<vmem>>, vector<1x128x512xbf16>
    %434 = vector.shape_cast %433 : vector<1x128x512xbf16> to vector<128x512xbf16>
    %cst_229 = arith.constant dense<0.000000e+00> : vector<64x512xf32>
    %435 = tpu.matmul %432, %434, %cst_229 {dimension_numbers = #tpu.dot_dimension_numbers<[1], [0], [0], [1], [0, 0, 1, 1], [], []>} : vector<64x128xbf16>, vector<128x512xbf16>, vector<64x512xf32> -> vector<64x512xf32>
    %c1 = arith.constant 1 : index
    %c0_230 = arith.constant 0 : index
    %c0_231 = arith.constant 0 : index
    %436 = vector.load %arg5[%c1, %c0_230, %c0_231] : memref<2x1x512xf32, #tpu.memory_space<vmem>>, vector<1x1x512xf32>
    %437 = vector.shape_cast %436 : vector<1x1x512xf32> to vector<1x512xf32>
    %438 = vector.broadcast %437 : vector<1x512xf32> to vector<64x512xf32>
    %439 = arith.addf %435, %438 : vector<64x512xf32>
    %440 = vector.shape_cast %439 : vector<64x512xf32> to vector<8x8x512xf32>
    %c0_232 = arith.constant 0 : index
    %c0_233 = arith.constant 0 : index
    %c0_234 = arith.constant 0 : index
    %441 = vector.load %arg12[%c0_232, %c0_233, %c0_234] : memref<8x8x512xf32, #tpu.memory_space<vmem>>, vector<8x8x512xf32>
    tpu.vector_store %arg12[%c0_232, %c0_233, %c0_234], %440 {strides = array<i32>} : memref<8x8x512xf32, #tpu.memory_space<vmem>>, vector<8x8x512xf32>,
    %c1_235 = arith.constant 1 : index
    %c0_236 = arith.constant 0 : index
    %c0_237 = arith.constant 0 : index
    %442 = vector.load %arg4[%c1_235, %c0_236, %c0_237] : memref<2x128x512xbf16, #tpu.memory_space<vmem>>, vector<1x128x512xbf16>
    %443 = vector.shape_cast %442 : vector<1x128x512xbf16> to vector<128x512xbf16>
    %c0_i32_238 = arith.constant 0 : i32
    %c1_239 = arith.constant 1 : index
    %c0_240 = arith.constant 0 : index
    %c0_241 = arith.constant 0 : index
    %444 = vector.load %arg9[%c1_239, %c0_240, %c0_241] : memref<2x8x128xf32, #tpu.memory_space<vmem>>, vector<1x8x128xf32>
    %445 = vector.shape_cast %444 : vector<1x8x128xf32> to vector<8x128xf32>
    %c1_242 = arith.constant 1 : index
    %c0_243 = arith.constant 0 : index
    %c0_244 = arith.constant 0 : index
    %446 = vector.load %arg10[%c1_242, %c0_243, %c0_244] : memref<2x8x128xf32, #tpu.memory_space<vmem>>, vector<1x8x128xf32>
    %447 = vector.shape_cast %446 : vector<1x8x128xf32> to vector<8x128xf32>
    %448 = arith.index_cast %c0_i32_238 : i32 to index
    %c0_245 = arith.constant 0 : index
    %c0_246 = arith.constant 0 : index
    %449 = vector.load %arg12[%448, %c0_245, %c0_246] : memref<8x8x512xf32, #tpu.memory_space<vmem>>, vector<1x8x512xf32>
    %450 = vector.shape_cast %449 : vector<1x8x512xf32> to vector<8x512xf32>
    %451 = arith.truncf %445 : vector<8x128xf32> to vector<8x128xbf16>
    %cst_247 = arith.constant dense<0.000000e+00> : vector<8x512xf32>
    %452 = tpu.matmul %451, %443, %cst_247 {dimension_numbers = #tpu.dot_dimension_numbers<[1], [0], [0], [1], [0, 0, 1, 1], [], []>} : vector<8x128xbf16>, vector<128x512xbf16>, vector<8x512xf32> -> vector<8x512xf32>
    %453 = arith.addf %450, %452 : vector<8x512xf32>
    %454 = vector.extract_strided_slice %453 {offsets = [0, 0], sizes = [8, 128], strides = [1, 1]} : vector<8x512xf32> to vector<8x128xf32>
    %cst_248 = arith.constant 5.000000e-01 : f32
    %455 = vector.broadcast %cst_248 : f32 to vector<8x128xf32>
    %456 = arith.mulf %455, %454 : vector<8x128xf32>
    %457 = math.tanh %456 : vector<8x128xf32>
    %cst_249 = arith.constant 5.000000e-01 : f32
    %458 = vector.broadcast %cst_249 : f32 to vector<8x128xf32>
    %459 = arith.mulf %458, %457 : vector<8x128xf32>
    %cst_250 = arith.constant 5.000000e-01 : f32
    %460 = vector.broadcast %cst_250 : f32 to vector<8x128xf32>
    %461 = arith.addf %459, %460 : vector<8x128xf32>
    %462 = vector.extract_strided_slice %453 {offsets = [0, 128], sizes = [8, 128], strides = [1, 1]} : vector<8x512xf32> to vector<8x128xf32>
    %cst_251 = arith.constant 5.000000e-01 : f32
    %463 = vector.broadcast %cst_251 : f32 to vector<8x128xf32>
    %464 = arith.mulf %463, %462 : vector<8x128xf32>
    %465 = math.tanh %464 : vector<8x128xf32>
    %cst_252 = arith.constant 5.000000e-01 : f32
    %466 = vector.broadcast %cst_252 : f32 to vector<8x128xf32>
    %467 = arith.mulf %466, %465 : vector<8x128xf32>
    %cst_253 = arith.constant 5.000000e-01 : f32
    %468 = vector.broadcast %cst_253 : f32 to vector<8x128xf32>
    %469 = arith.addf %467, %468 : vector<8x128xf32>
    %470 = vector.extract_strided_slice %453 {offsets = [0, 256], sizes = [8, 128], strides = [1, 1]} : vector<8x512xf32> to vector<8x128xf32>
    %471 = math.tanh %470 : vector<8x128xf32>
    %472 = vector.extract_strided_slice %453 {offsets = [0, 384], sizes = [8, 128], strides = [1, 1]} : vector<8x512xf32> to vector<8x128xf32>
    %cst_254 = arith.constant 5.000000e-01 : f32
    %473 = vector.broadcast %cst_254 : f32 to vector<8x128xf32>
    %474 = arith.mulf %473, %472 : vector<8x128xf32>
    %475 = math.tanh %474 : vector<8x128xf32>
    %cst_255 = arith.constant 5.000000e-01 : f32
    %476 = vector.broadcast %cst_255 : f32 to vector<8x128xf32>
    %477 = arith.mulf %476, %475 : vector<8x128xf32>
    %cst_256 = arith.constant 5.000000e-01 : f32
    %478 = vector.broadcast %cst_256 : f32 to vector<8x128xf32>
    %479 = arith.addf %477, %478 : vector<8x128xf32>
    %480 = arith.mulf %469, %447 : vector<8x128xf32>
    %481 = arith.mulf %461, %471 : vector<8x128xf32>
    %482 = arith.addf %480, %481 : vector<8x128xf32>
    %483 = math.tanh %482 : vector<8x128xf32>
    %484 = arith.mulf %479, %483 : vector<8x128xf32>
    %c1_257 = arith.constant 1 : index
    %c0_258 = arith.constant 0 : index
    %c0_259 = arith.constant 0 : index
    %485 = vector.load %arg10[%c1_257, %c0_258, %c0_259] : memref<2x8x128xf32, #tpu.memory_space<vmem>>, vector<1x8x128xf32>
    %486 = vector.shape_cast %485 : vector<1x8x128xf32> to vector<8x128xf32>
    %487 = vector.shape_cast %482 : vector<8x128xf32> to vector<1x8x128xf32>
    tpu.vector_store %arg10[%c1_257, %c0_258, %c0_259], %487 {strides = array<i32>} : memref<2x8x128xf32, #tpu.memory_space<vmem>>, vector<1x8x128xf32>,
    %c1_260 = arith.constant 1 : index
    %c0_261 = arith.constant 0 : index
    %c0_262 = arith.constant 0 : index
    %488 = vector.load %arg9[%c1_260, %c0_261, %c0_262] : memref<2x8x128xf32, #tpu.memory_space<vmem>>, vector<1x8x128xf32>
    %489 = vector.shape_cast %488 : vector<1x8x128xf32> to vector<8x128xf32>
    %490 = vector.shape_cast %484 : vector<8x128xf32> to vector<1x8x128xf32>
    tpu.vector_store %arg9[%c1_260, %c0_261, %c0_262], %490 {strides = array<i32>} : memref<2x8x128xf32, #tpu.memory_space<vmem>>, vector<1x8x128xf32>,
    %c1_i32_263 = arith.constant 1 : i32
    %c1_264 = arith.constant 1 : index
    %c0_265 = arith.constant 0 : index
    %c0_266 = arith.constant 0 : index
    %491 = vector.load %arg9[%c1_264, %c0_265, %c0_266] : memref<2x8x128xf32, #tpu.memory_space<vmem>>, vector<1x8x128xf32>
    %492 = vector.shape_cast %491 : vector<1x8x128xf32> to vector<8x128xf32>
    %c1_267 = arith.constant 1 : index
    %c0_268 = arith.constant 0 : index
    %c0_269 = arith.constant 0 : index
    %493 = vector.load %arg10[%c1_267, %c0_268, %c0_269] : memref<2x8x128xf32, #tpu.memory_space<vmem>>, vector<1x8x128xf32>
    %494 = vector.shape_cast %493 : vector<1x8x128xf32> to vector<8x128xf32>
    %495 = arith.index_cast %c1_i32_263 : i32 to index
    %c0_270 = arith.constant 0 : index
    %c0_271 = arith.constant 0 : index
    %496 = vector.load %arg12[%495, %c0_270, %c0_271] : memref<8x8x512xf32, #tpu.memory_space<vmem>>, vector<1x8x512xf32>
    %497 = vector.shape_cast %496 : vector<1x8x512xf32> to vector<8x512xf32>
    %498 = arith.truncf %492 : vector<8x128xf32> to vector<8x128xbf16>
    %cst_272 = arith.constant dense<0.000000e+00> : vector<8x512xf32>
    %499 = tpu.matmul %498, %443, %cst_272 {dimension_numbers = #tpu.dot_dimension_numbers<[1], [0], [0], [1], [0, 0, 1, 1], [], []>} : vector<8x128xbf16>, vector<128x512xbf16>, vector<8x512xf32> -> vector<8x512xf32>
    %500 = arith.addf %497, %499 : vector<8x512xf32>
    %501 = vector.extract_strided_slice %500 {offsets = [0, 0], sizes = [8, 128], strides = [1, 1]} : vector<8x512xf32> to vector<8x128xf32>
    %cst_273 = arith.constant 5.000000e-01 : f32
    %502 = vector.broadcast %cst_273 : f32 to vector<8x128xf32>
    %503 = arith.mulf %502, %501 : vector<8x128xf32>
    %504 = math.tanh %503 : vector<8x128xf32>
    %cst_274 = arith.constant 5.000000e-01 : f32
    %505 = vector.broadcast %cst_274 : f32 to vector<8x128xf32>
    %506 = arith.mulf %505, %504 : vector<8x128xf32>
    %cst_275 = arith.constant 5.000000e-01 : f32
    %507 = vector.broadcast %cst_275 : f32 to vector<8x128xf32>
    %508 = arith.addf %506, %507 : vector<8x128xf32>
    %509 = vector.extract_strided_slice %500 {offsets = [0, 128], sizes = [8, 128], strides = [1, 1]} : vector<8x512xf32> to vector<8x128xf32>
    %cst_276 = arith.constant 5.000000e-01 : f32
    %510 = vector.broadcast %cst_276 : f32 to vector<8x128xf32>
    %511 = arith.mulf %510, %509 : vector<8x128xf32>
    %512 = math.tanh %511 : vector<8x128xf32>
    %cst_277 = arith.constant 5.000000e-01 : f32
    %513 = vector.broadcast %cst_277 : f32 to vector<8x128xf32>
    %514 = arith.mulf %513, %512 : vector<8x128xf32>
    %cst_278 = arith.constant 5.000000e-01 : f32
    %515 = vector.broadcast %cst_278 : f32 to vector<8x128xf32>
    %516 = arith.addf %514, %515 : vector<8x128xf32>
    %517 = vector.extract_strided_slice %500 {offsets = [0, 256], sizes = [8, 128], strides = [1, 1]} : vector<8x512xf32> to vector<8x128xf32>
    %518 = math.tanh %517 : vector<8x128xf32>
    %519 = vector.extract_strided_slice %500 {offsets = [0, 384], sizes = [8, 128], strides = [1, 1]} : vector<8x512xf32> to vector<8x128xf32>
    %cst_279 = arith.constant 5.000000e-01 : f32
    %520 = vector.broadcast %cst_279 : f32 to vector<8x128xf32>
    %521 = arith.mulf %520, %519 : vector<8x128xf32>
    %522 = math.tanh %521 : vector<8x128xf32>
    %cst_280 = arith.constant 5.000000e-01 : f32
    %523 = vector.broadcast %cst_280 : f32 to vector<8x128xf32>
    %524 = arith.mulf %523, %522 : vector<8x128xf32>
    %cst_281 = arith.constant 5.000000e-01 : f32
    %525 = vector.broadcast %cst_281 : f32 to vector<8x128xf32>
    %526 = arith.addf %524, %525 : vector<8x128xf32>
    %527 = arith.mulf %516, %494 : vector<8x128xf32>
    %528 = arith.mulf %508, %518 : vector<8x128xf32>
    %529 = arith.addf %527, %528 : vector<8x128xf32>
    %530 = math.tanh %529 : vector<8x128xf32>
    %531 = arith.mulf %526, %530 : vector<8x128xf32>
    %c1_282 = arith.constant 1 : index
    %c0_283 = arith.constant 0 : index
    %c0_284 = arith.constant 0 : index
    %532 = vector.load %arg10[%c1_282, %c0_283, %c0_284] : memref<2x8x128xf32, #tpu.memory_space<vmem>>, vector<1x8x128xf32>
    %533 = vector.shape_cast %532 : vector<1x8x128xf32> to vector<8x128xf32>
    %534 = vector.shape_cast %529 : vector<8x128xf32> to vector<1x8x128xf32>
    tpu.vector_store %arg10[%c1_282, %c0_283, %c0_284], %534 {strides = array<i32>} : memref<2x8x128xf32, #tpu.memory_space<vmem>>, vector<1x8x128xf32>,
    %c1_285 = arith.constant 1 : index
    %c0_286 = arith.constant 0 : index
    %c0_287 = arith.constant 0 : index
    %535 = vector.load %arg9[%c1_285, %c0_286, %c0_287] : memref<2x8x128xf32, #tpu.memory_space<vmem>>, vector<1x8x128xf32>
    %536 = vector.shape_cast %535 : vector<1x8x128xf32> to vector<8x128xf32>
    %537 = vector.shape_cast %531 : vector<8x128xf32> to vector<1x8x128xf32>
    tpu.vector_store %arg9[%c1_285, %c0_286, %c0_287], %537 {strides = array<i32>} : memref<2x8x128xf32, #tpu.memory_space<vmem>>, vector<1x8x128xf32>,
    %c2_i32_288 = arith.constant 2 : i32
    %c1_289 = arith.constant 1 : index
    %c0_290 = arith.constant 0 : index
    %c0_291 = arith.constant 0 : index
    %538 = vector.load %arg9[%c1_289, %c0_290, %c0_291] : memref<2x8x128xf32, #tpu.memory_space<vmem>>, vector<1x8x128xf32>
    %539 = vector.shape_cast %538 : vector<1x8x128xf32> to vector<8x128xf32>
    %c1_292 = arith.constant 1 : index
    %c0_293 = arith.constant 0 : index
    %c0_294 = arith.constant 0 : index
    %540 = vector.load %arg10[%c1_292, %c0_293, %c0_294] : memref<2x8x128xf32, #tpu.memory_space<vmem>>, vector<1x8x128xf32>
    %541 = vector.shape_cast %540 : vector<1x8x128xf32> to vector<8x128xf32>
    %542 = arith.index_cast %c2_i32_288 : i32 to index
    %c0_295 = arith.constant 0 : index
    %c0_296 = arith.constant 0 : index
    %543 = vector.load %arg12[%542, %c0_295, %c0_296] : memref<8x8x512xf32, #tpu.memory_space<vmem>>, vector<1x8x512xf32>
    %544 = vector.shape_cast %543 : vector<1x8x512xf32> to vector<8x512xf32>
    %545 = arith.truncf %539 : vector<8x128xf32> to vector<8x128xbf16>
    %cst_297 = arith.constant dense<0.000000e+00> : vector<8x512xf32>
    %546 = tpu.matmul %545, %443, %cst_297 {dimension_numbers = #tpu.dot_dimension_numbers<[1], [0], [0], [1], [0, 0, 1, 1], [], []>} : vector<8x128xbf16>, vector<128x512xbf16>, vector<8x512xf32> -> vector<8x512xf32>
    %547 = arith.addf %544, %546 : vector<8x512xf32>
    %548 = vector.extract_strided_slice %547 {offsets = [0, 0], sizes = [8, 128], strides = [1, 1]} : vector<8x512xf32> to vector<8x128xf32>
    %cst_298 = arith.constant 5.000000e-01 : f32
    %549 = vector.broadcast %cst_298 : f32 to vector<8x128xf32>
    %550 = arith.mulf %549, %548 : vector<8x128xf32>
    %551 = math.tanh %550 : vector<8x128xf32>
    %cst_299 = arith.constant 5.000000e-01 : f32
    %552 = vector.broadcast %cst_299 : f32 to vector<8x128xf32>
    %553 = arith.mulf %552, %551 : vector<8x128xf32>
    %cst_300 = arith.constant 5.000000e-01 : f32
    %554 = vector.broadcast %cst_300 : f32 to vector<8x128xf32>
    %555 = arith.addf %553, %554 : vector<8x128xf32>
    %556 = vector.extract_strided_slice %547 {offsets = [0, 128], sizes = [8, 128], strides = [1, 1]} : vector<8x512xf32> to vector<8x128xf32>
    %cst_301 = arith.constant 5.000000e-01 : f32
    %557 = vector.broadcast %cst_301 : f32 to vector<8x128xf32>
    %558 = arith.mulf %557, %556 : vector<8x128xf32>
    %559 = math.tanh %558 : vector<8x128xf32>
    %cst_302 = arith.constant 5.000000e-01 : f32
    %560 = vector.broadcast %cst_302 : f32 to vector<8x128xf32>
    %561 = arith.mulf %560, %559 : vector<8x128xf32>
    %cst_303 = arith.constant 5.000000e-01 : f32
    %562 = vector.broadcast %cst_303 : f32 to vector<8x128xf32>
    %563 = arith.addf %561, %562 : vector<8x128xf32>
    %564 = vector.extract_strided_slice %547 {offsets = [0, 256], sizes = [8, 128], strides = [1, 1]} : vector<8x512xf32> to vector<8x128xf32>
    %565 = math.tanh %564 : vector<8x128xf32>
    %566 = vector.extract_strided_slice %547 {offsets = [0, 384], sizes = [8, 128], strides = [1, 1]} : vector<8x512xf32> to vector<8x128xf32>
    %cst_304 = arith.constant 5.000000e-01 : f32
    %567 = vector.broadcast %cst_304 : f32 to vector<8x128xf32>
    %568 = arith.mulf %567, %566 : vector<8x128xf32>
    %569 = math.tanh %568 : vector<8x128xf32>
    %cst_305 = arith.constant 5.000000e-01 : f32
    %570 = vector.broadcast %cst_305 : f32 to vector<8x128xf32>
    %571 = arith.mulf %570, %569 : vector<8x128xf32>
    %cst_306 = arith.constant 5.000000e-01 : f32
    %572 = vector.broadcast %cst_306 : f32 to vector<8x128xf32>
    %573 = arith.addf %571, %572 : vector<8x128xf32>
    %574 = arith.mulf %563, %541 : vector<8x128xf32>
    %575 = arith.mulf %555, %565 : vector<8x128xf32>
    %576 = arith.addf %574, %575 : vector<8x128xf32>
    %577 = math.tanh %576 : vector<8x128xf32>
    %578 = arith.mulf %573, %577 : vector<8x128xf32>
    %c1_307 = arith.constant 1 : index
    %c0_308 = arith.constant 0 : index
    %c0_309 = arith.constant 0 : index
    %579 = vector.load %arg10[%c1_307, %c0_308, %c0_309] : memref<2x8x128xf32, #tpu.memory_space<vmem>>, vector<1x8x128xf32>
    %580 = vector.shape_cast %579 : vector<1x8x128xf32> to vector<8x128xf32>
    %581 = vector.shape_cast %576 : vector<8x128xf32> to vector<1x8x128xf32>
    tpu.vector_store %arg10[%c1_307, %c0_308, %c0_309], %581 {strides = array<i32>} : memref<2x8x128xf32, #tpu.memory_space<vmem>>, vector<1x8x128xf32>,
    %c1_310 = arith.constant 1 : index
    %c0_311 = arith.constant 0 : index
    %c0_312 = arith.constant 0 : index
    %582 = vector.load %arg9[%c1_310, %c0_311, %c0_312] : memref<2x8x128xf32, #tpu.memory_space<vmem>>, vector<1x8x128xf32>
    %583 = vector.shape_cast %582 : vector<1x8x128xf32> to vector<8x128xf32>
    %584 = vector.shape_cast %578 : vector<8x128xf32> to vector<1x8x128xf32>
    tpu.vector_store %arg9[%c1_310, %c0_311, %c0_312], %584 {strides = array<i32>} : memref<2x8x128xf32, #tpu.memory_space<vmem>>, vector<1x8x128xf32>,
    %c3_i32_313 = arith.constant 3 : i32
    %c1_314 = arith.constant 1 : index
    %c0_315 = arith.constant 0 : index
    %c0_316 = arith.constant 0 : index
    %585 = vector.load %arg9[%c1_314, %c0_315, %c0_316] : memref<2x8x128xf32, #tpu.memory_space<vmem>>, vector<1x8x128xf32>
    %586 = vector.shape_cast %585 : vector<1x8x128xf32> to vector<8x128xf32>
    %c1_317 = arith.constant 1 : index
    %c0_318 = arith.constant 0 : index
    %c0_319 = arith.constant 0 : index
    %587 = vector.load %arg10[%c1_317, %c0_318, %c0_319] : memref<2x8x128xf32, #tpu.memory_space<vmem>>, vector<1x8x128xf32>
    %588 = vector.shape_cast %587 : vector<1x8x128xf32> to vector<8x128xf32>
    %589 = arith.index_cast %c3_i32_313 : i32 to index
    %c0_320 = arith.constant 0 : index
    %c0_321 = arith.constant 0 : index
    %590 = vector.load %arg12[%589, %c0_320, %c0_321] : memref<8x8x512xf32, #tpu.memory_space<vmem>>, vector<1x8x512xf32>
    %591 = vector.shape_cast %590 : vector<1x8x512xf32> to vector<8x512xf32>
    %592 = arith.truncf %586 : vector<8x128xf32> to vector<8x128xbf16>
    %cst_322 = arith.constant dense<0.000000e+00> : vector<8x512xf32>
    %593 = tpu.matmul %592, %443, %cst_322 {dimension_numbers = #tpu.dot_dimension_numbers<[1], [0], [0], [1], [0, 0, 1, 1], [], []>} : vector<8x128xbf16>, vector<128x512xbf16>, vector<8x512xf32> -> vector<8x512xf32>
    %594 = arith.addf %591, %593 : vector<8x512xf32>
    %595 = vector.extract_strided_slice %594 {offsets = [0, 0], sizes = [8, 128], strides = [1, 1]} : vector<8x512xf32> to vector<8x128xf32>
    %cst_323 = arith.constant 5.000000e-01 : f32
    %596 = vector.broadcast %cst_323 : f32 to vector<8x128xf32>
    %597 = arith.mulf %596, %595 : vector<8x128xf32>
    %598 = math.tanh %597 : vector<8x128xf32>
    %cst_324 = arith.constant 5.000000e-01 : f32
    %599 = vector.broadcast %cst_324 : f32 to vector<8x128xf32>
    %600 = arith.mulf %599, %598 : vector<8x128xf32>
    %cst_325 = arith.constant 5.000000e-01 : f32
    %601 = vector.broadcast %cst_325 : f32 to vector<8x128xf32>
    %602 = arith.addf %600, %601 : vector<8x128xf32>
    %603 = vector.extract_strided_slice %594 {offsets = [0, 128], sizes = [8, 128], strides = [1, 1]} : vector<8x512xf32> to vector<8x128xf32>
    %cst_326 = arith.constant 5.000000e-01 : f32
    %604 = vector.broadcast %cst_326 : f32 to vector<8x128xf32>
    %605 = arith.mulf %604, %603 : vector<8x128xf32>
    %606 = math.tanh %605 : vector<8x128xf32>
    %cst_327 = arith.constant 5.000000e-01 : f32
    %607 = vector.broadcast %cst_327 : f32 to vector<8x128xf32>
    %608 = arith.mulf %607, %606 : vector<8x128xf32>
    %cst_328 = arith.constant 5.000000e-01 : f32
    %609 = vector.broadcast %cst_328 : f32 to vector<8x128xf32>
    %610 = arith.addf %608, %609 : vector<8x128xf32>
    %611 = vector.extract_strided_slice %594 {offsets = [0, 256], sizes = [8, 128], strides = [1, 1]} : vector<8x512xf32> to vector<8x128xf32>
    %612 = math.tanh %611 : vector<8x128xf32>
    %613 = vector.extract_strided_slice %594 {offsets = [0, 384], sizes = [8, 128], strides = [1, 1]} : vector<8x512xf32> to vector<8x128xf32>
    %cst_329 = arith.constant 5.000000e-01 : f32
    %614 = vector.broadcast %cst_329 : f32 to vector<8x128xf32>
    %615 = arith.mulf %614, %613 : vector<8x128xf32>
    %616 = math.tanh %615 : vector<8x128xf32>
    %cst_330 = arith.constant 5.000000e-01 : f32
    %617 = vector.broadcast %cst_330 : f32 to vector<8x128xf32>
    %618 = arith.mulf %617, %616 : vector<8x128xf32>
    %cst_331 = arith.constant 5.000000e-01 : f32
    %619 = vector.broadcast %cst_331 : f32 to vector<8x128xf32>
    %620 = arith.addf %618, %619 : vector<8x128xf32>
    %621 = arith.mulf %610, %588 : vector<8x128xf32>
    %622 = arith.mulf %602, %612 : vector<8x128xf32>
    %623 = arith.addf %621, %622 : vector<8x128xf32>
    %624 = math.tanh %623 : vector<8x128xf32>
    %625 = arith.mulf %620, %624 : vector<8x128xf32>
    %c1_332 = arith.constant 1 : index
    %c0_333 = arith.constant 0 : index
    %c0_334 = arith.constant 0 : index
    %626 = vector.load %arg10[%c1_332, %c0_333, %c0_334] : memref<2x8x128xf32, #tpu.memory_space<vmem>>, vector<1x8x128xf32>
    %627 = vector.shape_cast %626 : vector<1x8x128xf32> to vector<8x128xf32>
    %628 = vector.shape_cast %623 : vector<8x128xf32> to vector<1x8x128xf32>
    tpu.vector_store %arg10[%c1_332, %c0_333, %c0_334], %628 {strides = array<i32>} : memref<2x8x128xf32, #tpu.memory_space<vmem>>, vector<1x8x128xf32>,
    %c1_335 = arith.constant 1 : index
    %c0_336 = arith.constant 0 : index
    %c0_337 = arith.constant 0 : index
    %629 = vector.load %arg9[%c1_335, %c0_336, %c0_337] : memref<2x8x128xf32, #tpu.memory_space<vmem>>, vector<1x8x128xf32>
    %630 = vector.shape_cast %629 : vector<1x8x128xf32> to vector<8x128xf32>
    %631 = vector.shape_cast %625 : vector<8x128xf32> to vector<1x8x128xf32>
    tpu.vector_store %arg9[%c1_335, %c0_336, %c0_337], %631 {strides = array<i32>} : memref<2x8x128xf32, #tpu.memory_space<vmem>>, vector<1x8x128xf32>,
    %c4_i32_338 = arith.constant 4 : i32
    %c1_339 = arith.constant 1 : index
    %c0_340 = arith.constant 0 : index
    %c0_341 = arith.constant 0 : index
    %632 = vector.load %arg9[%c1_339, %c0_340, %c0_341] : memref<2x8x128xf32, #tpu.memory_space<vmem>>, vector<1x8x128xf32>
    %633 = vector.shape_cast %632 : vector<1x8x128xf32> to vector<8x128xf32>
    %c1_342 = arith.constant 1 : index
    %c0_343 = arith.constant 0 : index
    %c0_344 = arith.constant 0 : index
    %634 = vector.load %arg10[%c1_342, %c0_343, %c0_344] : memref<2x8x128xf32, #tpu.memory_space<vmem>>, vector<1x8x128xf32>
    %635 = vector.shape_cast %634 : vector<1x8x128xf32> to vector<8x128xf32>
    %636 = arith.index_cast %c4_i32_338 : i32 to index
    %c0_345 = arith.constant 0 : index
    %c0_346 = arith.constant 0 : index
    %637 = vector.load %arg12[%636, %c0_345, %c0_346] : memref<8x8x512xf32, #tpu.memory_space<vmem>>, vector<1x8x512xf32>
    %638 = vector.shape_cast %637 : vector<1x8x512xf32> to vector<8x512xf32>
    %639 = arith.truncf %633 : vector<8x128xf32> to vector<8x128xbf16>
    %cst_347 = arith.constant dense<0.000000e+00> : vector<8x512xf32>
    %640 = tpu.matmul %639, %443, %cst_347 {dimension_numbers = #tpu.dot_dimension_numbers<[1], [0], [0], [1], [0, 0, 1, 1], [], []>} : vector<8x128xbf16>, vector<128x512xbf16>, vector<8x512xf32> -> vector<8x512xf32>
    %641 = arith.addf %638, %640 : vector<8x512xf32>
    %642 = vector.extract_strided_slice %641 {offsets = [0, 0], sizes = [8, 128], strides = [1, 1]} : vector<8x512xf32> to vector<8x128xf32>
    %cst_348 = arith.constant 5.000000e-01 : f32
    %643 = vector.broadcast %cst_348 : f32 to vector<8x128xf32>
    %644 = arith.mulf %643, %642 : vector<8x128xf32>
    %645 = math.tanh %644 : vector<8x128xf32>
    %cst_349 = arith.constant 5.000000e-01 : f32
    %646 = vector.broadcast %cst_349 : f32 to vector<8x128xf32>
    %647 = arith.mulf %646, %645 : vector<8x128xf32>
    %cst_350 = arith.constant 5.000000e-01 : f32
    %648 = vector.broadcast %cst_350 : f32 to vector<8x128xf32>
    %649 = arith.addf %647, %648 : vector<8x128xf32>
    %650 = vector.extract_strided_slice %641 {offsets = [0, 128], sizes = [8, 128], strides = [1, 1]} : vector<8x512xf32> to vector<8x128xf32>
    %cst_351 = arith.constant 5.000000e-01 : f32
    %651 = vector.broadcast %cst_351 : f32 to vector<8x128xf32>
    %652 = arith.mulf %651, %650 : vector<8x128xf32>
    %653 = math.tanh %652 : vector<8x128xf32>
    %cst_352 = arith.constant 5.000000e-01 : f32
    %654 = vector.broadcast %cst_352 : f32 to vector<8x128xf32>
    %655 = arith.mulf %654, %653 : vector<8x128xf32>
    %cst_353 = arith.constant 5.000000e-01 : f32
    %656 = vector.broadcast %cst_353 : f32 to vector<8x128xf32>
    %657 = arith.addf %655, %656 : vector<8x128xf32>
    %658 = vector.extract_strided_slice %641 {offsets = [0, 256], sizes = [8, 128], strides = [1, 1]} : vector<8x512xf32> to vector<8x128xf32>
    %659 = math.tanh %658 : vector<8x128xf32>
    %660 = vector.extract_strided_slice %641 {offsets = [0, 384], sizes = [8, 128], strides = [1, 1]} : vector<8x512xf32> to vector<8x128xf32>
    %cst_354 = arith.constant 5.000000e-01 : f32
    %661 = vector.broadcast %cst_354 : f32 to vector<8x128xf32>
    %662 = arith.mulf %661, %660 : vector<8x128xf32>
    %663 = math.tanh %662 : vector<8x128xf32>
    %cst_355 = arith.constant 5.000000e-01 : f32
    %664 = vector.broadcast %cst_355 : f32 to vector<8x128xf32>
    %665 = arith.mulf %664, %663 : vector<8x128xf32>
    %cst_356 = arith.constant 5.000000e-01 : f32
    %666 = vector.broadcast %cst_356 : f32 to vector<8x128xf32>
    %667 = arith.addf %665, %666 : vector<8x128xf32>
    %668 = arith.mulf %657, %635 : vector<8x128xf32>
    %669 = arith.mulf %649, %659 : vector<8x128xf32>
    %670 = arith.addf %668, %669 : vector<8x128xf32>
    %671 = math.tanh %670 : vector<8x128xf32>
    %672 = arith.mulf %667, %671 : vector<8x128xf32>
    %c1_357 = arith.constant 1 : index
    %c0_358 = arith.constant 0 : index
    %c0_359 = arith.constant 0 : index
    %673 = vector.load %arg10[%c1_357, %c0_358, %c0_359] : memref<2x8x128xf32, #tpu.memory_space<vmem>>, vector<1x8x128xf32>
    %674 = vector.shape_cast %673 : vector<1x8x128xf32> to vector<8x128xf32>
    %675 = vector.shape_cast %670 : vector<8x128xf32> to vector<1x8x128xf32>
    tpu.vector_store %arg10[%c1_357, %c0_358, %c0_359], %675 {strides = array<i32>} : memref<2x8x128xf32, #tpu.memory_space<vmem>>, vector<1x8x128xf32>,
    %c1_360 = arith.constant 1 : index
    %c0_361 = arith.constant 0 : index
    %c0_362 = arith.constant 0 : index
    %676 = vector.load %arg9[%c1_360, %c0_361, %c0_362] : memref<2x8x128xf32, #tpu.memory_space<vmem>>, vector<1x8x128xf32>
    %677 = vector.shape_cast %676 : vector<1x8x128xf32> to vector<8x128xf32>
    %678 = vector.shape_cast %672 : vector<8x128xf32> to vector<1x8x128xf32>
    tpu.vector_store %arg9[%c1_360, %c0_361, %c0_362], %678 {strides = array<i32>} : memref<2x8x128xf32, #tpu.memory_space<vmem>>, vector<1x8x128xf32>,
    %c5_i32_363 = arith.constant 5 : i32
    %c1_364 = arith.constant 1 : index
    %c0_365 = arith.constant 0 : index
    %c0_366 = arith.constant 0 : index
    %679 = vector.load %arg9[%c1_364, %c0_365, %c0_366] : memref<2x8x128xf32, #tpu.memory_space<vmem>>, vector<1x8x128xf32>
    %680 = vector.shape_cast %679 : vector<1x8x128xf32> to vector<8x128xf32>
    %c1_367 = arith.constant 1 : index
    %c0_368 = arith.constant 0 : index
    %c0_369 = arith.constant 0 : index
    %681 = vector.load %arg10[%c1_367, %c0_368, %c0_369] : memref<2x8x128xf32, #tpu.memory_space<vmem>>, vector<1x8x128xf32>
    %682 = vector.shape_cast %681 : vector<1x8x128xf32> to vector<8x128xf32>
    %683 = arith.index_cast %c5_i32_363 : i32 to index
    %c0_370 = arith.constant 0 : index
    %c0_371 = arith.constant 0 : index
    %684 = vector.load %arg12[%683, %c0_370, %c0_371] : memref<8x8x512xf32, #tpu.memory_space<vmem>>, vector<1x8x512xf32>
    %685 = vector.shape_cast %684 : vector<1x8x512xf32> to vector<8x512xf32>
    %686 = arith.truncf %680 : vector<8x128xf32> to vector<8x128xbf16>
    %cst_372 = arith.constant dense<0.000000e+00> : vector<8x512xf32>
    %687 = tpu.matmul %686, %443, %cst_372 {dimension_numbers = #tpu.dot_dimension_numbers<[1], [0], [0], [1], [0, 0, 1, 1], [], []>} : vector<8x128xbf16>, vector<128x512xbf16>, vector<8x512xf32> -> vector<8x512xf32>
    %688 = arith.addf %685, %687 : vector<8x512xf32>
    %689 = vector.extract_strided_slice %688 {offsets = [0, 0], sizes = [8, 128], strides = [1, 1]} : vector<8x512xf32> to vector<8x128xf32>
    %cst_373 = arith.constant 5.000000e-01 : f32
    %690 = vector.broadcast %cst_373 : f32 to vector<8x128xf32>
    %691 = arith.mulf %690, %689 : vector<8x128xf32>
    %692 = math.tanh %691 : vector<8x128xf32>
    %cst_374 = arith.constant 5.000000e-01 : f32
    %693 = vector.broadcast %cst_374 : f32 to vector<8x128xf32>
    %694 = arith.mulf %693, %692 : vector<8x128xf32>
    %cst_375 = arith.constant 5.000000e-01 : f32
    %695 = vector.broadcast %cst_375 : f32 to vector<8x128xf32>
    %696 = arith.addf %694, %695 : vector<8x128xf32>
    %697 = vector.extract_strided_slice %688 {offsets = [0, 128], sizes = [8, 128], strides = [1, 1]} : vector<8x512xf32> to vector<8x128xf32>
    %cst_376 = arith.constant 5.000000e-01 : f32
    %698 = vector.broadcast %cst_376 : f32 to vector<8x128xf32>
    %699 = arith.mulf %698, %697 : vector<8x128xf32>
    %700 = math.tanh %699 : vector<8x128xf32>
    %cst_377 = arith.constant 5.000000e-01 : f32
    %701 = vector.broadcast %cst_377 : f32 to vector<8x128xf32>
    %702 = arith.mulf %701, %700 : vector<8x128xf32>
    %cst_378 = arith.constant 5.000000e-01 : f32
    %703 = vector.broadcast %cst_378 : f32 to vector<8x128xf32>
    %704 = arith.addf %702, %703 : vector<8x128xf32>
    %705 = vector.extract_strided_slice %688 {offsets = [0, 256], sizes = [8, 128], strides = [1, 1]} : vector<8x512xf32> to vector<8x128xf32>
    %706 = math.tanh %705 : vector<8x128xf32>
    %707 = vector.extract_strided_slice %688 {offsets = [0, 384], sizes = [8, 128], strides = [1, 1]} : vector<8x512xf32> to vector<8x128xf32>
    %cst_379 = arith.constant 5.000000e-01 : f32
    %708 = vector.broadcast %cst_379 : f32 to vector<8x128xf32>
    %709 = arith.mulf %708, %707 : vector<8x128xf32>
    %710 = math.tanh %709 : vector<8x128xf32>
    %cst_380 = arith.constant 5.000000e-01 : f32
    %711 = vector.broadcast %cst_380 : f32 to vector<8x128xf32>
    %712 = arith.mulf %711, %710 : vector<8x128xf32>
    %cst_381 = arith.constant 5.000000e-01 : f32
    %713 = vector.broadcast %cst_381 : f32 to vector<8x128xf32>
    %714 = arith.addf %712, %713 : vector<8x128xf32>
    %715 = arith.mulf %704, %682 : vector<8x128xf32>
    %716 = arith.mulf %696, %706 : vector<8x128xf32>
    %717 = arith.addf %715, %716 : vector<8x128xf32>
    %718 = math.tanh %717 : vector<8x128xf32>
    %719 = arith.mulf %714, %718 : vector<8x128xf32>
    %c1_382 = arith.constant 1 : index
    %c0_383 = arith.constant 0 : index
    %c0_384 = arith.constant 0 : index
    %720 = vector.load %arg10[%c1_382, %c0_383, %c0_384] : memref<2x8x128xf32, #tpu.memory_space<vmem>>, vector<1x8x128xf32>
    %721 = vector.shape_cast %720 : vector<1x8x128xf32> to vector<8x128xf32>
    %722 = vector.shape_cast %717 : vector<8x128xf32> to vector<1x8x128xf32>
    tpu.vector_store %arg10[%c1_382, %c0_383, %c0_384], %722 {strides = array<i32>} : memref<2x8x128xf32, #tpu.memory_space<vmem>>, vector<1x8x128xf32>,
    %c1_385 = arith.constant 1 : index
    %c0_386 = arith.constant 0 : index
    %c0_387 = arith.constant 0 : index
    %723 = vector.load %arg9[%c1_385, %c0_386, %c0_387] : memref<2x8x128xf32, #tpu.memory_space<vmem>>, vector<1x8x128xf32>
    %724 = vector.shape_cast %723 : vector<1x8x128xf32> to vector<8x128xf32>
    %725 = vector.shape_cast %719 : vector<8x128xf32> to vector<1x8x128xf32>
    tpu.vector_store %arg9[%c1_385, %c0_386, %c0_387], %725 {strides = array<i32>} : memref<2x8x128xf32, #tpu.memory_space<vmem>>, vector<1x8x128xf32>,
    %c6_i32_388 = arith.constant 6 : i32
    %c1_389 = arith.constant 1 : index
    %c0_390 = arith.constant 0 : index
    %c0_391 = arith.constant 0 : index
    %726 = vector.load %arg9[%c1_389, %c0_390, %c0_391] : memref<2x8x128xf32, #tpu.memory_space<vmem>>, vector<1x8x128xf32>
    %727 = vector.shape_cast %726 : vector<1x8x128xf32> to vector<8x128xf32>
    %c1_392 = arith.constant 1 : index
    %c0_393 = arith.constant 0 : index
    %c0_394 = arith.constant 0 : index
    %728 = vector.load %arg10[%c1_392, %c0_393, %c0_394] : memref<2x8x128xf32, #tpu.memory_space<vmem>>, vector<1x8x128xf32>
    %729 = vector.shape_cast %728 : vector<1x8x128xf32> to vector<8x128xf32>
    %730 = arith.index_cast %c6_i32_388 : i32 to index
    %c0_395 = arith.constant 0 : index
    %c0_396 = arith.constant 0 : index
    %731 = vector.load %arg12[%730, %c0_395, %c0_396] : memref<8x8x512xf32, #tpu.memory_space<vmem>>, vector<1x8x512xf32>
    %732 = vector.shape_cast %731 : vector<1x8x512xf32> to vector<8x512xf32>
    %733 = arith.truncf %727 : vector<8x128xf32> to vector<8x128xbf16>
    %cst_397 = arith.constant dense<0.000000e+00> : vector<8x512xf32>
    %734 = tpu.matmul %733, %443, %cst_397 {dimension_numbers = #tpu.dot_dimension_numbers<[1], [0], [0], [1], [0, 0, 1, 1], [], []>} : vector<8x128xbf16>, vector<128x512xbf16>, vector<8x512xf32> -> vector<8x512xf32>
    %735 = arith.addf %732, %734 : vector<8x512xf32>
    %736 = vector.extract_strided_slice %735 {offsets = [0, 0], sizes = [8, 128], strides = [1, 1]} : vector<8x512xf32> to vector<8x128xf32>
    %cst_398 = arith.constant 5.000000e-01 : f32
    %737 = vector.broadcast %cst_398 : f32 to vector<8x128xf32>
    %738 = arith.mulf %737, %736 : vector<8x128xf32>
    %739 = math.tanh %738 : vector<8x128xf32>
    %cst_399 = arith.constant 5.000000e-01 : f32
    %740 = vector.broadcast %cst_399 : f32 to vector<8x128xf32>
    %741 = arith.mulf %740, %739 : vector<8x128xf32>
    %cst_400 = arith.constant 5.000000e-01 : f32
    %742 = vector.broadcast %cst_400 : f32 to vector<8x128xf32>
    %743 = arith.addf %741, %742 : vector<8x128xf32>
    %744 = vector.extract_strided_slice %735 {offsets = [0, 128], sizes = [8, 128], strides = [1, 1]} : vector<8x512xf32> to vector<8x128xf32>
    %cst_401 = arith.constant 5.000000e-01 : f32
    %745 = vector.broadcast %cst_401 : f32 to vector<8x128xf32>
    %746 = arith.mulf %745, %744 : vector<8x128xf32>
    %747 = math.tanh %746 : vector<8x128xf32>
    %cst_402 = arith.constant 5.000000e-01 : f32
    %748 = vector.broadcast %cst_402 : f32 to vector<8x128xf32>
    %749 = arith.mulf %748, %747 : vector<8x128xf32>
    %cst_403 = arith.constant 5.000000e-01 : f32
    %750 = vector.broadcast %cst_403 : f32 to vector<8x128xf32>
    %751 = arith.addf %749, %750 : vector<8x128xf32>
    %752 = vector.extract_strided_slice %735 {offsets = [0, 256], sizes = [8, 128], strides = [1, 1]} : vector<8x512xf32> to vector<8x128xf32>
    %753 = math.tanh %752 : vector<8x128xf32>
    %754 = vector.extract_strided_slice %735 {offsets = [0, 384], sizes = [8, 128], strides = [1, 1]} : vector<8x512xf32> to vector<8x128xf32>
    %cst_404 = arith.constant 5.000000e-01 : f32
    %755 = vector.broadcast %cst_404 : f32 to vector<8x128xf32>
    %756 = arith.mulf %755, %754 : vector<8x128xf32>
    %757 = math.tanh %756 : vector<8x128xf32>
    %cst_405 = arith.constant 5.000000e-01 : f32
    %758 = vector.broadcast %cst_405 : f32 to vector<8x128xf32>
    %759 = arith.mulf %758, %757 : vector<8x128xf32>
    %cst_406 = arith.constant 5.000000e-01 : f32
    %760 = vector.broadcast %cst_406 : f32 to vector<8x128xf32>
    %761 = arith.addf %759, %760 : vector<8x128xf32>
    %762 = arith.mulf %751, %729 : vector<8x128xf32>
    %763 = arith.mulf %743, %753 : vector<8x128xf32>
    %764 = arith.addf %762, %763 : vector<8x128xf32>
    %765 = math.tanh %764 : vector<8x128xf32>
    %766 = arith.mulf %761, %765 : vector<8x128xf32>
    %c1_407 = arith.constant 1 : index
    %c0_408 = arith.constant 0 : index
    %c0_409 = arith.constant 0 : index
    %767 = vector.load %arg10[%c1_407, %c0_408, %c0_409] : memref<2x8x128xf32, #tpu.memory_space<vmem>>, vector<1x8x128xf32>
    %768 = vector.shape_cast %767 : vector<1x8x128xf32> to vector<8x128xf32>
    %769 = vector.shape_cast %764 : vector<8x128xf32> to vector<1x8x128xf32>
    tpu.vector_store %arg10[%c1_407, %c0_408, %c0_409], %769 {strides = array<i32>} : memref<2x8x128xf32, #tpu.memory_space<vmem>>, vector<1x8x128xf32>,
    %c1_410 = arith.constant 1 : index
    %c0_411 = arith.constant 0 : index
    %c0_412 = arith.constant 0 : index
    %770 = vector.load %arg9[%c1_410, %c0_411, %c0_412] : memref<2x8x128xf32, #tpu.memory_space<vmem>>, vector<1x8x128xf32>
    %771 = vector.shape_cast %770 : vector<1x8x128xf32> to vector<8x128xf32>
    %772 = vector.shape_cast %766 : vector<8x128xf32> to vector<1x8x128xf32>
    tpu.vector_store %arg9[%c1_410, %c0_411, %c0_412], %772 {strides = array<i32>} : memref<2x8x128xf32, #tpu.memory_space<vmem>>, vector<1x8x128xf32>,
    %c7_i32_413 = arith.constant 7 : i32
    %c1_414 = arith.constant 1 : index
    %c0_415 = arith.constant 0 : index
    %c0_416 = arith.constant 0 : index
    %773 = vector.load %arg9[%c1_414, %c0_415, %c0_416] : memref<2x8x128xf32, #tpu.memory_space<vmem>>, vector<1x8x128xf32>
    %774 = vector.shape_cast %773 : vector<1x8x128xf32> to vector<8x128xf32>
    %c1_417 = arith.constant 1 : index
    %c0_418 = arith.constant 0 : index
    %c0_419 = arith.constant 0 : index
    %775 = vector.load %arg10[%c1_417, %c0_418, %c0_419] : memref<2x8x128xf32, #tpu.memory_space<vmem>>, vector<1x8x128xf32>
    %776 = vector.shape_cast %775 : vector<1x8x128xf32> to vector<8x128xf32>
    %777 = arith.index_cast %c7_i32_413 : i32 to index
    %c0_420 = arith.constant 0 : index
    %c0_421 = arith.constant 0 : index
    %778 = vector.load %arg12[%777, %c0_420, %c0_421] : memref<8x8x512xf32, #tpu.memory_space<vmem>>, vector<1x8x512xf32>
    %779 = vector.shape_cast %778 : vector<1x8x512xf32> to vector<8x512xf32>
    %780 = arith.truncf %774 : vector<8x128xf32> to vector<8x128xbf16>
    %cst_422 = arith.constant dense<0.000000e+00> : vector<8x512xf32>
    %781 = tpu.matmul %780, %443, %cst_422 {dimension_numbers = #tpu.dot_dimension_numbers<[1], [0], [0], [1], [0, 0, 1, 1], [], []>} : vector<8x128xbf16>, vector<128x512xbf16>, vector<8x512xf32> -> vector<8x512xf32>
    %782 = arith.addf %779, %781 : vector<8x512xf32>
    %783 = vector.extract_strided_slice %782 {offsets = [0, 0], sizes = [8, 128], strides = [1, 1]} : vector<8x512xf32> to vector<8x128xf32>
    %cst_423 = arith.constant 5.000000e-01 : f32
    %784 = vector.broadcast %cst_423 : f32 to vector<8x128xf32>
    %785 = arith.mulf %784, %783 : vector<8x128xf32>
    %786 = math.tanh %785 : vector<8x128xf32>
    %cst_424 = arith.constant 5.000000e-01 : f32
    %787 = vector.broadcast %cst_424 : f32 to vector<8x128xf32>
    %788 = arith.mulf %787, %786 : vector<8x128xf32>
    %cst_425 = arith.constant 5.000000e-01 : f32
    %789 = vector.broadcast %cst_425 : f32 to vector<8x128xf32>
    %790 = arith.addf %788, %789 : vector<8x128xf32>
    %791 = vector.extract_strided_slice %782 {offsets = [0, 128], sizes = [8, 128], strides = [1, 1]} : vector<8x512xf32> to vector<8x128xf32>
    %cst_426 = arith.constant 5.000000e-01 : f32
    %792 = vector.broadcast %cst_426 : f32 to vector<8x128xf32>
    %793 = arith.mulf %792, %791 : vector<8x128xf32>
    %794 = math.tanh %793 : vector<8x128xf32>
    %cst_427 = arith.constant 5.000000e-01 : f32
    %795 = vector.broadcast %cst_427 : f32 to vector<8x128xf32>
    %796 = arith.mulf %795, %794 : vector<8x128xf32>
    %cst_428 = arith.constant 5.000000e-01 : f32
    %797 = vector.broadcast %cst_428 : f32 to vector<8x128xf32>
    %798 = arith.addf %796, %797 : vector<8x128xf32>
    %799 = vector.extract_strided_slice %782 {offsets = [0, 256], sizes = [8, 128], strides = [1, 1]} : vector<8x512xf32> to vector<8x128xf32>
    %800 = math.tanh %799 : vector<8x128xf32>
    %801 = vector.extract_strided_slice %782 {offsets = [0, 384], sizes = [8, 128], strides = [1, 1]} : vector<8x512xf32> to vector<8x128xf32>
    %cst_429 = arith.constant 5.000000e-01 : f32
    %802 = vector.broadcast %cst_429 : f32 to vector<8x128xf32>
    %803 = arith.mulf %802, %801 : vector<8x128xf32>
    %804 = math.tanh %803 : vector<8x128xf32>
    %cst_430 = arith.constant 5.000000e-01 : f32
    %805 = vector.broadcast %cst_430 : f32 to vector<8x128xf32>
    %806 = arith.mulf %805, %804 : vector<8x128xf32>
    %cst_431 = arith.constant 5.000000e-01 : f32
    %807 = vector.broadcast %cst_431 : f32 to vector<8x128xf32>
    %808 = arith.addf %806, %807 : vector<8x128xf32>
    %809 = arith.mulf %798, %776 : vector<8x128xf32>
    %810 = arith.mulf %790, %800 : vector<8x128xf32>
    %811 = arith.addf %809, %810 : vector<8x128xf32>
    %812 = math.tanh %811 : vector<8x128xf32>
    %813 = arith.mulf %808, %812 : vector<8x128xf32>
    %c1_432 = arith.constant 1 : index
    %c0_433 = arith.constant 0 : index
    %c0_434 = arith.constant 0 : index
    %814 = vector.load %arg10[%c1_432, %c0_433, %c0_434] : memref<2x8x128xf32, #tpu.memory_space<vmem>>, vector<1x8x128xf32>
    %815 = vector.shape_cast %814 : vector<1x8x128xf32> to vector<8x128xf32>
    %816 = vector.shape_cast %811 : vector<8x128xf32> to vector<1x8x128xf32>
    tpu.vector_store %arg10[%c1_432, %c0_433, %c0_434], %816 {strides = array<i32>} : memref<2x8x128xf32, #tpu.memory_space<vmem>>, vector<1x8x128xf32>,
    %c1_435 = arith.constant 1 : index
    %c0_436 = arith.constant 0 : index
    %c0_437 = arith.constant 0 : index
    %817 = vector.load %arg9[%c1_435, %c0_436, %c0_437] : memref<2x8x128xf32, #tpu.memory_space<vmem>>, vector<1x8x128xf32>
    %818 = vector.shape_cast %817 : vector<1x8x128xf32> to vector<8x128xf32>
    %819 = vector.shape_cast %813 : vector<8x128xf32> to vector<1x8x128xf32>
    tpu.vector_store %arg9[%c1_435, %c0_436, %c0_437], %819 {strides = array<i32>} : memref<2x8x128xf32, #tpu.memory_space<vmem>>, vector<1x8x128xf32>,
    %c8_i32_438 = arith.constant 8 : i32
    %c0_i32_439 = arith.constant 0 : i32
    %820 = arith.cmpi eq, %arg0, %c0_i32_439 : i32
    %821 = arith.extui %820 : i1 to i32
    %c0_i32_440 = arith.constant 0 : i32
    %822 = arith.cmpi ne, %821, %c0_i32_440 : i32
    scf.if %822 {
      %c1_441 = arith.constant 1 : index
      %c0_442 = arith.constant 0 : index
      %c0_443 = arith.constant 0 : index
      %823 = vector.load %arg9[%c1_441, %c0_442, %c0_443] : memref<2x8x128xf32, #tpu.memory_space<vmem>>, vector<1x8x128xf32>
      %824 = vector.shape_cast %823 : vector<1x8x128xf32> to vector<8x128xf32>
      %825 = arith.truncf %824 : vector<8x128xf32> to vector<8x128xbf16>
      %c0_444 = arith.constant 0 : index
      %c0_445 = arith.constant 0 : index
      %826 = vector.load %arg6[%c0_444, %c0_445] : memref<128x128xbf16, #tpu.memory_space<vmem>>, vector<128x128xbf16>
      %cst_446 = arith.constant dense<0.000000e+00> : vector<8x128xf32>
      %827 = tpu.matmul %825, %826, %cst_446 {dimension_numbers = #tpu.dot_dimension_numbers<[1], [0], [0], [1], [0, 0, 1, 1], [], []>} : vector<8x128xbf16>, vector<128x128xbf16>, vector<8x128xf32> -> vector<8x128xf32>
      %c0_447 = arith.constant 0 : index
      %c0_448 = arith.constant 0 : index
      %828 = vector.load %arg7[%c0_447, %c0_448] : memref<1x128xf32, #tpu.memory_space<vmem>>, vector<1x128xf32>
      %829 = vector.broadcast %828 : vector<1x128xf32> to vector<8x128xf32>
      %830 = arith.addf %827, %829 : vector<8x128xf32>
      %c0_449 = arith.constant 0 : index
      %c0_450 = arith.constant 0 : index
      %831 = vector.load %arg8[%c0_449, %c0_450] : memref<8x128xf32, #tpu.memory_space<vmem>>, vector<8x128xf32>
      tpu.vector_store %arg8[%c0_449, %c0_450], %830 {strides = array<i32>} : memref<8x128xf32, #tpu.memory_space<vmem>>, vector<8x128xf32>,
    } else {
    }
    return
  }
  func.func @transform_0(%arg0: i32) -> (i32, i32, i32) {
    %c0_i32 = arith.constant 0 : i32
    %c0_i32_0 = arith.constant 0 : i32
    %c0_i32_1 = arith.constant 0 : i32
    return %arg0, %c0_i32, %c0_i32_0 : i32, i32, i32
  }
  func.func @transform_1(%arg0: i32) -> (i32, i32) {
    %c0_i32 = arith.constant 0 : i32
    %c0_i32_0 = arith.constant 0 : i32
    %c0_i32_1 = arith.constant 0 : i32
    return %c0_i32, %c0_i32_0 : i32, i32
  }
  func.func @transform_2(%arg0: i32) -> (i32, i32, i32) {
    %c0_i32 = arith.constant 0 : i32
    %c0_i32_0 = arith.constant 0 : i32
    %c0_i32_1 = arith.constant 0 : i32
    %c0_i32_2 = arith.constant 0 : i32
    return %c0_i32, %c0_i32_0, %c0_i32_1 : i32, i32, i32
  }
  func.func @transform_3(%arg0: i32) -> (i32, i32, i32) {
    %c0_i32 = arith.constant 0 : i32
    %c0_i32_0 = arith.constant 0 : i32
    %c0_i32_1 = arith.constant 0 : i32
    %c0_i32_2 = arith.constant 0 : i32
    return %c0_i32, %c0_i32_0, %c0_i32_1 : i32, i32, i32
  }
  func.func @transform_4(%arg0: i32) -> (i32, i32, i32) {
    %c0_i32 = arith.constant 0 : i32
    %c0_i32_0 = arith.constant 0 : i32
    %c0_i32_1 = arith.constant 0 : i32
    %c0_i32_2 = arith.constant 0 : i32
    return %c0_i32, %c0_i32_0, %c0_i32_1 : i32, i32, i32
  }
  func.func @transform_5(%arg0: i32) -> (i32, i32) {
    %c0_i32 = arith.constant 0 : i32
    %c0_i32_0 = arith.constant 0 : i32
    %c0_i32_1 = arith.constant 0 : i32
    return %c0_i32, %c0_i32_0 : i32, i32
  }
  func.func @transform_6(%arg0: i32) -> (i32, i32) {
    %c0_i32 = arith.constant 0 : i32
    %c0_i32_0 = arith.constant 0 : i32
    %c0_i32_1 = arith.constant 0 : i32
    return %c0_i32, %c0_i32_0 : i32, i32
  }
  func.func @transform_7(%arg0: i32) -> (i32, i32) {
    %c0_i32 = arith.constant 0 : i32
    %c0_i32_0 = arith.constant 0 : i32
    %c0_i32_1 = arith.constant 0 : i32
    return %c0_i32, %c0_i32_0 : i32, i32
  }
}

</mosaic_0001>

<llo_original>
// kernel: rnn_forward.1
$region0: #{rnn_forward.1}
  #allocation0 [shape = 'u32[]', space=smem, size = 0x4, offset = 0x4, fixed_abs, tag = 'smem constant byte address 0x4 - core index']
  #allocation1 [shape = 'u32[144,128]{1,0:T(1,128)}', space=vmem, size = 0x12000, scoped, tag = 'internal scratch']
  #allocation2 [shape = 'f32[2,8,128]{2,1,0:T(8,128)}', space=vmem, size = 0x2000, scoped, tag = 'scratch operand']
  #allocation3 [shape = 'f32[2,8,128]{2,1,0:T(8,128)}', space=vmem, size = 0x2000, scoped, tag = 'scratch operand']
  #allocation4 [shape = 'bf16[8,8,128]{2,1,0:T(8,128)(2,1)}', space=vmem, size = 0x4000, scoped, tag = 'scratch operand']
  #allocation5 [shape = 'f32[8,8,512]{2,1,0:T(8,128)}', space=vmem, size = 0x20000, scoped, tag = 'scratch operand']
  %s0 = inlined_call_operand.vmem [shape: bf16[8,8,128], index: 0, kind: input, shape index: {}]
  %s1 = inlined_call_operand.vmem [shape: bf16[128,512], index: 1, kind: input, shape index: {}]
  %s2 = inlined_call_operand.vmem [shape: bf16[1,128,512], index: 2, kind: input, shape index: {}]
  %s3 = inlined_call_operand.vmem [shape: bf16[2,128,512], index: 3, kind: input, shape index: {}]
  %s4 = inlined_call_operand.vmem [shape: f32[2,1,512], index: 4, kind: input, shape index: {}]
  %s5 = inlined_call_operand.vmem [shape: bf16[128,128], index: 5, kind: input, shape index: {}]
  %s6 = inlined_call_operand.vmem [shape: f32[1,128], index: 6, kind: input, shape index: {}]
  %s7 = inlined_call_operand.vmem [shape: f32[8,128], index: 7, kind: output, shape index: {}]
  %s8 = sld [smem:[#allocation0]]
  $region46: #{rnn_forward.1} parent=0
    _
  %s10 = ssub.s32 1, %s8
  %s11 = scalar_select 0, %s10, %s8
  // Predicated region
  $region2: #{rnn_forward.1} parent=0 // pred_check
    _
  $region3: #{rnn_forward.1} parent=0 // pred_check_branch
    %13 = sbr.rel (0) target = $region5
  $region4: #{rnn_forward.1} parent=0 // pred_region
    _
  $region5: #{rnn_forward.1} parent=0 // pred_fallthru
    _
  // Predicated region
  $region6: #{rnn_forward.1} parent=0 // pred_check
    _
  $region7: #{rnn_forward.1} parent=0 // pred_check_branch
    %15 = sbr.rel (0) target = $region9
  $region8: #{rnn_forward.1} parent=0 // pred_region
    _
  $region9: #{rnn_forward.1} parent=0 // pred_fallthru
    _
  // Predicated region
  $region10: #{rnn_forward.1} parent=0 // pred_check
    _
  $region11: #{rnn_forward.1} parent=0 // pred_check_branch
    %17 = sbr.rel (0) target = $region13
  $region12: #{rnn_forward.1} parent=0 // pred_region
    _
  $region13: #{rnn_forward.1} parent=0 // pred_fallthru
    _
  // Predicated region
  $region14: #{rnn_forward.1} parent=0 // pred_check
    _
  $region15: #{rnn_forward.1} parent=0 // pred_check_branch
    %19 = sbr.rel (0) target = $region17
  $region16: #{rnn_forward.1} parent=0 // pred_region
    _
  $region17: #{rnn_forward.1} parent=0 // pred_fallthru
    _
  // Predicated region
  $region18: #{rnn_forward.1} parent=0 // pred_check
    _
  $region19: #{rnn_forward.1} parent=0 // pred_check_branch
    %21 = sbr.rel (0) target = $region21
  $region20: #{rnn_forward.1} parent=0 // pred_region
    _
  $region21: #{rnn_forward.1} parent=0 // pred_fallthru
    _
  // Predicated region
  $region22: #{rnn_forward.1} parent=0 // pred_check
    _
  $region23: #{rnn_forward.1} parent=0 // pred_check_branch
    %23 = sbr.rel (0) target = $region25
  $region24: #{rnn_forward.1} parent=0 // pred_region
    _
  $region25: #{rnn_forward.1} parent=0 // pred_fallthru
    _
  // Predicated region
  $region26: #{rnn_forward.1} parent=0 // pred_check
    _
  $region27: #{rnn_forward.1} parent=0 // pred_check_branch
    %25 = sbr.rel (0) target = $region29
  $region28: #{rnn_forward.1} parent=0 // pred_region
    _
  $region29: #{rnn_forward.1} parent=0 // pred_fallthru
    _
  %p27 = scmp.eq.s32.totalorder 0, 0
  // Predicated region
  $region30: #{rnn_forward.1} parent=0 // pred_check
    %p28 = pneg %p27
  $region31: #{rnn_forward.1} parent=0 // pred_check_branch
    %30 = sbr.rel (%p28) target = $region33
  $region32: #{rnn_forward.1} parent=0 // pred_region
    %31 = vst [vmem:[#allocation2] sm:$0xff] 0.0
    %32 = vst [vmem:[#allocation2 + $0x8] sm:$0xff] 0.0
    %33 = vst [vmem:[#allocation3] sm:$0xff] 0.0
    %34 = vst [vmem:[#allocation3 + $0x8] sm:$0xff] 0.0
  $region33: #{rnn_forward.1} parent=0 // pred_fallthru
    _
  %v35 = vld [vmem:[%s0] sm:$0xf]
  %v36 = vld [vmem:[%s0 + $0x4] sm:$0xf]
  %v37 = vld [vmem:[%s0 + $0x8] sm:$0xf]
  %v38 = vld [vmem:[%s0 + $0xc] sm:$0xf]
  %v39 = vld [vmem:[%s0 + $0x10] sm:$0xf]
  %v40 = vld [vmem:[%s0 + $0x14] sm:$0xf]
  %v41 = vld [vmem:[%s0 + $0x18] sm:$0xf]
  %v42 = vld [vmem:[%s0 + $0x1c] sm:$0xf]
  %v43 = vld [vmem:[%s1] sm:$0xff]
  %v44 = vld [vmem:[%s1 + $0x8] sm:$0xff]
  %v45 = vld [vmem:[%s1 + $0x10] sm:$0xff]
  %v46 = vld [vmem:[%s1 + $0x18] sm:$0xff]
  %v47 = vld [vmem:[%s1 + $0x20] sm:$0xff]
  %v48 = vld [vmem:[%s1 + $0x28] sm:$0xff]
  %v49 = vld [vmem:[%s1 + $0x30] sm:$0xff]
  %v50 = vld [vmem:[%s1 + $0x38] sm:$0xff]
  %v51 = vld [vmem:[%s1 + $0x40] sm:$0xff]
  %v52 = vld [vmem:[%s1 + $0x48] sm:$0xff]
  %v53 = vld [vmem:[%s1 + $0x50] sm:$0xff]
  %v54 = vld [vmem:[%s1 + $0x58] sm:$0xff]
  %v55 = vld [vmem:[%s1 + $0x60] sm:$0xff]
  %v56 = vld [vmem:[%s1 + $0x68] sm:$0xff]
  %v57 = vld [vmem:[%s1 + $0x70] sm:$0xff]
  %v58 = vld [vmem:[%s1 + $0x78] sm:$0xff]
  %v59 = vld [vmem:[%s1 + $0x80] sm:$0xff]
  %v60 = vld [vmem:[%s1 + $0x88] sm:$0xff]
  %v61 = vld [vmem:[%s1 + $0x90] sm:$0xff]
  %v62 = vld [vmem:[%s1 + $0x98] sm:$0xff]
  %v63 = vld [vmem:[%s1 + $0xa0] sm:$0xff]
  %v64 = vld [vmem:[%s1 + $0xa8] sm:$0xff]
  %v65 = vld [vmem:[%s1 + $0xb0] sm:$0xff]
  %v66 = vld [vmem:[%s1 + $0xb8] sm:$0xff]
  %v67 = vld [vmem:[%s1 + $0xc0] sm:$0xff]
  %v68 = vld [vmem:[%s1 + $0xc8] sm:$0xff]
  %v69 = vld [vmem:[%s1 + $0xd0] sm:$0xff]
  %v70 = vld [vmem:[%s1 + $0xd8] sm:$0xff]
  %v71 = vld [vmem:[%s1 + $0xe0] sm:$0xff]
  %v72 = vld [vmem:[%s1 + $0xe8] sm:$0xff]
  %v73 = vld [vmem:[%s1 + $0xf0] sm:$0xff]
  %v74 = vld [vmem:[%s1 + $0xf8] sm:$0xff]
  %v75 = vld [vmem:[%s4] sm:$0xf]
  %v77 = vlaneseq
  %v78 = vshrl.u32 %v77, 7
  %v79 = vsub.s32 0, %v78
  %v80 = vrot.slane %v75, %v79
  %v81 = vlaneseq
  %v82 = vshrl.u32 %v81, 7
  %v83 = vsub.s32 1, %v82
  %v84 = vrot.slane %v75, %v83
  %v85 = vlaneseq
  %v86 = vshrl.u32 %v85, 7
  %v87 = vsub.s32 2, %v86
  %v88 = vrot.slane %v75, %v87
  %v89 = vlaneseq
  %v90 = vshrl.u32 %v89, 7
  %v91 = vsub.s32 3, %v90
  %v92 = vrot.slane %v75, %v91
  %v105 = vunpack.c.l.b16 %v35
  %v106 = vunpack.c.l.b16 %v36
  %v107 = vunpack.c.l.b16 %v37
  %v108 = vunpack.c.l.b16 %v38
  %v109 = vunpack.c.l.b16 %v39
  %v110 = vunpack.c.l.b16 %v40
  %v111 = vunpack.c.l.b16 %v41
  %v112 = vunpack.c.l.b16 %v42
  %v113 = vpack.c.b16 %v106, %v105
  %v114 = vpack.c.b16 %v108, %v107
  %v115 = vpack.c.b16 %v110, %v109
  %v116 = vpack.c.b16 %v112, %v111
  %v153 = vunpack.c.l.b16 %v43
  %v154 = vunpack.c.h.b16 %v43
  %v155 = vunpack.c.l.b16 %v44
  %v156 = vunpack.c.h.b16 %v44
  %v157 = vunpack.c.l.b16 %v45
  %v158 = vunpack.c.h.b16 %v45
  %v159 = vunpack.c.l.b16 %v46
  %v160 = vunpack.c.h.b16 %v46
  %v161 = vunpack.c.l.b16 %v47
  %v162 = vunpack.c.h.b16 %v47
  %v163 = vunpack.c.l.b16 %v48
  %v164 = vunpack.c.h.b16 %v48
  %v165 = vunpack.c.l.b16 %v49
  %v166 = vunpack.c.h.b16 %v49
  %v167 = vunpack.c.l.b16 %v50
  %v168 = vunpack.c.h.b16 %v50
  %v169 = vunpack.c.l.b16 %v51
  %v170 = vunpack.c.h.b16 %v51
  %v171 = vunpack.c.l.b16 %v52
  %v172 = vunpack.c.h.b16 %v52
  %v173 = vunpack.c.l.b16 %v53
  %v174 = vunpack.c.h.b16 %v53
  %v175 = vunpack.c.l.b16 %v54
  %v176 = vunpack.c.h.b16 %v54
  %v177 = vunpack.c.l.b16 %v55
  %v178 = vunpack.c.h.b16 %v55
  %v179 = vunpack.c.l.b16 %v56
  %v180 = vunpack.c.h.b16 %v56
  %v181 = vunpack.c.l.b16 %v57
  %v182 = vunpack.c.h.b16 %v57
  %v183 = vunpack.c.l.b16 %v58
  %v184 = vunpack.c.h.b16 %v58
  %v185 = vunpack.c.l.b16 %v59
  %v186 = vunpack.c.h.b16 %v59
  %v187 = vunpack.c.l.b16 %v60
  %v188 = vunpack.c.h.b16 %v60
  %v189 = vunpack.c.l.b16 %v61
  %v190 = vunpack.c.h.b16 %v61
  %v191 = vunpack.c.l.b16 %v62
  %v192 = vunpack.c.h.b16 %v62
  %v193 = vunpack.c.l.b16 %v63
  %v194 = vunpack.c.h.b16 %v63
  %v195 = vunpack.c.l.b16 %v64
  %v196 = vunpack.c.h.b16 %v64
  %v197 = vunpack.c.l.b16 %v65
  %v198 = vunpack.c.h.b16 %v65
  %v199 = vunpack.c.l.b16 %v66
  %v200 = vunpack.c.h.b16 %v66
  %v201 = vunpack.c.l.b16 %v67
  %v202 = vunpack.c.h.b16 %v67
  %v203 = vunpack.c.l.b16 %v68
  %v204 = vunpack.c.h.b16 %v68
  %v205 = vunpack.c.l.b16 %v69
  %v206 = vunpack.c.h.b16 %v69
  %v207 = vunpack.c.l.b16 %v70
  %v208 = vunpack.c.h.b16 %v70
  %v209 = vunpack.c.l.b16 %v71
  %v210 = vunpack.c.h.b16 %v71
  %v211 = vunpack.c.l.b16 %v72
  %v212 = vunpack.c.h.b16 %v72
  %v213 = vunpack.c.l.b16 %v73
  %v214 = vunpack.c.h.b16 %v73
  %v215 = vunpack.c.l.b16 %v74
  %v216 = vunpack.c.h.b16 %v74
  %v217 = vpack.c.b16 %v157, %v153
  %v218 = vpack.c.b16 %v158, %v154
  %v219 = vpack.c.b16 %v159, %v155
  %v220 = vpack.c.b16 %v160, %v156
  %v221 = vpack.c.b16 %v165, %v161
  %v222 = vpack.c.b16 %v166, %v162
  %v223 = vpack.c.b16 %v167, %v163
  %v224 = vpack.c.b16 %v168, %v164
  %v225 = vpack.c.b16 %v173, %v169
  %v226 = vpack.c.b16 %v174, %v170
  %v227 = vpack.c.b16 %v175, %v171
  %v228 = vpack.c.b16 %v176, %v172
  %v229 = vpack.c.b16 %v181, %v177
  %v230 = vpack.c.b16 %v182, %v178
  %v231 = vpack.c.b16 %v183, %v179
  %v232 = vpack.c.b16 %v184, %v180
  %v233 = vpack.c.b16 %v189, %v185
  %v234 = vpack.c.b16 %v190, %v186
  %v235 = vpack.c.b16 %v191, %v187
  %v236 = vpack.c.b16 %v192, %v188
  %v237 = vpack.c.b16 %v197, %v193
  %v238 = vpack.c.b16 %v198, %v194
  %v239 = vpack.c.b16 %v199, %v195
  %v240 = vpack.c.b16 %v200, %v196
  %v241 = vpack.c.b16 %v205, %v201
  %v242 = vpack.c.b16 %v206, %v202
  %v243 = vpack.c.b16 %v207, %v203
  %v244 = vpack.c.b16 %v208, %v204
  %v245 = vpack.c.b16 %v213, %v209
  %v246 = vpack.c.b16 %v214, %v210
  %v247 = vpack.c.b16 %v215, %v211
  %v248 = vpack.c.b16 %v216, %v212
  %281 = vmatprep.subr.bf16.mxu0 %v218
  %282 = vmatpush1.bf16.msra.mxu0 %v217
  %283 = vmatprep.subr.bf16.mxu0 %v222
  %284 = vmatpush1.bf16.msra.mxu0 %v221
  %285 = vmatprep.subr.bf16.mxu0 %v226
  %286 = vmatpush1.bf16.msra.mxu0 %v225
  %287 = vmatprep.subr.bf16.mxu0 %v230
  %288 = vmatpush1.bf16.msra.mxu0 %v229
  %289 = vmatprep.subr.bf16.mxu0 %v234
  %290 = vmatpush1.bf16.msra.mxu0 %v233
  %291 = vmatprep.subr.bf16.mxu0 %v238
  %292 = vmatpush1.bf16.msra.mxu0 %v237
  %293 = vmatprep.subr.bf16.mxu0 %v242
  %294 = vmatpush1.bf16.msra.mxu0 %v241
  %295 = vmatprep.subr.bf16.mxu0 %v246
  %296 = vmatpush1.bf16.msra.mxu0 %v245
  %297 = vmatprep.subr.bf16.mxu0 0
  %298 = vmatpush1.bf16.msra.mxu0 0
  %299 = vmatprep.subr.bf16.mxu0 0
  %300 = vmatpush1.bf16.msra.mxu0 0
  %301 = vmatprep.subr.bf16.mxu0 0
  %302 = vmatpush1.bf16.msra.mxu0 0
  %303 = vmatprep.subr.bf16.mxu0 0
  %304 = vmatpush1.bf16.msra.mxu0 0
  %305 = vmatprep.subr.bf16.mxu0 0
  %306 = vmatpush1.bf16.msra.mxu0 0
  %307 = vmatprep.subr.bf16.mxu0 0
  %308 = vmatpush1.bf16.msra.mxu0 0
  %309 = vmatprep.subr.bf16.mxu0 0
  %310 = vmatpush1.bf16.msra.mxu0 0
  %311 = vmatprep.subr.bf16.mxu0 0
  %312 = vmatpush1.bf16.msra.mxu0 0
  %313 = vmatprep.mubr.bf16.mxu0 0
  %314 = vmatmul.mubr.bf16.gmra.mrb[0].mxu0 %v113
  %v315 = vpop.f32.mrb[0].mxu0
  %v316 = vadd.f32 %v80, %v315
  %v317 = vpop.f32.mrb[0].mxu0
  %v318 = vadd.f32 %v84, %v317
  %v319 = vpop.f32.mrb[0].mxu0
  %v320 = vadd.f32 %v80, %v319
  %v321 = vpop.f32.mrb[0].mxu0
  %v322 = vadd.f32 %v84, %v321
  %323 = vmatprep.mubr.bf16.mxu0 0
  %324 = vmatmul.mubr.bf16.gmra.mrb[0].mxu0 %v114
  %v325 = vpop.f32.mrb[0].mxu0
  %v326 = vadd.f32 %v80, %v325
  %v327 = vpop.f32.mrb[0].mxu0
  %v328 = vadd.f32 %v84, %v327
  %v329 = vpop.f32.mrb[0].mxu0
  %v330 = vadd.f32 %v80, %v329
  %v331 = vpop.f32.mrb[0].mxu0
  %v332 = vadd.f32 %v84, %v331
  %333 = vmatprep.mubr.bf16.mxu0 0
  %334 = vmatmul.mubr.bf16.gmra.mrb[0].mxu0 %v115
  %v335 = vpop.f32.mrb[0].mxu0
  %v336 = vadd.f32 %v80, %v335
  %v337 = vpop.f32.mrb[0].mxu0
  %v338 = vadd.f32 %v84, %v337
  %v339 = vpop.f32.mrb[0].mxu0
  %v340 = vadd.f32 %v80, %v339
  %v341 = vpop.f32.mrb[0].mxu0
  %v342 = vadd.f32 %v84, %v341
  %343 = vmatprep.mubr.bf16.mxu0 0
  %344 = vmatmul.mubr.bf16.gmra.mrb[0].mxu0 %v116
  %v345 = vpop.f32.mrb[0].mxu0
  %v346 = vadd.f32 %v80, %v345
  %v347 = vpop.f32.mrb[0].mxu0
  %v348 = vadd.f32 %v84, %v347
  %v349 = vpop.f32.mrb[0].mxu0
  %v350 = vadd.f32 %v80, %v349
  %v351 = vpop.f32.mrb[0].mxu0
  %v352 = vadd.f32 %v84, %v351
  %353 = vdwg.mxu0
  %354 = vmatprep.subr.bf16.mxu0 %v220
  %355 = vmatpush1.bf16.msra.mxu0 %v219
  %356 = vmatprep.subr.bf16.mxu0 %v224
  %357 = vmatpush1.bf16.msra.mxu0 %v223
  %358 = vmatprep.subr.bf16.mxu0 %v228
  %359 = vmatpush1.bf16.msra.mxu0 %v227
  %360 = vmatprep.subr.bf16.mxu0 %v232
  %361 = vmatpush1.bf16.msra.mxu0 %v231
  %362 = vmatprep.subr.bf16.mxu0 %v236
  %363 = vmatpush1.bf16.msra.mxu0 %v235
  %364 = vmatprep.subr.bf16.mxu0 %v240
  %365 = vmatpush1.bf16.msra.mxu0 %v239
  %366 = vmatprep.subr.bf16.mxu0 %v244
  %367 = vmatpush1.bf16.msra.mxu0 %v243
  %368 = vmatprep.subr.bf16.mxu0 %v248
  %369 = vmatpush1.bf16.msra.mxu0 %v247
  %370 = vmatprep.subr.bf16.mxu0 0
  %371 = vmatpush1.bf16.msra.mxu0 0
  %372 = vmatprep.subr.bf16.mxu0 0
  %373 = vmatpush1.bf16.msra.mxu0 0
  %374 = vmatprep.subr.bf16.mxu0 0
  %375 = vmatpush1.bf16.msra.mxu0 0
  %376 = vmatprep.subr.bf16.mxu0 0
  %377 = vmatpush1.bf16.msra.mxu0 0
  %378 = vmatprep.subr.bf16.mxu0 0
  %379 = vmatpush1.bf16.msra.mxu0 0
  %380 = vmatprep.subr.bf16.mxu0 0
  %381 = vmatpush1.bf16.msra.mxu0 0
  %382 = vmatprep.subr.bf16.mxu0 0
  %383 = vmatpush1.bf16.msra.mxu0 0
  %384 = vmatprep.subr.bf16.mxu0 0
  %385 = vmatpush1.bf16.msra.mxu0 0
  %386 = vmatprep.mubr.bf16.mxu0 0
  %387 = vmatmul.mubr.bf16.gmra.mrb[0].mxu0 %v113
  %v388 = vpop.f32.mrb[0].mxu0
  %v389 = vadd.f32 %v88, %v388
  %v390 = vpop.f32.mrb[0].mxu0
  %v391 = vadd.f32 %v92, %v390
  %v392 = vpop.f32.mrb[0].mxu0
  %v393 = vadd.f32 %v88, %v392
  %v394 = vpop.f32.mrb[0].mxu0
  %v395 = vadd.f32 %v92, %v394
  %396 = vmatprep.mubr.bf16.mxu0 0
  %397 = vmatmul.mubr.bf16.gmra.mrb[0].mxu0 %v114
  %v398 = vpop.f32.mrb[0].mxu0
  %v399 = vadd.f32 %v88, %v398
  %v400 = vpop.f32.mrb[0].mxu0
  %v401 = vadd.f32 %v92, %v400
  %v402 = vpop.f32.mrb[0].mxu0
  %v403 = vadd.f32 %v88, %v402
  %v404 = vpop.f32.mrb[0].mxu0
  %v405 = vadd.f32 %v92, %v404
  %406 = vmatprep.mubr.bf16.mxu0 0
  %407 = vmatmul.mubr.bf16.gmra.mrb[0].mxu0 %v115
  %v408 = vpop.f32.mrb[0].mxu0
  %v409 = vadd.f32 %v88, %v408
  %v410 = vpop.f32.mrb[0].mxu0
  %v411 = vadd.f32 %v92, %v410
  %v412 = vpop.f32.mrb[0].mxu0
  %v413 = vadd.f32 %v88, %v412
  %v414 = vpop.f32.mrb[0].mxu0
  %v415 = vadd.f32 %v92, %v414
  %416 = vmatprep.mubr.bf16.mxu0 0
  %417 = vmatmul.mubr.bf16.gmra.mrb[0].mxu0 %v116
  %v418 = vpop.f32.mrb[0].mxu0
  %v419 = vadd.f32 %v88, %v418
  %v420 = vpop.f32.mrb[0].mxu0
  %v421 = vadd.f32 %v92, %v420
  %v422 = vpop.f32.mrb[0].mxu0
  %v423 = vadd.f32 %v88, %v422
  %v424 = vpop.f32.mrb[0].mxu0
  %v425 = vadd.f32 %v92, %v424
  %426 = vdwg.mxu0
  %427 = vst [vmem:[#allocation5] sm:$0xff] %v316
  %428 = vst [vmem:[#allocation5 + $0x8] sm:$0xff] %v318
  %429 = vst [vmem:[#allocation5 + $0x10] sm:$0xff] %v389
  %430 = vst [vmem:[#allocation5 + $0x18] sm:$0xff] %v391
  %431 = vst [vmem:[#allocation5 + $0x20] sm:$0xff] %v320
  %432 = vst [vmem:[#allocation5 + $0x28] sm:$0xff] %v322
  %433 = vst [vmem:[#allocation5 + $0x30] sm:$0xff] %v393
  %434 = vst [vmem:[#allocation5 + $0x38] sm:$0xff] %v395
  %435 = vst [vmem:[#allocation5 + $0x40] sm:$0xff] %v326
  %436 = vst [vmem:[#allocation5 + $0x48] sm:$0xff] %v328
  %437 = vst [vmem:[#allocation5 + $0x50] sm:$0xff] %v399
  %438 = vst [vmem:[#allocation5 + $0x58] sm:$0xff] %v401
  %439 = vst [vmem:[#allocation5 + $0x60] sm:$0xff] %v330
  %440 = vst [vmem:[#allocation5 + $0x68] sm:$0xff] %v332
  %441 = vst [vmem:[#allocation5 + $0x70] sm:$0xff] %v403
  %442 = vst [vmem:[#allocation5 + $0x78] sm:$0xff] %v405
  %443 = vst [vmem:[#allocation5 + $0x80] sm:$0xff] %v336
  %444 = vst [vmem:[#allocation5 + $0x88] sm:$0xff] %v338
  %445 = vst [vmem:[#allocation5 + $0x90] sm:$0xff] %v409
  %446 = vst [vmem:[#allocation5 + $0x98] sm:$0xff] %v411
  %447 = vst [vmem:[#allocation5 + $0xa0] sm:$0xff] %v340
  %448 = vst [vmem:[#allocation5 + $0xa8] sm:$0xff] %v342
  %449 = vst [vmem:[#allocation5 + $0xb0] sm:$0xff] %v413
  %450 = vst [vmem:[#allocation5 + $0xb8] sm:$0xff] %v415
  %451 = vst [vmem:[#allocation5 + $0xc0] sm:$0xff] %v346
  %452 = vst [vmem:[#allocation5 + $0xc8] sm:$0xff] %v348
  %453 = vst [vmem:[#allocation5 + $0xd0] sm:$0xff] %v419
  %454 = vst [vmem:[#allocation5 + $0xd8] sm:$0xff] %v421
  %455 = vst [vmem:[#allocation5 + $0xe0] sm:$0xff] %v350
  %456 = vst [vmem:[#allocation5 + $0xe8] sm:$0xff] %v352
  %457 = vst [vmem:[#allocation5 + $0xf0] sm:$0xff] %v423
  %458 = vst [vmem:[#allocation5 + $0xf8] sm:$0xff] %v425
  %v459 = vld [vmem:[%s3] sm:$0xff]
  %v460 = vld [vmem:[%s3 + $0x8] sm:$0xff]
  %v461 = vld [vmem:[%s3 + $0x10] sm:$0xff]
  %v462 = vld [vmem:[%s3 + $0x18] sm:$0xff]
  %v463 = vld [vmem:[%s3 + $0x20] sm:$0xff]
  %v464 = vld [vmem:[%s3 + $0x28] sm:$0xff]
  %v465 = vld [vmem:[%s3 + $0x30] sm:$0xff]
  %v466 = vld [vmem:[%s3 + $0x38] sm:$0xff]
  %v467 = vld [vmem:[%s3 + $0x40] sm:$0xff]
  %v468 = vld [vmem:[%s3 + $0x48] sm:$0xff]
  %v469 = vld [vmem:[%s3 + $0x50] sm:$0xff]
  %v470 = vld [vmem:[%s3 + $0x58] sm:$0xff]
  %v471 = vld [vmem:[%s3 + $0x60] sm:$0xff]
  %v472 = vld [vmem:[%s3 + $0x68] sm:$0xff]
  %v473 = vld [vmem:[%s3 + $0x70] sm:$0xff]
  %v474 = vld [vmem:[%s3 + $0x78] sm:$0xff]
  %v475 = vld [vmem:[%s3 + $0x80] sm:$0xff]
  %v476 = vld [vmem:[%s3 + $0x88] sm:$0xff]
  %v477 = vld [vmem:[%s3 + $0x90] sm:$0xff]
  %v478 = vld [vmem:[%s3 + $0x98] sm:$0xff]
  %v479 = vld [vmem:[%s3 + $0xa0] sm:$0xff]
  %v480 = vld [vmem:[%s3 + $0xa8] sm:$0xff]
  %v481 = vld [vmem:[%s3 + $0xb0] sm:$0xff]
  %v482 = vld [vmem:[%s3 + $0xb8] sm:$0xff]
  %v483 = vld [vmem:[%s3 + $0xc0] sm:$0xff]
  %v484 = vld [vmem:[%s3 + $0xc8] sm:$0xff]
  %v485 = vld [vmem:[%s3 + $0xd0] sm:$0xff]
  %v486 = vld [vmem:[%s3 + $0xd8] sm:$0xff]
  %v487 = vld [vmem:[%s3 + $0xe0] sm:$0xff]
  %v488 = vld [vmem:[%s3 + $0xe8] sm:$0xff]
  %v489 = vld [vmem:[%s3 + $0xf0] sm:$0xff]
  %v490 = vld [vmem:[%s3 + $0xf8] sm:$0xff]
  %v491 = vld [vmem:[#allocation2] sm:$0xff]
  %v492 = vld [vmem:[#allocation3] sm:$0xff]
  %v493 = vld [vmem:[#allocation5] sm:$0xff]
  %v494 = vld [vmem:[#allocation5 + $0x8] sm:$0xff]
  %v495 = vld [vmem:[#allocation5 + $0x10] sm:$0xff]
  %v496 = vld [vmem:[#allocation5 + $0x18] sm:$0xff]
  %v497 = vpack.c.bf16 %v491, %v491
  %v530 = vunpack.c.l.b16 %v459
  %v531 = vunpack.c.h.b16 %v459
  %v532 = vunpack.c.l.b16 %v460
  %v533 = vunpack.c.h.b16 %v460
  %v534 = vunpack.c.l.b16 %v461
  %v535 = vunpack.c.h.b16 %v461
  %v536 = vunpack.c.l.b16 %v462
  %v537 = vunpack.c.h.b16 %v462
  %v538 = vunpack.c.l.b16 %v463
  %v539 = vunpack.c.h.b16 %v463
  %v540 = vunpack.c.l.b16 %v464
  %v541 = vunpack.c.h.b16 %v464
  %v542 = vunpack.c.l.b16 %v465
  %v543 = vunpack.c.h.b16 %v465
  %v544 = vunpack.c.l.b16 %v466
  %v545 = vunpack.c.h.b16 %v466
  %v546 = vunpack.c.l.b16 %v467
  %v547 = vunpack.c.h.b16 %v467
  %v548 = vunpack.c.l.b16 %v468
  %v549 = vunpack.c.h.b16 %v468
  %v550 = vunpack.c.l.b16 %v469
  %v551 = vunpack.c.h.b16 %v469
  %v552 = vunpack.c.l.b16 %v470
  %v553 = vunpack.c.h.b16 %v470
  %v554 = vunpack.c.l.b16 %v471
  %v555 = vunpack.c.h.b16 %v471
  %v556 = vunpack.c.l.b16 %v472
  %v557 = vunpack.c.h.b16 %v472
  %v558 = vunpack.c.l.b16 %v473
  %v559 = vunpack.c.h.b16 %v473
  %v560 = vunpack.c.l.b16 %v474
  %v561 = vunpack.c.h.b16 %v474
  %v562 = vunpack.c.l.b16 %v475
  %v563 = vunpack.c.h.b16 %v475
  %v564 = vunpack.c.l.b16 %v476
  %v565 = vunpack.c.h.b16 %v476
  %v566 = vunpack.c.l.b16 %v477
  %v567 = vunpack.c.h.b16 %v477
  %v568 = vunpack.c.l.b16 %v478
  %v569 = vunpack.c.h.b16 %v478
  %v570 = vunpack.c.l.b16 %v479
  %v571 = vunpack.c.h.b16 %v479
  %v572 = vunpack.c.l.b16 %v480
  %v573 = vunpack.c.h.b16 %v480
  %v574 = vunpack.c.l.b16 %v481
  %v575 = vunpack.c.h.b16 %v481
  %v576 = vunpack.c.l.b16 %v482
  %v577 = vunpack.c.h.b16 %v482
  %v578 = vunpack.c.l.b16 %v483
  %v579 = vunpack.c.h.b16 %v483
  %v580 = vunpack.c.l.b16 %v484
  %v581 = vunpack.c.h.b16 %v484
  %v582 = vunpack.c.l.b16 %v485
  %v583 = vunpack.c.h.b16 %v485
  %v584 = vunpack.c.l.b16 %v486
  %v585 = vunpack.c.h.b16 %v486
  %v586 = vunpack.c.l.b16 %v487
  %v587 = vunpack.c.h.b16 %v487
  %v588 = vunpack.c.l.b16 %v488
  %v589 = vunpack.c.h.b16 %v488
  %v590 = vunpack.c.l.b16 %v489
  %v591 = vunpack.c.h.b16 %v489
  %v592 = vunpack.c.l.b16 %v490
  %v593 = vunpack.c.h.b16 %v490
  %v594 = vpack.c.b16 %v534, %v530
  %v595 = vpack.c.b16 %v535, %v531
  %v596 = vpack.c.b16 %v536, %v532
  %v597 = vpack.c.b16 %v537, %v533
  %v598 = vpack.c.b16 %v542, %v538
  %v599 = vpack.c.b16 %v543, %v539
  %v600 = vpack.c.b16 %v544, %v540
  %v601 = vpack.c.b16 %v545, %v541
  %v602 = vpack.c.b16 %v550, %v546
  %v603 = vpack.c.b16 %v551, %v547
  %v604 = vpack.c.b16 %v552, %v548
  %v605 = vpack.c.b16 %v553, %v549
  %v606 = vpack.c.b16 %v558, %v554
  %v607 = vpack.c.b16 %v559, %v555
  %v608 = vpack.c.b16 %v560, %v556
  %v609 = vpack.c.b16 %v561, %v557
  %v610 = vpack.c.b16 %v566, %v562
  %v611 = vpack.c.b16 %v567, %v563
  %v612 = vpack.c.b16 %v568, %v564
  %v613 = vpack.c.b16 %v569, %v565
  %v614 = vpack.c.b16 %v574, %v570
  %v615 = vpack.c.b16 %v575, %v571
  %v616 = vpack.c.b16 %v576, %v572
  %v617 = vpack.c.b16 %v577, %v573
  %v618 = vpack.c.b16 %v582, %v578
  %v619 = vpack.c.b16 %v583, %v579
  %v620 = vpack.c.b16 %v584, %v580
  %v621 = vpack.c.b16 %v585, %v581
  %v622 = vpack.c.b16 %v590, %v586
  %v623 = vpack.c.b16 %v591, %v587
  %v624 = vpack.c.b16 %v592, %v588
  %v625 = vpack.c.b16 %v593, %v589
  %658 = vmatprep.subr.bf16.mxu0 %v595
  %659 = vmatpush1.bf16.msra.mxu0 %v594
  %660 = vmatprep.subr.bf16.mxu0 %v599
  %661 = vmatpush1.bf16.msra.mxu0 %v598
  %662 = vmatprep.subr.bf16.mxu0 %v603
  %663 = vmatpush1.bf16.msra.mxu0 %v602
  %664 = vmatprep.subr.bf16.mxu0 %v607
  %665 = vmatpush1.bf16.msra.mxu0 %v606
  %666 = vmatprep.subr.bf16.mxu0 %v611
  %667 = vmatpush1.bf16.msra.mxu0 %v610
  %668 = vmatprep.subr.bf16.mxu0 %v615
  %669 = vmatpush1.bf16.msra.mxu0 %v614
  %670 = vmatprep.subr.bf16.mxu0 %v619
  %671 = vmatpush1.bf16.msra.mxu0 %v618
  %672 = vmatprep.subr.bf16.mxu0 %v623
  %673 = vmatpush1.bf16.msra.mxu0 %v622
  %674 = vmatprep.subr.bf16.mxu0 0
  %675 = vmatpush1.bf16.msra.mxu0 0
  %676 = vmatprep.subr.bf16.mxu0 0
  %677 = vmatpush1.bf16.msra.mxu0 0
  %678 = vmatprep.subr.bf16.mxu0 0
  %679 = vmatpush1.bf16.msra.mxu0 0
  %680 = vmatprep.subr.bf16.mxu0 0
  %681 = vmatpush1.bf16.msra.mxu0 0
  %682 = vmatprep.subr.bf16.mxu0 0
  %683 = vmatpush1.bf16.msra.mxu0 0
  %684 = vmatprep.subr.bf16.mxu0 0
  %685 = vmatpush1.bf16.msra.mxu0 0
  %686 = vmatprep.subr.bf16.mxu0 0
  %687 = vmatpush1.bf16.msra.mxu0 0
  %688 = vmatprep.subr.bf16.mxu0 0
  %689 = vmatpush1.bf16.msra.mxu0 0
  %690 = vmatprep.mubr.bf16.mxu0 0
  %691 = vmatmul.mubr.bf16.gmra.mrb[0].mxu0 %v497
  %v692 = vpop.f32.mrb[0].mxu0
  %v693 = vadd.f32 0.0, %v692
  %v694 = vpop.f32.mrb[0].mxu0
  %v695 = vadd.f32 0.0, %v694
  %v696 = vpop.f32.mrb[0].mxu0
  %v697 = vpop.f32.mrb[0].mxu0
  %698 = vdwg.mxu0
  %699 = vmatprep.subr.bf16.mxu0 %v597
  %700 = vmatpush1.bf16.msra.mxu0 %v596
  %701 = vmatprep.subr.bf16.mxu0 %v601
  %702 = vmatpush1.bf16.msra.mxu0 %v600
  %703 = vmatprep.subr.bf16.mxu0 %v605
  %704 = vmatpush1.bf16.msra.mxu0 %v604
  %705 = vmatprep.subr.bf16.mxu0 %v609
  %706 = vmatpush1.bf16.msra.mxu0 %v608
  %707 = vmatprep.subr.bf16.mxu0 %v613
  %708 = vmatpush1.bf16.msra.mxu0 %v612
  %709 = vmatprep.subr.bf16.mxu0 %v617
  %710 = vmatpush1.bf16.msra.mxu0 %v616
  %711 = vmatprep.subr.bf16.mxu0 %v621
  %712 = vmatpush1.bf16.msra.mxu0 %v620
  %713 = vmatprep.subr.bf16.mxu0 %v625
  %714 = vmatpush1.bf16.msra.mxu0 %v624
  %715 = vmatprep.subr.bf16.mxu0 0
  %716 = vmatpush1.bf16.msra.mxu0 0
  %717 = vmatprep.subr.bf16.mxu0 0
  %718 = vmatpush1.bf16.msra.mxu0 0
  %719 = vmatprep.subr.bf16.mxu0 0
  %720 = vmatpush1.bf16.msra.mxu0 0
  %721 = vmatprep.subr.bf16.mxu0 0
  %722 = vmatpush1.bf16.msra.mxu0 0
  %723 = vmatprep.subr.bf16.mxu0 0
  %724 = vmatpush1.bf16.msra.mxu0 0
  %725 = vmatprep.subr.bf16.mxu0 0
  %726 = vmatpush1.bf16.msra.mxu0 0
  %727 = vmatprep.subr.bf16.mxu0 0
  %728 = vmatpush1.bf16.msra.mxu0 0
  %729 = vmatprep.subr.bf16.mxu0 0
  %730 = vmatpush1.bf16.msra.mxu0 0
  %731 = vmatprep.mubr.bf16.mxu0 0
  %732 = vmatmul.mubr.bf16.gmra.mrb[0].mxu0 %v497
  %v733 = vpop.f32.mrb[0].mxu0
  %v734 = vadd.f32 0.0, %v733
  %v735 = vpop.f32.mrb[0].mxu0
  %v736 = vadd.f32 0.0, %v735
  %v737 = vpop.f32.mrb[0].mxu0
  %v738 = vpop.f32.mrb[0].mxu0
  %739 = vdwg.mxu0
  %v740 = vadd.f32 %v493, %v693
  %v741 = vadd.f32 %v494, %v695
  %v742 = vadd.f32 %v495, %v734
  %v743 = vadd.f32 %v496, %v736
  %v744 = vmul.f32 %v740, 0.5
  %v745 = vtanh.pop %v744
  %v746 = vmul.f32 %v745, 0.5
  %v747 = vadd.f32 %v746, 0.5
  %v748 = vmul.f32 %v741, 0.5
  %v749 = vtanh.pop %v748
  %v750 = vmul.f32 %v749, 0.5
  %v751 = vadd.f32 %v750, 0.5
  %v752 = vtanh.pop %v742
  %v753 = vmul.f32 %v743, 0.5
  %v754 = vtanh.pop %v753
  %v755 = vmul.f32 %v754, 0.5
  %v756 = vadd.f32 %v755, 0.5
  %v757 = vmul.f32 %v751, %v492
  %v758 = vmul.f32 %v747, %v752
  %v759 = vadd.f32 %v757, %v758
  %v760 = vtanh.pop %v759
  %v761 = vmul.f32 %v756, %v760
  %762 = vst [vmem:[#allocation3] sm:$0xff] %v759
  %763 = vst [vmem:[#allocation2] sm:$0xff] %v761
  %v764 = vpack.c.bf16 %v761, %v761
  %765 = vst [vmem:[#allocation4] sm:$0xf] %v764
  %v766 = vld [vmem:[#allocation2] sm:$0xff]
  %v767 = vld [vmem:[#allocation3] sm:$0xff]
  %s768 = scalar_lea.vmem [#allocation5], 32
  %v769 = vld [vmem:[%s768] sm:$0xff]
  %v770 = vld [vmem:[%s768 + $0x8] sm:$0xff]
  %v771 = vld [vmem:[%s768 + $0x10] sm:$0xff]
  %v772 = vld [vmem:[%s768 + $0x18] sm:$0xff]
  %v773 = vpack.c.bf16 %v766, %v766
  %774 = vmatprep.subr.bf16.mxu0 %v595
  %775 = vmatpush1.bf16.msra.mxu0 %v594
  %776 = vmatprep.subr.bf16.mxu0 %v599
  %777 = vmatpush1.bf16.msra.mxu0 %v598
  %778 = vmatprep.subr.bf16.mxu0 %v603
  %779 = vmatpush1.bf16.msra.mxu0 %v602
  %780 = vmatprep.subr.bf16.mxu0 %v607
  %781 = vmatpush1.bf16.msra.mxu0 %v606
  %782 = vmatprep.subr.bf16.mxu0 %v611
  %783 = vmatpush1.bf16.msra.mxu0 %v610
  %784 = vmatprep.subr.bf16.mxu0 %v615
  %785 = vmatpush1.bf16.msra.mxu0 %v614
  %786 = vmatprep.subr.bf16.mxu0 %v619
  %787 = vmatpush1.bf16.msra.mxu0 %v618
  %788 = vmatprep.subr.bf16.mxu0 %v623
  %789 = vmatpush1.bf16.msra.mxu0 %v622
  %790 = vmatprep.subr.bf16.mxu0 0
  %791 = vmatpush1.bf16.msra.mxu0 0
  %792 = vmatprep.subr.bf16.mxu0 0
  %793 = vmatpush1.bf16.msra.mxu0 0
  %794 = vmatprep.subr.bf16.mxu0 0
  %795 = vmatpush1.bf16.msra.mxu0 0
  %796 = vmatprep.subr.bf16.mxu0 0
  %797 = vmatpush1.bf16.msra.mxu0 0
  %798 = vmatprep.subr.bf16.mxu0 0
  %799 = vmatpush1.bf16.msra.mxu0 0
  %800 = vmatprep.subr.bf16.mxu0 0
  %801 = vmatpush1.bf16.msra.mxu0 0
  %802 = vmatprep.subr.bf16.mxu0 0
  %803 = vmatpush1.bf16.msra.mxu0 0
  %804 = vmatprep.subr.bf16.mxu0 0
  %805 = vmatpush1.bf16.msra.mxu0 0
  %806 = vmatprep.mubr.bf16.mxu0 0
  %807 = vmatmul.mubr.bf16.gmra.mrb[0].mxu0 %v773
  %v808 = vpop.f32.mrb[0].mxu0
  %v809 = vadd.f32 0.0, %v808
  %v810 = vpop.f32.mrb[0].mxu0
  %v811 = vadd.f32 0.0, %v810
  %v812 = vpop.f32.mrb[0].mxu0
  %v813 = vpop.f32.mrb[0].mxu0
  %814 = vdwg.mxu0
  %815 = vmatprep.subr.bf16.mxu0 %v597
  %816 = vmatpush1.bf16.msra.mxu0 %v596
  %817 = vmatprep.subr.bf16.mxu0 %v601
  %818 = vmatpush1.bf16.msra.mxu0 %v600
  %819 = vmatprep.subr.bf16.mxu0 %v605
  %820 = vmatpush1.bf16.msra.mxu0 %v604
  %821 = vmatprep.subr.bf16.mxu0 %v609
  %822 = vmatpush1.bf16.msra.mxu0 %v608
  %823 = vmatprep.subr.bf16.mxu0 %v613
  %824 = vmatpush1.bf16.msra.mxu0 %v612
  %825 = vmatprep.subr.bf16.mxu0 %v617
  %826 = vmatpush1.bf16.msra.mxu0 %v616
  %827 = vmatprep.subr.bf16.mxu0 %v621
  %828 = vmatpush1.bf16.msra.mxu0 %v620
  %829 = vmatprep.subr.bf16.mxu0 %v625
  %830 = vmatpush1.bf16.msra.mxu0 %v624
  %831 = vmatprep.subr.bf16.mxu0 0
  %832 = vmatpush1.bf16.msra.mxu0 0
  %833 = vmatprep.subr.bf16.mxu0 0
  %834 = vmatpush1.bf16.msra.mxu0 0
  %835 = vmatprep.subr.bf16.mxu0 0
  %836 = vmatpush1.bf16.msra.mxu0 0
  %837 = vmatprep.subr.bf16.mxu0 0
  %838 = vmatpush1.bf16.msra.mxu0 0
  %839 = vmatprep.subr.bf16.mxu0 0
  %840 = vmatpush1.bf16.msra.mxu0 0
  %841 = vmatprep.subr.bf16.mxu0 0
  %842 = vmatpush1.bf16.msra.mxu0 0
  %843 = vmatprep.subr.bf16.mxu0 0
  %844 = vmatpush1.bf16.msra.mxu0 0
  %845 = vmatprep.subr.bf16.mxu0 0
  %846 = vmatpush1.bf16.msra.mxu0 0
  %847 = vmatprep.mubr.bf16.mxu0 0
  %848 = vmatmul.mubr.bf16.gmra.mrb[0].mxu0 %v773
  %v849 = vpop.f32.mrb[0].mxu0
  %v850 = vadd.f32 0.0, %v849
  %v851 = vpop.f32.mrb[0].mxu0
  %v852 = vadd.f32 0.0, %v851
  %v853 = vpop.f32.mrb[0].mxu0
  %v854 = vpop.f32.mrb[0].mxu0
  %855 = vdwg.mxu0
  %v856 = vadd.f32 %v769, %v809
  %v857 = vadd.f32 %v770, %v811
  %v858 = vadd.f32 %v771, %v850
  %v859 = vadd.f32 %v772, %v852
  %v860 = vmul.f32 %v856, 0.5
  %v861 = vtanh.pop %v860
  %v862 = vmul.f32 %v861, 0.5
  %v863 = vadd.f32 %v862, 0.5
  %v864 = vmul.f32 %v857, 0.5
  %v865 = vtanh.pop %v864
  %v866 = vmul.f32 %v865, 0.5
  %v867 = vadd.f32 %v866, 0.5
  %v868 = vtanh.pop %v858
  %v869 = vmul.f32 %v859, 0.5
  %v870 = vtanh.pop %v869
  %v871 = vmul.f32 %v870, 0.5
  %v872 = vadd.f32 %v871, 0.5
  %v873 = vmul.f32 %v867, %v767
  %v874 = vmul.f32 %v863, %v868
  %v875 = vadd.f32 %v873, %v874
  %v876 = vtanh.pop %v875
  %v877 = vmul.f32 %v872, %v876
  %878 = vst [vmem:[#allocation3] sm:$0xff] %v875
  %879 = vst [vmem:[#allocation2] sm:$0xff] %v877
  %v880 = vpack.c.bf16 %v877, %v877
  %s881 = scalar_lea.vmem [#allocation4], 4
  %882 = vst [vmem:[%s881] sm:$0xf] %v880
  %v883 = vld [vmem:[#allocation2] sm:$0xff]
  %v884 = vld [vmem:[#allocation3] sm:$0xff]
  %s885 = scalar_lea.vmem [#allocation5], 64
  %v886 = vld [vmem:[%s885] sm:$0xff]
  %v887 = vld [vmem:[%s885 + $0x8] sm:$0xff]
  %v888 = vld [vmem:[%s885 + $0x10] sm:$0xff]
  %v889 = vld [vmem:[%s885 + $0x18] sm:$0xff]
  %v890 = vpack.c.bf16 %v883, %v883
  %891 = vmatprep.subr.bf16.mxu0 %v595
  %892 = vmatpush1.bf16.msra.mxu0 %v594
  %893 = vmatprep.subr.bf16.mxu0 %v599
  %894 = vmatpush1.bf16.msra.mxu0 %v598
  %895 = vmatprep.subr.bf16.mxu0 %v603
  %896 = vmatpush1.bf16.msra.mxu0 %v602
  %897 = vmatprep.subr.bf16.mxu0 %v607
  %898 = vmatpush1.bf16.msra.mxu0 %v606
  %899 = vmatprep.subr.bf16.mxu0 %v611
  %900 = vmatpush1.bf16.msra.mxu0 %v610
  %901 = vmatprep.subr.bf16.mxu0 %v615
  %902 = vmatpush1.bf16.msra.mxu0 %v614
  %903 = vmatprep.subr.bf16.mxu0 %v619
  %904 = vmatpush1.bf16.msra.mxu0 %v618
  %905 = vmatprep.subr.bf16.mxu0 %v623
  %906 = vmatpush1.bf16.msra.mxu0 %v622
  %907 = vmatprep.subr.bf16.mxu0 0
  %908 = vmatpush1.bf16.msra.mxu0 0
  %909 = vmatprep.subr.bf16.mxu0 0
  %910 = vmatpush1.bf16.msra.mxu0 0
  %911 = vmatprep.subr.bf16.mxu0 0
  %912 = vmatpush1.bf16.msra.mxu0 0
  %913 = vmatprep.subr.bf16.mxu0 0
  %914 = vmatpush1.bf16.msra.mxu0 0
  %915 = vmatprep.subr.bf16.mxu0 0
  %916 = vmatpush1.bf16.msra.mxu0 0
  %917 = vmatprep.subr.bf16.mxu0 0
  %918 = vmatpush1.bf16.msra.mxu0 0
  %919 = vmatprep.subr.bf16.mxu0 0
  %920 = vmatpush1.bf16.msra.mxu0 0
  %921 = vmatprep.subr.bf16.mxu0 0
  %922 = vmatpush1.bf16.msra.mxu0 0
  %923 = vmatprep.mubr.bf16.mxu0 0
  %924 = vmatmul.mubr.bf16.gmra.mrb[0].mxu0 %v890
  %v925 = vpop.f32.mrb[0].mxu0
  %v926 = vadd.f32 0.0, %v925
  %v927 = vpop.f32.mrb[0].mxu0
  %v928 = vadd.f32 0.0, %v927
  %v929 = vpop.f32.mrb[0].mxu0
  %v930 = vpop.f32.mrb[0].mxu0
  %931 = vdwg.mxu0
  %932 = vmatprep.subr.bf16.mxu0 %v597
  %933 = vmatpush1.bf16.msra.mxu0 %v596
  %934 = vmatprep.subr.bf16.mxu0 %v601
  %935 = vmatpush1.bf16.msra.mxu0 %v600
  %936 = vmatprep.subr.bf16.mxu0 %v605
  %937 = vmatpush1.bf16.msra.mxu0 %v604
  %938 = vmatprep.subr.bf16.mxu0 %v609
  %939 = vmatpush1.bf16.msra.mxu0 %v608
  %940 = vmatprep.subr.bf16.mxu0 %v613
  %941 = vmatpush1.bf16.msra.mxu0 %v612
  %942 = vmatprep.subr.bf16.mxu0 %v617
  %943 = vmatpush1.bf16.msra.mxu0 %v616
  %944 = vmatprep.subr.bf16.mxu0 %v621
  %945 = vmatpush1.bf16.msra.mxu0 %v620
  %946 = vmatprep.subr.bf16.mxu0 %v625
  %947 = vmatpush1.bf16.msra.mxu0 %v624
  %948 = vmatprep.subr.bf16.mxu0 0
  %949 = vmatpush1.bf16.msra.mxu0 0
  %950 = vmatprep.subr.bf16.mxu0 0
  %951 = vmatpush1.bf16.msra.mxu0 0
  %952 = vmatprep.subr.bf16.mxu0 0
  %953 = vmatpush1.bf16.msra.mxu0 0
  %954 = vmatprep.subr.bf16.mxu0 0
  %955 = vmatpush1.bf16.msra.mxu0 0
  %956 = vmatprep.subr.bf16.mxu0 0
  %957 = vmatpush1.bf16.msra.mxu0 0
  %958 = vmatprep.subr.bf16.mxu0 0
  %959 = vmatpush1.bf16.msra.mxu0 0
  %960 = vmatprep.subr.bf16.mxu0 0
  %961 = vmatpush1.bf16.msra.mxu0 0
  %962 = vmatprep.subr.bf16.mxu0 0
  %963 = vmatpush1.bf16.msra.mxu0 0
  %964 = vmatprep.mubr.bf16.mxu0 0
  %965 = vmatmul.mubr.bf16.gmra.mrb[0].mxu0 %v890
  %v966 = vpop.f32.mrb[0].mxu0
  %v967 = vadd.f32 0.0, %v966
  %v968 = vpop.f32.mrb[0].mxu0
  %v969 = vadd.f32 0.0, %v968
  %v970 = vpop.f32.mrb[0].mxu0
  %v971 = vpop.f32.mrb[0].mxu0
  %972 = vdwg.mxu0
  %v973 = vadd.f32 %v886, %v926
  %v974 = vadd.f32 %v887, %v928
  %v975 = vadd.f32 %v888, %v967
  %v976 = vadd.f32 %v889, %v969
  %v977 = vmul.f32 %v973, 0.5
  %v978 = vtanh.pop %v977
  %v979 = vmul.f32 %v978, 0.5
  %v980 = vadd.f32 %v979, 0.5
  %v981 = vmul.f32 %v974, 0.5
  %v982 = vtanh.pop %v981
  %v983 = vmul.f32 %v982, 0.5
  %v984 = vadd.f32 %v983, 0.5
  %v985 = vtanh.pop %v975
  %v986 = vmul.f32 %v976, 0.5
  %v987 = vtanh.pop %v986
  %v988 = vmul.f32 %v987, 0.5
  %v989 = vadd.f32 %v988, 0.5
  %v990 = vmul.f32 %v984, %v884
  %v991 = vmul.f32 %v980, %v985
  %v992 = vadd.f32 %v990, %v991
  %v993 = vtanh.pop %v992
  %v994 = vmul.f32 %v989, %v993
  %995 = vst [vmem:[#allocation3] sm:$0xff] %v992
  %996 = vst [vmem:[#allocation2] sm:$0xff] %v994
  %v997 = vpack.c.bf16 %v994, %v994
  %s998 = scalar_lea.vmem [#allocation4], 8
  %999 = vst [vmem:[%s998] sm:$0xf] %v997
  %v1000 = vld [vmem:[#allocation2] sm:$0xff]
  %v1001 = vld [vmem:[#allocation3] sm:$0xff]
  %s1002 = scalar_lea.vmem [#allocation5], 96
  %v1003 = vld [vmem:[%s1002] sm:$0xff]
  %v1004 = vld [vmem:[%s1002 + $0x8] sm:$0xff]
  %v1005 = vld [vmem:[%s1002 + $0x10] sm:$0xff]
  %v1006 = vld [vmem:[%s1002 + $0x18] sm:$0xff]
  %v1007 = vpack.c.bf16 %v1000, %v1000
  %1008 = vmatprep.subr.bf16.mxu0 %v595
  %1009 = vmatpush1.bf16.msra.mxu0 %v594
  %1010 = vmatprep.subr.bf16.mxu0 %v599
  %1011 = vmatpush1.bf16.msra.mxu0 %v598
  %1012 = vmatprep.subr.bf16.mxu0 %v603
  %1013 = vmatpush1.bf16.msra.mxu0 %v602
  %1014 = vmatprep.subr.bf16.mxu0 %v607
  %1015 = vmatpush1.bf16.msra.mxu0 %v606
  %1016 = vmatprep.subr.bf16.mxu0 %v611
  %1017 = vmatpush1.bf16.msra.mxu0 %v610
  %1018 = vmatprep.subr.bf16.mxu0 %v615
  %1019 = vmatpush1.bf16.msra.mxu0 %v614
  %1020 = vmatprep.subr.bf16.mxu0 %v619
  %1021 = vmatpush1.bf16.msra.mxu0 %v618
  %1022 = vmatprep.subr.bf16.mxu0 %v623
  %1023 = vmatpush1.bf16.msra.mxu0 %v622
  %1024 = vmatprep.subr.bf16.mxu0 0
  %1025 = vmatpush1.bf16.msra.mxu0 0
  %1026 = vmatprep.subr.bf16.mxu0 0
  %1027 = vmatpush1.bf16.msra.mxu0 0
  %1028 = vmatprep.subr.bf16.mxu0 0
  %1029 = vmatpush1.bf16.msra.mxu0 0
  %1030 = vmatprep.subr.bf16.mxu0 0
  %1031 = vmatpush1.bf16.msra.mxu0 0
  %1032 = vmatprep.subr.bf16.mxu0 0
  %1033 = vmatpush1.bf16.msra.mxu0 0
  %1034 = vmatprep.subr.bf16.mxu0 0
  %1035 = vmatpush1.bf16.msra.mxu0 0
  %1036 = vmatprep.subr.bf16.mxu0 0
  %1037 = vmatpush1.bf16.msra.mxu0 0
  %1038 = vmatprep.subr.bf16.mxu0 0
  %1039 = vmatpush1.bf16.msra.mxu0 0
  %1040 = vmatprep.mubr.bf16.mxu0 0
  %1041 = vmatmul.mubr.bf16.gmra.mrb[0].mxu0 %v1007
  %v1042 = vpop.f32.mrb[0].mxu0
  %v1043 = vadd.f32 0.0, %v1042
  %v1044 = vpop.f32.mrb[0].mxu0
  %v1045 = vadd.f32 0.0, %v1044
  %v1046 = vpop.f32.mrb[0].mxu0
  %v1047 = vpop.f32.mrb[0].mxu0
  %1048 = vdwg.mxu0
  %1049 = vmatprep.subr.bf16.mxu0 %v597
  %1050 = vmatpush1.bf16.msra.mxu0 %v596
  %1051 = vmatprep.subr.bf16.mxu0 %v601
  %1052 = vmatpush1.bf16.msra.mxu0 %v600
  %1053 = vmatprep.subr.bf16.mxu0 %v605
  %1054 = vmatpush1.bf16.msra.mxu0 %v604
  %1055 = vmatprep.subr.bf16.mxu0 %v609
  %1056 = vmatpush1.bf16.msra.mxu0 %v608
  %1057 = vmatprep.subr.bf16.mxu0 %v613
  %1058 = vmatpush1.bf16.msra.mxu0 %v612
  %1059 = vmatprep.subr.bf16.mxu0 %v617
  %1060 = vmatpush1.bf16.msra.mxu0 %v616
  %1061 = vmatprep.subr.bf16.mxu0 %v621
  %1062 = vmatpush1.bf16.msra.mxu0 %v620
  %1063 = vmatprep.subr.bf16.mxu0 %v625
  %1064 = vmatpush1.bf16.msra.mxu0 %v624
  %1065 = vmatprep.subr.bf16.mxu0 0
  %1066 = vmatpush1.bf16.msra.mxu0 0
  %1067 = vmatprep.subr.bf16.mxu0 0
  %1068 = vmatpush1.bf16.msra.mxu0 0
  %1069 = vmatprep.subr.bf16.mxu0 0
  %1070 = vmatpush1.bf16.msra.mxu0 0
  %1071 = vmatprep.subr.bf16.mxu0 0
  %1072 = vmatpush1.bf16.msra.mxu0 0
  %1073 = vmatprep.subr.bf16.mxu0 0
  %1074 = vmatpush1.bf16.msra.mxu0 0
  %1075 = vmatprep.subr.bf16.mxu0 0
  %1076 = vmatpush1.bf16.msra.mxu0 0
  %1077 = vmatprep.subr.bf16.mxu0 0
  %1078 = vmatpush1.bf16.msra.mxu0 0
  %1079 = vmatprep.subr.bf16.mxu0 0
  %1080 = vmatpush1.bf16.msra.mxu0 0
  %1081 = vmatprep.mubr.bf16.mxu0 0
  %1082 = vmatmul.mubr.bf16.gmra.mrb[0].mxu0 %v1007
  %v1083 = vpop.f32.mrb[0].mxu0
  %v1084 = vadd.f32 0.0, %v1083
  %v1085 = vpop.f32.mrb[0].mxu0
  %v1086 = vadd.f32 0.0, %v1085
  %v1087 = vpop.f32.mrb[0].mxu0
  %v1088 = vpop.f32.mrb[0].mxu0
  %1089 = vdwg.mxu0
  %v1090 = vadd.f32 %v1003, %v1043
  %v1091 = vadd.f32 %v1004, %v1045
  %v1092 = vadd.f32 %v1005, %v1084
  %v1093 = vadd.f32 %v1006, %v1086
  %v1094 = vmul.f32 %v1090, 0.5
  %v1095 = vtanh.pop %v1094
  %v1096 = vmul.f32 %v1095, 0.5
  %v1097 = vadd.f32 %v1096, 0.5
  %v1098 = vmul.f32 %v1091, 0.5
  %v1099 = vtanh.pop %v1098
  %v1100 = vmul.f32 %v1099, 0.5
  %v1101 = vadd.f32 %v1100, 0.5
  %v1102 = vtanh.pop %v1092
  %v1103 = vmul.f32 %v1093, 0.5
  %v1104 = vtanh.pop %v1103
  %v1105 = vmul.f32 %v1104, 0.5
  %v1106 = vadd.f32 %v1105, 0.5
  %v1107 = vmul.f32 %v1101, %v1001
  %v1108 = vmul.f32 %v1097, %v1102
  %v1109 = vadd.f32 %v1107, %v1108
  %v1110 = vtanh.pop %v1109
  %v1111 = vmul.f32 %v1106, %v1110
  %1112 = vst [vmem:[#allocation3] sm:$0xff] %v1109
  %1113 = vst [vmem:[#allocation2] sm:$0xff] %v1111
  %v1114 = vpack.c.bf16 %v1111, %v1111
  %s1115 = scalar_lea.vmem [#allocation4], 12
  %1116 = vst [vmem:[%s1115] sm:$0xf] %v1114
  %v1117 = vld [vmem:[#allocation2] sm:$0xff]
  %v1118 = vld [vmem:[#allocation3] sm:$0xff]
  %s1119 = scalar_lea.vmem [#allocation5], 128
  %v1120 = vld [vmem:[%s1119] sm:$0xff]
  %v1121 = vld [vmem:[%s1119 + $0x8] sm:$0xff]
  %v1122 = vld [vmem:[%s1119 + $0x10] sm:$0xff]
  %v1123 = vld [vmem:[%s1119 + $0x18] sm:$0xff]
  %v1124 = vpack.c.bf16 %v1117, %v1117
  %1125 = vmatprep.subr.bf16.mxu0 %v595
  %1126 = vmatpush1.bf16.msra.mxu0 %v594
  %1127 = vmatprep.subr.bf16.mxu0 %v599
  %1128 = vmatpush1.bf16.msra.mxu0 %v598
  %1129 = vmatprep.subr.bf16.mxu0 %v603
  %1130 = vmatpush1.bf16.msra.mxu0 %v602
  %1131 = vmatprep.subr.bf16.mxu0 %v607
  %1132 = vmatpush1.bf16.msra.mxu0 %v606
  %1133 = vmatprep.subr.bf16.mxu0 %v611
  %1134 = vmatpush1.bf16.msra.mxu0 %v610
  %1135 = vmatprep.subr.bf16.mxu0 %v615
  %1136 = vmatpush1.bf16.msra.mxu0 %v614
  %1137 = vmatprep.subr.bf16.mxu0 %v619
  %1138 = vmatpush1.bf16.msra.mxu0 %v618
  %1139 = vmatprep.subr.bf16.mxu0 %v623
  %1140 = vmatpush1.bf16.msra.mxu0 %v622
  %1141 = vmatprep.subr.bf16.mxu0 0
  %1142 = vmatpush1.bf16.msra.mxu0 0
  %1143 = vmatprep.subr.bf16.mxu0 0
  %1144 = vmatpush1.bf16.msra.mxu0 0
  %1145 = vmatprep.subr.bf16.mxu0 0
  %1146 = vmatpush1.bf16.msra.mxu0 0
  %1147 = vmatprep.subr.bf16.mxu0 0
  %1148 = vmatpush1.bf16.msra.mxu0 0
  %1149 = vmatprep.subr.bf16.mxu0 0
  %1150 = vmatpush1.bf16.msra.mxu0 0
  %1151 = vmatprep.subr.bf16.mxu0 0
  %1152 = vmatpush1.bf16.msra.mxu0 0
  %1153 = vmatprep.subr.bf16.mxu0 0
  %1154 = vmatpush1.bf16.msra.mxu0 0
  %1155 = vmatprep.subr.bf16.mxu0 0
  %1156 = vmatpush1.bf16.msra.mxu0 0
  %1157 = vmatprep.mubr.bf16.mxu0 0
  %1158 = vmatmul.mubr.bf16.gmra.mrb[0].mxu0 %v1124
  %v1159 = vpop.f32.mrb[0].mxu0
  %v1160 = vadd.f32 0.0, %v1159
  %v1161 = vpop.f32.mrb[0].mxu0
  %v1162 = vadd.f32 0.0, %v1161
  %v1163 = vpop.f32.mrb[0].mxu0
  %v1164 = vpop.f32.mrb[0].mxu0
  %1165 = vdwg.mxu0
  %1166 = vmatprep.subr.bf16.mxu0 %v597
  %1167 = vmatpush1.bf16.msra.mxu0 %v596
  %1168 = vmatprep.subr.bf16.mxu0 %v601
  %1169 = vmatpush1.bf16.msra.mxu0 %v600
  %1170 = vmatprep.subr.bf16.mxu0 %v605
  %1171 = vmatpush1.bf16.msra.mxu0 %v604
  %1172 = vmatprep.subr.bf16.mxu0 %v609
  %1173 = vmatpush1.bf16.msra.mxu0 %v608
  %1174 = vmatprep.subr.bf16.mxu0 %v613
  %1175 = vmatpush1.bf16.msra.mxu0 %v612
  %1176 = vmatprep.subr.bf16.mxu0 %v617
  %1177 = vmatpush1.bf16.msra.mxu0 %v616
  %1178 = vmatprep.subr.bf16.mxu0 %v621
  %1179 = vmatpush1.bf16.msra.mxu0 %v620
  %1180 = vmatprep.subr.bf16.mxu0 %v625
  %1181 = vmatpush1.bf16.msra.mxu0 %v624
  %1182 = vmatprep.subr.bf16.mxu0 0
  %1183 = vmatpush1.bf16.msra.mxu0 0
  %1184 = vmatprep.subr.bf16.mxu0 0
  %1185 = vmatpush1.bf16.msra.mxu0 0
  %1186 = vmatprep.subr.bf16.mxu0 0
  %1187 = vmatpush1.bf16.msra.mxu0 0
  %1188 = vmatprep.subr.bf16.mxu0 0
  %1189 = vmatpush1.bf16.msra.mxu0 0
  %1190 = vmatprep.subr.bf16.mxu0 0
  %1191 = vmatpush1.bf16.msra.mxu0 0
  %1192 = vmatprep.subr.bf16.mxu0 0
  %1193 = vmatpush1.bf16.msra.mxu0 0
  %1194 = vmatprep.subr.bf16.mxu0 0
  %1195 = vmatpush1.bf16.msra.mxu0 0
  %1196 = vmatprep.subr.bf16.mxu0 0
  %1197 = vmatpush1.bf16.msra.mxu0 0
  %1198 = vmatprep.mubr.bf16.mxu0 0
  %1199 = vmatmul.mubr.bf16.gmra.mrb[0].mxu0 %v1124
  %v1200 = vpop.f32.mrb[0].mxu0
  %v1201 = vadd.f32 0.0, %v1200
  %v1202 = vpop.f32.mrb[0].mxu0
  %v1203 = vadd.f32 0.0, %v1202
  %v1204 = vpop.f32.mrb[0].mxu0
  %v1205 = vpop.f32.mrb[0].mxu0
  %1206 = vdwg.mxu0
  %v1207 = vadd.f32 %v1120, %v1160
  %v1208 = vadd.f32 %v1121, %v1162
  %v1209 = vadd.f32 %v1122, %v1201
  %v1210 = vadd.f32 %v1123, %v1203
  %v1211 = vmul.f32 %v1207, 0.5
  %v1212 = vtanh.pop %v1211
  %v1213 = vmul.f32 %v1212, 0.5
  %v1214 = vadd.f32 %v1213, 0.5
  %v1215 = vmul.f32 %v1208, 0.5
  %v1216 = vtanh.pop %v1215
  %v1217 = vmul.f32 %v1216, 0.5
  %v1218 = vadd.f32 %v1217, 0.5
  %v1219 = vtanh.pop %v1209
  %v1220 = vmul.f32 %v1210, 0.5
  %v1221 = vtanh.pop %v1220
  %v1222 = vmul.f32 %v1221, 0.5
  %v1223 = vadd.f32 %v1222, 0.5
  %v1224 = vmul.f32 %v1218, %v1118
  %v1225 = vmul.f32 %v1214, %v1219
  %v1226 = vadd.f32 %v1224, %v1225
  %v1227 = vtanh.pop %v1226
  %v1228 = vmul.f32 %v1223, %v1227
  %1229 = vst [vmem:[#allocation3] sm:$0xff] %v1226
  %1230 = vst [vmem:[#allocation2] sm:$0xff] %v1228
  %v1231 = vpack.c.bf16 %v1228, %v1228
  %s1232 = scalar_lea.vmem [#allocation4], 16
  %1233 = vst [vmem:[%s1232] sm:$0xf] %v1231
  %v1234 = vld [vmem:[#allocation2] sm:$0xff]
  %v1235 = vld [vmem:[#allocation3] sm:$0xff]
  %s1236 = scalar_lea.vmem [#allocation5], 160
  %v1237 = vld [vmem:[%s1236] sm:$0xff]
  %v1238 = vld [vmem:[%s1236 + $0x8] sm:$0xff]
  %v1239 = vld [vmem:[%s1236 + $0x10] sm:$0xff]
  %v1240 = vld [vmem:[%s1236 + $0x18] sm:$0xff]
  %v1241 = vpack.c.bf16 %v1234, %v1234
  %1242 = vmatprep.subr.bf16.mxu0 %v595
  %1243 = vmatpush1.bf16.msra.mxu0 %v594
  %1244 = vmatprep.subr.bf16.mxu0 %v599
  %1245 = vmatpush1.bf16.msra.mxu0 %v598
  %1246 = vmatprep.subr.bf16.mxu0 %v603
  %1247 = vmatpush1.bf16.msra.mxu0 %v602
  %1248 = vmatprep.subr.bf16.mxu0 %v607
  %1249 = vmatpush1.bf16.msra.mxu0 %v606
  %1250 = vmatprep.subr.bf16.mxu0 %v611
  %1251 = vmatpush1.bf16.msra.mxu0 %v610
  %1252 = vmatprep.subr.bf16.mxu0 %v615
  %1253 = vmatpush1.bf16.msra.mxu0 %v614
  %1254 = vmatprep.subr.bf16.mxu0 %v619
  %1255 = vmatpush1.bf16.msra.mxu0 %v618
  %1256 = vmatprep.subr.bf16.mxu0 %v623
  %1257 = vmatpush1.bf16.msra.mxu0 %v622
  %1258 = vmatprep.subr.bf16.mxu0 0
  %1259 = vmatpush1.bf16.msra.mxu0 0
  %1260 = vmatprep.subr.bf16.mxu0 0
  %1261 = vmatpush1.bf16.msra.mxu0 0
  %1262 = vmatprep.subr.bf16.mxu0 0
  %1263 = vmatpush1.bf16.msra.mxu0 0
  %1264 = vmatprep.subr.bf16.mxu0 0
  %1265 = vmatpush1.bf16.msra.mxu0 0
  %1266 = vmatprep.subr.bf16.mxu0 0
  %1267 = vmatpush1.bf16.msra.mxu0 0
  %1268 = vmatprep.subr.bf16.mxu0 0
  %1269 = vmatpush1.bf16.msra.mxu0 0
  %1270 = vmatprep.subr.bf16.mxu0 0
  %1271 = vmatpush1.bf16.msra.mxu0 0
  %1272 = vmatprep.subr.bf16.mxu0 0
  %1273 = vmatpush1.bf16.msra.mxu0 0
  %1274 = vmatprep.mubr.bf16.mxu0 0
  %1275 = vmatmul.mubr.bf16.gmra.mrb[0].mxu0 %v1241
  %v1276 = vpop.f32.mrb[0].mxu0
  %v1277 = vadd.f32 0.0, %v1276
  %v1278 = vpop.f32.mrb[0].mxu0
  %v1279 = vadd.f32 0.0, %v1278
  %v1280 = vpop.f32.mrb[0].mxu0
  %v1281 = vpop.f32.mrb[0].mxu0
  %1282 = vdwg.mxu0
  %1283 = vmatprep.subr.bf16.mxu0 %v597
  %1284 = vmatpush1.bf16.msra.mxu0 %v596
  %1285 = vmatprep.subr.bf16.mxu0 %v601
  %1286 = vmatpush1.bf16.msra.mxu0 %v600
  %1287 = vmatprep.subr.bf16.mxu0 %v605
  %1288 = vmatpush1.bf16.msra.mxu0 %v604
  %1289 = vmatprep.subr.bf16.mxu0 %v609
  %1290 = vmatpush1.bf16.msra.mxu0 %v608
  %1291 = vmatprep.subr.bf16.mxu0 %v613
  %1292 = vmatpush1.bf16.msra.mxu0 %v612
  %1293 = vmatprep.subr.bf16.mxu0 %v617
  %1294 = vmatpush1.bf16.msra.mxu0 %v616
  %1295 = vmatprep.subr.bf16.mxu0 %v621
  %1296 = vmatpush1.bf16.msra.mxu0 %v620
  %1297 = vmatprep.subr.bf16.mxu0 %v625
  %1298 = vmatpush1.bf16.msra.mxu0 %v624
  %1299 = vmatprep.subr.bf16.mxu0 0
  %1300 = vmatpush1.bf16.msra.mxu0 0
  %1301 = vmatprep.subr.bf16.mxu0 0
  %1302 = vmatpush1.bf16.msra.mxu0 0
  %1303 = vmatprep.subr.bf16.mxu0 0
  %1304 = vmatpush1.bf16.msra.mxu0 0
  %1305 = vmatprep.subr.bf16.mxu0 0
  %1306 = vmatpush1.bf16.msra.mxu0 0
  %1307 = vmatprep.subr.bf16.mxu0 0
  %1308 = vmatpush1.bf16.msra.mxu0 0
  %1309 = vmatprep.subr.bf16.mxu0 0
  %1310 = vmatpush1.bf16.msra.mxu0 0
  %1311 = vmatprep.subr.bf16.mxu0 0
  %1312 = vmatpush1.bf16.msra.mxu0 0
  %1313 = vmatprep.subr.bf16.mxu0 0
  %1314 = vmatpush1.bf16.msra.mxu0 0
  %1315 = vmatprep.mubr.bf16.mxu0 0
  %1316 = vmatmul.mubr.bf16.gmra.mrb[0].mxu0 %v1241
  %v1317 = vpop.f32.mrb[0].mxu0
  %v1318 = vadd.f32 0.0, %v1317
  %v1319 = vpop.f32.mrb[0].mxu0
  %v1320 = vadd.f32 0.0, %v1319
  %v1321 = vpop.f32.mrb[0].mxu0
  %v1322 = vpop.f32.mrb[0].mxu0
  %1323 = vdwg.mxu0
  %v1324 = vadd.f32 %v1237, %v1277
  %v1325 = vadd.f32 %v1238, %v1279
  %v1326 = vadd.f32 %v1239, %v1318
  %v1327 = vadd.f32 %v1240, %v1320
  %v1328 = vmul.f32 %v1324, 0.5
  %v1329 = vtanh.pop %v1328
  %v1330 = vmul.f32 %v1329, 0.5
  %v1331 = vadd.f32 %v1330, 0.5
  %v1332 = vmul.f32 %v1325, 0.5
  %v1333 = vtanh.pop %v1332
  %v1334 = vmul.f32 %v1333, 0.5
  %v1335 = vadd.f32 %v1334, 0.5
  %v1336 = vtanh.pop %v1326
  %v1337 = vmul.f32 %v1327, 0.5
  %v1338 = vtanh.pop %v1337
  %v1339 = vmul.f32 %v1338, 0.5
  %v1340 = vadd.f32 %v1339, 0.5
  %v1341 = vmul.f32 %v1335, %v1235
  %v1342 = vmul.f32 %v1331, %v1336
  %v1343 = vadd.f32 %v1341, %v1342
  %v1344 = vtanh.pop %v1343
  %v1345 = vmul.f32 %v1340, %v1344
  %1346 = vst [vmem:[#allocation3] sm:$0xff] %v1343
  %1347 = vst [vmem:[#allocation2] sm:$0xff] %v1345
  %v1348 = vpack.c.bf16 %v1345, %v1345
  %s1349 = scalar_lea.vmem [#allocation4], 20
  %1350 = vst [vmem:[%s1349] sm:$0xf] %v1348
  %v1351 = vld [vmem:[#allocation2] sm:$0xff]
  %v1352 = vld [vmem:[#allocation3] sm:$0xff]
  %s1353 = scalar_lea.vmem [#allocation5], 192
  %v1354 = vld [vmem:[%s1353] sm:$0xff]
  %v1355 = vld [vmem:[%s1353 + $0x8] sm:$0xff]
  %v1356 = vld [vmem:[%s1353 + $0x10] sm:$0xff]
  %v1357 = vld [vmem:[%s1353 + $0x18] sm:$0xff]
  %v1358 = vpack.c.bf16 %v1351, %v1351
  %1359 = vmatprep.subr.bf16.mxu0 %v595
  %1360 = vmatpush1.bf16.msra.mxu0 %v594
  %1361 = vmatprep.subr.bf16.mxu0 %v599
  %1362 = vmatpush1.bf16.msra.mxu0 %v598
  %1363 = vmatprep.subr.bf16.mxu0 %v603
  %1364 = vmatpush1.bf16.msra.mxu0 %v602
  %1365 = vmatprep.subr.bf16.mxu0 %v607
  %1366 = vmatpush1.bf16.msra.mxu0 %v606
  %1367 = vmatprep.subr.bf16.mxu0 %v611
  %1368 = vmatpush1.bf16.msra.mxu0 %v610
  %1369 = vmatprep.subr.bf16.mxu0 %v615
  %1370 = vmatpush1.bf16.msra.mxu0 %v614
  %1371 = vmatprep.subr.bf16.mxu0 %v619
  %1372 = vmatpush1.bf16.msra.mxu0 %v618
  %1373 = vmatprep.subr.bf16.mxu0 %v623
  %1374 = vmatpush1.bf16.msra.mxu0 %v622
  %1375 = vmatprep.subr.bf16.mxu0 0
  %1376 = vmatpush1.bf16.msra.mxu0 0
  %1377 = vmatprep.subr.bf16.mxu0 0
  %1378 = vmatpush1.bf16.msra.mxu0 0
  %1379 = vmatprep.subr.bf16.mxu0 0
  %1380 = vmatpush1.bf16.msra.mxu0 0
  %1381 = vmatprep.subr.bf16.mxu0 0
  %1382 = vmatpush1.bf16.msra.mxu0 0
  %1383 = vmatprep.subr.bf16.mxu0 0
  %1384 = vmatpush1.bf16.msra.mxu0 0
  %1385 = vmatprep.subr.bf16.mxu0 0
  %1386 = vmatpush1.bf16.msra.mxu0 0
  %1387 = vmatprep.subr.bf16.mxu0 0
  %1388 = vmatpush1.bf16.msra.mxu0 0
  %1389 = vmatprep.subr.bf16.mxu0 0
  %1390 = vmatpush1.bf16.msra.mxu0 0
  %1391 = vmatprep.mubr.bf16.mxu0 0
  %1392 = vmatmul.mubr.bf16.gmra.mrb[0].mxu0 %v1358
  %v1393 = vpop.f32.mrb[0].mxu0
  %v1394 = vadd.f32 0.0, %v1393
  %v1395 = vpop.f32.mrb[0].mxu0
  %v1396 = vadd.f32 0.0, %v1395
  %v1397 = vpop.f32.mrb[0].mxu0
  %v1398 = vpop.f32.mrb[0].mxu0
  %1399 = vdwg.mxu0
  %1400 = vmatprep.subr.bf16.mxu0 %v597
  %1401 = vmatpush1.bf16.msra.mxu0 %v596
  %1402 = vmatprep.subr.bf16.mxu0 %v601
  %1403 = vmatpush1.bf16.msra.mxu0 %v600
  %1404 = vmatprep.subr.bf16.mxu0 %v605
  %1405 = vmatpush1.bf16.msra.mxu0 %v604
  %1406 = vmatprep.subr.bf16.mxu0 %v609
  %1407 = vmatpush1.bf16.msra.mxu0 %v608
  %1408 = vmatprep.subr.bf16.mxu0 %v613
  %1409 = vmatpush1.bf16.msra.mxu0 %v612
  %1410 = vmatprep.subr.bf16.mxu0 %v617
  %1411 = vmatpush1.bf16.msra.mxu0 %v616
  %1412 = vmatprep.subr.bf16.mxu0 %v621
  %1413 = vmatpush1.bf16.msra.mxu0 %v620
  %1414 = vmatprep.subr.bf16.mxu0 %v625
  %1415 = vmatpush1.bf16.msra.mxu0 %v624
  %1416 = vmatprep.subr.bf16.mxu0 0
  %1417 = vmatpush1.bf16.msra.mxu0 0
  %1418 = vmatprep.subr.bf16.mxu0 0
  %1419 = vmatpush1.bf16.msra.mxu0 0
  %1420 = vmatprep.subr.bf16.mxu0 0
  %1421 = vmatpush1.bf16.msra.mxu0 0
  %1422 = vmatprep.subr.bf16.mxu0 0
  %1423 = vmatpush1.bf16.msra.mxu0 0
  %1424 = vmatprep.subr.bf16.mxu0 0
  %1425 = vmatpush1.bf16.msra.mxu0 0
  %1426 = vmatprep.subr.bf16.mxu0 0
  %1427 = vmatpush1.bf16.msra.mxu0 0
  %1428 = vmatprep.subr.bf16.mxu0 0
  %1429 = vmatpush1.bf16.msra.mxu0 0
  %1430 = vmatprep.subr.bf16.mxu0 0
  %1431 = vmatpush1.bf16.msra.mxu0 0
  %1432 = vmatprep.mubr.bf16.mxu0 0
  %1433 = vmatmul.mubr.bf16.gmra.mrb[0].mxu0 %v1358
  %v1434 = vpop.f32.mrb[0].mxu0
  %v1435 = vadd.f32 0.0, %v1434
  %v1436 = vpop.f32.mrb[0].mxu0
  %v1437 = vadd.f32 0.0, %v1436
  %v1438 = vpop.f32.mrb[0].mxu0
  %v1439 = vpop.f32.mrb[0].mxu0
  %1440 = vdwg.mxu0
  %v1441 = vadd.f32 %v1354, %v1394
  %v1442 = vadd.f32 %v1355, %v1396
  %v1443 = vadd.f32 %v1356, %v1435
  %v1444 = vadd.f32 %v1357, %v1437
  %v1445 = vmul.f32 %v1441, 0.5
  %v1446 = vtanh.pop %v1445
  %v1447 = vmul.f32 %v1446, 0.5
  %v1448 = vadd.f32 %v1447, 0.5
  %v1449 = vmul.f32 %v1442, 0.5
  %v1450 = vtanh.pop %v1449
  %v1451 = vmul.f32 %v1450, 0.5
  %v1452 = vadd.f32 %v1451, 0.5
  %v1453 = vtanh.pop %v1443
  %v1454 = vmul.f32 %v1444, 0.5
  %v1455 = vtanh.pop %v1454
  %v1456 = vmul.f32 %v1455, 0.5
  %v1457 = vadd.f32 %v1456, 0.5
  %v1458 = vmul.f32 %v1452, %v1352
  %v1459 = vmul.f32 %v1448, %v1453
  %v1460 = vadd.f32 %v1458, %v1459
  %v1461 = vtanh.pop %v1460
  %v1462 = vmul.f32 %v1457, %v1461
  %1463 = vst [vmem:[#allocation3] sm:$0xff] %v1460
  %1464 = vst [vmem:[#allocation2] sm:$0xff] %v1462
  %v1465 = vpack.c.bf16 %v1462, %v1462
  %s1466 = scalar_lea.vmem [#allocation4], 24
  %1467 = vst [vmem:[%s1466] sm:$0xf] %v1465
  %v1468 = vld [vmem:[#allocation2] sm:$0xff]
  %v1469 = vld [vmem:[#allocation3] sm:$0xff]
  %s1470 = scalar_lea.vmem [#allocation5], 224
  %v1471 = vld [vmem:[%s1470] sm:$0xff]
  %v1472 = vld [vmem:[%s1470 + $0x8] sm:$0xff]
  %v1473 = vld [vmem:[%s1470 + $0x10] sm:$0xff]
  %v1474 = vld [vmem:[%s1470 + $0x18] sm:$0xff]
  %v1475 = vpack.c.bf16 %v1468, %v1468
  %1476 = vmatprep.subr.bf16.mxu0 %v595
  %1477 = vmatpush1.bf16.msra.mxu0 %v594
  %1478 = vmatprep.subr.bf16.mxu0 %v599
  %1479 = vmatpush1.bf16.msra.mxu0 %v598
  %1480 = vmatprep.subr.bf16.mxu0 %v603
  %1481 = vmatpush1.bf16.msra.mxu0 %v602
  %1482 = vmatprep.subr.bf16.mxu0 %v607
  %1483 = vmatpush1.bf16.msra.mxu0 %v606
  %1484 = vmatprep.subr.bf16.mxu0 %v611
  %1485 = vmatpush1.bf16.msra.mxu0 %v610
  %1486 = vmatprep.subr.bf16.mxu0 %v615
  %1487 = vmatpush1.bf16.msra.mxu0 %v614
  %1488 = vmatprep.subr.bf16.mxu0 %v619
  %1489 = vmatpush1.bf16.msra.mxu0 %v618
  %1490 = vmatprep.subr.bf16.mxu0 %v623
  %1491 = vmatpush1.bf16.msra.mxu0 %v622
  %1492 = vmatprep.subr.bf16.mxu0 0
  %1493 = vmatpush1.bf16.msra.mxu0 0
  %1494 = vmatprep.subr.bf16.mxu0 0
  %1495 = vmatpush1.bf16.msra.mxu0 0
  %1496 = vmatprep.subr.bf16.mxu0 0
  %1497 = vmatpush1.bf16.msra.mxu0 0
  %1498 = vmatprep.subr.bf16.mxu0 0
  %1499 = vmatpush1.bf16.msra.mxu0 0
  %1500 = vmatprep.subr.bf16.mxu0 0
  %1501 = vmatpush1.bf16.msra.mxu0 0
  %1502 = vmatprep.subr.bf16.mxu0 0
  %1503 = vmatpush1.bf16.msra.mxu0 0
  %1504 = vmatprep.subr.bf16.mxu0 0
  %1505 = vmatpush1.bf16.msra.mxu0 0
  %1506 = vmatprep.subr.bf16.mxu0 0
  %1507 = vmatpush1.bf16.msra.mxu0 0
  %1508 = vmatprep.mubr.bf16.mxu0 0
  %1509 = vmatmul.mubr.bf16.gmra.mrb[0].mxu0 %v1475
  %v1510 = vpop.f32.mrb[0].mxu0
  %v1511 = vadd.f32 0.0, %v1510
  %v1512 = vpop.f32.mrb[0].mxu0
  %v1513 = vadd.f32 0.0, %v1512
  %v1514 = vpop.f32.mrb[0].mxu0
  %v1515 = vpop.f32.mrb[0].mxu0
  %1516 = vdwg.mxu0
  %1517 = vmatprep.subr.bf16.mxu0 %v597
  %1518 = vmatpush1.bf16.msra.mxu0 %v596
  %1519 = vmatprep.subr.bf16.mxu0 %v601
  %1520 = vmatpush1.bf16.msra.mxu0 %v600
  %1521 = vmatprep.subr.bf16.mxu0 %v605
  %1522 = vmatpush1.bf16.msra.mxu0 %v604
  %1523 = vmatprep.subr.bf16.mxu0 %v609
  %1524 = vmatpush1.bf16.msra.mxu0 %v608
  %1525 = vmatprep.subr.bf16.mxu0 %v613
  %1526 = vmatpush1.bf16.msra.mxu0 %v612
  %1527 = vmatprep.subr.bf16.mxu0 %v617
  %1528 = vmatpush1.bf16.msra.mxu0 %v616
  %1529 = vmatprep.subr.bf16.mxu0 %v621
  %1530 = vmatpush1.bf16.msra.mxu0 %v620
  %1531 = vmatprep.subr.bf16.mxu0 %v625
  %1532 = vmatpush1.bf16.msra.mxu0 %v624
  %1533 = vmatprep.subr.bf16.mxu0 0
  %1534 = vmatpush1.bf16.msra.mxu0 0
  %1535 = vmatprep.subr.bf16.mxu0 0
  %1536 = vmatpush1.bf16.msra.mxu0 0
  %1537 = vmatprep.subr.bf16.mxu0 0
  %1538 = vmatpush1.bf16.msra.mxu0 0
  %1539 = vmatprep.subr.bf16.mxu0 0
  %1540 = vmatpush1.bf16.msra.mxu0 0
  %1541 = vmatprep.subr.bf16.mxu0 0
  %1542 = vmatpush1.bf16.msra.mxu0 0
  %1543 = vmatprep.subr.bf16.mxu0 0
  %1544 = vmatpush1.bf16.msra.mxu0 0
  %1545 = vmatprep.subr.bf16.mxu0 0
  %1546 = vmatpush1.bf16.msra.mxu0 0
  %1547 = vmatprep.subr.bf16.mxu0 0
  %1548 = vmatpush1.bf16.msra.mxu0 0
  %1549 = vmatprep.mubr.bf16.mxu0 0
  %1550 = vmatmul.mubr.bf16.gmra.mrb[0].mxu0 %v1475
  %v1551 = vpop.f32.mrb[0].mxu0
  %v1552 = vadd.f32 0.0, %v1551
  %v1553 = vpop.f32.mrb[0].mxu0
  %v1554 = vadd.f32 0.0, %v1553
  %v1555 = vpop.f32.mrb[0].mxu0
  %v1556 = vpop.f32.mrb[0].mxu0
  %1557 = vdwg.mxu0
  %v1558 = vadd.f32 %v1471, %v1511
  %v1559 = vadd.f32 %v1472, %v1513
  %v1560 = vadd.f32 %v1473, %v1552
  %v1561 = vadd.f32 %v1474, %v1554
  %v1562 = vmul.f32 %v1558, 0.5
  %v1563 = vtanh.pop %v1562
  %v1564 = vmul.f32 %v1563, 0.5
  %v1565 = vadd.f32 %v1564, 0.5
  %v1566 = vmul.f32 %v1559, 0.5
  %v1567 = vtanh.pop %v1566
  %v1568 = vmul.f32 %v1567, 0.5
  %v1569 = vadd.f32 %v1568, 0.5
  %v1570 = vtanh.pop %v1560
  %v1571 = vmul.f32 %v1561, 0.5
  %v1572 = vtanh.pop %v1571
  %v1573 = vmul.f32 %v1572, 0.5
  %v1574 = vadd.f32 %v1573, 0.5
  %v1575 = vmul.f32 %v1569, %v1469
  %v1576 = vmul.f32 %v1565, %v1570
  %v1577 = vadd.f32 %v1575, %v1576
  %v1578 = vtanh.pop %v1577
  %v1579 = vmul.f32 %v1574, %v1578
  %1580 = vst [vmem:[#allocation3] sm:$0xff] %v1577
  %1581 = vst [vmem:[#allocation2] sm:$0xff] %v1579
  %v1582 = vpack.c.bf16 %v1579, %v1579
  %s1583 = scalar_lea.vmem [#allocation4], 28
  %1584 = vst [vmem:[%s1583] sm:$0xf] %v1582
  %v1585 = vld [vmem:[#allocation4] sm:$0xf]
  %v1586 = vld [vmem:[#allocation4 + $0x4] sm:$0xf]
  %v1587 = vld [vmem:[#allocation4 + $0x8] sm:$0xf]
  %v1588 = vld [vmem:[#allocation4 + $0xc] sm:$0xf]
  %v1589 = vld [vmem:[#allocation4 + $0x10] sm:$0xf]
  %v1590 = vld [vmem:[#allocation4 + $0x14] sm:$0xf]
  %v1591 = vld [vmem:[#allocation4 + $0x18] sm:$0xf]
  %v1592 = vld [vmem:[#allocation4 + $0x1c] sm:$0xf]
  %v1593 = vld [vmem:[%s2] sm:$0xff]
  %v1594 = vld [vmem:[%s2 + $0x8] sm:$0xff]
  %v1595 = vld [vmem:[%s2 + $0x10] sm:$0xff]
  %v1596 = vld [vmem:[%s2 + $0x18] sm:$0xff]
  %v1597 = vld [vmem:[%s2 + $0x20] sm:$0xff]
  %v1598 = vld [vmem:[%s2 + $0x28] sm:$0xff]
  %v1599 = vld [vmem:[%s2 + $0x30] sm:$0xff]
  %v1600 = vld [vmem:[%s2 + $0x38] sm:$0xff]
  %v1601 = vld [vmem:[%s2 + $0x40] sm:$0xff]
  %v1602 = vld [vmem:[%s2 + $0x48] sm:$0xff]
  %v1603 = vld [vmem:[%s2 + $0x50] sm:$0xff]
  %v1604 = vld [vmem:[%s2 + $0x58] sm:$0xff]
  %v1605 = vld [vmem:[%s2 + $0x60] sm:$0xff]
  %v1606 = vld [vmem:[%s2 + $0x68] sm:$0xff]
  %v1607 = vld [vmem:[%s2 + $0x70] sm:$0xff]
  %v1608 = vld [vmem:[%s2 + $0x78] sm:$0xff]
  %v1609 = vld [vmem:[%s2 + $0x80] sm:$0xff]
  %v1610 = vld [vmem:[%s2 + $0x88] sm:$0xff]
  %v1611 = vld [vmem:[%s2 + $0x90] sm:$0xff]
  %v1612 = vld [vmem:[%s2 + $0x98] sm:$0xff]
  %v1613 = vld [vmem:[%s2 + $0xa0] sm:$0xff]
  %v1614 = vld [vmem:[%s2 + $0xa8] sm:$0xff]
  %v1615 = vld [vmem:[%s2 + $0xb0] sm:$0xff]
  %v1616 = vld [vmem:[%s2 + $0xb8] sm:$0xff]
  %v1617 = vld [vmem:[%s2 + $0xc0] sm:$0xff]
  %v1618 = vld [vmem:[%s2 + $0xc8] sm:$0xff]
  %v1619 = vld [vmem:[%s2 + $0xd0] sm:$0xff]
  %v1620 = vld [vmem:[%s2 + $0xd8] sm:$0xff]
  %v1621 = vld [vmem:[%s2 + $0xe0] sm:$0xff]
  %v1622 = vld [vmem:[%s2 + $0xe8] sm:$0xff]
  %v1623 = vld [vmem:[%s2 + $0xf0] sm:$0xff]
  %v1624 = vld [vmem:[%s2 + $0xf8] sm:$0xff]
  %s1625 = scalar_lea.vmem %s4, 4
  %v1626 = vld [vmem:[%s1625] sm:$0xf]
  %v1628 = vlaneseq
  %v1629 = vshrl.u32 %v1628, 7
  %v1630 = vsub.s32 0, %v1629
  %v1631 = vrot.slane %v1626, %v1630
  %v1632 = vlaneseq
  %v1633 = vshrl.u32 %v1632, 7
  %v1634 = vsub.s32 1, %v1633
  %v1635 = vrot.slane %v1626, %v1634
  %v1636 = vlaneseq
  %v1637 = vshrl.u32 %v1636, 7
  %v1638 = vsub.s32 2, %v1637
  %v1639 = vrot.slane %v1626, %v1638
  %v1640 = vlaneseq
  %v1641 = vshrl.u32 %v1640, 7
  %v1642 = vsub.s32 3, %v1641
  %v1643 = vrot.slane %v1626, %v1642
  %v1656 = vunpack.c.l.b16 %v1585
  %v1657 = vunpack.c.l.b16 %v1586
  %v1658 = vunpack.c.l.b16 %v1587
  %v1659 = vunpack.c.l.b16 %v1588
  %v1660 = vunpack.c.l.b16 %v1589
  %v1661 = vunpack.c.l.b16 %v1590
  %v1662 = vunpack.c.l.b16 %v1591
  %v1663 = vunpack.c.l.b16 %v1592
  %v1664 = vpack.c.b16 %v1657, %v1656
  %v1665 = vpack.c.b16 %v1659, %v1658
  %v1666 = vpack.c.b16 %v1661, %v1660
  %v1667 = vpack.c.b16 %v1663, %v1662
  %v1704 = vunpack.c.l.b16 %v1593
  %v1705 = vunpack.c.h.b16 %v1593
  %v1706 = vunpack.c.l.b16 %v1594
  %v1707 = vunpack.c.h.b16 %v1594
  %v1708 = vunpack.c.l.b16 %v1595
  %v1709 = vunpack.c.h.b16 %v1595
  %v1710 = vunpack.c.l.b16 %v1596
  %v1711 = vunpack.c.h.b16 %v1596
  %v1712 = vunpack.c.l.b16 %v1597
  %v1713 = vunpack.c.h.b16 %v1597
  %v1714 = vunpack.c.l.b16 %v1598
  %v1715 = vunpack.c.h.b16 %v1598
  %v1716 = vunpack.c.l.b16 %v1599
  %v1717 = vunpack.c.h.b16 %v1599
  %v1718 = vunpack.c.l.b16 %v1600
  %v1719 = vunpack.c.h.b16 %v1600
  %v1720 = vunpack.c.l.b16 %v1601
  %v1721 = vunpack.c.h.b16 %v1601
  %v1722 = vunpack.c.l.b16 %v1602
  %v1723 = vunpack.c.h.b16 %v1602
  %v1724 = vunpack.c.l.b16 %v1603
  %v1725 = vunpack.c.h.b16 %v1603
  %v1726 = vunpack.c.l.b16 %v1604
  %v1727 = vunpack.c.h.b16 %v1604
  %v1728 = vunpack.c.l.b16 %v1605
  %v1729 = vunpack.c.h.b16 %v1605
  %v1730 = vunpack.c.l.b16 %v1606
  %v1731 = vunpack.c.h.b16 %v1606
  %v1732 = vunpack.c.l.b16 %v1607
  %v1733 = vunpack.c.h.b16 %v1607
  %v1734 = vunpack.c.l.b16 %v1608
  %v1735 = vunpack.c.h.b16 %v1608
  %v1736 = vunpack.c.l.b16 %v1609
  %v1737 = vunpack.c.h.b16 %v1609
  %v1738 = vunpack.c.l.b16 %v1610
  %v1739 = vunpack.c.h.b16 %v1610
  %v1740 = vunpack.c.l.b16 %v1611
  %v1741 = vunpack.c.h.b16 %v1611
  %v1742 = vunpack.c.l.b16 %v1612
  %v1743 = vunpack.c.h.b16 %v1612
  %v1744 = vunpack.c.l.b16 %v1613
  %v1745 = vunpack.c.h.b16 %v1613
  %v1746 = vunpack.c.l.b16 %v1614
  %v1747 = vunpack.c.h.b16 %v1614
  %v1748 = vunpack.c.l.b16 %v1615
  %v1749 = vunpack.c.h.b16 %v1615
  %v1750 = vunpack.c.l.b16 %v1616
  %v1751 = vunpack.c.h.b16 %v1616
  %v1752 = vunpack.c.l.b16 %v1617
  %v1753 = vunpack.c.h.b16 %v1617
  %v1754 = vunpack.c.l.b16 %v1618
  %v1755 = vunpack.c.h.b16 %v1618
  %v1756 = vunpack.c.l.b16 %v1619
  %v1757 = vunpack.c.h.b16 %v1619
  %v1758 = vunpack.c.l.b16 %v1620
  %v1759 = vunpack.c.h.b16 %v1620
  %v1760 = vunpack.c.l.b16 %v1621
  %v1761 = vunpack.c.h.b16 %v1621
  %v1762 = vunpack.c.l.b16 %v1622
  %v1763 = vunpack.c.h.b16 %v1622
  %v1764 = vunpack.c.l.b16 %v1623
  %v1765 = vunpack.c.h.b16 %v1623
  %v1766 = vunpack.c.l.b16 %v1624
  %v1767 = vunpack.c.h.b16 %v1624
  %v1768 = vpack.c.b16 %v1708, %v1704
  %v1769 = vpack.c.b16 %v1709, %v1705
  %v1770 = vpack.c.b16 %v1710, %v1706
  %v1771 = vpack.c.b16 %v1711, %v1707
  %v1772 = vpack.c.b16 %v1716, %v1712
  %v1773 = vpack.c.b16 %v1717, %v1713
  %v1774 = vpack.c.b16 %v1718, %v1714
  %v1775 = vpack.c.b16 %v1719, %v1715
  %v1776 = vpack.c.b16 %v1724, %v1720
  %v1777 = vpack.c.b16 %v1725, %v1721
  %v1778 = vpack.c.b16 %v1726, %v1722
  %v1779 = vpack.c.b16 %v1727, %v1723
  %v1780 = vpack.c.b16 %v1732, %v1728
  %v1781 = vpack.c.b16 %v1733, %v1729
  %v1782 = vpack.c.b16 %v1734, %v1730
  %v1783 = vpack.c.b16 %v1735, %v1731
  %v1784 = vpack.c.b16 %v1740, %v1736
  %v1785 = vpack.c.b16 %v1741, %v1737
  %v1786 = vpack.c.b16 %v1742, %v1738
  %v1787 = vpack.c.b16 %v1743, %v1739
  %v1788 = vpack.c.b16 %v1748, %v1744
  %v1789 = vpack.c.b16 %v1749, %v1745
  %v1790 = vpack.c.b16 %v1750, %v1746
  %v1791 = vpack.c.b16 %v1751, %v1747
  %v1792 = vpack.c.b16 %v1756, %v1752
  %v1793 = vpack.c.b16 %v1757, %v1753
  %v1794 = vpack.c.b16 %v1758, %v1754
  %v1795 = vpack.c.b16 %v1759, %v1755
  %v1796 = vpack.c.b16 %v1764, %v1760
  %v1797 = vpack.c.b16 %v1765, %v1761
  %v1798 = vpack.c.b16 %v1766, %v1762
  %v1799 = vpack.c.b16 %v1767, %v1763
  %1832 = vmatprep.subr.bf16.mxu0 %v1769
  %1833 = vmatpush1.bf16.msra.mxu0 %v1768
  %1834 = vmatprep.subr.bf16.mxu0 %v1773
  %1835 = vmatpush1.bf16.msra.mxu0 %v1772
  %1836 = vmatprep.subr.bf16.mxu0 %v1777
  %1837 = vmatpush1.bf16.msra.mxu0 %v1776
  %1838 = vmatprep.subr.bf16.mxu0 %v1781
  %1839 = vmatpush1.bf16.msra.mxu0 %v1780
  %1840 = vmatprep.subr.bf16.mxu0 %v1785
  %1841 = vmatpush1.bf16.msra.mxu0 %v1784
  %1842 = vmatprep.subr.bf16.mxu0 %v1789
  %1843 = vmatpush1.bf16.msra.mxu0 %v1788
  %1844 = vmatprep.subr.bf16.mxu0 %v1793
  %1845 = vmatpush1.bf16.msra.mxu0 %v1792
  %1846 = vmatprep.subr.bf16.mxu0 %v1797
  %1847 = vmatpush1.bf16.msra.mxu0 %v1796
  %1848 = vmatprep.subr.bf16.mxu0 0
  %1849 = vmatpush1.bf16.msra.mxu0 0
  %1850 = vmatprep.subr.bf16.mxu0 0
  %1851 = vmatpush1.bf16.msra.mxu0 0
  %1852 = vmatprep.subr.bf16.mxu0 0
  %1853 = vmatpush1.bf16.msra.mxu0 0
  %1854 = vmatprep.subr.bf16.mxu0 0
  %1855 = vmatpush1.bf16.msra.mxu0 0
  %1856 = vmatprep.subr.bf16.mxu0 0
  %1857 = vmatpush1.bf16.msra.mxu0 0
  %1858 = vmatprep.subr.bf16.mxu0 0
  %1859 = vmatpush1.bf16.msra.mxu0 0
  %1860 = vmatprep.subr.bf16.mxu0 0
  %1861 = vmatpush1.bf16.msra.mxu0 0
  %1862 = vmatprep.subr.bf16.mxu0 0
  %1863 = vmatpush1.bf16.msra.mxu0 0
  %1864 = vmatprep.mubr.bf16.mxu0 0
  %1865 = vmatmul.mubr.bf16.gmra.mrb[0].mxu0 %v1664
  %v1866 = vpop.f32.mrb[0].mxu0
  %v1867 = vadd.f32 %v1631, %v1866
  %v1868 = vpop.f32.mrb[0].mxu0
  %v1869 = vadd.f32 %v1635, %v1868
  %v1870 = vpop.f32.mrb[0].mxu0
  %v1871 = vadd.f32 %v1631, %v1870
  %v1872 = vpop.f32.mrb[0].mxu0
  %v1873 = vadd.f32 %v1635, %v1872
  %1874 = vmatprep.mubr.bf16.mxu0 0
  %1875 = vmatmul.mubr.bf16.gmra.mrb[0].mxu0 %v1665
  %v1876 = vpop.f32.mrb[0].mxu0
  %v1877 = vadd.f32 %v1631, %v1876
  %v1878 = vpop.f32.mrb[0].mxu0
  %v1879 = vadd.f32 %v1635, %v1878
  %v1880 = vpop.f32.mrb[0].mxu0
  %v1881 = vadd.f32 %v1631, %v1880
  %v1882 = vpop.f32.mrb[0].mxu0
  %v1883 = vadd.f32 %v1635, %v1882
  %1884 = vmatprep.mubr.bf16.mxu0 0
  %1885 = vmatmul.mubr.bf16.gmra.mrb[0].mxu0 %v1666
  %v1886 = vpop.f32.mrb[0].mxu0
  %v1887 = vadd.f32 %v1631, %v1886
  %v1888 = vpop.f32.mrb[0].mxu0
  %v1889 = vadd.f32 %v1635, %v1888
  %v1890 = vpop.f32.mrb[0].mxu0
  %v1891 = vadd.f32 %v1631, %v1890
  %v1892 = vpop.f32.mrb[0].mxu0
  %v1893 = vadd.f32 %v1635, %v1892
  %1894 = vmatprep.mubr.bf16.mxu0 0
  %1895 = vmatmul.mubr.bf16.gmra.mrb[0].mxu0 %v1667
  %v1896 = vpop.f32.mrb[0].mxu0
  %v1897 = vadd.f32 %v1631, %v1896
  %v1898 = vpop.f32.mrb[0].mxu0
  %v1899 = vadd.f32 %v1635, %v1898
  %v1900 = vpop.f32.mrb[0].mxu0
  %v1901 = vadd.f32 %v1631, %v1900
  %v1902 = vpop.f32.mrb[0].mxu0
  %v1903 = vadd.f32 %v1635, %v1902
  %1904 = vdwg.mxu0
  %1905 = vmatprep.subr.bf16.mxu0 %v1771
  %1906 = vmatpush1.bf16.msra.mxu0 %v1770
  %1907 = vmatprep.subr.bf16.mxu0 %v1775
  %1908 = vmatpush1.bf16.msra.mxu0 %v1774
  %1909 = vmatprep.subr.bf16.mxu0 %v1779
  %1910 = vmatpush1.bf16.msra.mxu0 %v1778
  %1911 = vmatprep.subr.bf16.mxu0 %v1783
  %1912 = vmatpush1.bf16.msra.mxu0 %v1782
  %1913 = vmatprep.subr.bf16.mxu0 %v1787
  %1914 = vmatpush1.bf16.msra.mxu0 %v1786
  %1915 = vmatprep.subr.bf16.mxu0 %v1791
  %1916 = vmatpush1.bf16.msra.mxu0 %v1790
  %1917 = vmatprep.subr.bf16.mxu0 %v1795
  %1918 = vmatpush1.bf16.msra.mxu0 %v1794
  %1919 = vmatprep.subr.bf16.mxu0 %v1799
  %1920 = vmatpush1.bf16.msra.mxu0 %v1798
  %1921 = vmatprep.subr.bf16.mxu0 0
  %1922 = vmatpush1.bf16.msra.mxu0 0
  %1923 = vmatprep.subr.bf16.mxu0 0
  %1924 = vmatpush1.bf16.msra.mxu0 0
  %1925 = vmatprep.subr.bf16.mxu0 0
  %1926 = vmatpush1.bf16.msra.mxu0 0
  %1927 = vmatprep.subr.bf16.mxu0 0
  %1928 = vmatpush1.bf16.msra.mxu0 0
  %1929 = vmatprep.subr.bf16.mxu0 0
  %1930 = vmatpush1.bf16.msra.mxu0 0
  %1931 = vmatprep.subr.bf16.mxu0 0
  %1932 = vmatpush1.bf16.msra.mxu0 0
  %1933 = vmatprep.subr.bf16.mxu0 0
  %1934 = vmatpush1.bf16.msra.mxu0 0
  %1935 = vmatprep.subr.bf16.mxu0 0
  %1936 = vmatpush1.bf16.msra.mxu0 0
  %1937 = vmatprep.mubr.bf16.mxu0 0
  %1938 = vmatmul.mubr.bf16.gmra.mrb[0].mxu0 %v1664
  %v1939 = vpop.f32.mrb[0].mxu0
  %v1940 = vadd.f32 %v1639, %v1939
  %v1941 = vpop.f32.mrb[0].mxu0
  %v1942 = vadd.f32 %v1643, %v1941
  %v1943 = vpop.f32.mrb[0].mxu0
  %v1944 = vadd.f32 %v1639, %v1943
  %v1945 = vpop.f32.mrb[0].mxu0
  %v1946 = vadd.f32 %v1643, %v1945
  %1947 = vmatprep.mubr.bf16.mxu0 0
  %1948 = vmatmul.mubr.bf16.gmra.mrb[0].mxu0 %v1665
  %v1949 = vpop.f32.mrb[0].mxu0
  %v1950 = vadd.f32 %v1639, %v1949
  %v1951 = vpop.f32.mrb[0].mxu0
  %v1952 = vadd.f32 %v1643, %v1951
  %v1953 = vpop.f32.mrb[0].mxu0
  %v1954 = vadd.f32 %v1639, %v1953
  %v1955 = vpop.f32.mrb[0].mxu0
  %v1956 = vadd.f32 %v1643, %v1955
  %1957 = vmatprep.mubr.bf16.mxu0 0
  %1958 = vmatmul.mubr.bf16.gmra.mrb[0].mxu0 %v1666
  %v1959 = vpop.f32.mrb[0].mxu0
  %v1960 = vadd.f32 %v1639, %v1959
  %v1961 = vpop.f32.mrb[0].mxu0
  %v1962 = vadd.f32 %v1643, %v1961
  %v1963 = vpop.f32.mrb[0].mxu0
  %v1964 = vadd.f32 %v1639, %v1963
  %v1965 = vpop.f32.mrb[0].mxu0
  %v1966 = vadd.f32 %v1643, %v1965
  %1967 = vmatprep.mubr.bf16.mxu0 0
  %1968 = vmatmul.mubr.bf16.gmra.mrb[0].mxu0 %v1667
  %v1969 = vpop.f32.mrb[0].mxu0
  %v1970 = vadd.f32 %v1639, %v1969
  %v1971 = vpop.f32.mrb[0].mxu0
  %v1972 = vadd.f32 %v1643, %v1971
  %v1973 = vpop.f32.mrb[0].mxu0
  %v1974 = vadd.f32 %v1639, %v1973
  %v1975 = vpop.f32.mrb[0].mxu0
  %v1976 = vadd.f32 %v1643, %v1975
  %1977 = vdwg.mxu0
  %1978 = vst [vmem:[#allocation5] sm:$0xff] %v1867
  %1979 = vst [vmem:[#allocation5 + $0x8] sm:$0xff] %v1869
  %1980 = vst [vmem:[#allocation5 + $0x10] sm:$0xff] %v1940
  %1981 = vst [vmem:[#allocation5 + $0x18] sm:$0xff] %v1942
  %1982 = vst [vmem:[#allocation5 + $0x20] sm:$0xff] %v1871
  %1983 = vst [vmem:[#allocation5 + $0x28] sm:$0xff] %v1873
  %1984 = vst [vmem:[#allocation5 + $0x30] sm:$0xff] %v1944
  %1985 = vst [vmem:[#allocation5 + $0x38] sm:$0xff] %v1946
  %1986 = vst [vmem:[#allocation5 + $0x40] sm:$0xff] %v1877
  %1987 = vst [vmem:[#allocation5 + $0x48] sm:$0xff] %v1879
  %1988 = vst [vmem:[#allocation5 + $0x50] sm:$0xff] %v1950
  %1989 = vst [vmem:[#allocation5 + $0x58] sm:$0xff] %v1952
  %1990 = vst [vmem:[#allocation5 + $0x60] sm:$0xff] %v1881
  %1991 = vst [vmem:[#allocation5 + $0x68] sm:$0xff] %v1883
  %1992 = vst [vmem:[#allocation5 + $0x70] sm:$0xff] %v1954
  %1993 = vst [vmem:[#allocation5 + $0x78] sm:$0xff] %v1956
  %1994 = vst [vmem:[#allocation5 + $0x80] sm:$0xff] %v1887
  %1995 = vst [vmem:[#allocation5 + $0x88] sm:$0xff] %v1889
  %1996 = vst [vmem:[#allocation5 + $0x90] sm:$0xff] %v1960
  %1997 = vst [vmem:[#allocation5 + $0x98] sm:$0xff] %v1962
  %1998 = vst [vmem:[#allocation5 + $0xa0] sm:$0xff] %v1891
  %1999 = vst [vmem:[#allocation5 + $0xa8] sm:$0xff] %v1893
  %2000 = vst [vmem:[#allocation5 + $0xb0] sm:$0xff] %v1964
  %2001 = vst [vmem:[#allocation5 + $0xb8] sm:$0xff] %v1966
  %2002 = vst [vmem:[#allocation5 + $0xc0] sm:$0xff] %v1897
  %2003 = vst [vmem:[#allocation5 + $0xc8] sm:$0xff] %v1899
  %2004 = vst [vmem:[#allocation5 + $0xd0] sm:$0xff] %v1970
  %2005 = vst [vmem:[#allocation5 + $0xd8] sm:$0xff] %v1972
  %2006 = vst [vmem:[#allocation5 + $0xe0] sm:$0xff] %v1901
  %2007 = vst [vmem:[#allocation5 + $0xe8] sm:$0xff] %v1903
  %2008 = vst [vmem:[#allocation5 + $0xf0] sm:$0xff] %v1974
  %2009 = vst [vmem:[#allocation5 + $0xf8] sm:$0xff] %v1976
  %s2010 = scalar_lea.vmem %s3, 256
  %v2011 = vld [vmem:[%s2010] sm:$0xff]
  %v2012 = vld [vmem:[%s2010 + $0x8] sm:$0xff]
  %v2013 = vld [vmem:[%s2010 + $0x10] sm:$0xff]
  %v2014 = vld [vmem:[%s2010 + $0x18] sm:$0xff]
  %v2015 = vld [vmem:[%s2010 + $0x20] sm:$0xff]
  %v2016 = vld [vmem:[%s2010 + $0x28] sm:$0xff]
  %v2017 = vld [vmem:[%s2010 + $0x30] sm:$0xff]
  %v2018 = vld [vmem:[%s2010 + $0x38] sm:$0xff]
  %v2019 = vld [vmem:[%s2010 + $0x40] sm:$0xff]
  %v2020 = vld [vmem:[%s2010 + $0x48] sm:$0xff]
  %v2021 = vld [vmem:[%s2010 + $0x50] sm:$0xff]
  %v2022 = vld [vmem:[%s2010 + $0x58] sm:$0xff]
  %v2023 = vld [vmem:[%s2010 + $0x60] sm:$0xff]
  %v2024 = vld [vmem:[%s2010 + $0x68] sm:$0xff]
  %v2025 = vld [vmem:[%s2010 + $0x70] sm:$0xff]
  %v2026 = vld [vmem:[%s2010 + $0x78] sm:$0xff]
  %v2027 = vld [vmem:[%s2010 + $0x80] sm:$0xff]
  %v2028 = vld [vmem:[%s2010 + $0x88] sm:$0xff]
  %v2029 = vld [vmem:[%s2010 + $0x90] sm:$0xff]
  %v2030 = vld [vmem:[%s2010 + $0x98] sm:$0xff]
  %v2031 = vld [vmem:[%s2010 + $0xa0] sm:$0xff]
  %v2032 = vld [vmem:[%s2010 + $0xa8] sm:$0xff]
  %v2033 = vld [vmem:[%s2010 + $0xb0] sm:$0xff]
  %v2034 = vld [vmem:[%s2010 + $0xb8] sm:$0xff]
  %v2035 = vld [vmem:[%s2010 + $0xc0] sm:$0xff]
  %v2036 = vld [vmem:[%s2010 + $0xc8] sm:$0xff]
  %v2037 = vld [vmem:[%s2010 + $0xd0] sm:$0xff]
  %v2038 = vld [vmem:[%s2010 + $0xd8] sm:$0xff]
  %v2039 = vld [vmem:[%s2010 + $0xe0] sm:$0xff]
  %v2040 = vld [vmem:[%s2010 + $0xe8] sm:$0xff]
  %v2041 = vld [vmem:[%s2010 + $0xf0] sm:$0xff]
  %v2042 = vld [vmem:[%s2010 + $0xf8] sm:$0xff]
  %s2043 = scalar_lea.vmem [#allocation2], 8
  %v2044 = vld [vmem:[%s2043] sm:$0xff]
  %s2045 = scalar_lea.vmem [#allocation3], 8
  %v2046 = vld [vmem:[%s2045] sm:$0xff]
  %v2047 = vld [vmem:[#allocation5] sm:$0xff]
  %v2048 = vld [vmem:[#allocation5 + $0x8] sm:$0xff]
  %v2049 = vld [vmem:[#allocation5 + $0x10] sm:$0xff]
  %v2050 = vld [vmem:[#allocation5 + $0x18] sm:$0xff]
  %v2051 = vpack.c.bf16 %v2044, %v2044
  %v2084 = vunpack.c.l.b16 %v2011
  %v2085 = vunpack.c.h.b16 %v2011
  %v2086 = vunpack.c.l.b16 %v2012
  %v2087 = vunpack.c.h.b16 %v2012
  %v2088 = vunpack.c.l.b16 %v2013
  %v2089 = vunpack.c.h.b16 %v2013
  %v2090 = vunpack.c.l.b16 %v2014
  %v2091 = vunpack.c.h.b16 %v2014
  %v2092 = vunpack.c.l.b16 %v2015
  %v2093 = vunpack.c.h.b16 %v2015
  %v2094 = vunpack.c.l.b16 %v2016
  %v2095 = vunpack.c.h.b16 %v2016
  %v2096 = vunpack.c.l.b16 %v2017
  %v2097 = vunpack.c.h.b16 %v2017
  %v2098 = vunpack.c.l.b16 %v2018
  %v2099 = vunpack.c.h.b16 %v2018
  %v2100 = vunpack.c.l.b16 %v2019
  %v2101 = vunpack.c.h.b16 %v2019
  %v2102 = vunpack.c.l.b16 %v2020
  %v2103 = vunpack.c.h.b16 %v2020
  %v2104 = vunpack.c.l.b16 %v2021
  %v2105 = vunpack.c.h.b16 %v2021
  %v2106 = vunpack.c.l.b16 %v2022
  %v2107 = vunpack.c.h.b16 %v2022
  %v2108 = vunpack.c.l.b16 %v2023
  %v2109 = vunpack.c.h.b16 %v2023
  %v2110 = vunpack.c.l.b16 %v2024
  %v2111 = vunpack.c.h.b16 %v2024
  %v2112 = vunpack.c.l.b16 %v2025
  %v2113 = vunpack.c.h.b16 %v2025
  %v2114 = vunpack.c.l.b16 %v2026
  %v2115 = vunpack.c.h.b16 %v2026
  %v2116 = vunpack.c.l.b16 %v2027
  %v2117 = vunpack.c.h.b16 %v2027
  %v2118 = vunpack.c.l.b16 %v2028
  %v2119 = vunpack.c.h.b16 %v2028
  %v2120 = vunpack.c.l.b16 %v2029
  %v2121 = vunpack.c.h.b16 %v2029
  %v2122 = vunpack.c.l.b16 %v2030
  %v2123 = vunpack.c.h.b16 %v2030
  %v2124 = vunpack.c.l.b16 %v2031
  %v2125 = vunpack.c.h.b16 %v2031
  %v2126 = vunpack.c.l.b16 %v2032
  %v2127 = vunpack.c.h.b16 %v2032
  %v2128 = vunpack.c.l.b16 %v2033
  %v2129 = vunpack.c.h.b16 %v2033
  %v2130 = vunpack.c.l.b16 %v2034
  %v2131 = vunpack.c.h.b16 %v2034
  %v2132 = vunpack.c.l.b16 %v2035
  %v2133 = vunpack.c.h.b16 %v2035
  %v2134 = vunpack.c.l.b16 %v2036
  %v2135 = vunpack.c.h.b16 %v2036
  %v2136 = vunpack.c.l.b16 %v2037
  %v2137 = vunpack.c.h.b16 %v2037
  %v2138 = vunpack.c.l.b16 %v2038
  %v2139 = vunpack.c.h.b16 %v2038
  %v2140 = vunpack.c.l.b16 %v2039
  %v2141 = vunpack.c.h.b16 %v2039
  %v2142 = vunpack.c.l.b16 %v2040
  %v2143 = vunpack.c.h.b16 %v2040
  %v2144 = vunpack.c.l.b16 %v2041
  %v2145 = vunpack.c.h.b16 %v2041
  %v2146 = vunpack.c.l.b16 %v2042
  %v2147 = vunpack.c.h.b16 %v2042
  %v2148 = vpack.c.b16 %v2088, %v2084
  %v2149 = vpack.c.b16 %v2089, %v2085
  %v2150 = vpack.c.b16 %v2090, %v2086
  %v2151 = vpack.c.b16 %v2091, %v2087
  %v2152 = vpack.c.b16 %v2096, %v2092
  %v2153 = vpack.c.b16 %v2097, %v2093
  %v2154 = vpack.c.b16 %v2098, %v2094
  %v2155 = vpack.c.b16 %v2099, %v2095
  %v2156 = vpack.c.b16 %v2104, %v2100
  %v2157 = vpack.c.b16 %v2105, %v2101
  %v2158 = vpack.c.b16 %v2106, %v2102
  %v2159 = vpack.c.b16 %v2107, %v2103
  %v2160 = vpack.c.b16 %v2112, %v2108
  %v2161 = vpack.c.b16 %v2113, %v2109
  %v2162 = vpack.c.b16 %v2114, %v2110
  %v2163 = vpack.c.b16 %v2115, %v2111
  %v2164 = vpack.c.b16 %v2120, %v2116
  %v2165 = vpack.c.b16 %v2121, %v2117
  %v2166 = vpack.c.b16 %v2122, %v2118
  %v2167 = vpack.c.b16 %v2123, %v2119
  %v2168 = vpack.c.b16 %v2128, %v2124
  %v2169 = vpack.c.b16 %v2129, %v2125
  %v2170 = vpack.c.b16 %v2130, %v2126
  %v2171 = vpack.c.b16 %v2131, %v2127
  %v2172 = vpack.c.b16 %v2136, %v2132
  %v2173 = vpack.c.b16 %v2137, %v2133
  %v2174 = vpack.c.b16 %v2138, %v2134
  %v2175 = vpack.c.b16 %v2139, %v2135
  %v2176 = vpack.c.b16 %v2144, %v2140
  %v2177 = vpack.c.b16 %v2145, %v2141
  %v2178 = vpack.c.b16 %v2146, %v2142
  %v2179 = vpack.c.b16 %v2147, %v2143
  %2212 = vmatprep.subr.bf16.mxu0 %v2149
  %2213 = vmatpush1.bf16.msra.mxu0 %v2148
  %2214 = vmatprep.subr.bf16.mxu0 %v2153
  %2215 = vmatpush1.bf16.msra.mxu0 %v2152
  %2216 = vmatprep.subr.bf16.mxu0 %v2157
  %2217 = vmatpush1.bf16.msra.mxu0 %v2156
  %2218 = vmatprep.subr.bf16.mxu0 %v2161
  %2219 = vmatpush1.bf16.msra.mxu0 %v2160
  %2220 = vmatprep.subr.bf16.mxu0 %v2165
  %2221 = vmatpush1.bf16.msra.mxu0 %v2164
  %2222 = vmatprep.subr.bf16.mxu0 %v2169
  %2223 = vmatpush1.bf16.msra.mxu0 %v2168
  %2224 = vmatprep.subr.bf16.mxu0 %v2173
  %2225 = vmatpush1.bf16.msra.mxu0 %v2172
  %2226 = vmatprep.subr.bf16.mxu0 %v2177
  %2227 = vmatpush1.bf16.msra.mxu0 %v2176
  %2228 = vmatprep.subr.bf16.mxu0 0
  %2229 = vmatpush1.bf16.msra.mxu0 0
  %2230 = vmatprep.subr.bf16.mxu0 0
  %2231 = vmatpush1.bf16.msra.mxu0 0
  %2232 = vmatprep.subr.bf16.mxu0 0
  %2233 = vmatpush1.bf16.msra.mxu0 0
  %2234 = vmatprep.subr.bf16.mxu0 0
  %2235 = vmatpush1.bf16.msra.mxu0 0
  %2236 = vmatprep.subr.bf16.mxu0 0
  %2237 = vmatpush1.bf16.msra.mxu0 0
  %2238 = vmatprep.subr.bf16.mxu0 0
  %2239 = vmatpush1.bf16.msra.mxu0 0
  %2240 = vmatprep.subr.bf16.mxu0 0
  %2241 = vmatpush1.bf16.msra.mxu0 0
  %2242 = vmatprep.subr.bf16.mxu0 0
  %2243 = vmatpush1.bf16.msra.mxu0 0
  %2244 = vmatprep.mubr.bf16.mxu0 0
  %2245 = vmatmul.mubr.bf16.gmra.mrb[0].mxu0 %v2051
  %v2246 = vpop.f32.mrb[0].mxu0
  %v2247 = vadd.f32 0.0, %v2246
  %v2248 = vpop.f32.mrb[0].mxu0
  %v2249 = vadd.f32 0.0, %v2248
  %v2250 = vpop.f32.mrb[0].mxu0
  %v2251 = vpop.f32.mrb[0].mxu0
  %2252 = vdwg.mxu0
  %2253 = vmatprep.subr.bf16.mxu0 %v2151
  %2254 = vmatpush1.bf16.msra.mxu0 %v2150
  %2255 = vmatprep.subr.bf16.mxu0 %v2155
  %2256 = vmatpush1.bf16.msra.mxu0 %v2154
  %2257 = vmatprep.subr.bf16.mxu0 %v2159
  %2258 = vmatpush1.bf16.msra.mxu0 %v2158
  %2259 = vmatprep.subr.bf16.mxu0 %v2163
  %2260 = vmatpush1.bf16.msra.mxu0 %v2162
  %2261 = vmatprep.subr.bf16.mxu0 %v2167
  %2262 = vmatpush1.bf16.msra.mxu0 %v2166
  %2263 = vmatprep.subr.bf16.mxu0 %v2171
  %2264 = vmatpush1.bf16.msra.mxu0 %v2170
  %2265 = vmatprep.subr.bf16.mxu0 %v2175
  %2266 = vmatpush1.bf16.msra.mxu0 %v2174
  %2267 = vmatprep.subr.bf16.mxu0 %v2179
  %2268 = vmatpush1.bf16.msra.mxu0 %v2178
  %2269 = vmatprep.subr.bf16.mxu0 0
  %2270 = vmatpush1.bf16.msra.mxu0 0
  %2271 = vmatprep.subr.bf16.mxu0 0
  %2272 = vmatpush1.bf16.msra.mxu0 0
  %2273 = vmatprep.subr.bf16.mxu0 0
  %2274 = vmatpush1.bf16.msra.mxu0 0
  %2275 = vmatprep.subr.bf16.mxu0 0
  %2276 = vmatpush1.bf16.msra.mxu0 0
  %2277 = vmatprep.subr.bf16.mxu0 0
  %2278 = vmatpush1.bf16.msra.mxu0 0
  %2279 = vmatprep.subr.bf16.mxu0 0
  %2280 = vmatpush1.bf16.msra.mxu0 0
  %2281 = vmatprep.subr.bf16.mxu0 0
  %2282 = vmatpush1.bf16.msra.mxu0 0
  %2283 = vmatprep.subr.bf16.mxu0 0
  %2284 = vmatpush1.bf16.msra.mxu0 0
  %2285 = vmatprep.mubr.bf16.mxu0 0
  %2286 = vmatmul.mubr.bf16.gmra.mrb[0].mxu0 %v2051
  %v2287 = vpop.f32.mrb[0].mxu0
  %v2288 = vadd.f32 0.0, %v2287
  %v2289 = vpop.f32.mrb[0].mxu0
  %v2290 = vadd.f32 0.0, %v2289
  %v2291 = vpop.f32.mrb[0].mxu0
  %v2292 = vpop.f32.mrb[0].mxu0
  %2293 = vdwg.mxu0
  %v2294 = vadd.f32 %v2047, %v2247
  %v2295 = vadd.f32 %v2048, %v2249
  %v2296 = vadd.f32 %v2049, %v2288
  %v2297 = vadd.f32 %v2050, %v2290
  %v2298 = vmul.f32 %v2294, 0.5
  %v2299 = vtanh.pop %v2298
  %v2300 = vmul.f32 %v2299, 0.5
  %v2301 = vadd.f32 %v2300, 0.5
  %v2302 = vmul.f32 %v2295, 0.5
  %v2303 = vtanh.pop %v2302
  %v2304 = vmul.f32 %v2303, 0.5
  %v2305 = vadd.f32 %v2304, 0.5
  %v2306 = vtanh.pop %v2296
  %v2307 = vmul.f32 %v2297, 0.5
  %v2308 = vtanh.pop %v2307
  %v2309 = vmul.f32 %v2308, 0.5
  %v2310 = vadd.f32 %v2309, 0.5
  %v2311 = vmul.f32 %v2305, %v2046
  %v2312 = vmul.f32 %v2301, %v2306
  %v2313 = vadd.f32 %v2311, %v2312
  %v2314 = vtanh.pop %v2313
  %v2315 = vmul.f32 %v2310, %v2314
  %2316 = vst [vmem:[%s2045] sm:$0xff] %v2313
  %2317 = vst [vmem:[%s2043] sm:$0xff] %v2315
  %v2318 = vld [vmem:[%s2043] sm:$0xff]
  %v2319 = vld [vmem:[%s2045] sm:$0xff]
  %v2320 = vld [vmem:[%s768] sm:$0xff]
  %v2321 = vld [vmem:[%s768 + $0x8] sm:$0xff]
  %v2322 = vld [vmem:[%s768 + $0x10] sm:$0xff]
  %v2323 = vld [vmem:[%s768 + $0x18] sm:$0xff]
  %v2324 = vpack.c.bf16 %v2318, %v2318
  %2325 = vmatprep.subr.bf16.mxu0 %v2149
  %2326 = vmatpush1.bf16.msra.mxu0 %v2148
  %2327 = vmatprep.subr.bf16.mxu0 %v2153
  %2328 = vmatpush1.bf16.msra.mxu0 %v2152
  %2329 = vmatprep.subr.bf16.mxu0 %v2157
  %2330 = vmatpush1.bf16.msra.mxu0 %v2156
  %2331 = vmatprep.subr.bf16.mxu0 %v2161
  %2332 = vmatpush1.bf16.msra.mxu0 %v2160
  %2333 = vmatprep.subr.bf16.mxu0 %v2165
  %2334 = vmatpush1.bf16.msra.mxu0 %v2164
  %2335 = vmatprep.subr.bf16.mxu0 %v2169
  %2336 = vmatpush1.bf16.msra.mxu0 %v2168
  %2337 = vmatprep.subr.bf16.mxu0 %v2173
  %2338 = vmatpush1.bf16.msra.mxu0 %v2172
  %2339 = vmatprep.subr.bf16.mxu0 %v2177
  %2340 = vmatpush1.bf16.msra.mxu0 %v2176
  %2341 = vmatprep.subr.bf16.mxu0 0
  %2342 = vmatpush1.bf16.msra.mxu0 0
  %2343 = vmatprep.subr.bf16.mxu0 0
  %2344 = vmatpush1.bf16.msra.mxu0 0
  %2345 = vmatprep.subr.bf16.mxu0 0
  %2346 = vmatpush1.bf16.msra.mxu0 0
  %2347 = vmatprep.subr.bf16.mxu0 0
  %2348 = vmatpush1.bf16.msra.mxu0 0
  %2349 = vmatprep.subr.bf16.mxu0 0
  %2350 = vmatpush1.bf16.msra.mxu0 0
  %2351 = vmatprep.subr.bf16.mxu0 0
  %2352 = vmatpush1.bf16.msra.mxu0 0
  %2353 = vmatprep.subr.bf16.mxu0 0
  %2354 = vmatpush1.bf16.msra.mxu0 0
  %2355 = vmatprep.subr.bf16.mxu0 0
  %2356 = vmatpush1.bf16.msra.mxu0 0
  %2357 = vmatprep.mubr.bf16.mxu0 0
  %2358 = vmatmul.mubr.bf16.gmra.mrb[0].mxu0 %v2324
  %v2359 = vpop.f32.mrb[0].mxu0
  %v2360 = vadd.f32 0.0, %v2359
  %v2361 = vpop.f32.mrb[0].mxu0
  %v2362 = vadd.f32 0.0, %v2361
  %v2363 = vpop.f32.mrb[0].mxu0
  %v2364 = vpop.f32.mrb[0].mxu0
  %2365 = vdwg.mxu0
  %2366 = vmatprep.subr.bf16.mxu0 %v2151
  %2367 = vmatpush1.bf16.msra.mxu0 %v2150
  %2368 = vmatprep.subr.bf16.mxu0 %v2155
  %2369 = vmatpush1.bf16.msra.mxu0 %v2154
  %2370 = vmatprep.subr.bf16.mxu0 %v2159
  %2371 = vmatpush1.bf16.msra.mxu0 %v2158
  %2372 = vmatprep.subr.bf16.mxu0 %v2163
  %2373 = vmatpush1.bf16.msra.mxu0 %v2162
  %2374 = vmatprep.subr.bf16.mxu0 %v2167
  %2375 = vmatpush1.bf16.msra.mxu0 %v2166
  %2376 = vmatprep.subr.bf16.mxu0 %v2171
  %2377 = vmatpush1.bf16.msra.mxu0 %v2170
  %2378 = vmatprep.subr.bf16.mxu0 %v2175
  %2379 = vmatpush1.bf16.msra.mxu0 %v2174
  %2380 = vmatprep.subr.bf16.mxu0 %v2179
  %2381 = vmatpush1.bf16.msra.mxu0 %v2178
  %2382 = vmatprep.subr.bf16.mxu0 0
  %2383 = vmatpush1.bf16.msra.mxu0 0
  %2384 = vmatprep.subr.bf16.mxu0 0
  %2385 = vmatpush1.bf16.msra.mxu0 0
  %2386 = vmatprep.subr.bf16.mxu0 0
  %2387 = vmatpush1.bf16.msra.mxu0 0
  %2388 = vmatprep.subr.bf16.mxu0 0
  %2389 = vmatpush1.bf16.msra.mxu0 0
  %2390 = vmatprep.subr.bf16.mxu0 0
  %2391 = vmatpush1.bf16.msra.mxu0 0
  %2392 = vmatprep.subr.bf16.mxu0 0
  %2393 = vmatpush1.bf16.msra.mxu0 0
  %2394 = vmatprep.subr.bf16.mxu0 0
  %2395 = vmatpush1.bf16.msra.mxu0 0
  %2396 = vmatprep.subr.bf16.mxu0 0
  %2397 = vmatpush1.bf16.msra.mxu0 0
  %2398 = vmatprep.mubr.bf16.mxu0 0
  %2399 = vmatmul.mubr.bf16.gmra.mrb[0].mxu0 %v2324
  %v2400 = vpop.f32.mrb[0].mxu0
  %v2401 = vadd.f32 0.0, %v2400
  %v2402 = vpop.f32.mrb[0].mxu0
  %v2403 = vadd.f32 0.0, %v2402
  %v2404 = vpop.f32.mrb[0].mxu0
  %v2405 = vpop.f32.mrb[0].mxu0
  %2406 = vdwg.mxu0
  %v2407 = vadd.f32 %v2320, %v2360
  %v2408 = vadd.f32 %v2321, %v2362
  %v2409 = vadd.f32 %v2322, %v2401
  %v2410 = vadd.f32 %v2323, %v2403
  %v2411 = vmul.f32 %v2407, 0.5
  %v2412 = vtanh.pop %v2411
  %v2413 = vmul.f32 %v2412, 0.5
  %v2414 = vadd.f32 %v2413, 0.5
  %v2415 = vmul.f32 %v2408, 0.5
  %v2416 = vtanh.pop %v2415
  %v2417 = vmul.f32 %v2416, 0.5
  %v2418 = vadd.f32 %v2417, 0.5
  %v2419 = vtanh.pop %v2409
  %v2420 = vmul.f32 %v2410, 0.5
  %v2421 = vtanh.pop %v2420
  %v2422 = vmul.f32 %v2421, 0.5
  %v2423 = vadd.f32 %v2422, 0.5
  %v2424 = vmul.f32 %v2418, %v2319
  %v2425 = vmul.f32 %v2414, %v2419
  %v2426 = vadd.f32 %v2424, %v2425
  %v2427 = vtanh.pop %v2426
  %v2428 = vmul.f32 %v2423, %v2427
  %2429 = vst [vmem:[%s2045] sm:$0xff] %v2426
  %2430 = vst [vmem:[%s2043] sm:$0xff] %v2428
  %v2431 = vld [vmem:[%s2043] sm:$0xff]
  %v2432 = vld [vmem:[%s2045] sm:$0xff]
  %v2433 = vld [vmem:[%s885] sm:$0xff]
  %v2434 = vld [vmem:[%s885 + $0x8] sm:$0xff]
  %v2435 = vld [vmem:[%s885 + $0x10] sm:$0xff]
  %v2436 = vld [vmem:[%s885 + $0x18] sm:$0xff]
  %v2437 = vpack.c.bf16 %v2431, %v2431
  %2438 = vmatprep.subr.bf16.mxu0 %v2149
  %2439 = vmatpush1.bf16.msra.mxu0 %v2148
  %2440 = vmatprep.subr.bf16.mxu0 %v2153
  %2441 = vmatpush1.bf16.msra.mxu0 %v2152
  %2442 = vmatprep.subr.bf16.mxu0 %v2157
  %2443 = vmatpush1.bf16.msra.mxu0 %v2156
  %2444 = vmatprep.subr.bf16.mxu0 %v2161
  %2445 = vmatpush1.bf16.msra.mxu0 %v2160
  %2446 = vmatprep.subr.bf16.mxu0 %v2165
  %2447 = vmatpush1.bf16.msra.mxu0 %v2164
  %2448 = vmatprep.subr.bf16.mxu0 %v2169
  %2449 = vmatpush1.bf16.msra.mxu0 %v2168
  %2450 = vmatprep.subr.bf16.mxu0 %v2173
  %2451 = vmatpush1.bf16.msra.mxu0 %v2172
  %2452 = vmatprep.subr.bf16.mxu0 %v2177
  %2453 = vmatpush1.bf16.msra.mxu0 %v2176
  %2454 = vmatprep.subr.bf16.mxu0 0
  %2455 = vmatpush1.bf16.msra.mxu0 0
  %2456 = vmatprep.subr.bf16.mxu0 0
  %2457 = vmatpush1.bf16.msra.mxu0 0
  %2458 = vmatprep.subr.bf16.mxu0 0
  %2459 = vmatpush1.bf16.msra.mxu0 0
  %2460 = vmatprep.subr.bf16.mxu0 0
  %2461 = vmatpush1.bf16.msra.mxu0 0
  %2462 = vmatprep.subr.bf16.mxu0 0
  %2463 = vmatpush1.bf16.msra.mxu0 0
  %2464 = vmatprep.subr.bf16.mxu0 0
  %2465 = vmatpush1.bf16.msra.mxu0 0
  %2466 = vmatprep.subr.bf16.mxu0 0
  %2467 = vmatpush1.bf16.msra.mxu0 0
  %2468 = vmatprep.subr.bf16.mxu0 0
  %2469 = vmatpush1.bf16.msra.mxu0 0
  %2470 = vmatprep.mubr.bf16.mxu0 0
  %2471 = vmatmul.mubr.bf16.gmra.mrb[0].mxu0 %v2437
  %v2472 = vpop.f32.mrb[0].mxu0
  %v2473 = vadd.f32 0.0, %v2472
  %v2474 = vpop.f32.mrb[0].mxu0
  %v2475 = vadd.f32 0.0, %v2474
  %v2476 = vpop.f32.mrb[0].mxu0
  %v2477 = vpop.f32.mrb[0].mxu0
  %2478 = vdwg.mxu0
  %2479 = vmatprep.subr.bf16.mxu0 %v2151
  %2480 = vmatpush1.bf16.msra.mxu0 %v2150
  %2481 = vmatprep.subr.bf16.mxu0 %v2155
  %2482 = vmatpush1.bf16.msra.mxu0 %v2154
  %2483 = vmatprep.subr.bf16.mxu0 %v2159
  %2484 = vmatpush1.bf16.msra.mxu0 %v2158
  %2485 = vmatprep.subr.bf16.mxu0 %v2163
  %2486 = vmatpush1.bf16.msra.mxu0 %v2162
  %2487 = vmatprep.subr.bf16.mxu0 %v2167
  %2488 = vmatpush1.bf16.msra.mxu0 %v2166
  %2489 = vmatprep.subr.bf16.mxu0 %v2171
  %2490 = vmatpush1.bf16.msra.mxu0 %v2170
  %2491 = vmatprep.subr.bf16.mxu0 %v2175
  %2492 = vmatpush1.bf16.msra.mxu0 %v2174
  %2493 = vmatprep.subr.bf16.mxu0 %v2179
  %2494 = vmatpush1.bf16.msra.mxu0 %v2178
  %2495 = vmatprep.subr.bf16.mxu0 0
  %2496 = vmatpush1.bf16.msra.mxu0 0
  %2497 = vmatprep.subr.bf16.mxu0 0
  %2498 = vmatpush1.bf16.msra.mxu0 0
  %2499 = vmatprep.subr.bf16.mxu0 0
  %2500 = vmatpush1.bf16.msra.mxu0 0
  %2501 = vmatprep.subr.bf16.mxu0 0
  %2502 = vmatpush1.bf16.msra.mxu0 0
  %2503 = vmatprep.subr.bf16.mxu0 0
  %2504 = vmatpush1.bf16.msra.mxu0 0
  %2505 = vmatprep.subr.bf16.mxu0 0
  %2506 = vmatpush1.bf16.msra.mxu0 0
  %2507 = vmatprep.subr.bf16.mxu0 0
  %2508 = vmatpush1.bf16.msra.mxu0 0
  %2509 = vmatprep.subr.bf16.mxu0 0
  %2510 = vmatpush1.bf16.msra.mxu0 0
  %2511 = vmatprep.mubr.bf16.mxu0 0
  %2512 = vmatmul.mubr.bf16.gmra.mrb[0].mxu0 %v2437
  %v2513 = vpop.f32.mrb[0].mxu0
  %v2514 = vadd.f32 0.0, %v2513
  %v2515 = vpop.f32.mrb[0].mxu0
  %v2516 = vadd.f32 0.0, %v2515
  %v2517 = vpop.f32.mrb[0].mxu0
  %v2518 = vpop.f32.mrb[0].mxu0
  %2519 = vdwg.mxu0
  %v2520 = vadd.f32 %v2433, %v2473
  %v2521 = vadd.f32 %v2434, %v2475
  %v2522 = vadd.f32 %v2435, %v2514
  %v2523 = vadd.f32 %v2436, %v2516
  %v2524 = vmul.f32 %v2520, 0.5
  %v2525 = vtanh.pop %v2524
  %v2526 = vmul.f32 %v2525, 0.5
  %v2527 = vadd.f32 %v2526, 0.5
  %v2528 = vmul.f32 %v2521, 0.5
  %v2529 = vtanh.pop %v2528
  %v2530 = vmul.f32 %v2529, 0.5
  %v2531 = vadd.f32 %v2530, 0.5
  %v2532 = vtanh.pop %v2522
  %v2533 = vmul.f32 %v2523, 0.5
  %v2534 = vtanh.pop %v2533
  %v2535 = vmul.f32 %v2534, 0.5
  %v2536 = vadd.f32 %v2535, 0.5
  %v2537 = vmul.f32 %v2531, %v2432
  %v2538 = vmul.f32 %v2527, %v2532
  %v2539 = vadd.f32 %v2537, %v2538
  %v2540 = vtanh.pop %v2539
  %v2541 = vmul.f32 %v2536, %v2540
  %2542 = vst [vmem:[%s2045] sm:$0xff] %v2539
  %2543 = vst [vmem:[%s2043] sm:$0xff] %v2541
  %v2544 = vld [vmem:[%s2043] sm:$0xff]
  %v2545 = vld [vmem:[%s2045] sm:$0xff]
  %v2546 = vld [vmem:[%s1002] sm:$0xff]
  %v2547 = vld [vmem:[%s1002 + $0x8] sm:$0xff]
  %v2548 = vld [vmem:[%s1002 + $0x10] sm:$0xff]
  %v2549 = vld [vmem:[%s1002 + $0x18] sm:$0xff]
  %v2550 = vpack.c.bf16 %v2544, %v2544
  %2551 = vmatprep.subr.bf16.mxu0 %v2149
  %2552 = vmatpush1.bf16.msra.mxu0 %v2148
  %2553 = vmatprep.subr.bf16.mxu0 %v2153
  %2554 = vmatpush1.bf16.msra.mxu0 %v2152
  %2555 = vmatprep.subr.bf16.mxu0 %v2157
  %2556 = vmatpush1.bf16.msra.mxu0 %v2156
  %2557 = vmatprep.subr.bf16.mxu0 %v2161
  %2558 = vmatpush1.bf16.msra.mxu0 %v2160
  %2559 = vmatprep.subr.bf16.mxu0 %v2165
  %2560 = vmatpush1.bf16.msra.mxu0 %v2164
  %2561 = vmatprep.subr.bf16.mxu0 %v2169
  %2562 = vmatpush1.bf16.msra.mxu0 %v2168
  %2563 = vmatprep.subr.bf16.mxu0 %v2173
  %2564 = vmatpush1.bf16.msra.mxu0 %v2172
  %2565 = vmatprep.subr.bf16.mxu0 %v2177
  %2566 = vmatpush1.bf16.msra.mxu0 %v2176
  %2567 = vmatprep.subr.bf16.mxu0 0
  %2568 = vmatpush1.bf16.msra.mxu0 0
  %2569 = vmatprep.subr.bf16.mxu0 0
  %2570 = vmatpush1.bf16.msra.mxu0 0
  %2571 = vmatprep.subr.bf16.mxu0 0
  %2572 = vmatpush1.bf16.msra.mxu0 0
  %2573 = vmatprep.subr.bf16.mxu0 0
  %2574 = vmatpush1.bf16.msra.mxu0 0
  %2575 = vmatprep.subr.bf16.mxu0 0
  %2576 = vmatpush1.bf16.msra.mxu0 0
  %2577 = vmatprep.subr.bf16.mxu0 0
  %2578 = vmatpush1.bf16.msra.mxu0 0
  %2579 = vmatprep.subr.bf16.mxu0 0
  %2580 = vmatpush1.bf16.msra.mxu0 0
  %2581 = vmatprep.subr.bf16.mxu0 0
  %2582 = vmatpush1.bf16.msra.mxu0 0
  %2583 = vmatprep.mubr.bf16.mxu0 0
  %2584 = vmatmul.mubr.bf16.gmra.mrb[0].mxu0 %v2550
  %v2585 = vpop.f32.mrb[0].mxu0
  %v2586 = vadd.f32 0.0, %v2585
  %v2587 = vpop.f32.mrb[0].mxu0
  %v2588 = vadd.f32 0.0, %v2587
  %v2589 = vpop.f32.mrb[0].mxu0
  %v2590 = vpop.f32.mrb[0].mxu0
  %2591 = vdwg.mxu0
  %2592 = vmatprep.subr.bf16.mxu0 %v2151
  %2593 = vmatpush1.bf16.msra.mxu0 %v2150
  %2594 = vmatprep.subr.bf16.mxu0 %v2155
  %2595 = vmatpush1.bf16.msra.mxu0 %v2154
  %2596 = vmatprep.subr.bf16.mxu0 %v2159
  %2597 = vmatpush1.bf16.msra.mxu0 %v2158
  %2598 = vmatprep.subr.bf16.mxu0 %v2163
  %2599 = vmatpush1.bf16.msra.mxu0 %v2162
  %2600 = vmatprep.subr.bf16.mxu0 %v2167
  %2601 = vmatpush1.bf16.msra.mxu0 %v2166
  %2602 = vmatprep.subr.bf16.mxu0 %v2171
  %2603 = vmatpush1.bf16.msra.mxu0 %v2170
  %2604 = vmatprep.subr.bf16.mxu0 %v2175
  %2605 = vmatpush1.bf16.msra.mxu0 %v2174
  %2606 = vmatprep.subr.bf16.mxu0 %v2179
  %2607 = vmatpush1.bf16.msra.mxu0 %v2178
  %2608 = vmatprep.subr.bf16.mxu0 0
  %2609 = vmatpush1.bf16.msra.mxu0 0
  %2610 = vmatprep.subr.bf16.mxu0 0
  %2611 = vmatpush1.bf16.msra.mxu0 0
  %2612 = vmatprep.subr.bf16.mxu0 0
  %2613 = vmatpush1.bf16.msra.mxu0 0
  %2614 = vmatprep.subr.bf16.mxu0 0
  %2615 = vmatpush1.bf16.msra.mxu0 0
  %2616 = vmatprep.subr.bf16.mxu0 0
  %2617 = vmatpush1.bf16.msra.mxu0 0
  %2618 = vmatprep.subr.bf16.mxu0 0
  %2619 = vmatpush1.bf16.msra.mxu0 0
  %2620 = vmatprep.subr.bf16.mxu0 0
  %2621 = vmatpush1.bf16.msra.mxu0 0
  %2622 = vmatprep.subr.bf16.mxu0 0
  %2623 = vmatpush1.bf16.msra.mxu0 0
  %2624 = vmatprep.mubr.bf16.mxu0 0
  %2625 = vmatmul.mubr.bf16.gmra.mrb[0].mxu0 %v2550
  %v2626 = vpop.f32.mrb[0].mxu0
  %v2627 = vadd.f32 0.0, %v2626
  %v2628 = vpop.f32.mrb[0].mxu0
  %v2629 = vadd.f32 0.0, %v2628
  %v2630 = vpop.f32.mrb[0].mxu0
  %v2631 = vpop.f32.mrb[0].mxu0
  %2632 = vdwg.mxu0
  %v2633 = vadd.f32 %v2546, %v2586
  %v2634 = vadd.f32 %v2547, %v2588
  %v2635 = vadd.f32 %v2548, %v2627
  %v2636 = vadd.f32 %v2549, %v2629
  %v2637 = vmul.f32 %v2633, 0.5
  %v2638 = vtanh.pop %v2637
  %v2639 = vmul.f32 %v2638, 0.5
  %v2640 = vadd.f32 %v2639, 0.5
  %v2641 = vmul.f32 %v2634, 0.5
  %v2642 = vtanh.pop %v2641
  %v2643 = vmul.f32 %v2642, 0.5
  %v2644 = vadd.f32 %v2643, 0.5
  %v2645 = vtanh.pop %v2635
  %v2646 = vmul.f32 %v2636, 0.5
  %v2647 = vtanh.pop %v2646
  %v2648 = vmul.f32 %v2647, 0.5
  %v2649 = vadd.f32 %v2648, 0.5
  %v2650 = vmul.f32 %v2644, %v2545
  %v2651 = vmul.f32 %v2640, %v2645
  %v2652 = vadd.f32 %v2650, %v2651
  %v2653 = vtanh.pop %v2652
  %v2654 = vmul.f32 %v2649, %v2653
  %2655 = vst [vmem:[%s2045] sm:$0xff] %v2652
  %2656 = vst [vmem:[%s2043] sm:$0xff] %v2654
  %v2657 = vld [vmem:[%s2043] sm:$0xff]
  %v2658 = vld [vmem:[%s2045] sm:$0xff]
  %v2659 = vld [vmem:[%s1119] sm:$0xff]
  %v2660 = vld [vmem:[%s1119 + $0x8] sm:$0xff]
  %v2661 = vld [vmem:[%s1119 + $0x10] sm:$0xff]
  %v2662 = vld [vmem:[%s1119 + $0x18] sm:$0xff]
  %v2663 = vpack.c.bf16 %v2657, %v2657
  %2664 = vmatprep.subr.bf16.mxu0 %v2149
  %2665 = vmatpush1.bf16.msra.mxu0 %v2148
  %2666 = vmatprep.subr.bf16.mxu0 %v2153
  %2667 = vmatpush1.bf16.msra.mxu0 %v2152
  %2668 = vmatprep.subr.bf16.mxu0 %v2157
  %2669 = vmatpush1.bf16.msra.mxu0 %v2156
  %2670 = vmatprep.subr.bf16.mxu0 %v2161
  %2671 = vmatpush1.bf16.msra.mxu0 %v2160
  %2672 = vmatprep.subr.bf16.mxu0 %v2165
  %2673 = vmatpush1.bf16.msra.mxu0 %v2164
  %2674 = vmatprep.subr.bf16.mxu0 %v2169
  %2675 = vmatpush1.bf16.msra.mxu0 %v2168
  %2676 = vmatprep.subr.bf16.mxu0 %v2173
  %2677 = vmatpush1.bf16.msra.mxu0 %v2172
  %2678 = vmatprep.subr.bf16.mxu0 %v2177
  %2679 = vmatpush1.bf16.msra.mxu0 %v2176
  %2680 = vmatprep.subr.bf16.mxu0 0
  %2681 = vmatpush1.bf16.msra.mxu0 0
  %2682 = vmatprep.subr.bf16.mxu0 0
  %2683 = vmatpush1.bf16.msra.mxu0 0
  %2684 = vmatprep.subr.bf16.mxu0 0
  %2685 = vmatpush1.bf16.msra.mxu0 0
  %2686 = vmatprep.subr.bf16.mxu0 0
  %2687 = vmatpush1.bf16.msra.mxu0 0
  %2688 = vmatprep.subr.bf16.mxu0 0
  %2689 = vmatpush1.bf16.msra.mxu0 0
  %2690 = vmatprep.subr.bf16.mxu0 0
  %2691 = vmatpush1.bf16.msra.mxu0 0
  %2692 = vmatprep.subr.bf16.mxu0 0
  %2693 = vmatpush1.bf16.msra.mxu0 0
  %2694 = vmatprep.subr.bf16.mxu0 0
  %2695 = vmatpush1.bf16.msra.mxu0 0
  %2696 = vmatprep.mubr.bf16.mxu0 0
  %2697 = vmatmul.mubr.bf16.gmra.mrb[0].mxu0 %v2663
  %v2698 = vpop.f32.mrb[0].mxu0
  %v2699 = vadd.f32 0.0, %v2698
  %v2700 = vpop.f32.mrb[0].mxu0
  %v2701 = vadd.f32 0.0, %v2700
  %v2702 = vpop.f32.mrb[0].mxu0
  %v2703 = vpop.f32.mrb[0].mxu0
  %2704 = vdwg.mxu0
  %2705 = vmatprep.subr.bf16.mxu0 %v2151
  %2706 = vmatpush1.bf16.msra.mxu0 %v2150
  %2707 = vmatprep.subr.bf16.mxu0 %v2155
  %2708 = vmatpush1.bf16.msra.mxu0 %v2154
  %2709 = vmatprep.subr.bf16.mxu0 %v2159
  %2710 = vmatpush1.bf16.msra.mxu0 %v2158
  %2711 = vmatprep.subr.bf16.mxu0 %v2163
  %2712 = vmatpush1.bf16.msra.mxu0 %v2162
  %2713 = vmatprep.subr.bf16.mxu0 %v2167
  %2714 = vmatpush1.bf16.msra.mxu0 %v2166
  %2715 = vmatprep.subr.bf16.mxu0 %v2171
  %2716 = vmatpush1.bf16.msra.mxu0 %v2170
  %2717 = vmatprep.subr.bf16.mxu0 %v2175
  %2718 = vmatpush1.bf16.msra.mxu0 %v2174
  %2719 = vmatprep.subr.bf16.mxu0 %v2179
  %2720 = vmatpush1.bf16.msra.mxu0 %v2178
  %2721 = vmatprep.subr.bf16.mxu0 0
  %2722 = vmatpush1.bf16.msra.mxu0 0
  %2723 = vmatprep.subr.bf16.mxu0 0
  %2724 = vmatpush1.bf16.msra.mxu0 0
  %2725 = vmatprep.subr.bf16.mxu0 0
  %2726 = vmatpush1.bf16.msra.mxu0 0
  %2727 = vmatprep.subr.bf16.mxu0 0
  %2728 = vmatpush1.bf16.msra.mxu0 0
  %2729 = vmatprep.subr.bf16.mxu0 0
  %2730 = vmatpush1.bf16.msra.mxu0 0
  %2731 = vmatprep.subr.bf16.mxu0 0
  %2732 = vmatpush1.bf16.msra.mxu0 0
  %2733 = vmatprep.subr.bf16.mxu0 0
  %2734 = vmatpush1.bf16.msra.mxu0 0
  %2735 = vmatprep.subr.bf16.mxu0 0
  %2736 = vmatpush1.bf16.msra.mxu0 0
  %2737 = vmatprep.mubr.bf16.mxu0 0
  %2738 = vmatmul.mubr.bf16.gmra.mrb[0].mxu0 %v2663
  %v2739 = vpop.f32.mrb[0].mxu0
  %v2740 = vadd.f32 0.0, %v2739
  %v2741 = vpop.f32.mrb[0].mxu0
  %v2742 = vadd.f32 0.0, %v2741
  %v2743 = vpop.f32.mrb[0].mxu0
  %v2744 = vpop.f32.mrb[0].mxu0
  %2745 = vdwg.mxu0
  %v2746 = vadd.f32 %v2659, %v2699
  %v2747 = vadd.f32 %v2660, %v2701
  %v2748 = vadd.f32 %v2661, %v2740
  %v2749 = vadd.f32 %v2662, %v2742
  %v2750 = vmul.f32 %v2746, 0.5
  %v2751 = vtanh.pop %v2750
  %v2752 = vmul.f32 %v2751, 0.5
  %v2753 = vadd.f32 %v2752, 0.5
  %v2754 = vmul.f32 %v2747, 0.5
  %v2755 = vtanh.pop %v2754
  %v2756 = vmul.f32 %v2755, 0.5
  %v2757 = vadd.f32 %v2756, 0.5
  %v2758 = vtanh.pop %v2748
  %v2759 = vmul.f32 %v2749, 0.5
  %v2760 = vtanh.pop %v2759
  %v2761 = vmul.f32 %v2760, 0.5
  %v2762 = vadd.f32 %v2761, 0.5
  %v2763 = vmul.f32 %v2757, %v2658
  %v2764 = vmul.f32 %v2753, %v2758
  %v2765 = vadd.f32 %v2763, %v2764
  %v2766 = vtanh.pop %v2765
  %v2767 = vmul.f32 %v2762, %v2766
  %2768 = vst [vmem:[%s2045] sm:$0xff] %v2765
  %2769 = vst [vmem:[%s2043] sm:$0xff] %v2767
  %v2770 = vld [vmem:[%s2043] sm:$0xff]
  %v2771 = vld [vmem:[%s2045] sm:$0xff]
  %v2772 = vld [vmem:[%s1236] sm:$0xff]
  %v2773 = vld [vmem:[%s1236 + $0x8] sm:$0xff]
  %v2774 = vld [vmem:[%s1236 + $0x10] sm:$0xff]
  %v2775 = vld [vmem:[%s1236 + $0x18] sm:$0xff]
  %v2776 = vpack.c.bf16 %v2770, %v2770
  %2777 = vmatprep.subr.bf16.mxu0 %v2149
  %2778 = vmatpush1.bf16.msra.mxu0 %v2148
  %2779 = vmatprep.subr.bf16.mxu0 %v2153
  %2780 = vmatpush1.bf16.msra.mxu0 %v2152
  %2781 = vmatprep.subr.bf16.mxu0 %v2157
  %2782 = vmatpush1.bf16.msra.mxu0 %v2156
  %2783 = vmatprep.subr.bf16.mxu0 %v2161
  %2784 = vmatpush1.bf16.msra.mxu0 %v2160
  %2785 = vmatprep.subr.bf16.mxu0 %v2165
  %2786 = vmatpush1.bf16.msra.mxu0 %v2164
  %2787 = vmatprep.subr.bf16.mxu0 %v2169
  %2788 = vmatpush1.bf16.msra.mxu0 %v2168
  %2789 = vmatprep.subr.bf16.mxu0 %v2173
  %2790 = vmatpush1.bf16.msra.mxu0 %v2172
  %2791 = vmatprep.subr.bf16.mxu0 %v2177
  %2792 = vmatpush1.bf16.msra.mxu0 %v2176
  %2793 = vmatprep.subr.bf16.mxu0 0
  %2794 = vmatpush1.bf16.msra.mxu0 0
  %2795 = vmatprep.subr.bf16.mxu0 0
  %2796 = vmatpush1.bf16.msra.mxu0 0
  %2797 = vmatprep.subr.bf16.mxu0 0
  %2798 = vmatpush1.bf16.msra.mxu0 0
  %2799 = vmatprep.subr.bf16.mxu0 0
  %2800 = vmatpush1.bf16.msra.mxu0 0
  %2801 = vmatprep.subr.bf16.mxu0 0
  %2802 = vmatpush1.bf16.msra.mxu0 0
  %2803 = vmatprep.subr.bf16.mxu0 0
  %2804 = vmatpush1.bf16.msra.mxu0 0
  %2805 = vmatprep.subr.bf16.mxu0 0
  %2806 = vmatpush1.bf16.msra.mxu0 0
  %2807 = vmatprep.subr.bf16.mxu0 0
  %2808 = vmatpush1.bf16.msra.mxu0 0
  %2809 = vmatprep.mubr.bf16.mxu0 0
  %2810 = vmatmul.mubr.bf16.gmra.mrb[0].mxu0 %v2776
  %v2811 = vpop.f32.mrb[0].mxu0
  %v2812 = vadd.f32 0.0, %v2811
  %v2813 = vpop.f32.mrb[0].mxu0
  %v2814 = vadd.f32 0.0, %v2813
  %v2815 = vpop.f32.mrb[0].mxu0
  %v2816 = vpop.f32.mrb[0].mxu0
  %2817 = vdwg.mxu0
  %2818 = vmatprep.subr.bf16.mxu0 %v2151
  %2819 = vmatpush1.bf16.msra.mxu0 %v2150
  %2820 = vmatprep.subr.bf16.mxu0 %v2155
  %2821 = vmatpush1.bf16.msra.mxu0 %v2154
  %2822 = vmatprep.subr.bf16.mxu0 %v2159
  %2823 = vmatpush1.bf16.msra.mxu0 %v2158
  %2824 = vmatprep.subr.bf16.mxu0 %v2163
  %2825 = vmatpush1.bf16.msra.mxu0 %v2162
  %2826 = vmatprep.subr.bf16.mxu0 %v2167
  %2827 = vmatpush1.bf16.msra.mxu0 %v2166
  %2828 = vmatprep.subr.bf16.mxu0 %v2171
  %2829 = vmatpush1.bf16.msra.mxu0 %v2170
  %2830 = vmatprep.subr.bf16.mxu0 %v2175
  %2831 = vmatpush1.bf16.msra.mxu0 %v2174
  %2832 = vmatprep.subr.bf16.mxu0 %v2179
  %2833 = vmatpush1.bf16.msra.mxu0 %v2178
  %2834 = vmatprep.subr.bf16.mxu0 0
  %2835 = vmatpush1.bf16.msra.mxu0 0
  %2836 = vmatprep.subr.bf16.mxu0 0
  %2837 = vmatpush1.bf16.msra.mxu0 0
  %2838 = vmatprep.subr.bf16.mxu0 0
  %2839 = vmatpush1.bf16.msra.mxu0 0
  %2840 = vmatprep.subr.bf16.mxu0 0
  %2841 = vmatpush1.bf16.msra.mxu0 0
  %2842 = vmatprep.subr.bf16.mxu0 0
  %2843 = vmatpush1.bf16.msra.mxu0 0
  %2844 = vmatprep.subr.bf16.mxu0 0
  %2845 = vmatpush1.bf16.msra.mxu0 0
  %2846 = vmatprep.subr.bf16.mxu0 0
  %2847 = vmatpush1.bf16.msra.mxu0 0
  %2848 = vmatprep.subr.bf16.mxu0 0
  %2849 = vmatpush1.bf16.msra.mxu0 0
  %2850 = vmatprep.mubr.bf16.mxu0 0
  %2851 = vmatmul.mubr.bf16.gmra.mrb[0].mxu0 %v2776
  %v2852 = vpop.f32.mrb[0].mxu0
  %v2853 = vadd.f32 0.0, %v2852
  %v2854 = vpop.f32.mrb[0].mxu0
  %v2855 = vadd.f32 0.0, %v2854
  %v2856 = vpop.f32.mrb[0].mxu0
  %v2857 = vpop.f32.mrb[0].mxu0
  %2858 = vdwg.mxu0
  %v2859 = vadd.f32 %v2772, %v2812
  %v2860 = vadd.f32 %v2773, %v2814
  %v2861 = vadd.f32 %v2774, %v2853
  %v2862 = vadd.f32 %v2775, %v2855
  %v2863 = vmul.f32 %v2859, 0.5
  %v2864 = vtanh.pop %v2863
  %v2865 = vmul.f32 %v2864, 0.5
  %v2866 = vadd.f32 %v2865, 0.5
  %v2867 = vmul.f32 %v2860, 0.5
  %v2868 = vtanh.pop %v2867
  %v2869 = vmul.f32 %v2868, 0.5
  %v2870 = vadd.f32 %v2869, 0.5
  %v2871 = vtanh.pop %v2861
  %v2872 = vmul.f32 %v2862, 0.5
  %v2873 = vtanh.pop %v2872
  %v2874 = vmul.f32 %v2873, 0.5
  %v2875 = vadd.f32 %v2874, 0.5
  %v2876 = vmul.f32 %v2870, %v2771
  %v2877 = vmul.f32 %v2866, %v2871
  %v2878 = vadd.f32 %v2876, %v2877
  %v2879 = vtanh.pop %v2878
  %v2880 = vmul.f32 %v2875, %v2879
  %2881 = vst [vmem:[%s2045] sm:$0xff] %v2878
  %2882 = vst [vmem:[%s2043] sm:$0xff] %v2880
  %v2883 = vld [vmem:[%s2043] sm:$0xff]
  %v2884 = vld [vmem:[%s2045] sm:$0xff]
  %v2885 = vld [vmem:[%s1353] sm:$0xff]
  %v2886 = vld [vmem:[%s1353 + $0x8] sm:$0xff]
  %v2887 = vld [vmem:[%s1353 + $0x10] sm:$0xff]
  %v2888 = vld [vmem:[%s1353 + $0x18] sm:$0xff]
  %v2889 = vpack.c.bf16 %v2883, %v2883
  %2890 = vmatprep.subr.bf16.mxu0 %v2149
  %2891 = vmatpush1.bf16.msra.mxu0 %v2148
  %2892 = vmatprep.subr.bf16.mxu0 %v2153
  %2893 = vmatpush1.bf16.msra.mxu0 %v2152
  %2894 = vmatprep.subr.bf16.mxu0 %v2157
  %2895 = vmatpush1.bf16.msra.mxu0 %v2156
  %2896 = vmatprep.subr.bf16.mxu0 %v2161
  %2897 = vmatpush1.bf16.msra.mxu0 %v2160
  %2898 = vmatprep.subr.bf16.mxu0 %v2165
  %2899 = vmatpush1.bf16.msra.mxu0 %v2164
  %2900 = vmatprep.subr.bf16.mxu0 %v2169
  %2901 = vmatpush1.bf16.msra.mxu0 %v2168
  %2902 = vmatprep.subr.bf16.mxu0 %v2173
  %2903 = vmatpush1.bf16.msra.mxu0 %v2172
  %2904 = vmatprep.subr.bf16.mxu0 %v2177
  %2905 = vmatpush1.bf16.msra.mxu0 %v2176
  %2906 = vmatprep.subr.bf16.mxu0 0
  %2907 = vmatpush1.bf16.msra.mxu0 0
  %2908 = vmatprep.subr.bf16.mxu0 0
  %2909 = vmatpush1.bf16.msra.mxu0 0
  %2910 = vmatprep.subr.bf16.mxu0 0
  %2911 = vmatpush1.bf16.msra.mxu0 0
  %2912 = vmatprep.subr.bf16.mxu0 0
  %2913 = vmatpush1.bf16.msra.mxu0 0
  %2914 = vmatprep.subr.bf16.mxu0 0
  %2915 = vmatpush1.bf16.msra.mxu0 0
  %2916 = vmatprep.subr.bf16.mxu0 0
  %2917 = vmatpush1.bf16.msra.mxu0 0
  %2918 = vmatprep.subr.bf16.mxu0 0
  %2919 = vmatpush1.bf16.msra.mxu0 0
  %2920 = vmatprep.subr.bf16.mxu0 0
  %2921 = vmatpush1.bf16.msra.mxu0 0
  %2922 = vmatprep.mubr.bf16.mxu0 0
  %2923 = vmatmul.mubr.bf16.gmra.mrb[0].mxu0 %v2889
  %v2924 = vpop.f32.mrb[0].mxu0
  %v2925 = vadd.f32 0.0, %v2924
  %v2926 = vpop.f32.mrb[0].mxu0
  %v2927 = vadd.f32 0.0, %v2926
  %v2928 = vpop.f32.mrb[0].mxu0
  %v2929 = vpop.f32.mrb[0].mxu0
  %2930 = vdwg.mxu0
  %2931 = vmatprep.subr.bf16.mxu0 %v2151
  %2932 = vmatpush1.bf16.msra.mxu0 %v2150
  %2933 = vmatprep.subr.bf16.mxu0 %v2155
  %2934 = vmatpush1.bf16.msra.mxu0 %v2154
  %2935 = vmatprep.subr.bf16.mxu0 %v2159
  %2936 = vmatpush1.bf16.msra.mxu0 %v2158
  %2937 = vmatprep.subr.bf16.mxu0 %v2163
  %2938 = vmatpush1.bf16.msra.mxu0 %v2162
  %2939 = vmatprep.subr.bf16.mxu0 %v2167
  %2940 = vmatpush1.bf16.msra.mxu0 %v2166
  %2941 = vmatprep.subr.bf16.mxu0 %v2171
  %2942 = vmatpush1.bf16.msra.mxu0 %v2170
  %2943 = vmatprep.subr.bf16.mxu0 %v2175
  %2944 = vmatpush1.bf16.msra.mxu0 %v2174
  %2945 = vmatprep.subr.bf16.mxu0 %v2179
  %2946 = vmatpush1.bf16.msra.mxu0 %v2178
  %2947 = vmatprep.subr.bf16.mxu0 0
  %2948 = vmatpush1.bf16.msra.mxu0 0
  %2949 = vmatprep.subr.bf16.mxu0 0
  %2950 = vmatpush1.bf16.msra.mxu0 0
  %2951 = vmatprep.subr.bf16.mxu0 0
  %2952 = vmatpush1.bf16.msra.mxu0 0
  %2953 = vmatprep.subr.bf16.mxu0 0
  %2954 = vmatpush1.bf16.msra.mxu0 0
  %2955 = vmatprep.subr.bf16.mxu0 0
  %2956 = vmatpush1.bf16.msra.mxu0 0
  %2957 = vmatprep.subr.bf16.mxu0 0
  %2958 = vmatpush1.bf16.msra.mxu0 0
  %2959 = vmatprep.subr.bf16.mxu0 0
  %2960 = vmatpush1.bf16.msra.mxu0 0
  %2961 = vmatprep.subr.bf16.mxu0 0
  %2962 = vmatpush1.bf16.msra.mxu0 0
  %2963 = vmatprep.mubr.bf16.mxu0 0
  %2964 = vmatmul.mubr.bf16.gmra.mrb[0].mxu0 %v2889
  %v2965 = vpop.f32.mrb[0].mxu0
  %v2966 = vadd.f32 0.0, %v2965
  %v2967 = vpop.f32.mrb[0].mxu0
  %v2968 = vadd.f32 0.0, %v2967
  %v2969 = vpop.f32.mrb[0].mxu0
  %v2970 = vpop.f32.mrb[0].mxu0
  %2971 = vdwg.mxu0
  %v2972 = vadd.f32 %v2885, %v2925
  %v2973 = vadd.f32 %v2886, %v2927
  %v2974 = vadd.f32 %v2887, %v2966
  %v2975 = vadd.f32 %v2888, %v2968
  %v2976 = vmul.f32 %v2972, 0.5
  %v2977 = vtanh.pop %v2976
  %v2978 = vmul.f32 %v2977, 0.5
  %v2979 = vadd.f32 %v2978, 0.5
  %v2980 = vmul.f32 %v2973, 0.5
  %v2981 = vtanh.pop %v2980
  %v2982 = vmul.f32 %v2981, 0.5
  %v2983 = vadd.f32 %v2982, 0.5
  %v2984 = vtanh.pop %v2974
  %v2985 = vmul.f32 %v2975, 0.5
  %v2986 = vtanh.pop %v2985
  %v2987 = vmul.f32 %v2986, 0.5
  %v2988 = vadd.f32 %v2987, 0.5
  %v2989 = vmul.f32 %v2983, %v2884
  %v2990 = vmul.f32 %v2979, %v2984
  %v2991 = vadd.f32 %v2989, %v2990
  %v2992 = vtanh.pop %v2991
  %v2993 = vmul.f32 %v2988, %v2992
  %2994 = vst [vmem:[%s2045] sm:$0xff] %v2991
  %2995 = vst [vmem:[%s2043] sm:$0xff] %v2993
  %v2996 = vld [vmem:[%s2043] sm:$0xff]
  %v2997 = vld [vmem:[%s2045] sm:$0xff]
  %v2998 = vld [vmem:[%s1470] sm:$0xff]
  %v2999 = vld [vmem:[%s1470 + $0x8] sm:$0xff]
  %v3000 = vld [vmem:[%s1470 + $0x10] sm:$0xff]
  %v3001 = vld [vmem:[%s1470 + $0x18] sm:$0xff]
  %v3002 = vpack.c.bf16 %v2996, %v2996
  %3003 = vmatprep.subr.bf16.mxu0 %v2149
  %3004 = vmatpush1.bf16.msra.mxu0 %v2148
  %3005 = vmatprep.subr.bf16.mxu0 %v2153
  %3006 = vmatpush1.bf16.msra.mxu0 %v2152
  %3007 = vmatprep.subr.bf16.mxu0 %v2157
  %3008 = vmatpush1.bf16.msra.mxu0 %v2156
  %3009 = vmatprep.subr.bf16.mxu0 %v2161
  %3010 = vmatpush1.bf16.msra.mxu0 %v2160
  %3011 = vmatprep.subr.bf16.mxu0 %v2165
  %3012 = vmatpush1.bf16.msra.mxu0 %v2164
  %3013 = vmatprep.subr.bf16.mxu0 %v2169
  %3014 = vmatpush1.bf16.msra.mxu0 %v2168
  %3015 = vmatprep.subr.bf16.mxu0 %v2173
  %3016 = vmatpush1.bf16.msra.mxu0 %v2172
  %3017 = vmatprep.subr.bf16.mxu0 %v2177
  %3018 = vmatpush1.bf16.msra.mxu0 %v2176
  %3019 = vmatprep.subr.bf16.mxu0 0
  %3020 = vmatpush1.bf16.msra.mxu0 0
  %3021 = vmatprep.subr.bf16.mxu0 0
  %3022 = vmatpush1.bf16.msra.mxu0 0
  %3023 = vmatprep.subr.bf16.mxu0 0
  %3024 = vmatpush1.bf16.msra.mxu0 0
  %3025 = vmatprep.subr.bf16.mxu0 0
  %3026 = vmatpush1.bf16.msra.mxu0 0
  %3027 = vmatprep.subr.bf16.mxu0 0
  %3028 = vmatpush1.bf16.msra.mxu0 0
  %3029 = vmatprep.subr.bf16.mxu0 0
  %3030 = vmatpush1.bf16.msra.mxu0 0
  %3031 = vmatprep.subr.bf16.mxu0 0
  %3032 = vmatpush1.bf16.msra.mxu0 0
  %3033 = vmatprep.subr.bf16.mxu0 0
  %3034 = vmatpush1.bf16.msra.mxu0 0
  %3035 = vmatprep.mubr.bf16.mxu0 0
  %3036 = vmatmul.mubr.bf16.gmra.mrb[0].mxu0 %v3002
  %v3037 = vpop.f32.mrb[0].mxu0
  %v3038 = vadd.f32 0.0, %v3037
  %v3039 = vpop.f32.mrb[0].mxu0
  %v3040 = vadd.f32 0.0, %v3039
  %v3041 = vpop.f32.mrb[0].mxu0
  %v3042 = vpop.f32.mrb[0].mxu0
  %3043 = vdwg.mxu0
  %3044 = vmatprep.subr.bf16.mxu0 %v2151
  %3045 = vmatpush1.bf16.msra.mxu0 %v2150
  %3046 = vmatprep.subr.bf16.mxu0 %v2155
  %3047 = vmatpush1.bf16.msra.mxu0 %v2154
  %3048 = vmatprep.subr.bf16.mxu0 %v2159
  %3049 = vmatpush1.bf16.msra.mxu0 %v2158
  %3050 = vmatprep.subr.bf16.mxu0 %v2163
  %3051 = vmatpush1.bf16.msra.mxu0 %v2162
  %3052 = vmatprep.subr.bf16.mxu0 %v2167
  %3053 = vmatpush1.bf16.msra.mxu0 %v2166
  %3054 = vmatprep.subr.bf16.mxu0 %v2171
  %3055 = vmatpush1.bf16.msra.mxu0 %v2170
  %3056 = vmatprep.subr.bf16.mxu0 %v2175
  %3057 = vmatpush1.bf16.msra.mxu0 %v2174
  %3058 = vmatprep.subr.bf16.mxu0 %v2179
  %3059 = vmatpush1.bf16.msra.mxu0 %v2178
  %3060 = vmatprep.subr.bf16.mxu0 0
  %3061 = vmatpush1.bf16.msra.mxu0 0
  %3062 = vmatprep.subr.bf16.mxu0 0
  %3063 = vmatpush1.bf16.msra.mxu0 0
  %3064 = vmatprep.subr.bf16.mxu0 0
  %3065 = vmatpush1.bf16.msra.mxu0 0
  %3066 = vmatprep.subr.bf16.mxu0 0
  %3067 = vmatpush1.bf16.msra.mxu0 0
  %3068 = vmatprep.subr.bf16.mxu0 0
  %3069 = vmatpush1.bf16.msra.mxu0 0
  %3070 = vmatprep.subr.bf16.mxu0 0
  %3071 = vmatpush1.bf16.msra.mxu0 0
  %3072 = vmatprep.subr.bf16.mxu0 0
  %3073 = vmatpush1.bf16.msra.mxu0 0
  %3074 = vmatprep.subr.bf16.mxu0 0
  %3075 = vmatpush1.bf16.msra.mxu0 0
  %3076 = vmatprep.mubr.bf16.mxu0 0
  %3077 = vmatmul.mubr.bf16.gmra.mrb[0].mxu0 %v3002
  %v3078 = vpop.f32.mrb[0].mxu0
  %v3079 = vadd.f32 0.0, %v3078
  %v3080 = vpop.f32.mrb[0].mxu0
  %v3081 = vadd.f32 0.0, %v3080
  %v3082 = vpop.f32.mrb[0].mxu0
  %v3083 = vpop.f32.mrb[0].mxu0
  %3084 = vdwg.mxu0
  %v3085 = vadd.f32 %v2998, %v3038
  %v3086 = vadd.f32 %v2999, %v3040
  %v3087 = vadd.f32 %v3000, %v3079
  %v3088 = vadd.f32 %v3001, %v3081
  %v3089 = vmul.f32 %v3085, 0.5
  %v3090 = vtanh.pop %v3089
  %v3091 = vmul.f32 %v3090, 0.5
  %v3092 = vadd.f32 %v3091, 0.5
  %v3093 = vmul.f32 %v3086, 0.5
  %v3094 = vtanh.pop %v3093
  %v3095 = vmul.f32 %v3094, 0.5
  %v3096 = vadd.f32 %v3095, 0.5
  %v3097 = vtanh.pop %v3087
  %v3098 = vmul.f32 %v3088, 0.5
  %v3099 = vtanh.pop %v3098
  %v3100 = vmul.f32 %v3099, 0.5
  %v3101 = vadd.f32 %v3100, 0.5
  %v3102 = vmul.f32 %v3096, %v2997
  %v3103 = vmul.f32 %v3092, %v3097
  %v3104 = vadd.f32 %v3102, %v3103
  %v3105 = vtanh.pop %v3104
  %v3106 = vmul.f32 %v3101, %v3105
  %3107 = vst [vmem:[%s2045] sm:$0xff] %v3104
  %3108 = vst [vmem:[%s2043] sm:$0xff] %v3106
  // Predicated region
  $region34: #{rnn_forward.1} parent=0 // pred_check
    %p3109 = pneg %p27
  $region35: #{rnn_forward.1} parent=0 // pred_check_branch
    %3111 = sbr.rel (%p3109) target = $region37
  $region36: #{rnn_forward.1} parent=0 // pred_region
    %v3112 = vld [vmem:[%s2043] sm:$0xff]
    %v3113 = vpack.c.bf16 %v3112, %v3112
    %v3114 = vld [vmem:[%s5] sm:$0xf]
    %v3115 = vld [vmem:[%s5 + $0x4] sm:$0xf]
    %v3116 = vld [vmem:[%s5 + $0x8] sm:$0xf]
    %v3117 = vld [vmem:[%s5 + $0xc] sm:$0xf]
    %v3118 = vld [vmem:[%s5 + $0x10] sm:$0xf]
    %v3119 = vld [vmem:[%s5 + $0x14] sm:$0xf]
    %v3120 = vld [vmem:[%s5 + $0x18] sm:$0xf]
    %v3121 = vld [vmem:[%s5 + $0x1c] sm:$0xf]
    %v3122 = vld [vmem:[%s5 + $0x20] sm:$0xf]
    %v3123 = vld [vmem:[%s5 + $0x24] sm:$0xf]
    %v3124 = vld [vmem:[%s5 + $0x28] sm:$0xf]
    %v3125 = vld [vmem:[%s5 + $0x2c] sm:$0xf]
    %v3126 = vld [vmem:[%s5 + $0x30] sm:$0xf]
    %v3127 = vld [vmem:[%s5 + $0x34] sm:$0xf]
    %v3128 = vld [vmem:[%s5 + $0x38] sm:$0xf]
    %v3129 = vld [vmem:[%s5 + $0x3c] sm:$0xf]
    %v3130 = vld [vmem:[%s6] sm:$0x1]
    %v3132 = vlaneseq
    %v3133 = vshrl.u32 %v3132, 7
    %v3134 = vsub.s32 0, %v3133
    %v3135 = vrot.slane %v3130, %v3134
    %v3153 = vunpack.c.l.b16 %v3114
    %v3154 = vunpack.c.l.b16 %v3115
    %v3155 = vunpack.c.l.b16 %v3116
    %v3156 = vunpack.c.l.b16 %v3117
    %v3157 = vunpack.c.l.b16 %v3118
    %v3158 = vunpack.c.l.b16 %v3119
    %v3159 = vunpack.c.l.b16 %v3120
    %v3160 = vunpack.c.l.b16 %v3121
    %v3161 = vunpack.c.l.b16 %v3122
    %v3162 = vunpack.c.l.b16 %v3123
    %v3163 = vunpack.c.l.b16 %v3124
    %v3164 = vunpack.c.l.b16 %v3125
    %v3165 = vunpack.c.l.b16 %v3126
    %v3166 = vunpack.c.l.b16 %v3127
    %v3167 = vunpack.c.l.b16 %v3128
    %v3168 = vunpack.c.l.b16 %v3129
    %v3169 = vpack.c.b16 %v3154, %v3153
    %v3170 = vpack.c.b16 %v3156, %v3155
    %v3171 = vpack.c.b16 %v3158, %v3157
    %v3172 = vpack.c.b16 %v3160, %v3159
    %v3173 = vpack.c.b16 %v3162, %v3161
    %v3174 = vpack.c.b16 %v3164, %v3163
    %v3175 = vpack.c.b16 %v3166, %v3165
    %v3176 = vpack.c.b16 %v3168, %v3167
    %3185 = vmatprep.subr.bf16.mxu0 0
    %3186 = vmatpush1.bf16.msra.mxu0 %v3169
    %3187 = vmatprep.subr.bf16.mxu0 0
    %3188 = vmatpush1.bf16.msra.mxu0 %v3170
    %3189 = vmatprep.subr.bf16.mxu0 0
    %3190 = vmatpush1.bf16.msra.mxu0 %v3171
    %3191 = vmatprep.subr.bf16.mxu0 0
    %3192 = vmatpush1.bf16.msra.mxu0 %v3172
    %3193 = vmatprep.subr.bf16.mxu0 0
    %3194 = vmatpush1.bf16.msra.mxu0 %v3173
    %3195 = vmatprep.subr.bf16.mxu0 0
    %3196 = vmatpush1.bf16.msra.mxu0 %v3174
    %3197 = vmatprep.subr.bf16.mxu0 0
    %3198 = vmatpush1.bf16.msra.mxu0 %v3175
    %3199 = vmatprep.subr.bf16.mxu0 0
    %3200 = vmatpush1.bf16.msra.mxu0 %v3176
    %3201 = vmatprep.subr.bf16.mxu0 0
    %3202 = vmatpush1.bf16.msra.mxu0 0
    %3203 = vmatprep.subr.bf16.mxu0 0
    %3204 = vmatpush1.bf16.msra.mxu0 0
    %3205 = vmatprep.subr.bf16.mxu0 0
    %3206 = vmatpush1.bf16.msra.mxu0 0
    %3207 = vmatprep.subr.bf16.mxu0 0
    %3208 = vmatpush1.bf16.msra.mxu0 0
    %3209 = vmatprep.subr.bf16.mxu0 0
    %3210 = vmatpush1.bf16.msra.mxu0 0
    %3211 = vmatprep.subr.bf16.mxu0 0
    %3212 = vmatpush1.bf16.msra.mxu0 0
    %3213 = vmatprep.subr.bf16.mxu0 0
    %3214 = vmatpush1.bf16.msra.mxu0 0
    %3215 = vmatprep.subr.bf16.mxu0 0
    %3216 = vmatpush1.bf16.msra.mxu0 0
    %3217 = vmatprep.mubr.bf16.mxu0 0
    %3218 = vmatmul.mubr.bf16.gmra.mrb[0].mxu0 %v3113
    %v3219 = vpop.f32.mrb[0].mxu0
    %v3220 = vadd.f32 %v3135, %v3219
    %v3221 = vpop.f32.mrb[0].mxu0
    %v3222 = vpop.f32.mrb[0].mxu0
    %v3223 = vpop.f32.mrb[0].mxu0
    %3224 = vdwg.mxu0
    %3225 = vst [vmem:[%s7] sm:$0xff] %v3220
  $region37: #{rnn_forward.1} parent=0 // pred_fallthru
    _
  // Predicated region
  $region38: #{rnn_forward.1} parent=0 // pred_check
    _
  $region39: #{rnn_forward.1} parent=0 // pred_check_branch
    %3227 = sbr.rel (0) target = $region41
  $region40: #{rnn_forward.1} parent=0 // pred_region
    _
  $region41: #{rnn_forward.1} parent=0 // pred_fallthru
    _
  // Predicated region
  $region42: #{rnn_forward.1} parent=0 // pred_check
    _
  $region43: #{rnn_forward.1} parent=0 // pred_check_branch
    %3229 = sbr.rel (0) target = $region45
  $region44: #{rnn_forward.1} parent=0 // pred_region
    _
  $region45: #{rnn_forward.1} parent=0 // pred_fallthru
    _

// kernel: rnn_forward.1
$region0: #{rnn_forward.1}
  #allocation0 [shape = 'u32[]', space=smem, size = 0x4, offset = 0x4, fixed_abs, tag = 'smem constant byte address 0x4 - core index']
  #allocation1 [shape = 'u32[144,128]{1,0:T(1,128)}', space=vmem, size = 0x12000, scoped, tag = 'internal scratch']
  #allocation2 [shape = 'f32[2,8,128]{2,1,0:T(8,128)}', space=vmem, size = 0x2000, scoped, tag = 'scratch operand']
  #allocation3 [shape = 'f32[2,8,128]{2,1,0:T(8,128)}', space=vmem, size = 0x2000, scoped, tag = 'scratch operand']
  #allocation4 [shape = 'bf16[8,8,128]{2,1,0:T(8,128)(2,1)}', space=vmem, size = 0x4000, scoped, tag = 'scratch operand']
  #allocation5 [shape = 'f32[8,8,512]{2,1,0:T(8,128)}', space=vmem, size = 0x20000, scoped, tag = 'scratch operand']
  %s0 = inlined_call_operand.vmem [shape: bf16[8,8,128], index: 0, kind: input, shape index: {}]
  %s1 = inlined_call_operand.vmem [shape: bf16[128,512], index: 1, kind: input, shape index: {}]
  %s2 = inlined_call_operand.vmem [shape: bf16[1,128,512], index: 2, kind: input, shape index: {}]
  %s3 = inlined_call_operand.vmem [shape: bf16[2,128,512], index: 3, kind: input, shape index: {}]
  %s4 = inlined_call_operand.vmem [shape: f32[2,1,512], index: 4, kind: input, shape index: {}]
  %s5 = inlined_call_operand.vmem [shape: bf16[128,128], index: 5, kind: input, shape index: {}]
  %s6 = inlined_call_operand.vmem [shape: f32[1,128], index: 6, kind: input, shape index: {}]
  %s7 = inlined_call_operand.vmem [shape: f32[8,128], index: 7, kind: output, shape index: {}]
  %s8 = sld [smem:[#allocation0]]
  $region46: #{rnn_forward.1} parent=0
    _
  %s10 = ssub.s32 1, %s8
  %s11 = scalar_select 0, %s10, %s8
  // Predicated region
  $region2: #{rnn_forward.1} parent=0 // pred_check
    _
  $region3: #{rnn_forward.1} parent=0 // pred_check_branch
    %13 = sbr.rel (0) target = $region5
  $region4: #{rnn_forward.1} parent=0 // pred_region
    _
  $region5: #{rnn_forward.1} parent=0 // pred_fallthru
    _
  // Predicated region
  $region6: #{rnn_forward.1} parent=0 // pred_check
    _
  $region7: #{rnn_forward.1} parent=0 // pred_check_branch
    %15 = sbr.rel (0) target = $region9
  $region8: #{rnn_forward.1} parent=0 // pred_region
    _
  $region9: #{rnn_forward.1} parent=0 // pred_fallthru
    _
  // Predicated region
  $region10: #{rnn_forward.1} parent=0 // pred_check
    _
  $region11: #{rnn_forward.1} parent=0 // pred_check_branch
    %17 = sbr.rel (0) target = $region13
  $region12: #{rnn_forward.1} parent=0 // pred_region
    _
  $region13: #{rnn_forward.1} parent=0 // pred_fallthru
    _
  // Predicated region
  $region14: #{rnn_forward.1} parent=0 // pred_check
    _
  $region15: #{rnn_forward.1} parent=0 // pred_check_branch
    %19 = sbr.rel (0) target = $region17
  $region16: #{rnn_forward.1} parent=0 // pred_region
    _
  $region17: #{rnn_forward.1} parent=0 // pred_fallthru
    _
  // Predicated region
  $region18: #{rnn_forward.1} parent=0 // pred_check
    _
  $region19: #{rnn_forward.1} parent=0 // pred_check_branch
    %21 = sbr.rel (0) target = $region21
  $region20: #{rnn_forward.1} parent=0 // pred_region
    _
  $region21: #{rnn_forward.1} parent=0 // pred_fallthru
    _
  // Predicated region
  $region22: #{rnn_forward.1} parent=0 // pred_check
    _
  $region23: #{rnn_forward.1} parent=0 // pred_check_branch
    %23 = sbr.rel (0) target = $region25
  $region24: #{rnn_forward.1} parent=0 // pred_region
    _
  $region25: #{rnn_forward.1} parent=0 // pred_fallthru
    _
  // Predicated region
  $region26: #{rnn_forward.1} parent=0 // pred_check
    _
  $region27: #{rnn_forward.1} parent=0 // pred_check_branch
    %25 = sbr.rel (0) target = $region29
  $region28: #{rnn_forward.1} parent=0 // pred_region
    _
  $region29: #{rnn_forward.1} parent=0 // pred_fallthru
    _
  %p27 = scmp.eq.s32.totalorder 0, 0
  // Predicated region
  $region30: #{rnn_forward.1} parent=0 // pred_check
    %p28 = pneg %p27
  $region31: #{rnn_forward.1} parent=0 // pred_check_branch
    %30 = sbr.rel (%p28) target = $region33
  $region32: #{rnn_forward.1} parent=0 // pred_region
    %31 = vst [vmem:[#allocation2] sm:$0xff] 0.0
    %32 = vst [vmem:[#allocation2 + $0x8] sm:$0xff] 0.0
    %33 = vst [vmem:[#allocation3] sm:$0xff] 0.0
    %34 = vst [vmem:[#allocation3 + $0x8] sm:$0xff] 0.0
  $region33: #{rnn_forward.1} parent=0 // pred_fallthru
    _
  %v35 = vld [vmem:[%s0] sm:$0xf]
  %v36 = vld [vmem:[%s0 + $0x4] sm:$0xf]
  %v37 = vld [vmem:[%s0 + $0x8] sm:$0xf]
  %v38 = vld [vmem:[%s0 + $0xc] sm:$0xf]
  %v39 = vld [vmem:[%s0 + $0x10] sm:$0xf]
  %v40 = vld [vmem:[%s0 + $0x14] sm:$0xf]
  %v41 = vld [vmem:[%s0 + $0x18] sm:$0xf]
  %v42 = vld [vmem:[%s0 + $0x1c] sm:$0xf]
  %v43 = vld [vmem:[%s1] sm:$0xff]
  %v44 = vld [vmem:[%s1 + $0x8] sm:$0xff]
  %v45 = vld [vmem:[%s1 + $0x10] sm:$0xff]
  %v46 = vld [vmem:[%s1 + $0x18] sm:$0xff]
  %v47 = vld [vmem:[%s1 + $0x20] sm:$0xff]
  %v48 = vld [vmem:[%s1 + $0x28] sm:$0xff]
  %v49 = vld [vmem:[%s1 + $0x30] sm:$0xff]
  %v50 = vld [vmem:[%s1 + $0x38] sm:$0xff]
  %v51 = vld [vmem:[%s1 + $0x40] sm:$0xff]
  %v52 = vld [vmem:[%s1 + $0x48] sm:$0xff]
  %v53 = vld [vmem:[%s1 + $0x50] sm:$0xff]
  %v54 = vld [vmem:[%s1 + $0x58] sm:$0xff]
  %v55 = vld [vmem:[%s1 + $0x60] sm:$0xff]
  %v56 = vld [vmem:[%s1 + $0x68] sm:$0xff]
  %v57 = vld [vmem:[%s1 + $0x70] sm:$0xff]
  %v58 = vld [vmem:[%s1 + $0x78] sm:$0xff]
  %v59 = vld [vmem:[%s1 + $0x80] sm:$0xff]
  %v60 = vld [vmem:[%s1 + $0x88] sm:$0xff]
  %v61 = vld [vmem:[%s1 + $0x90] sm:$0xff]
  %v62 = vld [vmem:[%s1 + $0x98] sm:$0xff]
  %v63 = vld [vmem:[%s1 + $0xa0] sm:$0xff]
  %v64 = vld [vmem:[%s1 + $0xa8] sm:$0xff]
  %v65 = vld [vmem:[%s1 + $0xb0] sm:$0xff]
  %v66 = vld [vmem:[%s1 + $0xb8] sm:$0xff]
  %v67 = vld [vmem:[%s1 + $0xc0] sm:$0xff]
  %v68 = vld [vmem:[%s1 + $0xc8] sm:$0xff]
  %v69 = vld [vmem:[%s1 + $0xd0] sm:$0xff]
  %v70 = vld [vmem:[%s1 + $0xd8] sm:$0xff]
  %v71 = vld [vmem:[%s1 + $0xe0] sm:$0xff]
  %v72 = vld [vmem:[%s1 + $0xe8] sm:$0xff]
  %v73 = vld [vmem:[%s1 + $0xf0] sm:$0xff]
  %v74 = vld [vmem:[%s1 + $0xf8] sm:$0xff]
  %v75 = vld [vmem:[%s4] sm:$0xf]
  %v77 = vlaneseq
  %v78 = vshrl.u32 %v77, 7
  %v79 = vsub.s32 0, %v78
  %v80 = vrot.slane %v75, %v79
  %v81 = vlaneseq
  %v82 = vshrl.u32 %v81, 7
  %v83 = vsub.s32 1, %v82
  %v84 = vrot.slane %v75, %v83
  %v85 = vlaneseq
  %v86 = vshrl.u32 %v85, 7
  %v87 = vsub.s32 2, %v86
  %v88 = vrot.slane %v75, %v87
  %v89 = vlaneseq
  %v90 = vshrl.u32 %v89, 7
  %v91 = vsub.s32 3, %v90
  %v92 = vrot.slane %v75, %v91
  %v105 = vunpack.c.l.b16 %v35
  %v106 = vunpack.c.l.b16 %v36
  %v107 = vunpack.c.l.b16 %v37
  %v108 = vunpack.c.l.b16 %v38
  %v109 = vunpack.c.l.b16 %v39
  %v110 = vunpack.c.l.b16 %v40
  %v111 = vunpack.c.l.b16 %v41
  %v112 = vunpack.c.l.b16 %v42
  %v113 = vpack.c.b16 %v106, %v105
  %v114 = vpack.c.b16 %v108, %v107
  %v115 = vpack.c.b16 %v110, %v109
  %v116 = vpack.c.b16 %v112, %v111
  %v153 = vunpack.c.l.b16 %v43
  %v154 = vunpack.c.h.b16 %v43
  %v155 = vunpack.c.l.b16 %v44
  %v156 = vunpack.c.h.b16 %v44
  %v157 = vunpack.c.l.b16 %v45
  %v158 = vunpack.c.h.b16 %v45
  %v159 = vunpack.c.l.b16 %v46
  %v160 = vunpack.c.h.b16 %v46
  %v161 = vunpack.c.l.b16 %v47
  %v162 = vunpack.c.h.b16 %v47
  %v163 = vunpack.c.l.b16 %v48
  %v164 = vunpack.c.h.b16 %v48
  %v165 = vunpack.c.l.b16 %v49
  %v166 = vunpack.c.h.b16 %v49
  %v167 = vunpack.c.l.b16 %v50
  %v168 = vunpack.c.h.b16 %v50
  %v169 = vunpack.c.l.b16 %v51
  %v170 = vunpack.c.h.b16 %v51
  %v171 = vunpack.c.l.b16 %v52
  %v172 = vunpack.c.h.b16 %v52
  %v173 = vunpack.c.l.b16 %v53
  %v174 = vunpack.c.h.b16 %v53
  %v175 = vunpack.c.l.b16 %v54
  %v176 = vunpack.c.h.b16 %v54
  %v177 = vunpack.c.l.b16 %v55
  %v178 = vunpack.c.h.b16 %v55
  %v179 = vunpack.c.l.b16 %v56
  %v180 = vunpack.c.h.b16 %v56
  %v181 = vunpack.c.l.b16 %v57
  %v182 = vunpack.c.h.b16 %v57
  %v183 = vunpack.c.l.b16 %v58
  %v184 = vunpack.c.h.b16 %v58
  %v185 = vunpack.c.l.b16 %v59
  %v186 = vunpack.c.h.b16 %v59
  %v187 = vunpack.c.l.b16 %v60
  %v188 = vunpack.c.h.b16 %v60
  %v189 = vunpack.c.l.b16 %v61
  %v190 = vunpack.c.h.b16 %v61
  %v191 = vunpack.c.l.b16 %v62
  %v192 = vunpack.c.h.b16 %v62
  %v193 = vunpack.c.l.b16 %v63
  %v194 = vunpack.c.h.b16 %v63
  %v195 = vunpack.c.l.b16 %v64
  %v196 = vunpack.c.h.b16 %v64
  %v197 = vunpack.c.l.b16 %v65
  %v198 = vunpack.c.h.b16 %v65
  %v199 = vunpack.c.l.b16 %v66
  %v200 = vunpack.c.h.b16 %v66
  %v201 = vunpack.c.l.b16 %v67
  %v202 = vunpack.c.h.b16 %v67
  %v203 = vunpack.c.l.b16 %v68
  %v204 = vunpack.c.h.b16 %v68
  %v205 = vunpack.c.l.b16 %v69
  %v206 = vunpack.c.h.b16 %v69
  %v207 = vunpack.c.l.b16 %v70
  %v208 = vunpack.c.h.b16 %v70
  %v209 = vunpack.c.l.b16 %v71
  %v210 = vunpack.c.h.b16 %v71
  %v211 = vunpack.c.l.b16 %v72
  %v212 = vunpack.c.h.b16 %v72
  %v213 = vunpack.c.l.b16 %v73
  %v214 = vunpack.c.h.b16 %v73
  %v215 = vunpack.c.l.b16 %v74
  %v216 = vunpack.c.h.b16 %v74
  %v217 = vpack.c.b16 %v157, %v153
  %v218 = vpack.c.b16 %v158, %v154
  %v219 = vpack.c.b16 %v159, %v155
  %v220 = vpack.c.b16 %v160, %v156
  %v221 = vpack.c.b16 %v165, %v161
  %v222 = vpack.c.b16 %v166, %v162
  %v223 = vpack.c.b16 %v167, %v163
  %v224 = vpack.c.b16 %v168, %v164
  %v225 = vpack.c.b16 %v173, %v169
  %v226 = vpack.c.b16 %v174, %v170
  %v227 = vpack.c.b16 %v175, %v171
  %v228 = vpack.c.b16 %v176, %v172
  %v229 = vpack.c.b16 %v181, %v177
  %v230 = vpack.c.b16 %v182, %v178
  %v231 = vpack.c.b16 %v183, %v179
  %v232 = vpack.c.b16 %v184, %v180
  %v233 = vpack.c.b16 %v189, %v185
  %v234 = vpack.c.b16 %v190, %v186
  %v235 = vpack.c.b16 %v191, %v187
  %v236 = vpack.c.b16 %v192, %v188
  %v237 = vpack.c.b16 %v197, %v193
  %v238 = vpack.c.b16 %v198, %v194
  %v239 = vpack.c.b16 %v199, %v195
  %v240 = vpack.c.b16 %v200, %v196
  %v241 = vpack.c.b16 %v205, %v201
  %v242 = vpack.c.b16 %v206, %v202
  %v243 = vpack.c.b16 %v207, %v203
  %v244 = vpack.c.b16 %v208, %v204
  %v245 = vpack.c.b16 %v213, %v209
  %v246 = vpack.c.b16 %v214, %v210
  %v247 = vpack.c.b16 %v215, %v211
  %v248 = vpack.c.b16 %v216, %v212
  %281 = vmatprep.subr.bf16.mxu0 %v218
  %282 = vmatpush1.bf16.msra.mxu0 %v217
  %283 = vmatprep.subr.bf16.mxu0 %v222
  %284 = vmatpush1.bf16.msra.mxu0 %v221
  %285 = vmatprep.subr.bf16.mxu0 %v226
  %286 = vmatpush1.bf16.msra.mxu0 %v225
  %287 = vmatprep.subr.bf16.mxu0 %v230
  %288 = vmatpush1.bf16.msra.mxu0 %v229
  %289 = vmatprep.subr.bf16.mxu0 %v234
  %290 = vmatpush1.bf16.msra.mxu0 %v233
  %291 = vmatprep.subr.bf16.mxu0 %v238
  %292 = vmatpush1.bf16.msra.mxu0 %v237
  %293 = vmatprep.subr.bf16.mxu0 %v242
  %294 = vmatpush1.bf16.msra.mxu0 %v241
  %295 = vmatprep.subr.bf16.mxu0 %v246
  %296 = vmatpush1.bf16.msra.mxu0 %v245
  %297 = vmatprep.subr.bf16.mxu0 0
  %298 = vmatpush1.bf16.msra.mxu0 0
  %299 = vmatprep.subr.bf16.mxu0 0
  %300 = vmatpush1.bf16.msra.mxu0 0
  %301 = vmatprep.subr.bf16.mxu0 0
  %302 = vmatpush1.bf16.msra.mxu0 0
  %303 = vmatprep.subr.bf16.mxu0 0
  %304 = vmatpush1.bf16.msra.mxu0 0
  %305 = vmatprep.subr.bf16.mxu0 0
  %306 = vmatpush1.bf16.msra.mxu0 0
  %307 = vmatprep.subr.bf16.mxu0 0
  %308 = vmatpush1.bf16.msra.mxu0 0
  %309 = vmatprep.subr.bf16.mxu0 0
  %310 = vmatpush1.bf16.msra.mxu0 0
  %311 = vmatprep.subr.bf16.mxu0 0
  %312 = vmatpush1.bf16.msra.mxu0 0
  %313 = vmatprep.mubr.bf16.mxu0 0
  %314 = vmatmul.mubr.bf16.gmra.mrb[0].mxu0 %v113
  %v315 = vpop.f32.mrb[0].mxu0
  %v316 = vadd.f32 %v80, %v315
  %v317 = vpop.f32.mrb[0].mxu0
  %v318 = vadd.f32 %v84, %v317
  %v319 = vpop.f32.mrb[0].mxu0
  %v320 = vadd.f32 %v80, %v319
  %v321 = vpop.f32.mrb[0].mxu0
  %v322 = vadd.f32 %v84, %v321
  %323 = vmatprep.mubr.bf16.mxu0 0
  %324 = vmatmul.mubr.bf16.gmra.mrb[0].mxu0 %v114
  %v325 = vpop.f32.mrb[0].mxu0
  %v326 = vadd.f32 %v80, %v325
  %v327 = vpop.f32.mrb[0].mxu0
  %v328 = vadd.f32 %v84, %v327
  %v329 = vpop.f32.mrb[0].mxu0
  %v330 = vadd.f32 %v80, %v329
  %v331 = vpop.f32.mrb[0].mxu0
  %v332 = vadd.f32 %v84, %v331
  %333 = vmatprep.mubr.bf16.mxu0 0
  %334 = vmatmul.mubr.bf16.gmra.mrb[0].mxu0 %v115
  %v335 = vpop.f32.mrb[0].mxu0
  %v336 = vadd.f32 %v80, %v335
  %v337 = vpop.f32.mrb[0].mxu0
  %v338 = vadd.f32 %v84, %v337
  %v339 = vpop.f32.mrb[0].mxu0
  %v340 = vadd.f32 %v80, %v339
  %v341 = vpop.f32.mrb[0].mxu0
  %v342 = vadd.f32 %v84, %v341
  %343 = vmatprep.mubr.bf16.mxu0 0
  %344 = vmatmul.mubr.bf16.gmra.mrb[0].mxu0 %v116
  %v345 = vpop.f32.mrb[0].mxu0
  %v346 = vadd.f32 %v80, %v345
  %v347 = vpop.f32.mrb[0].mxu0
  %v348 = vadd.f32 %v84, %v347
  %v349 = vpop.f32.mrb[0].mxu0
  %v350 = vadd.f32 %v80, %v349
  %v351 = vpop.f32.mrb[0].mxu0
  %v352 = vadd.f32 %v84, %v351
  %353 = vdwg.mxu0
  %354 = vmatprep.subr.bf16.mxu0 %v220
  %355 = vmatpush1.bf16.msra.mxu0 %v219
  %356 = vmatprep.subr.bf16.mxu0 %v224
  %357 = vmatpush1.bf16.msra.mxu0 %v223
  %358 = vmatprep.subr.bf16.mxu0 %v228
  %359 = vmatpush1.bf16.msra.mxu0 %v227
  %360 = vmatprep.subr.bf16.mxu0 %v232
  %361 = vmatpush1.bf16.msra.mxu0 %v231
  %362 = vmatprep.subr.bf16.mxu0 %v236
  %363 = vmatpush1.bf16.msra.mxu0 %v235
  %364 = vmatprep.subr.bf16.mxu0 %v240
  %365 = vmatpush1.bf16.msra.mxu0 %v239
  %366 = vmatprep.subr.bf16.mxu0 %v244
  %367 = vmatpush1.bf16.msra.mxu0 %v243
  %368 = vmatprep.subr.bf16.mxu0 %v248
  %369 = vmatpush1.bf16.msra.mxu0 %v247
  %370 = vmatprep.subr.bf16.mxu0 0
  %371 = vmatpush1.bf16.msra.mxu0 0
  %372 = vmatprep.subr.bf16.mxu0 0
  %373 = vmatpush1.bf16.msra.mxu0 0
  %374 = vmatprep.subr.bf16.mxu0 0
  %375 = vmatpush1.bf16.msra.mxu0 0
  %376 = vmatprep.subr.bf16.mxu0 0
  %377 = vmatpush1.bf16.msra.mxu0 0
  %378 = vmatprep.subr.bf16.mxu0 0
  %379 = vmatpush1.bf16.msra.mxu0 0
  %380 = vmatprep.subr.bf16.mxu0 0
  %381 = vmatpush1.bf16.msra.mxu0 0
  %382 = vmatprep.subr.bf16.mxu0 0
  %383 = vmatpush1.bf16.msra.mxu0 0
  %384 = vmatprep.subr.bf16.mxu0 0
  %385 = vmatpush1.bf16.msra.mxu0 0
  %386 = vmatprep.mubr.bf16.mxu0 0
  %387 = vmatmul.mubr.bf16.gmra.mrb[0].mxu0 %v113
  %v388 = vpop.f32.mrb[0].mxu0
  %v389 = vadd.f32 %v88, %v388
  %v390 = vpop.f32.mrb[0].mxu0
  %v391 = vadd.f32 %v92, %v390
  %v392 = vpop.f32.mrb[0].mxu0
  %v393 = vadd.f32 %v88, %v392
  %v394 = vpop.f32.mrb[0].mxu0
  %v395 = vadd.f32 %v92, %v394
  %396 = vmatprep.mubr.bf16.mxu0 0
  %397 = vmatmul.mubr.bf16.gmra.mrb[0].mxu0 %v114
  %v398 = vpop.f32.mrb[0].mxu0
  %v399 = vadd.f32 %v88, %v398
  %v400 = vpop.f32.mrb[0].mxu0
  %v401 = vadd.f32 %v92, %v400
  %v402 = vpop.f32.mrb[0].mxu0
  %v403 = vadd.f32 %v88, %v402
  %v404 = vpop.f32.mrb[0].mxu0
  %v405 = vadd.f32 %v92, %v404
  %406 = vmatprep.mubr.bf16.mxu0 0
  %407 = vmatmul.mubr.bf16.gmra.mrb[0].mxu0 %v115
  %v408 = vpop.f32.mrb[0].mxu0
  %v409 = vadd.f32 %v88, %v408
  %v410 = vpop.f32.mrb[0].mxu0
  %v411 = vadd.f32 %v92, %v410
  %v412 = vpop.f32.mrb[0].mxu0
  %v413 = vadd.f32 %v88, %v412
  %v414 = vpop.f32.mrb[0].mxu0
  %v415 = vadd.f32 %v92, %v414
  %416 = vmatprep.mubr.bf16.mxu0 0
  %417 = vmatmul.mubr.bf16.gmra.mrb[0].mxu0 %v116
  %v418 = vpop.f32.mrb[0].mxu0
  %v419 = vadd.f32 %v88, %v418
  %v420 = vpop.f32.mrb[0].mxu0
  %v421 = vadd.f32 %v92, %v420
  %v422 = vpop.f32.mrb[0].mxu0
  %v423 = vadd.f32 %v88, %v422
  %v424 = vpop.f32.mrb[0].mxu0
  %v425 = vadd.f32 %v92, %v424
  %426 = vdwg.mxu0
  %427 = vst [vmem:[#allocation5] sm:$0xff] %v316
  %428 = vst [vmem:[#allocation5 + $0x8] sm:$0xff] %v318
  %429 = vst [vmem:[#allocation5 + $0x10] sm:$0xff] %v389
  %430 = vst [vmem:[#allocation5 + $0x18] sm:$0xff] %v391
  %431 = vst [vmem:[#allocation5 + $0x20] sm:$0xff] %v320
  %432 = vst [vmem:[#allocation5 + $0x28] sm:$0xff] %v322
  %433 = vst [vmem:[#allocation5 + $0x30] sm:$0xff] %v393
  %434 = vst [vmem:[#allocation5 + $0x38] sm:$0xff] %v395
  %435 = vst [vmem:[#allocation5 + $0x40] sm:$0xff] %v326
  %436 = vst [vmem:[#allocation5 + $0x48] sm:$0xff] %v328
  %437 = vst [vmem:[#allocation5 + $0x50] sm:$0xff] %v399
  %438 = vst [vmem:[#allocation5 + $0x58] sm:$0xff] %v401
  %439 = vst [vmem:[#allocation5 + $0x60] sm:$0xff] %v330
  %440 = vst [vmem:[#allocation5 + $0x68] sm:$0xff] %v332
  %441 = vst [vmem:[#allocation5 + $0x70] sm:$0xff] %v403
  %442 = vst [vmem:[#allocation5 + $0x78] sm:$0xff] %v405
  %443 = vst [vmem:[#allocation5 + $0x80] sm:$0xff] %v336
  %444 = vst [vmem:[#allocation5 + $0x88] sm:$0xff] %v338
  %445 = vst [vmem:[#allocation5 + $0x90] sm:$0xff] %v409
  %446 = vst [vmem:[#allocation5 + $0x98] sm:$0xff] %v411
  %447 = vst [vmem:[#allocation5 + $0xa0] sm:$0xff] %v340
  %448 = vst [vmem:[#allocation5 + $0xa8] sm:$0xff] %v342
  %449 = vst [vmem:[#allocation5 + $0xb0] sm:$0xff] %v413
  %450 = vst [vmem:[#allocation5 + $0xb8] sm:$0xff] %v415
  %451 = vst [vmem:[#allocation5 + $0xc0] sm:$0xff] %v346
  %452 = vst [vmem:[#allocation5 + $0xc8] sm:$0xff] %v348
  %453 = vst [vmem:[#allocation5 + $0xd0] sm:$0xff] %v419
  %454 = vst [vmem:[#allocation5 + $0xd8] sm:$0xff] %v421
  %455 = vst [vmem:[#allocation5 + $0xe0] sm:$0xff] %v350
  %456 = vst [vmem:[#allocation5 + $0xe8] sm:$0xff] %v352
  %457 = vst [vmem:[#allocation5 + $0xf0] sm:$0xff] %v423
  %458 = vst [vmem:[#allocation5 + $0xf8] sm:$0xff] %v425
  %v459 = vld [vmem:[%s3] sm:$0xff]
  %v460 = vld [vmem:[%s3 + $0x8] sm:$0xff]
  %v461 = vld [vmem:[%s3 + $0x10] sm:$0xff]
  %v462 = vld [vmem:[%s3 + $0x18] sm:$0xff]
  %v463 = vld [vmem:[%s3 + $0x20] sm:$0xff]
  %v464 = vld [vmem:[%s3 + $0x28] sm:$0xff]
  %v465 = vld [vmem:[%s3 + $0x30] sm:$0xff]
  %v466 = vld [vmem:[%s3 + $0x38] sm:$0xff]
  %v467 = vld [vmem:[%s3 + $0x40] sm:$0xff]
  %v468 = vld [vmem:[%s3 + $0x48] sm:$0xff]
  %v469 = vld [vmem:[%s3 + $0x50] sm:$0xff]
  %v470 = vld [vmem:[%s3 + $0x58] sm:$0xff]
  %v471 = vld [vmem:[%s3 + $0x60] sm:$0xff]
  %v472 = vld [vmem:[%s3 + $0x68] sm:$0xff]
  %v473 = vld [vmem:[%s3 + $0x70] sm:$0xff]
  %v474 = vld [vmem:[%s3 + $0x78] sm:$0xff]
  %v475 = vld [vmem:[%s3 + $0x80] sm:$0xff]
  %v476 = vld [vmem:[%s3 + $0x88] sm:$0xff]
  %v477 = vld [vmem:[%s3 + $0x90] sm:$0xff]
  %v478 = vld [vmem:[%s3 + $0x98] sm:$0xff]
  %v479 = vld [vmem:[%s3 + $0xa0] sm:$0xff]
  %v480 = vld [vmem:[%s3 + $0xa8] sm:$0xff]
  %v481 = vld [vmem:[%s3 + $0xb0] sm:$0xff]
  %v482 = vld [vmem:[%s3 + $0xb8] sm:$0xff]
  %v483 = vld [vmem:[%s3 + $0xc0] sm:$0xff]
  %v484 = vld [vmem:[%s3 + $0xc8] sm:$0xff]
  %v485 = vld [vmem:[%s3 + $0xd0] sm:$0xff]
  %v486 = vld [vmem:[%s3 + $0xd8] sm:$0xff]
  %v487 = vld [vmem:[%s3 + $0xe0] sm:$0xff]
  %v488 = vld [vmem:[%s3 + $0xe8] sm:$0xff]
  %v489 = vld [vmem:[%s3 + $0xf0] sm:$0xff]
  %v490 = vld [vmem:[%s3 + $0xf8] sm:$0xff]
  %v491 = vld [vmem:[#allocation2] sm:$0xff]
  %v492 = vld [vmem:[#allocation3] sm:$0xff]
  %v493 = vld [vmem:[#allocation5] sm:$0xff]
  %v494 = vld [vmem:[#allocation5 + $0x8] sm:$0xff]
  %v495 = vld [vmem:[#allocation5 + $0x10] sm:$0xff]
  %v496 = vld [vmem:[#allocation5 + $0x18] sm:$0xff]
  %v497 = vpack.c.bf16 %v491, %v491
  %v530 = vunpack.c.l.b16 %v459
  %v531 = vunpack.c.h.b16 %v459
  %v532 = vunpack.c.l.b16 %v460
  %v533 = vunpack.c.h.b16 %v460
  %v534 = vunpack.c.l.b16 %v461
  %v535 = vunpack.c.h.b16 %v461
  %v536 = vunpack.c.l.b16 %v462
  %v537 = vunpack.c.h.b16 %v462
  %v538 = vunpack.c.l.b16 %v463
  %v539 = vunpack.c.h.b16 %v463
  %v540 = vunpack.c.l.b16 %v464
  %v541 = vunpack.c.h.b16 %v464
  %v542 = vunpack.c.l.b16 %v465
  %v543 = vunpack.c.h.b16 %v465
  %v544 = vunpack.c.l.b16 %v466
  %v545 = vunpack.c.h.b16 %v466
  %v546 = vunpack.c.l.b16 %v467
  %v547 = vunpack.c.h.b16 %v467
  %v548 = vunpack.c.l.b16 %v468
  %v549 = vunpack.c.h.b16 %v468
  %v550 = vunpack.c.l.b16 %v469
  %v551 = vunpack.c.h.b16 %v469
  %v552 = vunpack.c.l.b16 %v470
  %v553 = vunpack.c.h.b16 %v470
  %v554 = vunpack.c.l.b16 %v471
  %v555 = vunpack.c.h.b16 %v471
  %v556 = vunpack.c.l.b16 %v472
  %v557 = vunpack.c.h.b16 %v472
  %v558 = vunpack.c.l.b16 %v473
  %v559 = vunpack.c.h.b16 %v473
  %v560 = vunpack.c.l.b16 %v474
  %v561 = vunpack.c.h.b16 %v474
  %v562 = vunpack.c.l.b16 %v475
  %v563 = vunpack.c.h.b16 %v475
  %v564 = vunpack.c.l.b16 %v476
  %v565 = vunpack.c.h.b16 %v476
  %v566 = vunpack.c.l.b16 %v477
  %v567 = vunpack.c.h.b16 %v477
  %v568 = vunpack.c.l.b16 %v478
  %v569 = vunpack.c.h.b16 %v478
  %v570 = vunpack.c.l.b16 %v479
  %v571 = vunpack.c.h.b16 %v479
  %v572 = vunpack.c.l.b16 %v480
  %v573 = vunpack.c.h.b16 %v480
  %v574 = vunpack.c.l.b16 %v481
  %v575 = vunpack.c.h.b16 %v481
  %v576 = vunpack.c.l.b16 %v482
  %v577 = vunpack.c.h.b16 %v482
  %v578 = vunpack.c.l.b16 %v483
  %v579 = vunpack.c.h.b16 %v483
  %v580 = vunpack.c.l.b16 %v484
  %v581 = vunpack.c.h.b16 %v484
  %v582 = vunpack.c.l.b16 %v485
  %v583 = vunpack.c.h.b16 %v485
  %v584 = vunpack.c.l.b16 %v486
  %v585 = vunpack.c.h.b16 %v486
  %v586 = vunpack.c.l.b16 %v487
  %v587 = vunpack.c.h.b16 %v487
  %v588 = vunpack.c.l.b16 %v488
  %v589 = vunpack.c.h.b16 %v488
  %v590 = vunpack.c.l.b16 %v489
  %v591 = vunpack.c.h.b16 %v489
  %v592 = vunpack.c.l.b16 %v490
  %v593 = vunpack.c.h.b16 %v490
  %v594 = vpack.c.b16 %v534, %v530
  %v595 = vpack.c.b16 %v535, %v531
  %v596 = vpack.c.b16 %v536, %v532
  %v597 = vpack.c.b16 %v537, %v533
  %v598 = vpack.c.b16 %v542, %v538
  %v599 = vpack.c.b16 %v543, %v539
  %v600 = vpack.c.b16 %v544, %v540
  %v601 = vpack.c.b16 %v545, %v541
  %v602 = vpack.c.b16 %v550, %v546
  %v603 = vpack.c.b16 %v551, %v547
  %v604 = vpack.c.b16 %v552, %v548
  %v605 = vpack.c.b16 %v553, %v549
  %v606 = vpack.c.b16 %v558, %v554
  %v607 = vpack.c.b16 %v559, %v555
  %v608 = vpack.c.b16 %v560, %v556
  %v609 = vpack.c.b16 %v561, %v557
  %v610 = vpack.c.b16 %v566, %v562
  %v611 = vpack.c.b16 %v567, %v563
  %v612 = vpack.c.b16 %v568, %v564
  %v613 = vpack.c.b16 %v569, %v565
  %v614 = vpack.c.b16 %v574, %v570
  %v615 = vpack.c.b16 %v575, %v571
  %v616 = vpack.c.b16 %v576, %v572
  %v617 = vpack.c.b16 %v577, %v573
  %v618 = vpack.c.b16 %v582, %v578
  %v619 = vpack.c.b16 %v583, %v579
  %v620 = vpack.c.b16 %v584, %v580
  %v621 = vpack.c.b16 %v585, %v581
  %v622 = vpack.c.b16 %v590, %v586
  %v623 = vpack.c.b16 %v591, %v587
  %v624 = vpack.c.b16 %v592, %v588
  %v625 = vpack.c.b16 %v593, %v589
  %658 = vmatprep.subr.bf16.mxu0 %v595
  %659 = vmatpush1.bf16.msra.mxu0 %v594
  %660 = vmatprep.subr.bf16.mxu0 %v599
  %661 = vmatpush1.bf16.msra.mxu0 %v598
  %662 = vmatprep.subr.bf16.mxu0 %v603
  %663 = vmatpush1.bf16.msra.mxu0 %v602
  %664 = vmatprep.subr.bf16.mxu0 %v607
  %665 = vmatpush1.bf16.msra.mxu0 %v606
  %666 = vmatprep.subr.bf16.mxu0 %v611
  %667 = vmatpush1.bf16.msra.mxu0 %v610
  %668 = vmatprep.subr.bf16.mxu0 %v615
  %669 = vmatpush1.bf16.msra.mxu0 %v614
  %670 = vmatprep.subr.bf16.mxu0 %v619
  %671 = vmatpush1.bf16.msra.mxu0 %v618
  %672 = vmatprep.subr.bf16.mxu0 %v623
  %673 = vmatpush1.bf16.msra.mxu0 %v622
  %674 = vmatprep.subr.bf16.mxu0 0
  %675 = vmatpush1.bf16.msra.mxu0 0
  %676 = vmatprep.subr.bf16.mxu0 0
  %677 = vmatpush1.bf16.msra.mxu0 0
  %678 = vmatprep.subr.bf16.mxu0 0
  %679 = vmatpush1.bf16.msra.mxu0 0
  %680 = vmatprep.subr.bf16.mxu0 0
  %681 = vmatpush1.bf16.msra.mxu0 0
  %682 = vmatprep.subr.bf16.mxu0 0
  %683 = vmatpush1.bf16.msra.mxu0 0
  %684 = vmatprep.subr.bf16.mxu0 0
  %685 = vmatpush1.bf16.msra.mxu0 0
  %686 = vmatprep.subr.bf16.mxu0 0
  %687 = vmatpush1.bf16.msra.mxu0 0
  %688 = vmatprep.subr.bf16.mxu0 0
  %689 = vmatpush1.bf16.msra.mxu0 0
  %690 = vmatprep.mubr.bf16.mxu0 0
  %691 = vmatmul.mubr.bf16.gmra.mrb[0].mxu0 %v497
  %v692 = vpop.f32.mrb[0].mxu0
  %v693 = vadd.f32 0.0, %v692
  %v694 = vpop.f32.mrb[0].mxu0
  %v695 = vadd.f32 0.0, %v694
  %v696 = vpop.f32.mrb[0].mxu0
  %v697 = vpop.f32.mrb[0].mxu0
  %698 = vdwg.mxu0
  %699 = vmatprep.subr.bf16.mxu0 %v597
  %700 = vmatpush1.bf16.msra.mxu0 %v596
  %701 = vmatprep.subr.bf16.mxu0 %v601
  %702 = vmatpush1.bf16.msra.mxu0 %v600
  %703 = vmatprep.subr.bf16.mxu0 %v605
  %704 = vmatpush1.bf16.msra.mxu0 %v604
  %705 = vmatprep.subr.bf16.mxu0 %v609
  %706 = vmatpush1.bf16.msra.mxu0 %v608
  %707 = vmatprep.subr.bf16.mxu0 %v613
  %708 = vmatpush1.bf16.msra.mxu0 %v612
  %709 = vmatprep.subr.bf16.mxu0 %v617
  %710 = vmatpush1.bf16.msra.mxu0 %v616
  %711 = vmatprep.subr.bf16.mxu0 %v621
  %712 = vmatpush1.bf16.msra.mxu0 %v620
  %713 = vmatprep.subr.bf16.mxu0 %v625
  %714 = vmatpush1.bf16.msra.mxu0 %v624
  %715 = vmatprep.subr.bf16.mxu0 0
  %716 = vmatpush1.bf16.msra.mxu0 0
  %717 = vmatprep.subr.bf16.mxu0 0
  %718 = vmatpush1.bf16.msra.mxu0 0
  %719 = vmatprep.subr.bf16.mxu0 0
  %720 = vmatpush1.bf16.msra.mxu0 0
  %721 = vmatprep.subr.bf16.mxu0 0
  %722 = vmatpush1.bf16.msra.mxu0 0
  %723 = vmatprep.subr.bf16.mxu0 0
  %724 = vmatpush1.bf16.msra.mxu0 0
  %725 = vmatprep.subr.bf16.mxu0 0
  %726 = vmatpush1.bf16.msra.mxu0 0
  %727 = vmatprep.subr.bf16.mxu0 0
  %728 = vmatpush1.bf16.msra.mxu0 0
  %729 = vmatprep.subr.bf16.mxu0 0
  %730 = vmatpush1.bf16.msra.mxu0 0
  %731 = vmatprep.mubr.bf16.mxu0 0
  %732 = vmatmul.mubr.bf16.gmra.mrb[0].mxu0 %v497
  %v733 = vpop.f32.mrb[0].mxu0
  %v734 = vadd.f32 0.0, %v733
  %v735 = vpop.f32.mrb[0].mxu0
  %v736 = vadd.f32 0.0, %v735
  %v737 = vpop.f32.mrb[0].mxu0
  %v738 = vpop.f32.mrb[0].mxu0
  %739 = vdwg.mxu0
  %v740 = vadd.f32 %v493, %v693
  %v741 = vadd.f32 %v494, %v695
  %v742 = vadd.f32 %v495, %v734
  %v743 = vadd.f32 %v496, %v736
  %v744 = vmul.f32 %v740, 0.5
  %v745 = vtanh.pop %v744
  %v746 = vmul.f32 %v745, 0.5
  %v747 = vadd.f32 %v746, 0.5
  %v748 = vmul.f32 %v741, 0.5
  %v749 = vtanh.pop %v748
  %v750 = vmul.f32 %v749, 0.5
  %v751 = vadd.f32 %v750, 0.5
  %v752 = vtanh.pop %v742
  %v753 = vmul.f32 %v743, 0.5
  %v754 = vtanh.pop %v753
  %v755 = vmul.f32 %v754, 0.5
  %v756 = vadd.f32 %v755, 0.5
  %v757 = vmul.f32 %v751, %v492
  %v758 = vmul.f32 %v747, %v752
  %v759 = vadd.f32 %v757, %v758
  %v760 = vtanh.pop %v759
  %v761 = vmul.f32 %v756, %v760
  %762 = vst [vmem:[#allocation3] sm:$0xff] %v759
  %763 = vst [vmem:[#allocation2] sm:$0xff] %v761
  %v764 = vpack.c.bf16 %v761, %v761
  %765 = vst [vmem:[#allocation4] sm:$0xf] %v764
  %v766 = vld [vmem:[#allocation2] sm:$0xff]
  %v767 = vld [vmem:[#allocation3] sm:$0xff]
  %s768 = scalar_lea.vmem [#allocation5], 32
  %v769 = vld [vmem:[%s768] sm:$0xff]
  %v770 = vld [vmem:[%s768 + $0x8] sm:$0xff]
  %v771 = vld [vmem:[%s768 + $0x10] sm:$0xff]
  %v772 = vld [vmem:[%s768 + $0x18] sm:$0xff]
  %v773 = vpack.c.bf16 %v766, %v766
  %774 = vmatprep.subr.bf16.mxu0 %v595
  %775 = vmatpush1.bf16.msra.mxu0 %v594
  %776 = vmatprep.subr.bf16.mxu0 %v599
  %777 = vmatpush1.bf16.msra.mxu0 %v598
  %778 = vmatprep.subr.bf16.mxu0 %v603
  %779 = vmatpush1.bf16.msra.mxu0 %v602
  %780 = vmatprep.subr.bf16.mxu0 %v607
  %781 = vmatpush1.bf16.msra.mxu0 %v606
  %782 = vmatprep.subr.bf16.mxu0 %v611
  %783 = vmatpush1.bf16.msra.mxu0 %v610
  %784 = vmatprep.subr.bf16.mxu0 %v615
  %785 = vmatpush1.bf16.msra.mxu0 %v614
  %786 = vmatprep.subr.bf16.mxu0 %v619
  %787 = vmatpush1.bf16.msra.mxu0 %v618
  %788 = vmatprep.subr.bf16.mxu0 %v623
  %789 = vmatpush1.bf16.msra.mxu0 %v622
  %790 = vmatprep.subr.bf16.mxu0 0
  %791 = vmatpush1.bf16.msra.mxu0 0
  %792 = vmatprep.subr.bf16.mxu0 0
  %793 = vmatpush1.bf16.msra.mxu0 0
  %794 = vmatprep.subr.bf16.mxu0 0
  %795 = vmatpush1.bf16.msra.mxu0 0
  %796 = vmatprep.subr.bf16.mxu0 0
  %797 = vmatpush1.bf16.msra.mxu0 0
  %798 = vmatprep.subr.bf16.mxu0 0
  %799 = vmatpush1.bf16.msra.mxu0 0
  %800 = vmatprep.subr.bf16.mxu0 0
  %801 = vmatpush1.bf16.msra.mxu0 0
  %802 = vmatprep.subr.bf16.mxu0 0
  %803 = vmatpush1.bf16.msra.mxu0 0
  %804 = vmatprep.subr.bf16.mxu0 0
  %805 = vmatpush1.bf16.msra.mxu0 0
  %806 = vmatprep.mubr.bf16.mxu0 0
  %807 = vmatmul.mubr.bf16.gmra.mrb[0].mxu0 %v773
  %v808 = vpop.f32.mrb[0].mxu0
  %v809 = vadd.f32 0.0, %v808
  %v810 = vpop.f32.mrb[0].mxu0
  %v811 = vadd.f32 0.0, %v810
  %v812 = vpop.f32.mrb[0].mxu0
  %v813 = vpop.f32.mrb[0].mxu0
  %814 = vdwg.mxu0
  %815 = vmatprep.subr.bf16.mxu0 %v597
  %816 = vmatpush1.bf16.msra.mxu0 %v596
  %817 = vmatprep.subr.bf16.mxu0 %v601
  %818 = vmatpush1.bf16.msra.mxu0 %v600
  %819 = vmatprep.subr.bf16.mxu0 %v605
  %820 = vmatpush1.bf16.msra.mxu0 %v604
  %821 = vmatprep.subr.bf16.mxu0 %v609
  %822 = vmatpush1.bf16.msra.mxu0 %v608
  %823 = vmatprep.subr.bf16.mxu0 %v613
  %824 = vmatpush1.bf16.msra.mxu0 %v612
  %825 = vmatprep.subr.bf16.mxu0 %v617
  %826 = vmatpush1.bf16.msra.mxu0 %v616
  %827 = vmatprep.subr.bf16.mxu0 %v621
  %828 = vmatpush1.bf16.msra.mxu0 %v620
  %829 = vmatprep.subr.bf16.mxu0 %v625
  %830 = vmatpush1.bf16.msra.mxu0 %v624
  %831 = vmatprep.subr.bf16.mxu0 0
  %832 = vmatpush1.bf16.msra.mxu0 0
  %833 = vmatprep.subr.bf16.mxu0 0
  %834 = vmatpush1.bf16.msra.mxu0 0
  %835 = vmatprep.subr.bf16.mxu0 0
  %836 = vmatpush1.bf16.msra.mxu0 0
  %837 = vmatprep.subr.bf16.mxu0 0
  %838 = vmatpush1.bf16.msra.mxu0 0
  %839 = vmatprep.subr.bf16.mxu0 0
  %840 = vmatpush1.bf16.msra.mxu0 0
  %841 = vmatprep.subr.bf16.mxu0 0
  %842 = vmatpush1.bf16.msra.mxu0 0
  %843 = vmatprep.subr.bf16.mxu0 0
  %844 = vmatpush1.bf16.msra.mxu0 0
  %845 = vmatprep.subr.bf16.mxu0 0
  %846 = vmatpush1.bf16.msra.mxu0 0
  %847 = vmatprep.mubr.bf16.mxu0 0
  %848 = vmatmul.mubr.bf16.gmra.mrb[0].mxu0 %v773
  %v849 = vpop.f32.mrb[0].mxu0
  %v850 = vadd.f32 0.0, %v849
  %v851 = vpop.f32.mrb[0].mxu0
  %v852 = vadd.f32 0.0, %v851
  %v853 = vpop.f32.mrb[0].mxu0
  %v854 = vpop.f32.mrb[0].mxu0
  %855 = vdwg.mxu0
  %v856 = vadd.f32 %v769, %v809
  %v857 = vadd.f32 %v770, %v811
  %v858 = vadd.f32 %v771, %v850
  %v859 = vadd.f32 %v772, %v852
  %v860 = vmul.f32 %v856, 0.5
  %v861 = vtanh.pop %v860
  %v862 = vmul.f32 %v861, 0.5
  %v863 = vadd.f32 %v862, 0.5
  %v864 = vmul.f32 %v857, 0.5
  %v865 = vtanh.pop %v864
  %v866 = vmul.f32 %v865, 0.5
  %v867 = vadd.f32 %v866, 0.5
  %v868 = vtanh.pop %v858
  %v869 = vmul.f32 %v859, 0.5
  %v870 = vtanh.pop %v869
  %v871 = vmul.f32 %v870, 0.5
  %v872 = vadd.f32 %v871, 0.5
  %v873 = vmul.f32 %v867, %v767
  %v874 = vmul.f32 %v863, %v868
  %v875 = vadd.f32 %v873, %v874
  %v876 = vtanh.pop %v875
  %v877 = vmul.f32 %v872, %v876
  %878 = vst [vmem:[#allocation3] sm:$0xff] %v875
  %879 = vst [vmem:[#allocation2] sm:$0xff] %v877
  %v880 = vpack.c.bf16 %v877, %v877
  %s881 = scalar_lea.vmem [#allocation4], 4
  %882 = vst [vmem:[%s881] sm:$0xf] %v880
  %v883 = vld [vmem:[#allocation2] sm:$0xff]
  %v884 = vld [vmem:[#allocation3] sm:$0xff]
  %s885 = scalar_lea.vmem [#allocation5], 64
  %v886 = vld [vmem:[%s885] sm:$0xff]
  %v887 = vld [vmem:[%s885 + $0x8] sm:$0xff]
  %v888 = vld [vmem:[%s885 + $0x10] sm:$0xff]
  %v889 = vld [vmem:[%s885 + $0x18] sm:$0xff]
  %v890 = vpack.c.bf16 %v883, %v883
  %891 = vmatprep.subr.bf16.mxu0 %v595
  %892 = vmatpush1.bf16.msra.mxu0 %v594
  %893 = vmatprep.subr.bf16.mxu0 %v599
  %894 = vmatpush1.bf16.msra.mxu0 %v598
  %895 = vmatprep.subr.bf16.mxu0 %v603
  %896 = vmatpush1.bf16.msra.mxu0 %v602
  %897 = vmatprep.subr.bf16.mxu0 %v607
  %898 = vmatpush1.bf16.msra.mxu0 %v606
  %899 = vmatprep.subr.bf16.mxu0 %v611
  %900 = vmatpush1.bf16.msra.mxu0 %v610
  %901 = vmatprep.subr.bf16.mxu0 %v615
  %902 = vmatpush1.bf16.msra.mxu0 %v614
  %903 = vmatprep.subr.bf16.mxu0 %v619
  %904 = vmatpush1.bf16.msra.mxu0 %v618
  %905 = vmatprep.subr.bf16.mxu0 %v623
  %906 = vmatpush1.bf16.msra.mxu0 %v622
  %907 = vmatprep.subr.bf16.mxu0 0
  %908 = vmatpush1.bf16.msra.mxu0 0
  %909 = vmatprep.subr.bf16.mxu0 0
  %910 = vmatpush1.bf16.msra.mxu0 0
  %911 = vmatprep.subr.bf16.mxu0 0
  %912 = vmatpush1.bf16.msra.mxu0 0
  %913 = vmatprep.subr.bf16.mxu0 0
  %914 = vmatpush1.bf16.msra.mxu0 0
  %915 = vmatprep.subr.bf16.mxu0 0
  %916 = vmatpush1.bf16.msra.mxu0 0
  %917 = vmatprep.subr.bf16.mxu0 0
  %918 = vmatpush1.bf16.msra.mxu0 0
  %919 = vmatprep.subr.bf16.mxu0 0
  %920 = vmatpush1.bf16.msra.mxu0 0
  %921 = vmatprep.subr.bf16.mxu0 0
  %922 = vmatpush1.bf16.msra.mxu0 0
  %923 = vmatprep.mubr.bf16.mxu0 0
  %924 = vmatmul.mubr.bf16.gmra.mrb[0].mxu0 %v890
  %v925 = vpop.f32.mrb[0].mxu0
  %v926 = vadd.f32 0.0, %v925
  %v927 = vpop.f32.mrb[0].mxu0
  %v928 = vadd.f32 0.0, %v927
  %v929 = vpop.f32.mrb[0].mxu0
  %v930 = vpop.f32.mrb[0].mxu0
  %931 = vdwg.mxu0
  %932 = vmatprep.subr.bf16.mxu0 %v597
  %933 = vmatpush1.bf16.msra.mxu0 %v596
  %934 = vmatprep.subr.bf16.mxu0 %v601
  %935 = vmatpush1.bf16.msra.mxu0 %v600
  %936 = vmatprep.subr.bf16.mxu0 %v605
  %937 = vmatpush1.bf16.msra.mxu0 %v604
  %938 = vmatprep.subr.bf16.mxu0 %v609
  %939 = vmatpush1.bf16.msra.mxu0 %v608
  %940 = vmatprep.subr.bf16.mxu0 %v613
  %941 = vmatpush1.bf16.msra.mxu0 %v612
  %942 = vmatprep.subr.bf16.mxu0 %v617
  %943 = vmatpush1.bf16.msra.mxu0 %v616
  %944 = vmatprep.subr.bf16.mxu0 %v621
  %945 = vmatpush1.bf16.msra.mxu0 %v620
  %946 = vmatprep.subr.bf16.mxu0 %v625
  %947 = vmatpush1.bf16.msra.mxu0 %v624
  %948 = vmatprep.subr.bf16.mxu0 0
  %949 = vmatpush1.bf16.msra.mxu0 0
  %950 = vmatprep.subr.bf16.mxu0 0
  %951 = vmatpush1.bf16.msra.mxu0 0
  %952 = vmatprep.subr.bf16.mxu0 0
  %953 = vmatpush1.bf16.msra.mxu0 0
  %954 = vmatprep.subr.bf16.mxu0 0
  %955 = vmatpush1.bf16.msra.mxu0 0
  %956 = vmatprep.subr.bf16.mxu0 0
  %957 = vmatpush1.bf16.msra.mxu0 0
  %958 = vmatprep.subr.bf16.mxu0 0
  %959 = vmatpush1.bf16.msra.mxu0 0
  %960 = vmatprep.subr.bf16.mxu0 0
  %961 = vmatpush1.bf16.msra.mxu0 0
  %962 = vmatprep.subr.bf16.mxu0 0
  %963 = vmatpush1.bf16.msra.mxu0 0
  %964 = vmatprep.mubr.bf16.mxu0 0
  %965 = vmatmul.mubr.bf16.gmra.mrb[0].mxu0 %v890
  %v966 = vpop.f32.mrb[0].mxu0
  %v967 = vadd.f32 0.0, %v966
  %v968 = vpop.f32.mrb[0].mxu0
  %v969 = vadd.f32 0.0, %v968
  %v970 = vpop.f32.mrb[0].mxu0
  %v971 = vpop.f32.mrb[0].mxu0
  %972 = vdwg.mxu0
  %v973 = vadd.f32 %v886, %v926
  %v974 = vadd.f32 %v887, %v928
  %v975 = vadd.f32 %v888, %v967
  %v976 = vadd.f32 %v889, %v969
  %v977 = vmul.f32 %v973, 0.5
  %v978 = vtanh.pop %v977
  %v979 = vmul.f32 %v978, 0.5
  %v980 = vadd.f32 %v979, 0.5
  %v981 = vmul.f32 %v974, 0.5
  %v982 = vtanh.pop %v981
  %v983 = vmul.f32 %v982, 0.5
  %v984 = vadd.f32 %v983, 0.5
  %v985 = vtanh.pop %v975
  %v986 = vmul.f32 %v976, 0.5
  %v987 = vtanh.pop %v986
  %v988 = vmul.f32 %v987, 0.5
  %v989 = vadd.f32 %v988, 0.5
  %v990 = vmul.f32 %v984, %v884
  %v991 = vmul.f32 %v980, %v985
  %v992 = vadd.f32 %v990, %v991
  %v993 = vtanh.pop %v992
  %v994 = vmul.f32 %v989, %v993
  %995 = vst [vmem:[#allocation3] sm:$0xff] %v992
  %996 = vst [vmem:[#allocation2] sm:$0xff] %v994
  %v997 = vpack.c.bf16 %v994, %v994
  %s998 = scalar_lea.vmem [#allocation4], 8
  %999 = vst [vmem:[%s998] sm:$0xf] %v997
  %v1000 = vld [vmem:[#allocation2] sm:$0xff]
  %v1001 = vld [vmem:[#allocation3] sm:$0xff]
  %s1002 = scalar_lea.vmem [#allocation5], 96
  %v1003 = vld [vmem:[%s1002] sm:$0xff]
  %v1004 = vld [vmem:[%s1002 + $0x8] sm:$0xff]
  %v1005 = vld [vmem:[%s1002 + $0x10] sm:$0xff]
  %v1006 = vld [vmem:[%s1002 + $0x18] sm:$0xff]
  %v1007 = vpack.c.bf16 %v1000, %v1000
  %1008 = vmatprep.subr.bf16.mxu0 %v595
  %1009 = vmatpush1.bf16.msra.mxu0 %v594
  %1010 = vmatprep.subr.bf16.mxu0 %v599
  %1011 = vmatpush1.bf16.msra.mxu0 %v598
  %1012 = vmatprep.subr.bf16.mxu0 %v603
  %1013 = vmatpush1.bf16.msra.mxu0 %v602
  %1014 = vmatprep.subr.bf16.mxu0 %v607
  %1015 = vmatpush1.bf16.msra.mxu0 %v606
  %1016 = vmatprep.subr.bf16.mxu0 %v611
  %1017 = vmatpush1.bf16.msra.mxu0 %v610
  %1018 = vmatprep.subr.bf16.mxu0 %v615
  %1019 = vmatpush1.bf16.msra.mxu0 %v614
  %1020 = vmatprep.subr.bf16.mxu0 %v619
  %1021 = vmatpush1.bf16.msra.mxu0 %v618
  %1022 = vmatprep.subr.bf16.mxu0 %v623
  %1023 = vmatpush1.bf16.msra.mxu0 %v622
  %1024 = vmatprep.subr.bf16.mxu0 0
  %1025 = vmatpush1.bf16.msra.mxu0 0
  %1026 = vmatprep.subr.bf16.mxu0 0
  %1027 = vmatpush1.bf16.msra.mxu0 0
  %1028 = vmatprep.subr.bf16.mxu0 0
  %1029 = vmatpush1.bf16.msra.mxu0 0
  %1030 = vmatprep.subr.bf16.mxu0 0
  %1031 = vmatpush1.bf16.msra.mxu0 0
  %1032 = vmatprep.subr.bf16.mxu0 0
  %1033 = vmatpush1.bf16.msra.mxu0 0
  %1034 = vmatprep.subr.bf16.mxu0 0
  %1035 = vmatpush1.bf16.msra.mxu0 0
  %1036 = vmatprep.subr.bf16.mxu0 0
  %1037 = vmatpush1.bf16.msra.mxu0 0
  %1038 = vmatprep.subr.bf16.mxu0 0
  %1039 = vmatpush1.bf16.msra.mxu0 0
  %1040 = vmatprep.mubr.bf16.mxu0 0
  %1041 = vmatmul.mubr.bf16.gmra.mrb[0].mxu0 %v1007
  %v1042 = vpop.f32.mrb[0].mxu0
  %v1043 = vadd.f32 0.0, %v1042
  %v1044 = vpop.f32.mrb[0].mxu0
  %v1045 = vadd.f32 0.0, %v1044
  %v1046 = vpop.f32.mrb[0].mxu0
  %v1047 = vpop.f32.mrb[0].mxu0
  %1048 = vdwg.mxu0
  %1049 = vmatprep.subr.bf16.mxu0 %v597
  %1050 = vmatpush1.bf16.msra.mxu0 %v596
  %1051 = vmatprep.subr.bf16.mxu0 %v601
  %1052 = vmatpush1.bf16.msra.mxu0 %v600
  %1053 = vmatprep.subr.bf16.mxu0 %v605
  %1054 = vmatpush1.bf16.msra.mxu0 %v604
  %1055 = vmatprep.subr.bf16.mxu0 %v609
  %1056 = vmatpush1.bf16.msra.mxu0 %v608
  %1057 = vmatprep.subr.bf16.mxu0 %v613
  %1058 = vmatpush1.bf16.msra.mxu0 %v612
  %1059 = vmatprep.subr.bf16.mxu0 %v617
  %1060 = vmatpush1.bf16.msra.mxu0 %v616
  %1061 = vmatprep.subr.bf16.mxu0 %v621
  %1062 = vmatpush1.bf16.msra.mxu0 %v620
  %1063 = vmatprep.subr.bf16.mxu0 %v625
  %1064 = vmatpush1.bf16.msra.mxu0 %v624
  %1065 = vmatprep.subr.bf16.mxu0 0
  %1066 = vmatpush1.bf16.msra.mxu0 0
  %1067 = vmatprep.subr.bf16.mxu0 0
  %1068 = vmatpush1.bf16.msra.mxu0 0
  %1069 = vmatprep.subr.bf16.mxu0 0
  %1070 = vmatpush1.bf16.msra.mxu0 0
  %1071 = vmatprep.subr.bf16.mxu0 0
  %1072 = vmatpush1.bf16.msra.mxu0 0
  %1073 = vmatprep.subr.bf16.mxu0 0
  %1074 = vmatpush1.bf16.msra.mxu0 0
  %1075 = vmatprep.subr.bf16.mxu0 0
  %1076 = vmatpush1.bf16.msra.mxu0 0
  %1077 = vmatprep.subr.bf16.mxu0 0
  %1078 = vmatpush1.bf16.msra.mxu0 0
  %1079 = vmatprep.subr.bf16.mxu0 0
  %1080 = vmatpush1.bf16.msra.mxu0 0
  %1081 = vmatprep.mubr.bf16.mxu0 0
  %1082 = vmatmul.mubr.bf16.gmra.mrb[0].mxu0 %v1007
  %v1083 = vpop.f32.mrb[0].mxu0
  %v1084 = vadd.f32 0.0, %v1083
  %v1085 = vpop.f32.mrb[0].mxu0
  %v1086 = vadd.f32 0.0, %v1085
  %v1087 = vpop.f32.mrb[0].mxu0
  %v1088 = vpop.f32.mrb[0].mxu0
  %1089 = vdwg.mxu0
  %v1090 = vadd.f32 %v1003, %v1043
  %v1091 = vadd.f32 %v1004, %v1045
  %v1092 = vadd.f32 %v1005, %v1084
  %v1093 = vadd.f32 %v1006, %v1086
  %v1094 = vmul.f32 %v1090, 0.5
  %v1095 = vtanh.pop %v1094
  %v1096 = vmul.f32 %v1095, 0.5
  %v1097 = vadd.f32 %v1096, 0.5
  %v1098 = vmul.f32 %v1091, 0.5
  %v1099 = vtanh.pop %v1098
  %v1100 = vmul.f32 %v1099, 0.5
  %v1101 = vadd.f32 %v1100, 0.5
  %v1102 = vtanh.pop %v1092
  %v1103 = vmul.f32 %v1093, 0.5
  %v1104 = vtanh.pop %v1103
  %v1105 = vmul.f32 %v1104, 0.5
  %v1106 = vadd.f32 %v1105, 0.5
  %v1107 = vmul.f32 %v1101, %v1001
  %v1108 = vmul.f32 %v1097, %v1102
  %v1109 = vadd.f32 %v1107, %v1108
  %v1110 = vtanh.pop %v1109
  %v1111 = vmul.f32 %v1106, %v1110
  %1112 = vst [vmem:[#allocation3] sm:$0xff] %v1109
  %1113 = vst [vmem:[#allocation2] sm:$0xff] %v1111
  %v1114 = vpack.c.bf16 %v1111, %v1111
  %s1115 = scalar_lea.vmem [#allocation4], 12
  %1116 = vst [vmem:[%s1115] sm:$0xf] %v1114
  %v1117 = vld [vmem:[#allocation2] sm:$0xff]
  %v1118 = vld [vmem:[#allocation3] sm:$0xff]
  %s1119 = scalar_lea.vmem [#allocation5], 128
  %v1120 = vld [vmem:[%s1119] sm:$0xff]
  %v1121 = vld [vmem:[%s1119 + $0x8] sm:$0xff]
  %v1122 = vld [vmem:[%s1119 + $0x10] sm:$0xff]
  %v1123 = vld [vmem:[%s1119 + $0x18] sm:$0xff]
  %v1124 = vpack.c.bf16 %v1117, %v1117
  %1125 = vmatprep.subr.bf16.mxu0 %v595
  %1126 = vmatpush1.bf16.msra.mxu0 %v594
  %1127 = vmatprep.subr.bf16.mxu0 %v599
  %1128 = vmatpush1.bf16.msra.mxu0 %v598
  %1129 = vmatprep.subr.bf16.mxu0 %v603
  %1130 = vmatpush1.bf16.msra.mxu0 %v602
  %1131 = vmatprep.subr.bf16.mxu0 %v607
  %1132 = vmatpush1.bf16.msra.mxu0 %v606
  %1133 = vmatprep.subr.bf16.mxu0 %v611
  %1134 = vmatpush1.bf16.msra.mxu0 %v610
  %1135 = vmatprep.subr.bf16.mxu0 %v615
  %1136 = vmatpush1.bf16.msra.mxu0 %v614
  %1137 = vmatprep.subr.bf16.mxu0 %v619
  %1138 = vmatpush1.bf16.msra.mxu0 %v618
  %1139 = vmatprep.subr.bf16.mxu0 %v623
  %1140 = vmatpush1.bf16.msra.mxu0 %v622
  %1141 = vmatprep.subr.bf16.mxu0 0
  %1142 = vmatpush1.bf16.msra.mxu0 0
  %1143 = vmatprep.subr.bf16.mxu0 0
  %1144 = vmatpush1.bf16.msra.mxu0 0
  %1145 = vmatprep.subr.bf16.mxu0 0
  %1146 = vmatpush1.bf16.msra.mxu0 0
  %1147 = vmatprep.subr.bf16.mxu0 0
  %1148 = vmatpush1.bf16.msra.mxu0 0
  %1149 = vmatprep.subr.bf16.mxu0 0
  %1150 = vmatpush1.bf16.msra.mxu0 0
  %1151 = vmatprep.subr.bf16.mxu0 0
  %1152 = vmatpush1.bf16.msra.mxu0 0
  %1153 = vmatprep.subr.bf16.mxu0 0
  %1154 = vmatpush1.bf16.msra.mxu0 0
  %1155 = vmatprep.subr.bf16.mxu0 0
  %1156 = vmatpush1.bf16.msra.mxu0 0
  %1157 = vmatprep.mubr.bf16.mxu0 0
  %1158 = vmatmul.mubr.bf16.gmra.mrb[0].mxu0 %v1124
  %v1159 = vpop.f32.mrb[0].mxu0
  %v1160 = vadd.f32 0.0, %v1159
  %v1161 = vpop.f32.mrb[0].mxu0
  %v1162 = vadd.f32 0.0, %v1161
  %v1163 = vpop.f32.mrb[0].mxu0
  %v1164 = vpop.f32.mrb[0].mxu0
  %1165 = vdwg.mxu0
  %1166 = vmatprep.subr.bf16.mxu0 %v597
  %1167 = vmatpush1.bf16.msra.mxu0 %v596
  %1168 = vmatprep.subr.bf16.mxu0 %v601
  %1169 = vmatpush1.bf16.msra.mxu0 %v600
  %1170 = vmatprep.subr.bf16.mxu0 %v605
  %1171 = vmatpush1.bf16.msra.mxu0 %v604
  %1172 = vmatprep.subr.bf16.mxu0 %v609
  %1173 = vmatpush1.bf16.msra.mxu0 %v608
  %1174 = vmatprep.subr.bf16.mxu0 %v613
  %1175 = vmatpush1.bf16.msra.mxu0 %v612
  %1176 = vmatprep.subr.bf16.mxu0 %v617
  %1177 = vmatpush1.bf16.msra.mxu0 %v616
  %1178 = vmatprep.subr.bf16.mxu0 %v621
  %1179 = vmatpush1.bf16.msra.mxu0 %v620
  %1180 = vmatprep.subr.bf16.mxu0 %v625
  %1181 = vmatpush1.bf16.msra.mxu0 %v624
  %1182 = vmatprep.subr.bf16.mxu0 0
  %1183 = vmatpush1.bf16.msra.mxu0 0
  %1184 = vmatprep.subr.bf16.mxu0 0
  %1185 = vmatpush1.bf16.msra.mxu0 0
  %1186 = vmatprep.subr.bf16.mxu0 0
  %1187 = vmatpush1.bf16.msra.mxu0 0
  %1188 = vmatprep.subr.bf16.mxu0 0
  %1189 = vmatpush1.bf16.msra.mxu0 0
  %1190 = vmatprep.subr.bf16.mxu0 0
  %1191 = vmatpush1.bf16.msra.mxu0 0
  %1192 = vmatprep.subr.bf16.mxu0 0
  %1193 = vmatpush1.bf16.msra.mxu0 0
  %1194 = vmatprep.subr.bf16.mxu0 0
  %1195 = vmatpush1.bf16.msra.mxu0 0
  %1196 = vmatprep.subr.bf16.mxu0 0
  %1197 = vmatpush1.bf16.msra.mxu0 0
  %1198 = vmatprep.mubr.bf16.mxu0 0
  %1199 = vmatmul.mubr.bf16.gmra.mrb[0].mxu0 %v1124
  %v1200 = vpop.f32.mrb[0].mxu0
  %v1201 = vadd.f32 0.0, %v1200
  %v1202 = vpop.f32.mrb[0].mxu0
  %v1203 = vadd.f32 0.0, %v1202
  %v1204 = vpop.f32.mrb[0].mxu0
  %v1205 = vpop.f32.mrb[0].mxu0
  %1206 = vdwg.mxu0
  %v1207 = vadd.f32 %v1120, %v1160
  %v1208 = vadd.f32 %v1121, %v1162
  %v1209 = vadd.f32 %v1122, %v1201
  %v1210 = vadd.f32 %v1123, %v1203
  %v1211 = vmul.f32 %v1207, 0.5
  %v1212 = vtanh.pop %v1211
  %v1213 = vmul.f32 %v1212, 0.5
  %v1214 = vadd.f32 %v1213, 0.5
  %v1215 = vmul.f32 %v1208, 0.5
  %v1216 = vtanh.pop %v1215
  %v1217 = vmul.f32 %v1216, 0.5
  %v1218 = vadd.f32 %v1217, 0.5
  %v1219 = vtanh.pop %v1209
  %v1220 = vmul.f32 %v1210, 0.5
  %v1221 = vtanh.pop %v1220
  %v1222 = vmul.f32 %v1221, 0.5
  %v1223 = vadd.f32 %v1222, 0.5
  %v1224 = vmul.f32 %v1218, %v1118
  %v1225 = vmul.f32 %v1214, %v1219
  %v1226 = vadd.f32 %v1224, %v1225
  %v1227 = vtanh.pop %v1226
  %v1228 = vmul.f32 %v1223, %v1227
  %1229 = vst [vmem:[#allocation3] sm:$0xff] %v1226
  %1230 = vst [vmem:[#allocation2] sm:$0xff] %v1228
  %v1231 = vpack.c.bf16 %v1228, %v1228
  %s1232 = scalar_lea.vmem [#allocation4], 16
  %1233 = vst [vmem:[%s1232] sm:$0xf] %v1231
  %v1234 = vld [vmem:[#allocation2] sm:$0xff]
  %v1235 = vld [vmem:[#allocation3] sm:$0xff]
  %s1236 = scalar_lea.vmem [#allocation5], 160
  %v1237 = vld [vmem:[%s1236] sm:$0xff]
  %v1238 = vld [vmem:[%s1236 + $0x8] sm:$0xff]
  %v1239 = vld [vmem:[%s1236 + $0x10] sm:$0xff]
  %v1240 = vld [vmem:[%s1236 + $0x18] sm:$0xff]
  %v1241 = vpack.c.bf16 %v1234, %v1234
  %1242 = vmatprep.subr.bf16.mxu0 %v595
  %1243 = vmatpush1.bf16.msra.mxu0 %v594
  %1244 = vmatprep.subr.bf16.mxu0 %v599
  %1245 = vmatpush1.bf16.msra.mxu0 %v598
  %1246 = vmatprep.subr.bf16.mxu0 %v603
  %1247 = vmatpush1.bf16.msra.mxu0 %v602
  %1248 = vmatprep.subr.bf16.mxu0 %v607
  %1249 = vmatpush1.bf16.msra.mxu0 %v606
  %1250 = vmatprep.subr.bf16.mxu0 %v611
  %1251 = vmatpush1.bf16.msra.mxu0 %v610
  %1252 = vmatprep.subr.bf16.mxu0 %v615
  %1253 = vmatpush1.bf16.msra.mxu0 %v614
  %1254 = vmatprep.subr.bf16.mxu0 %v619
  %1255 = vmatpush1.bf16.msra.mxu0 %v618
  %1256 = vmatprep.subr.bf16.mxu0 %v623
  %1257 = vmatpush1.bf16.msra.mxu0 %v622
  %1258 = vmatprep.subr.bf16.mxu0 0
  %1259 = vmatpush1.bf16.msra.mxu0 0
  %1260 = vmatprep.subr.bf16.mxu0 0
  %1261 = vmatpush1.bf16.msra.mxu0 0
  %1262 = vmatprep.subr.bf16.mxu0 0
  %1263 = vmatpush1.bf16.msra.mxu0 0
  %1264 = vmatprep.subr.bf16.mxu0 0
  %1265 = vmatpush1.bf16.msra.mxu0 0
  %1266 = vmatprep.subr.bf16.mxu0 0
  %1267 = vmatpush1.bf16.msra.mxu0 0
  %1268 = vmatprep.subr.bf16.mxu0 0
  %1269 = vmatpush1.bf16.msra.mxu0 0
  %1270 = vmatprep.subr.bf16.mxu0 0
  %1271 = vmatpush1.bf16.msra.mxu0 0
  %1272 = vmatprep.subr.bf16.mxu0 0
  %1273 = vmatpush1.bf16.msra.mxu0 0
  %1274 = vmatprep.mubr.bf16.mxu0 0
  %1275 = vmatmul.mubr.bf16.gmra.mrb[0].mxu0 %v1241
  %v1276 = vpop.f32.mrb[0].mxu0
  %v1277 = vadd.f32 0.0, %v1276
  %v1278 = vpop.f32.mrb[0].mxu0
  %v1279 = vadd.f32 0.0, %v1278
  %v1280 = vpop.f32.mrb[0].mxu0
  %v1281 = vpop.f32.mrb[0].mxu0
  %1282 = vdwg.mxu0
  %1283 = vmatprep.subr.bf16.mxu0 %v597
  %1284 = vmatpush1.bf16.msra.mxu0 %v596
  %1285 = vmatprep.subr.bf16.mxu0 %v601
  %1286 = vmatpush1.bf16.msra.mxu0 %v600
  %1287 = vmatprep.subr.bf16.mxu0 %v605
  %1288 = vmatpush1.bf16.msra.mxu0 %v604
  %1289 = vmatprep.subr.bf16.mxu0 %v609
  %1290 = vmatpush1.bf16.msra.mxu0 %v608
  %1291 = vmatprep.subr.bf16.mxu0 %v613
  %1292 = vmatpush1.bf16.msra.mxu0 %v612
  %1293 = vmatprep.subr.bf16.mxu0 %v617
  %1294 = vmatpush1.bf16.msra.mxu0 %v616
  %1295 = vmatprep.subr.bf16.mxu0 %v621
  %1296 = vmatpush1.bf16.msra.mxu0 %v620
  %1297 = vmatprep.subr.bf16.mxu0 %v625
  %1298 = vmatpush1.bf16.msra.mxu0 %v624
  %1299 = vmatprep.subr.bf16.mxu0 0
  %1300 = vmatpush1.bf16.msra.mxu0 0
  %1301 = vmatprep.subr.bf16.mxu0 0
  %1302 = vmatpush1.bf16.msra.mxu0 0
  %1303 = vmatprep.subr.bf16.mxu0 0
  %1304 = vmatpush1.bf16.msra.mxu0 0
  %1305 = vmatprep.subr.bf16.mxu0 0
  %1306 = vmatpush1.bf16.msra.mxu0 0
  %1307 = vmatprep.subr.bf16.mxu0 0
  %1308 = vmatpush1.bf16.msra.mxu0 0
  %1309 = vmatprep.subr.bf16.mxu0 0
  %1310 = vmatpush1.bf16.msra.mxu0 0
  %1311 = vmatprep.subr.bf16.mxu0 0
  %1312 = vmatpush1.bf16.msra.mxu0 0
  %1313 = vmatprep.subr.bf16.mxu0 0
  %1314 = vmatpush1.bf16.msra.mxu0 0
  %1315 = vmatprep.mubr.bf16.mxu0 0
  %1316 = vmatmul.mubr.bf16.gmra.mrb[0].mxu0 %v1241
  %v1317 = vpop.f32.mrb[0].mxu0
  %v1318 = vadd.f32 0.0, %v1317
  %v1319 = vpop.f32.mrb[0].mxu0
  %v1320 = vadd.f32 0.0, %v1319
  %v1321 = vpop.f32.mrb[0].mxu0
  %v1322 = vpop.f32.mrb[0].mxu0
  %1323 = vdwg.mxu0
  %v1324 = vadd.f32 %v1237, %v1277
  %v1325 = vadd.f32 %v1238, %v1279
  %v1326 = vadd.f32 %v1239, %v1318
  %v1327 = vadd.f32 %v1240, %v1320
  %v1328 = vmul.f32 %v1324, 0.5
  %v1329 = vtanh.pop %v1328
  %v1330 = vmul.f32 %v1329, 0.5
  %v1331 = vadd.f32 %v1330, 0.5
  %v1332 = vmul.f32 %v1325, 0.5
  %v1333 = vtanh.pop %v1332
  %v1334 = vmul.f32 %v1333, 0.5
  %v1335 = vadd.f32 %v1334, 0.5
  %v1336 = vtanh.pop %v1326
  %v1337 = vmul.f32 %v1327, 0.5
  %v1338 = vtanh.pop %v1337
  %v1339 = vmul.f32 %v1338, 0.5
  %v1340 = vadd.f32 %v1339, 0.5
  %v1341 = vmul.f32 %v1335, %v1235
  %v1342 = vmul.f32 %v1331, %v1336
  %v1343 = vadd.f32 %v1341, %v1342
  %v1344 = vtanh.pop %v1343
  %v1345 = vmul.f32 %v1340, %v1344
  %1346 = vst [vmem:[#allocation3] sm:$0xff] %v1343
  %1347 = vst [vmem:[#allocation2] sm:$0xff] %v1345
  %v1348 = vpack.c.bf16 %v1345, %v1345
  %s1349 = scalar_lea.vmem [#allocation4], 20
  %1350 = vst [vmem:[%s1349] sm:$0xf] %v1348
  %v1351 = vld [vmem:[#allocation2] sm:$0xff]
  %v1352 = vld [vmem:[#allocation3] sm:$0xff]
  %s1353 = scalar_lea.vmem [#allocation5], 192
  %v1354 = vld [vmem:[%s1353] sm:$0xff]
  %v1355 = vld [vmem:[%s1353 + $0x8] sm:$0xff]
  %v1356 = vld [vmem:[%s1353 + $0x10] sm:$0xff]
  %v1357 = vld [vmem:[%s1353 + $0x18] sm:$0xff]
  %v1358 = vpack.c.bf16 %v1351, %v1351
  %1359 = vmatprep.subr.bf16.mxu0 %v595
  %1360 = vmatpush1.bf16.msra.mxu0 %v594
  %1361 = vmatprep.subr.bf16.mxu0 %v599
  %1362 = vmatpush1.bf16.msra.mxu0 %v598
  %1363 = vmatprep.subr.bf16.mxu0 %v603
  %1364 = vmatpush1.bf16.msra.mxu0 %v602
  %1365 = vmatprep.subr.bf16.mxu0 %v607
  %1366 = vmatpush1.bf16.msra.mxu0 %v606
  %1367 = vmatprep.subr.bf16.mxu0 %v611
  %1368 = vmatpush1.bf16.msra.mxu0 %v610
  %1369 = vmatprep.subr.bf16.mxu0 %v615
  %1370 = vmatpush1.bf16.msra.mxu0 %v614
  %1371 = vmatprep.subr.bf16.mxu0 %v619
  %1372 = vmatpush1.bf16.msra.mxu0 %v618
  %1373 = vmatprep.subr.bf16.mxu0 %v623
  %1374 = vmatpush1.bf16.msra.mxu0 %v622
  %1375 = vmatprep.subr.bf16.mxu0 0
  %1376 = vmatpush1.bf16.msra.mxu0 0
  %1377 = vmatprep.subr.bf16.mxu0 0
  %1378 = vmatpush1.bf16.msra.mxu0 0
  %1379 = vmatprep.subr.bf16.mxu0 0
  %1380 = vmatpush1.bf16.msra.mxu0 0
  %1381 = vmatprep.subr.bf16.mxu0 0
  %1382 = vmatpush1.bf16.msra.mxu0 0
  %1383 = vmatprep.subr.bf16.mxu0 0
  %1384 = vmatpush1.bf16.msra.mxu0 0
  %1385 = vmatprep.subr.bf16.mxu0 0
  %1386 = vmatpush1.bf16.msra.mxu0 0
  %1387 = vmatprep.subr.bf16.mxu0 0
  %1388 = vmatpush1.bf16.msra.mxu0 0
  %1389 = vmatprep.subr.bf16.mxu0 0
  %1390 = vmatpush1.bf16.msra.mxu0 0
  %1391 = vmatprep.mubr.bf16.mxu0 0
  %1392 = vmatmul.mubr.bf16.gmra.mrb[0].mxu0 %v1358
  %v1393 = vpop.f32.mrb[0].mxu0
  %v1394 = vadd.f32 0.0, %v1393
  %v1395 = vpop.f32.mrb[0].mxu0
  %v1396 = vadd.f32 0.0, %v1395
  %v1397 = vpop.f32.mrb[0].mxu0
  %v1398 = vpop.f32.mrb[0].mxu0
  %1399 = vdwg.mxu0
  %1400 = vmatprep.subr.bf16.mxu0 %v597
  %1401 = vmatpush1.bf16.msra.mxu0 %v596
  %1402 = vmatprep.subr.bf16.mxu0 %v601
  %1403 = vmatpush1.bf16.msra.mxu0 %v600
  %1404 = vmatprep.subr.bf16.mxu0 %v605
  %1405 = vmatpush1.bf16.msra.mxu0 %v604
  %1406 = vmatprep.subr.bf16.mxu0 %v609
  %1407 = vmatpush1.bf16.msra.mxu0 %v608
  %1408 = vmatprep.subr.bf16.mxu0 %v613
  %1409 = vmatpush1.bf16.msra.mxu0 %v612
  %1410 = vmatprep.subr.bf16.mxu0 %v617
  %1411 = vmatpush1.bf16.msra.mxu0 %v616
  %1412 = vmatprep.subr.bf16.mxu0 %v621
  %1413 = vmatpush1.bf16.msra.mxu0 %v620
  %1414 = vmatprep.subr.bf16.mxu0 %v625
  %1415 = vmatpush1.bf16.msra.mxu0 %v624
  %1416 = vmatprep.subr.bf16.mxu0 0
  %1417 = vmatpush1.bf16.msra.mxu0 0
  %1418 = vmatprep.subr.bf16.mxu0 0
  %1419 = vmatpush1.bf16.msra.mxu0 0
  %1420 = vmatprep.subr.bf16.mxu0 0
  %1421 = vmatpush1.bf16.msra.mxu0 0
  %1422 = vmatprep.subr.bf16.mxu0 0
  %1423 = vmatpush1.bf16.msra.mxu0 0
  %1424 = vmatprep.subr.bf16.mxu0 0
  %1425 = vmatpush1.bf16.msra.mxu0 0
  %1426 = vmatprep.subr.bf16.mxu0 0
  %1427 = vmatpush1.bf16.msra.mxu0 0
  %1428 = vmatprep.subr.bf16.mxu0 0
  %1429 = vmatpush1.bf16.msra.mxu0 0
  %1430 = vmatprep.subr.bf16.mxu0 0
  %1431 = vmatpush1.bf16.msra.mxu0 0
  %1432 = vmatprep.mubr.bf16.mxu0 0
  %1433 = vmatmul.mubr.bf16.gmra.mrb[0].mxu0 %v1358
  %v1434 = vpop.f32.mrb[0].mxu0
  %v1435 = vadd.f32 0.0, %v1434
  %v1436 = vpop.f32.mrb[0].mxu0
  %v1437 = vadd.f32 0.0, %v1436
  %v1438 = vpop.f32.mrb[0].mxu0
  %v1439 = vpop.f32.mrb[0].mxu0
  %1440 = vdwg.mxu0
  %v1441 = vadd.f32 %v1354, %v1394
  %v1442 = vadd.f32 %v1355, %v1396
  %v1443 = vadd.f32 %v1356, %v1435
  %v1444 = vadd.f32 %v1357, %v1437
  %v1445 = vmul.f32 %v1441, 0.5
  %v1446 = vtanh.pop %v1445
  %v1447 = vmul.f32 %v1446, 0.5
  %v1448 = vadd.f32 %v1447, 0.5
  %v1449 = vmul.f32 %v1442, 0.5
  %v1450 = vtanh.pop %v1449
  %v1451 = vmul.f32 %v1450, 0.5
  %v1452 = vadd.f32 %v1451, 0.5
  %v1453 = vtanh.pop %v1443
  %v1454 = vmul.f32 %v1444, 0.5
  %v1455 = vtanh.pop %v1454
  %v1456 = vmul.f32 %v1455, 0.5
  %v1457 = vadd.f32 %v1456, 0.5
  %v1458 = vmul.f32 %v1452, %v1352
  %v1459 = vmul.f32 %v1448, %v1453
  %v1460 = vadd.f32 %v1458, %v1459
  %v1461 = vtanh.pop %v1460
  %v1462 = vmul.f32 %v1457, %v1461
  %1463 = vst [vmem:[#allocation3] sm:$0xff] %v1460
  %1464 = vst [vmem:[#allocation2] sm:$0xff] %v1462
  %v1465 = vpack.c.bf16 %v1462, %v1462
  %s1466 = scalar_lea.vmem [#allocation4], 24
  %1467 = vst [vmem:[%s1466] sm:$0xf] %v1465
  %v1468 = vld [vmem:[#allocation2] sm:$0xff]
  %v1469 = vld [vmem:[#allocation3] sm:$0xff]
  %s1470 = scalar_lea.vmem [#allocation5], 224
  %v1471 = vld [vmem:[%s1470] sm:$0xff]
  %v1472 = vld [vmem:[%s1470 + $0x8] sm:$0xff]
  %v1473 = vld [vmem:[%s1470 + $0x10] sm:$0xff]
  %v1474 = vld [vmem:[%s1470 + $0x18] sm:$0xff]
  %v1475 = vpack.c.bf16 %v1468, %v1468
  %1476 = vmatprep.subr.bf16.mxu0 %v595
  %1477 = vmatpush1.bf16.msra.mxu0 %v594
  %1478 = vmatprep.subr.bf16.mxu0 %v599
  %1479 = vmatpush1.bf16.msra.mxu0 %v598
  %1480 = vmatprep.subr.bf16.mxu0 %v603
  %1481 = vmatpush1.bf16.msra.mxu0 %v602
  %1482 = vmatprep.subr.bf16.mxu0 %v607
  %1483 = vmatpush1.bf16.msra.mxu0 %v606
  %1484 = vmatprep.subr.bf16.mxu0 %v611
  %1485 = vmatpush1.bf16.msra.mxu0 %v610
  %1486 = vmatprep.subr.bf16.mxu0 %v615
  %1487 = vmatpush1.bf16.msra.mxu0 %v614
  %1488 = vmatprep.subr.bf16.mxu0 %v619
  %1489 = vmatpush1.bf16.msra.mxu0 %v618
  %1490 = vmatprep.subr.bf16.mxu0 %v623
  %1491 = vmatpush1.bf16.msra.mxu0 %v622
  %1492 = vmatprep.subr.bf16.mxu0 0
  %1493 = vmatpush1.bf16.msra.mxu0 0
  %1494 = vmatprep.subr.bf16.mxu0 0
  %1495 = vmatpush1.bf16.msra.mxu0 0
  %1496 = vmatprep.subr.bf16.mxu0 0
  %1497 = vmatpush1.bf16.msra.mxu0 0
  %1498 = vmatprep.subr.bf16.mxu0 0
  %1499 = vmatpush1.bf16.msra.mxu0 0
  %1500 = vmatprep.subr.bf16.mxu0 0
  %1501 = vmatpush1.bf16.msra.mxu0 0
  %1502 = vmatprep.subr.bf16.mxu0 0
  %1503 = vmatpush1.bf16.msra.mxu0 0
  %1504 = vmatprep.subr.bf16.mxu0 0
  %1505 = vmatpush1.bf16.msra.mxu0 0
  %1506 = vmatprep.subr.bf16.mxu0 0
  %1507 = vmatpush1.bf16.msra.mxu0 0
  %1508 = vmatprep.mubr.bf16.mxu0 0
  %1509 = vmatmul.mubr.bf16.gmra.mrb[0].mxu0 %v1475
  %v1510 = vpop.f32.mrb[0].mxu0
  %v1511 = vadd.f32 0.0, %v1510
  %v1512 = vpop.f32.mrb[0].mxu0
  %v1513 = vadd.f32 0.0, %v1512
  %v1514 = vpop.f32.mrb[0].mxu0
  %v1515 = vpop.f32.mrb[0].mxu0
  %1516 = vdwg.mxu0
  %1517 = vmatprep.subr.bf16.mxu0 %v597
  %1518 = vmatpush1.bf16.msra.mxu0 %v596
  %1519 = vmatprep.subr.bf16.mxu0 %v601
  %1520 = vmatpush1.bf16.msra.mxu0 %v600
  %1521 = vmatprep.subr.bf16.mxu0 %v605
  %1522 = vmatpush1.bf16.msra.mxu0 %v604
  %1523 = vmatprep.subr.bf16.mxu0 %v609
  %1524 = vmatpush1.bf16.msra.mxu0 %v608
  %1525 = vmatprep.subr.bf16.mxu0 %v613
  %1526 = vmatpush1.bf16.msra.mxu0 %v612
  %1527 = vmatprep.subr.bf16.mxu0 %v617
  %1528 = vmatpush1.bf16.msra.mxu0 %v616
  %1529 = vmatprep.subr.bf16.mxu0 %v621
  %1530 = vmatpush1.bf16.msra.mxu0 %v620
  %1531 = vmatprep.subr.bf16.mxu0 %v625
  %1532 = vmatpush1.bf16.msra.mxu0 %v624
  %1533 = vmatprep.subr.bf16.mxu0 0
  %1534 = vmatpush1.bf16.msra.mxu0 0
  %1535 = vmatprep.subr.bf16.mxu0 0
  %1536 = vmatpush1.bf16.msra.mxu0 0
  %1537 = vmatprep.subr.bf16.mxu0 0
  %1538 = vmatpush1.bf16.msra.mxu0 0
  %1539 = vmatprep.subr.bf16.mxu0 0
  %1540 = vmatpush1.bf16.msra.mxu0 0
  %1541 = vmatprep.subr.bf16.mxu0 0
  %1542 = vmatpush1.bf16.msra.mxu0 0
  %1543 = vmatprep.subr.bf16.mxu0 0
  %1544 = vmatpush1.bf16.msra.mxu0 0
  %1545 = vmatprep.subr.bf16.mxu0 0
  %1546 = vmatpush1.bf16.msra.mxu0 0
  %1547 = vmatprep.subr.bf16.mxu0 0
  %1548 = vmatpush1.bf16.msra.mxu0 0
  %1549 = vmatprep.mubr.bf16.mxu0 0
  %1550 = vmatmul.mubr.bf16.gmra.mrb[0].mxu0 %v1475
  %v1551 = vpop.f32.mrb[0].mxu0
  %v1552 = vadd.f32 0.0, %v1551
  %v1553 = vpop.f32.mrb[0].mxu0
  %v1554 = vadd.f32 0.0, %v1553
  %v1555 = vpop.f32.mrb[0].mxu0
  %v1556 = vpop.f32.mrb[0].mxu0
  %1557 = vdwg.mxu0
  %v1558 = vadd.f32 %v1471, %v1511
  %v1559 = vadd.f32 %v1472, %v1513
  %v1560 = vadd.f32 %v1473, %v1552
  %v1561 = vadd.f32 %v1474, %v1554
  %v1562 = vmul.f32 %v1558, 0.5
  %v1563 = vtanh.pop %v1562
  %v1564 = vmul.f32 %v1563, 0.5
  %v1565 = vadd.f32 %v1564, 0.5
  %v1566 = vmul.f32 %v1559, 0.5
  %v1567 = vtanh.pop %v1566
  %v1568 = vmul.f32 %v1567, 0.5
  %v1569 = vadd.f32 %v1568, 0.5
  %v1570 = vtanh.pop %v1560
  %v1571 = vmul.f32 %v1561, 0.5
  %v1572 = vtanh.pop %v1571
  %v1573 = vmul.f32 %v1572, 0.5
  %v1574 = vadd.f32 %v1573, 0.5
  %v1575 = vmul.f32 %v1569, %v1469
  %v1576 = vmul.f32 %v1565, %v1570
  %v1577 = vadd.f32 %v1575, %v1576
  %v1578 = vtanh.pop %v1577
  %v1579 = vmul.f32 %v1574, %v1578
  %1580 = vst [vmem:[#allocation3] sm:$0xff] %v1577
  %1581 = vst [vmem:[#allocation2] sm:$0xff] %v1579
  %v1582 = vpack.c.bf16 %v1579, %v1579
  %s1583 = scalar_lea.vmem [#allocation4], 28
  %1584 = vst [vmem:[%s1583] sm:$0xf] %v1582
  %v1585 = vld [vmem:[#allocation4] sm:$0xf]
  %v1586 = vld [vmem:[#allocation4 + $0x4] sm:$0xf]
  %v1587 = vld [vmem:[#allocation4 + $0x8] sm:$0xf]
  %v1588 = vld [vmem:[#allocation4 + $0xc] sm:$0xf]
  %v1589 = vld [vmem:[#allocation4 + $0x10] sm:$0xf]
  %v1590 = vld [vmem:[#allocation4 + $0x14] sm:$0xf]
  %v1591 = vld [vmem:[#allocation4 + $0x18] sm:$0xf]
  %v1592 = vld [vmem:[#allocation4 + $0x1c] sm:$0xf]
  %v1593 = vld [vmem:[%s2] sm:$0xff]
  %v1594 = vld [vmem:[%s2 + $0x8] sm:$0xff]
  %v1595 = vld [vmem:[%s2 + $0x10] sm:$0xff]
  %v1596 = vld [vmem:[%s2 + $0x18] sm:$0xff]
  %v1597 = vld [vmem:[%s2 + $0x20] sm:$0xff]
  %v1598 = vld [vmem:[%s2 + $0x28] sm:$0xff]
  %v1599 = vld [vmem:[%s2 + $0x30] sm:$0xff]
  %v1600 = vld [vmem:[%s2 + $0x38] sm:$0xff]
  %v1601 = vld [vmem:[%s2 + $0x40] sm:$0xff]
  %v1602 = vld [vmem:[%s2 + $0x48] sm:$0xff]
  %v1603 = vld [vmem:[%s2 + $0x50] sm:$0xff]
  %v1604 = vld [vmem:[%s2 + $0x58] sm:$0xff]
  %v1605 = vld [vmem:[%s2 + $0x60] sm:$0xff]
  %v1606 = vld [vmem:[%s2 + $0x68] sm:$0xff]
  %v1607 = vld [vmem:[%s2 + $0x70] sm:$0xff]
  %v1608 = vld [vmem:[%s2 + $0x78] sm:$0xff]
  %v1609 = vld [vmem:[%s2 + $0x80] sm:$0xff]
  %v1610 = vld [vmem:[%s2 + $0x88] sm:$0xff]
  %v1611 = vld [vmem:[%s2 + $0x90] sm:$0xff]
  %v1612 = vld [vmem:[%s2 + $0x98] sm:$0xff]
  %v1613 = vld [vmem:[%s2 + $0xa0] sm:$0xff]
  %v1614 = vld [vmem:[%s2 + $0xa8] sm:$0xff]
  %v1615 = vld [vmem:[%s2 + $0xb0] sm:$0xff]
  %v1616 = vld [vmem:[%s2 + $0xb8] sm:$0xff]
  %v1617 = vld [vmem:[%s2 + $0xc0] sm:$0xff]
  %v1618 = vld [vmem:[%s2 + $0xc8] sm:$0xff]
  %v1619 = vld [vmem:[%s2 + $0xd0] sm:$0xff]
  %v1620 = vld [vmem:[%s2 + $0xd8] sm:$0xff]
  %v1621 = vld [vmem:[%s2 + $0xe0] sm:$0xff]
  %v1622 = vld [vmem:[%s2 + $0xe8] sm:$0xff]
  %v1623 = vld [vmem:[%s2 + $0xf0] sm:$0xff]
  %v1624 = vld [vmem:[%s2 + $0xf8] sm:$0xff]
  %s1625 = scalar_lea.vmem %s4, 4
  %v1626 = vld [vmem:[%s1625] sm:$0xf]
  %v1628 = vlaneseq
  %v1629 = vshrl.u32 %v1628, 7
  %v1630 = vsub.s32 0, %v1629
  %v1631 = vrot.slane %v1626, %v1630
  %v1632 = vlaneseq
  %v1633 = vshrl.u32 %v1632, 7
  %v1634 = vsub.s32 1, %v1633
  %v1635 = vrot.slane %v1626, %v1634
  %v1636 = vlaneseq
  %v1637 = vshrl.u32 %v1636, 7
  %v1638 = vsub.s32 2, %v1637
  %v1639 = vrot.slane %v1626, %v1638
  %v1640 = vlaneseq
  %v1641 = vshrl.u32 %v1640, 7
  %v1642 = vsub.s32 3, %v1641
  %v1643 = vrot.slane %v1626, %v1642
  %v1656 = vunpack.c.l.b16 %v1585
  %v1657 = vunpack.c.l.b16 %v1586
  %v1658 = vunpack.c.l.b16 %v1587
  %v1659 = vunpack.c.l.b16 %v1588
  %v1660 = vunpack.c.l.b16 %v1589
  %v1661 = vunpack.c.l.b16 %v1590
  %v1662 = vunpack.c.l.b16 %v1591
  %v1663 = vunpack.c.l.b16 %v1592
  %v1664 = vpack.c.b16 %v1657, %v1656
  %v1665 = vpack.c.b16 %v1659, %v1658
  %v1666 = vpack.c.b16 %v1661, %v1660
  %v1667 = vpack.c.b16 %v1663, %v1662
  %v1704 = vunpack.c.l.b16 %v1593
  %v1705 = vunpack.c.h.b16 %v1593
  %v1706 = vunpack.c.l.b16 %v1594
  %v1707 = vunpack.c.h.b16 %v1594
  %v1708 = vunpack.c.l.b16 %v1595
  %v1709 = vunpack.c.h.b16 %v1595
  %v1710 = vunpack.c.l.b16 %v1596
  %v1711 = vunpack.c.h.b16 %v1596
  %v1712 = vunpack.c.l.b16 %v1597
  %v1713 = vunpack.c.h.b16 %v1597
  %v1714 = vunpack.c.l.b16 %v1598
  %v1715 = vunpack.c.h.b16 %v1598
  %v1716 = vunpack.c.l.b16 %v1599
  %v1717 = vunpack.c.h.b16 %v1599
  %v1718 = vunpack.c.l.b16 %v1600
  %v1719 = vunpack.c.h.b16 %v1600
  %v1720 = vunpack.c.l.b16 %v1601
  %v1721 = vunpack.c.h.b16 %v1601
  %v1722 = vunpack.c.l.b16 %v1602
  %v1723 = vunpack.c.h.b16 %v1602
  %v1724 = vunpack.c.l.b16 %v1603
  %v1725 = vunpack.c.h.b16 %v1603
  %v1726 = vunpack.c.l.b16 %v1604
  %v1727 = vunpack.c.h.b16 %v1604
  %v1728 = vunpack.c.l.b16 %v1605
  %v1729 = vunpack.c.h.b16 %v1605
  %v1730 = vunpack.c.l.b16 %v1606
  %v1731 = vunpack.c.h.b16 %v1606
  %v1732 = vunpack.c.l.b16 %v1607
  %v1733 = vunpack.c.h.b16 %v1607
  %v1734 = vunpack.c.l.b16 %v1608
  %v1735 = vunpack.c.h.b16 %v1608
  %v1736 = vunpack.c.l.b16 %v1609
  %v1737 = vunpack.c.h.b16 %v1609
  %v1738 = vunpack.c.l.b16 %v1610
  %v1739 = vunpack.c.h.b16 %v1610
  %v1740 = vunpack.c.l.b16 %v1611
  %v1741 = vunpack.c.h.b16 %v1611
  %v1742 = vunpack.c.l.b16 %v1612
  %v1743 = vunpack.c.h.b16 %v1612
  %v1744 = vunpack.c.l.b16 %v1613
  %v1745 = vunpack.c.h.b16 %v1613
  %v1746 = vunpack.c.l.b16 %v1614
  %v1747 = vunpack.c.h.b16 %v1614
  %v1748 = vunpack.c.l.b16 %v1615
  %v1749 = vunpack.c.h.b16 %v1615
  %v1750 = vunpack.c.l.b16 %v1616
  %v1751 = vunpack.c.h.b16 %v1616
  %v1752 = vunpack.c.l.b16 %v1617
  %v1753 = vunpack.c.h.b16 %v1617
  %v1754 = vunpack.c.l.b16 %v1618
  %v1755 = vunpack.c.h.b16 %v1618
  %v1756 = vunpack.c.l.b16 %v1619
  %v1757 = vunpack.c.h.b16 %v1619
  %v1758 = vunpack.c.l.b16 %v1620
  %v1759 = vunpack.c.h.b16 %v1620
  %v1760 = vunpack.c.l.b16 %v1621
  %v1761 = vunpack.c.h.b16 %v1621
  %v1762 = vunpack.c.l.b16 %v1622
  %v1763 = vunpack.c.h.b16 %v1622
  %v1764 = vunpack.c.l.b16 %v1623
  %v1765 = vunpack.c.h.b16 %v1623
  %v1766 = vunpack.c.l.b16 %v1624
  %v1767 = vunpack.c.h.b16 %v1624
  %v1768 = vpack.c.b16 %v1708, %v1704
  %v1769 = vpack.c.b16 %v1709, %v1705
  %v1770 = vpack.c.b16 %v1710, %v1706
  %v1771 = vpack.c.b16 %v1711, %v1707
  %v1772 = vpack.c.b16 %v1716, %v1712
  %v1773 = vpack.c.b16 %v1717, %v1713
  %v1774 = vpack.c.b16 %v1718, %v1714
  %v1775 = vpack.c.b16 %v1719, %v1715
  %v1776 = vpack.c.b16 %v1724, %v1720
  %v1777 = vpack.c.b16 %v1725, %v1721
  %v1778 = vpack.c.b16 %v1726, %v1722
  %v1779 = vpack.c.b16 %v1727, %v1723
  %v1780 = vpack.c.b16 %v1732, %v1728
  %v1781 = vpack.c.b16 %v1733, %v1729
  %v1782 = vpack.c.b16 %v1734, %v1730
  %v1783 = vpack.c.b16 %v1735, %v1731
  %v1784 = vpack.c.b16 %v1740, %v1736
  %v1785 = vpack.c.b16 %v1741, %v1737
  %v1786 = vpack.c.b16 %v1742, %v1738
  %v1787 = vpack.c.b16 %v1743, %v1739
  %v1788 = vpack.c.b16 %v1748, %v1744
  %v1789 = vpack.c.b16 %v1749, %v1745
  %v1790 = vpack.c.b16 %v1750, %v1746
  %v1791 = vpack.c.b16 %v1751, %v1747
  %v1792 = vpack.c.b16 %v1756, %v1752
  %v1793 = vpack.c.b16 %v1757, %v1753
  %v1794 = vpack.c.b16 %v1758, %v1754
  %v1795 = vpack.c.b16 %v1759, %v1755
  %v1796 = vpack.c.b16 %v1764, %v1760
  %v1797 = vpack.c.b16 %v1765, %v1761
  %v1798 = vpack.c.b16 %v1766, %v1762
  %v1799 = vpack.c.b16 %v1767, %v1763
  %1832 = vmatprep.subr.bf16.mxu0 %v1769
  %1833 = vmatpush1.bf16.msra.mxu0 %v1768
  %1834 = vmatprep.subr.bf16.mxu0 %v1773
  %1835 = vmatpush1.bf16.msra.mxu0 %v1772
  %1836 = vmatprep.subr.bf16.mxu0 %v1777
  %1837 = vmatpush1.bf16.msra.mxu0 %v1776
  %1838 = vmatprep.subr.bf16.mxu0 %v1781
  %1839 = vmatpush1.bf16.msra.mxu0 %v1780
  %1840 = vmatprep.subr.bf16.mxu0 %v1785
  %1841 = vmatpush1.bf16.msra.mxu0 %v1784
  %1842 = vmatprep.subr.bf16.mxu0 %v1789
  %1843 = vmatpush1.bf16.msra.mxu0 %v1788
  %1844 = vmatprep.subr.bf16.mxu0 %v1793
  %1845 = vmatpush1.bf16.msra.mxu0 %v1792
  %1846 = vmatprep.subr.bf16.mxu0 %v1797
  %1847 = vmatpush1.bf16.msra.mxu0 %v1796
  %1848 = vmatprep.subr.bf16.mxu0 0
  %1849 = vmatpush1.bf16.msra.mxu0 0
  %1850 = vmatprep.subr.bf16.mxu0 0
  %1851 = vmatpush1.bf16.msra.mxu0 0
  %1852 = vmatprep.subr.bf16.mxu0 0
  %1853 = vmatpush1.bf16.msra.mxu0 0
  %1854 = vmatprep.subr.bf16.mxu0 0
  %1855 = vmatpush1.bf16.msra.mxu0 0
  %1856 = vmatprep.subr.bf16.mxu0 0
  %1857 = vmatpush1.bf16.msra.mxu0 0
  %1858 = vmatprep.subr.bf16.mxu0 0
  %1859 = vmatpush1.bf16.msra.mxu0 0
  %1860 = vmatprep.subr.bf16.mxu0 0
  %1861 = vmatpush1.bf16.msra.mxu0 0
  %1862 = vmatprep.subr.bf16.mxu0 0
  %1863 = vmatpush1.bf16.msra.mxu0 0
  %1864 = vmatprep.mubr.bf16.mxu0 0
  %1865 = vmatmul.mubr.bf16.gmra.mrb[0].mxu0 %v1664
  %v1866 = vpop.f32.mrb[0].mxu0
  %v1867 = vadd.f32 %v1631, %v1866
  %v1868 = vpop.f32.mrb[0].mxu0
  %v1869 = vadd.f32 %v1635, %v1868
  %v1870 = vpop.f32.mrb[0].mxu0
  %v1871 = vadd.f32 %v1631, %v1870
  %v1872 = vpop.f32.mrb[0].mxu0
  %v1873 = vadd.f32 %v1635, %v1872
  %1874 = vmatprep.mubr.bf16.mxu0 0
  %1875 = vmatmul.mubr.bf16.gmra.mrb[0].mxu0 %v1665
  %v1876 = vpop.f32.mrb[0].mxu0
  %v1877 = vadd.f32 %v1631, %v1876
  %v1878 = vpop.f32.mrb[0].mxu0
  %v1879 = vadd.f32 %v1635, %v1878
  %v1880 = vpop.f32.mrb[0].mxu0
  %v1881 = vadd.f32 %v1631, %v1880
  %v1882 = vpop.f32.mrb[0].mxu0
  %v1883 = vadd.f32 %v1635, %v1882
  %1884 = vmatprep.mubr.bf16.mxu0 0
  %1885 = vmatmul.mubr.bf16.gmra.mrb[0].mxu0 %v1666
  %v1886 = vpop.f32.mrb[0].mxu0
  %v1887 = vadd.f32 %v1631, %v1886
  %v1888 = vpop.f32.mrb[0].mxu0
  %v1889 = vadd.f32 %v1635, %v1888
  %v1890 = vpop.f32.mrb[0].mxu0
  %v1891 = vadd.f32 %v1631, %v1890
  %v1892 = vpop.f32.mrb[0].mxu0
  %v1893 = vadd.f32 %v1635, %v1892
  %1894 = vmatprep.mubr.bf16.mxu0 0
  %1895 = vmatmul.mubr.bf16.gmra.mrb[0].mxu0 %v1667
  %v1896 = vpop.f32.mrb[0].mxu0
  %v1897 = vadd.f32 %v1631, %v1896
  %v1898 = vpop.f32.mrb[0].mxu0
  %v1899 = vadd.f32 %v1635, %v1898
  %v1900 = vpop.f32.mrb[0].mxu0
  %v1901 = vadd.f32 %v1631, %v1900
  %v1902 = vpop.f32.mrb[0].mxu0
  %v1903 = vadd.f32 %v1635, %v1902
  %1904 = vdwg.mxu0
  %1905 = vmatprep.subr.bf16.mxu0 %v1771
  %1906 = vmatpush1.bf16.msra.mxu0 %v1770
  %1907 = vmatprep.subr.bf16.mxu0 %v1775
  %1908 = vmatpush1.bf16.msra.mxu0 %v1774
  %1909 = vmatprep.subr.bf16.mxu0 %v1779
  %1910 = vmatpush1.bf16.msra.mxu0 %v1778
  %1911 = vmatprep.subr.bf16.mxu0 %v1783
  %1912 = vmatpush1.bf16.msra.mxu0 %v1782
  %1913 = vmatprep.subr.bf16.mxu0 %v1787
  %1914 = vmatpush1.bf16.msra.mxu0 %v1786
  %1915 = vmatprep.subr.bf16.mxu0 %v1791
  %1916 = vmatpush1.bf16.msra.mxu0 %v1790
  %1917 = vmatprep.subr.bf16.mxu0 %v1795
  %1918 = vmatpush1.bf16.msra.mxu0 %v1794
  %1919 = vmatprep.subr.bf16.mxu0 %v1799
  %1920 = vmatpush1.bf16.msra.mxu0 %v1798
  %1921 = vmatprep.subr.bf16.mxu0 0
  %1922 = vmatpush1.bf16.msra.mxu0 0
  %1923 = vmatprep.subr.bf16.mxu0 0
  %1924 = vmatpush1.bf16.msra.mxu0 0
  %1925 = vmatprep.subr.bf16.mxu0 0
  %1926 = vmatpush1.bf16.msra.mxu0 0
  %1927 = vmatprep.subr.bf16.mxu0 0
  %1928 = vmatpush1.bf16.msra.mxu0 0
  %1929 = vmatprep.subr.bf16.mxu0 0
  %1930 = vmatpush1.bf16.msra.mxu0 0
  %1931 = vmatprep.subr.bf16.mxu0 0
  %1932 = vmatpush1.bf16.msra.mxu0 0
  %1933 = vmatprep.subr.bf16.mxu0 0
  %1934 = vmatpush1.bf16.msra.mxu0 0
  %1935 = vmatprep.subr.bf16.mxu0 0
  %1936 = vmatpush1.bf16.msra.mxu0 0
  %1937 = vmatprep.mubr.bf16.mxu0 0
  %1938 = vmatmul.mubr.bf16.gmra.mrb[0].mxu0 %v1664
  %v1939 = vpop.f32.mrb[0].mxu0
  %v1940 = vadd.f32 %v1639, %v1939
  %v1941 = vpop.f32.mrb[0].mxu0
  %v1942 = vadd.f32 %v1643, %v1941
  %v1943 = vpop.f32.mrb[0].mxu0
  %v1944 = vadd.f32 %v1639, %v1943
  %v1945 = vpop.f32.mrb[0].mxu0
  %v1946 = vadd.f32 %v1643, %v1945
  %1947 = vmatprep.mubr.bf16.mxu0 0
  %1948 = vmatmul.mubr.bf16.gmra.mrb[0].mxu0 %v1665
  %v1949 = vpop.f32.mrb[0].mxu0
  %v1950 = vadd.f32 %v1639, %v1949
  %v1951 = vpop.f32.mrb[0].mxu0
  %v1952 = vadd.f32 %v1643, %v1951
  %v1953 = vpop.f32.mrb[0].mxu0
  %v1954 = vadd.f32 %v1639, %v1953
  %v1955 = vpop.f32.mrb[0].mxu0
  %v1956 = vadd.f32 %v1643, %v1955
  %1957 = vmatprep.mubr.bf16.mxu0 0
  %1958 = vmatmul.mubr.bf16.gmra.mrb[0].mxu0 %v1666
  %v1959 = vpop.f32.mrb[0].mxu0
  %v1960 = vadd.f32 %v1639, %v1959
  %v1961 = vpop.f32.mrb[0].mxu0
  %v1962 = vadd.f32 %v1643, %v1961
  %v1963 = vpop.f32.mrb[0].mxu0
  %v1964 = vadd.f32 %v1639, %v1963
  %v1965 = vpop.f32.mrb[0].mxu0
  %v1966 = vadd.f32 %v1643, %v1965
  %1967 = vmatprep.mubr.bf16.mxu0 0
  %1968 = vmatmul.mubr.bf16.gmra.mrb[0].mxu0 %v1667
  %v1969 = vpop.f32.mrb[0].mxu0
  %v1970 = vadd.f32 %v1639, %v1969
  %v1971 = vpop.f32.mrb[0].mxu0
  %v1972 = vadd.f32 %v1643, %v1971
  %v1973 = vpop.f32.mrb[0].mxu0
  %v1974 = vadd.f32 %v1639, %v1973
  %v1975 = vpop.f32.mrb[0].mxu0
  %v1976 = vadd.f32 %v1643, %v1975
  %1977 = vdwg.mxu0
  %1978 = vst [vmem:[#allocation5] sm:$0xff] %v1867
  %1979 = vst [vmem:[#allocation5 + $0x8] sm:$0xff] %v1869
  %1980 = vst [vmem:[#allocation5 + $0x10] sm:$0xff] %v1940
  %1981 = vst [vmem:[#allocation5 + $0x18] sm:$0xff] %v1942
  %1982 = vst [vmem:[#allocation5 + $0x20] sm:$0xff] %v1871
  %1983 = vst [vmem:[#allocation5 + $0x28] sm:$0xff] %v1873
  %1984 = vst [vmem:[#allocation5 + $0x30] sm:$0xff] %v1944
  %1985 = vst [vmem:[#allocation5 + $0x38] sm:$0xff] %v1946
  %1986 = vst [vmem:[#allocation5 + $0x40] sm:$0xff] %v1877
  %1987 = vst [vmem:[#allocation5 + $0x48] sm:$0xff] %v1879
  %1988 = vst [vmem:[#allocation5 + $0x50] sm:$0xff] %v1950
  %1989 = vst [vmem:[#allocation5 + $0x58] sm:$0xff] %v1952
  %1990 = vst [vmem:[#allocation5 + $0x60] sm:$0xff] %v1881
  %1991 = vst [vmem:[#allocation5 + $0x68] sm:$0xff] %v1883
  %1992 = vst [vmem:[#allocation5 + $0x70] sm:$0xff] %v1954
  %1993 = vst [vmem:[#allocation5 + $0x78] sm:$0xff] %v1956
  %1994 = vst [vmem:[#allocation5 + $0x80] sm:$0xff] %v1887
  %1995 = vst [vmem:[#allocation5 + $0x88] sm:$0xff] %v1889
  %1996 = vst [vmem:[#allocation5 + $0x90] sm:$0xff] %v1960
  %1997 = vst [vmem:[#allocation5 + $0x98] sm:$0xff] %v1962
  %1998 = vst [vmem:[#allocation5 + $0xa0] sm:$0xff] %v1891
  %1999 = vst [vmem:[#allocation5 + $0xa8] sm:$0xff] %v1893
  %2000 = vst [vmem:[#allocation5 + $0xb0] sm:$0xff] %v1964
  %2001 = vst [vmem:[#allocation5 + $0xb8] sm:$0xff] %v1966
  %2002 = vst [vmem:[#allocation5 + $0xc0] sm:$0xff] %v1897
  %2003 = vst [vmem:[#allocation5 + $0xc8] sm:$0xff] %v1899
  %2004 = vst [vmem:[#allocation5 + $0xd0] sm:$0xff] %v1970
  %2005 = vst [vmem:[#allocation5 + $0xd8] sm:$0xff] %v1972
  %2006 = vst [vmem:[#allocation5 + $0xe0] sm:$0xff] %v1901
  %2007 = vst [vmem:[#allocation5 + $0xe8] sm:$0xff] %v1903
  %2008 = vst [vmem:[#allocation5 + $0xf0] sm:$0xff] %v1974
  %2009 = vst [vmem:[#allocation5 + $0xf8] sm:$0xff] %v1976
  %s2010 = scalar_lea.vmem %s3, 256
  %v2011 = vld [vmem:[%s2010] sm:$0xff]
  %v2012 = vld [vmem:[%s2010 + $0x8] sm:$0xff]
  %v2013 = vld [vmem:[%s2010 + $0x10] sm:$0xff]
  %v2014 = vld [vmem:[%s2010 + $0x18] sm:$0xff]
  %v2015 = vld [vmem:[%s2010 + $0x20] sm:$0xff]
  %v2016 = vld [vmem:[%s2010 + $0x28] sm:$0xff]
  %v2017 = vld [vmem:[%s2010 + $0x30] sm:$0xff]
  %v2018 = vld [vmem:[%s2010 + $0x38] sm:$0xff]
  %v2019 = vld [vmem:[%s2010 + $0x40] sm:$0xff]
  %v2020 = vld [vmem:[%s2010 + $0x48] sm:$0xff]
  %v2021 = vld [vmem:[%s2010 + $0x50] sm:$0xff]
  %v2022 = vld [vmem:[%s2010 + $0x58] sm:$0xff]
  %v2023 = vld [vmem:[%s2010 + $0x60] sm:$0xff]
  %v2024 = vld [vmem:[%s2010 + $0x68] sm:$0xff]
  %v2025 = vld [vmem:[%s2010 + $0x70] sm:$0xff]
  %v2026 = vld [vmem:[%s2010 + $0x78] sm:$0xff]
  %v2027 = vld [vmem:[%s2010 + $0x80] sm:$0xff]
  %v2028 = vld [vmem:[%s2010 + $0x88] sm:$0xff]
  %v2029 = vld [vmem:[%s2010 + $0x90] sm:$0xff]
  %v2030 = vld [vmem:[%s2010 + $0x98] sm:$0xff]
  %v2031 = vld [vmem:[%s2010 + $0xa0] sm:$0xff]
  %v2032 = vld [vmem:[%s2010 + $0xa8] sm:$0xff]
  %v2033 = vld [vmem:[%s2010 + $0xb0] sm:$0xff]
  %v2034 = vld [vmem:[%s2010 + $0xb8] sm:$0xff]
  %v2035 = vld [vmem:[%s2010 + $0xc0] sm:$0xff]
  %v2036 = vld [vmem:[%s2010 + $0xc8] sm:$0xff]
  %v2037 = vld [vmem:[%s2010 + $0xd0] sm:$0xff]
  %v2038 = vld [vmem:[%s2010 + $0xd8] sm:$0xff]
  %v2039 = vld [vmem:[%s2010 + $0xe0] sm:$0xff]
  %v2040 = vld [vmem:[%s2010 + $0xe8] sm:$0xff]
  %v2041 = vld [vmem:[%s2010 + $0xf0] sm:$0xff]
  %v2042 = vld [vmem:[%s2010 + $0xf8] sm:$0xff]
  %s2043 = scalar_lea.vmem [#allocation2], 8
  %v2044 = vld [vmem:[%s2043] sm:$0xff]
  %s2045 = scalar_lea.vmem [#allocation3], 8
  %v2046 = vld [vmem:[%s2045] sm:$0xff]
  %v2047 = vld [vmem:[#allocation5] sm:$0xff]
  %v2048 = vld [vmem:[#allocation5 + $0x8] sm:$0xff]
  %v2049 = vld [vmem:[#allocation5 + $0x10] sm:$0xff]
  %v2050 = vld [vmem:[#allocation5 + $0x18] sm:$0xff]
  %v2051 = vpack.c.bf16 %v2044, %v2044
  %v2084 = vunpack.c.l.b16 %v2011
  %v2085 = vunpack.c.h.b16 %v2011
  %v2086 = vunpack.c.l.b16 %v2012
  %v2087 = vunpack.c.h.b16 %v2012
  %v2088 = vunpack.c.l.b16 %v2013
  %v2089 = vunpack.c.h.b16 %v2013
  %v2090 = vunpack.c.l.b16 %v2014
  %v2091 = vunpack.c.h.b16 %v2014
  %v2092 = vunpack.c.l.b16 %v2015
  %v2093 = vunpack.c.h.b16 %v2015
  %v2094 = vunpack.c.l.b16 %v2016
  %v2095 = vunpack.c.h.b16 %v2016
  %v2096 = vunpack.c.l.b16 %v2017
  %v2097 = vunpack.c.h.b16 %v2017
  %v2098 = vunpack.c.l.b16 %v2018
  %v2099 = vunpack.c.h.b16 %v2018
  %v2100 = vunpack.c.l.b16 %v2019
  %v2101 = vunpack.c.h.b16 %v2019
  %v2102 = vunpack.c.l.b16 %v2020
  %v2103 = vunpack.c.h.b16 %v2020
  %v2104 = vunpack.c.l.b16 %v2021
  %v2105 = vunpack.c.h.b16 %v2021
  %v2106 = vunpack.c.l.b16 %v2022
  %v2107 = vunpack.c.h.b16 %v2022
  %v2108 = vunpack.c.l.b16 %v2023
  %v2109 = vunpack.c.h.b16 %v2023
  %v2110 = vunpack.c.l.b16 %v2024
  %v2111 = vunpack.c.h.b16 %v2024
  %v2112 = vunpack.c.l.b16 %v2025
  %v2113 = vunpack.c.h.b16 %v2025
  %v2114 = vunpack.c.l.b16 %v2026
  %v2115 = vunpack.c.h.b16 %v2026
  %v2116 = vunpack.c.l.b16 %v2027
  %v2117 = vunpack.c.h.b16 %v2027
  %v2118 = vunpack.c.l.b16 %v2028
  %v2119 = vunpack.c.h.b16 %v2028
  %v2120 = vunpack.c.l.b16 %v2029
  %v2121 = vunpack.c.h.b16 %v2029
  %v2122 = vunpack.c.l.b16 %v2030
  %v2123 = vunpack.c.h.b16 %v2030
  %v2124 = vunpack.c.l.b16 %v2031
  %v2125 = vunpack.c.h.b16 %v2031
  %v2126 = vunpack.c.l.b16 %v2032
  %v2127 = vunpack.c.h.b16 %v2032
  %v2128 = vunpack.c.l.b16 %v2033
  %v2129 = vunpack.c.h.b16 %v2033
  %v2130 = vunpack.c.l.b16 %v2034
  %v2131 = vunpack.c.h.b16 %v2034
  %v2132 = vunpack.c.l.b16 %v2035
  %v2133 = vunpack.c.h.b16 %v2035
  %v2134 = vunpack.c.l.b16 %v2036
  %v2135 = vunpack.c.h.b16 %v2036
  %v2136 = vunpack.c.l.b16 %v2037
  %v2137 = vunpack.c.h.b16 %v2037
  %v2138 = vunpack.c.l.b16 %v2038
  %v2139 = vunpack.c.h.b16 %v2038
  %v2140 = vunpack.c.l.b16 %v2039
  %v2141 = vunpack.c.h.b16 %v2039
  %v2142 = vunpack.c.l.b16 %v2040
  %v2143 = vunpack.c.h.b16 %v2040
  %v2144 = vunpack.c.l.b16 %v2041
  %v2145 = vunpack.c.h.b16 %v2041
  %v2146 = vunpack.c.l.b16 %v2042
  %v2147 = vunpack.c.h.b16 %v2042
  %v2148 = vpack.c.b16 %v2088, %v2084
  %v2149 = vpack.c.b16 %v2089, %v2085
  %v2150 = vpack.c.b16 %v2090, %v2086
  %v2151 = vpack.c.b16 %v2091, %v2087
  %v2152 = vpack.c.b16 %v2096, %v2092
  %v2153 = vpack.c.b16 %v2097, %v2093
  %v2154 = vpack.c.b16 %v2098, %v2094
  %v2155 = vpack.c.b16 %v2099, %v2095
  %v2156 = vpack.c.b16 %v2104, %v2100
  %v2157 = vpack.c.b16 %v2105, %v2101
  %v2158 = vpack.c.b16 %v2106, %v2102
  %v2159 = vpack.c.b16 %v2107, %v2103
  %v2160 = vpack.c.b16 %v2112, %v2108
  %v2161 = vpack.c.b16 %v2113, %v2109
  %v2162 = vpack.c.b16 %v2114, %v2110
  %v2163 = vpack.c.b16 %v2115, %v2111
  %v2164 = vpack.c.b16 %v2120, %v2116
  %v2165 = vpack.c.b16 %v2121, %v2117
  %v2166 = vpack.c.b16 %v2122, %v2118
  %v2167 = vpack.c.b16 %v2123, %v2119
  %v2168 = vpack.c.b16 %v2128, %v2124
  %v2169 = vpack.c.b16 %v2129, %v2125
  %v2170 = vpack.c.b16 %v2130, %v2126
  %v2171 = vpack.c.b16 %v2131, %v2127
  %v2172 = vpack.c.b16 %v2136, %v2132
  %v2173 = vpack.c.b16 %v2137, %v2133
  %v2174 = vpack.c.b16 %v2138, %v2134
  %v2175 = vpack.c.b16 %v2139, %v2135
  %v2176 = vpack.c.b16 %v2144, %v2140
  %v2177 = vpack.c.b16 %v2145, %v2141
  %v2178 = vpack.c.b16 %v2146, %v2142
  %v2179 = vpack.c.b16 %v2147, %v2143
  %2212 = vmatprep.subr.bf16.mxu0 %v2149
  %2213 = vmatpush1.bf16.msra.mxu0 %v2148
  %2214 = vmatprep.subr.bf16.mxu0 %v2153
  %2215 = vmatpush1.bf16.msra.mxu0 %v2152
  %2216 = vmatprep.subr.bf16.mxu0 %v2157
  %2217 = vmatpush1.bf16.msra.mxu0 %v2156
  %2218 = vmatprep.subr.bf16.mxu0 %v2161
  %2219 = vmatpush1.bf16.msra.mxu0 %v2160
  %2220 = vmatprep.subr.bf16.mxu0 %v2165
  %2221 = vmatpush1.bf16.msra.mxu0 %v2164
  %2222 = vmatprep.subr.bf16.mxu0 %v2169
  %2223 = vmatpush1.bf16.msra.mxu0 %v2168
  %2224 = vmatprep.subr.bf16.mxu0 %v2173
  %2225 = vmatpush1.bf16.msra.mxu0 %v2172
  %2226 = vmatprep.subr.bf16.mxu0 %v2177
  %2227 = vmatpush1.bf16.msra.mxu0 %v2176
  %2228 = vmatprep.subr.bf16.mxu0 0
  %2229 = vmatpush1.bf16.msra.mxu0 0
  %2230 = vmatprep.subr.bf16.mxu0 0
  %2231 = vmatpush1.bf16.msra.mxu0 0
  %2232 = vmatprep.subr.bf16.mxu0 0
  %2233 = vmatpush1.bf16.msra.mxu0 0
  %2234 = vmatprep.subr.bf16.mxu0 0
  %2235 = vmatpush1.bf16.msra.mxu0 0
  %2236 = vmatprep.subr.bf16.mxu0 0
  %2237 = vmatpush1.bf16.msra.mxu0 0
  %2238 = vmatprep.subr.bf16.mxu0 0
  %2239 = vmatpush1.bf16.msra.mxu0 0
  %2240 = vmatprep.subr.bf16.mxu0 0
  %2241 = vmatpush1.bf16.msra.mxu0 0
  %2242 = vmatprep.subr.bf16.mxu0 0
  %2243 = vmatpush1.bf16.msra.mxu0 0
  %2244 = vmatprep.mubr.bf16.mxu0 0
  %2245 = vmatmul.mubr.bf16.gmra.mrb[0].mxu0 %v2051
  %v2246 = vpop.f32.mrb[0].mxu0
  %v2247 = vadd.f32 0.0, %v2246
  %v2248 = vpop.f32.mrb[0].mxu0
  %v2249 = vadd.f32 0.0, %v2248
  %v2250 = vpop.f32.mrb[0].mxu0
  %v2251 = vpop.f32.mrb[0].mxu0
  %2252 = vdwg.mxu0
  %2253 = vmatprep.subr.bf16.mxu0 %v2151
  %2254 = vmatpush1.bf16.msra.mxu0 %v2150
  %2255 = vmatprep.subr.bf16.mxu0 %v2155
  %2256 = vmatpush1.bf16.msra.mxu0 %v2154
  %2257 = vmatprep.subr.bf16.mxu0 %v2159
  %2258 = vmatpush1.bf16.msra.mxu0 %v2158
  %2259 = vmatprep.subr.bf16.mxu0 %v2163
  %2260 = vmatpush1.bf16.msra.mxu0 %v2162
  %2261 = vmatprep.subr.bf16.mxu0 %v2167
  %2262 = vmatpush1.bf16.msra.mxu0 %v2166
  %2263 = vmatprep.subr.bf16.mxu0 %v2171
  %2264 = vmatpush1.bf16.msra.mxu0 %v2170
  %2265 = vmatprep.subr.bf16.mxu0 %v2175
  %2266 = vmatpush1.bf16.msra.mxu0 %v2174
  %2267 = vmatprep.subr.bf16.mxu0 %v2179
  %2268 = vmatpush1.bf16.msra.mxu0 %v2178
  %2269 = vmatprep.subr.bf16.mxu0 0
  %2270 = vmatpush1.bf16.msra.mxu0 0
  %2271 = vmatprep.subr.bf16.mxu0 0
  %2272 = vmatpush1.bf16.msra.mxu0 0
  %2273 = vmatprep.subr.bf16.mxu0 0
  %2274 = vmatpush1.bf16.msra.mxu0 0
  %2275 = vmatprep.subr.bf16.mxu0 0
  %2276 = vmatpush1.bf16.msra.mxu0 0
  %2277 = vmatprep.subr.bf16.mxu0 0
  %2278 = vmatpush1.bf16.msra.mxu0 0
  %2279 = vmatprep.subr.bf16.mxu0 0
  %2280 = vmatpush1.bf16.msra.mxu0 0
  %2281 = vmatprep.subr.bf16.mxu0 0
  %2282 = vmatpush1.bf16.msra.mxu0 0
  %2283 = vmatprep.subr.bf16.mxu0 0
  %2284 = vmatpush1.bf16.msra.mxu0 0
  %2285 = vmatprep.mubr.bf16.mxu0 0
  %2286 = vmatmul.mubr.bf16.gmra.mrb[0].mxu0 %v2051
  %v2287 = vpop.f32.mrb[0].mxu0
  %v2288 = vadd.f32 0.0, %v2287
  %v2289 = vpop.f32.mrb[0].mxu0
  %v2290 = vadd.f32 0.0, %v2289
  %v2291 = vpop.f32.mrb[0].mxu0
  %v2292 = vpop.f32.mrb[0].mxu0
  %2293 = vdwg.mxu0
  %v2294 = vadd.f32 %v2047, %v2247
  %v2295 = vadd.f32 %v2048, %v2249
  %v2296 = vadd.f32 %v2049, %v2288
  %v2297 = vadd.f32 %v2050, %v2290
  %v2298 = vmul.f32 %v2294, 0.5
  %v2299 = vtanh.pop %v2298
  %v2300 = vmul.f32 %v2299, 0.5
  %v2301 = vadd.f32 %v2300, 0.5
  %v2302 = vmul.f32 %v2295, 0.5
  %v2303 = vtanh.pop %v2302
  %v2304 = vmul.f32 %v2303, 0.5
  %v2305 = vadd.f32 %v2304, 0.5
  %v2306 = vtanh.pop %v2296
  %v2307 = vmul.f32 %v2297, 0.5
  %v2308 = vtanh.pop %v2307
  %v2309 = vmul.f32 %v2308, 0.5
  %v2310 = vadd.f32 %v2309, 0.5
  %v2311 = vmul.f32 %v2305, %v2046
  %v2312 = vmul.f32 %v2301, %v2306
  %v2313 = vadd.f32 %v2311, %v2312
  %v2314 = vtanh.pop %v2313
  %v2315 = vmul.f32 %v2310, %v2314
  %2316 = vst [vmem:[%s2045] sm:$0xff] %v2313
  %2317 = vst [vmem:[%s2043] sm:$0xff] %v2315
  %v2318 = vld [vmem:[%s2043] sm:$0xff]
  %v2319 = vld [vmem:[%s2045] sm:$0xff]
  %v2320 = vld [vmem:[%s768] sm:$0xff]
  %v2321 = vld [vmem:[%s768 + $0x8] sm:$0xff]
  %v2322 = vld [vmem:[%s768 + $0x10] sm:$0xff]
  %v2323 = vld [vmem:[%s768 + $0x18] sm:$0xff]
  %v2324 = vpack.c.bf16 %v2318, %v2318
  %2325 = vmatprep.subr.bf16.mxu0 %v2149
  %2326 = vmatpush1.bf16.msra.mxu0 %v2148
  %2327 = vmatprep.subr.bf16.mxu0 %v2153
  %2328 = vmatpush1.bf16.msra.mxu0 %v2152
  %2329 = vmatprep.subr.bf16.mxu0 %v2157
  %2330 = vmatpush1.bf16.msra.mxu0 %v2156
  %2331 = vmatprep.subr.bf16.mxu0 %v2161
  %2332 = vmatpush1.bf16.msra.mxu0 %v2160
  %2333 = vmatprep.subr.bf16.mxu0 %v2165
  %2334 = vmatpush1.bf16.msra.mxu0 %v2164
  %2335 = vmatprep.subr.bf16.mxu0 %v2169
  %2336 = vmatpush1.bf16.msra.mxu0 %v2168
  %2337 = vmatprep.subr.bf16.mxu0 %v2173
  %2338 = vmatpush1.bf16.msra.mxu0 %v2172
  %2339 = vmatprep.subr.bf16.mxu0 %v2177
  %2340 = vmatpush1.bf16.msra.mxu0 %v2176
  %2341 = vmatprep.subr.bf16.mxu0 0
  %2342 = vmatpush1.bf16.msra.mxu0 0
  %2343 = vmatprep.subr.bf16.mxu0 0
  %2344 = vmatpush1.bf16.msra.mxu0 0
  %2345 = vmatprep.subr.bf16.mxu0 0
  %2346 = vmatpush1.bf16.msra.mxu0 0
  %2347 = vmatprep.subr.bf16.mxu0 0
  %2348 = vmatpush1.bf16.msra.mxu0 0
  %2349 = vmatprep.subr.bf16.mxu0 0
  %2350 = vmatpush1.bf16.msra.mxu0 0
  %2351 = vmatprep.subr.bf16.mxu0 0
  %2352 = vmatpush1.bf16.msra.mxu0 0
  %2353 = vmatprep.subr.bf16.mxu0 0
  %2354 = vmatpush1.bf16.msra.mxu0 0
  %2355 = vmatprep.subr.bf16.mxu0 0
  %2356 = vmatpush1.bf16.msra.mxu0 0
  %2357 = vmatprep.mubr.bf16.mxu0 0
  %2358 = vmatmul.mubr.bf16.gmra.mrb[0].mxu0 %v2324
  %v2359 = vpop.f32.mrb[0].mxu0
  %v2360 = vadd.f32 0.0, %v2359
  %v2361 = vpop.f32.mrb[0].mxu0
  %v2362 = vadd.f32 0.0, %v2361
  %v2363 = vpop.f32.mrb[0].mxu0
  %v2364 = vpop.f32.mrb[0].mxu0
  %2365 = vdwg.mxu0
  %2366 = vmatprep.subr.bf16.mxu0 %v2151
  %2367 = vmatpush1.bf16.msra.mxu0 %v2150
  %2368 = vmatprep.subr.bf16.mxu0 %v2155
  %2369 = vmatpush1.bf16.msra.mxu0 %v2154
  %2370 = vmatprep.subr.bf16.mxu0 %v2159
  %2371 = vmatpush1.bf16.msra.mxu0 %v2158
  %2372 = vmatprep.subr.bf16.mxu0 %v2163
  %2373 = vmatpush1.bf16.msra.mxu0 %v2162
  %2374 = vmatprep.subr.bf16.mxu0 %v2167
  %2375 = vmatpush1.bf16.msra.mxu0 %v2166
  %2376 = vmatprep.subr.bf16.mxu0 %v2171
  %2377 = vmatpush1.bf16.msra.mxu0 %v2170
  %2378 = vmatprep.subr.bf16.mxu0 %v2175
  %2379 = vmatpush1.bf16.msra.mxu0 %v2174
  %2380 = vmatprep.subr.bf16.mxu0 %v2179
  %2381 = vmatpush1.bf16.msra.mxu0 %v2178
  %2382 = vmatprep.subr.bf16.mxu0 0
  %2383 = vmatpush1.bf16.msra.mxu0 0
  %2384 = vmatprep.subr.bf16.mxu0 0
  %2385 = vmatpush1.bf16.msra.mxu0 0
  %2386 = vmatprep.subr.bf16.mxu0 0
  %2387 = vmatpush1.bf16.msra.mxu0 0
  %2388 = vmatprep.subr.bf16.mxu0 0
  %2389 = vmatpush1.bf16.msra.mxu0 0
  %2390 = vmatprep.subr.bf16.mxu0 0
  %2391 = vmatpush1.bf16.msra.mxu0 0
  %2392 = vmatprep.subr.bf16.mxu0 0
  %2393 = vmatpush1.bf16.msra.mxu0 0
  %2394 = vmatprep.subr.bf16.mxu0 0
  %2395 = vmatpush1.bf16.msra.mxu0 0
  %2396 = vmatprep.subr.bf16.mxu0 0
  %2397 = vmatpush1.bf16.msra.mxu0 0
  %2398 = vmatprep.mubr.bf16.mxu0 0
  %2399 = vmatmul.mubr.bf16.gmra.mrb[0].mxu0 %v2324
  %v2400 = vpop.f32.mrb[0].mxu0
  %v2401 = vadd.f32 0.0, %v2400
  %v2402 = vpop.f32.mrb[0].mxu0
  %v2403 = vadd.f32 0.0, %v2402
  %v2404 = vpop.f32.mrb[0].mxu0
  %v2405 = vpop.f32.mrb[0].mxu0
  %2406 = vdwg.mxu0
  %v2407 = vadd.f32 %v2320, %v2360
  %v2408 = vadd.f32 %v2321, %v2362
  %v2409 = vadd.f32 %v2322, %v2401
  %v2410 = vadd.f32 %v2323, %v2403
  %v2411 = vmul.f32 %v2407, 0.5
  %v2412 = vtanh.pop %v2411
  %v2413 = vmul.f32 %v2412, 0.5
  %v2414 = vadd.f32 %v2413, 0.5
  %v2415 = vmul.f32 %v2408, 0.5
  %v2416 = vtanh.pop %v2415
  %v2417 = vmul.f32 %v2416, 0.5
  %v2418 = vadd.f32 %v2417, 0.5
  %v2419 = vtanh.pop %v2409
  %v2420 = vmul.f32 %v2410, 0.5
  %v2421 = vtanh.pop %v2420
  %v2422 = vmul.f32 %v2421, 0.5
  %v2423 = vadd.f32 %v2422, 0.5
  %v2424 = vmul.f32 %v2418, %v2319
  %v2425 = vmul.f32 %v2414, %v2419
  %v2426 = vadd.f32 %v2424, %v2425
  %v2427 = vtanh.pop %v2426
  %v2428 = vmul.f32 %v2423, %v2427
  %2429 = vst [vmem:[%s2045] sm:$0xff] %v2426
  %2430 = vst [vmem:[%s2043] sm:$0xff] %v2428
  %v2431 = vld [vmem:[%s2043] sm:$0xff]
  %v2432 = vld [vmem:[%s2045] sm:$0xff]
  %v2433 = vld [vmem:[%s885] sm:$0xff]
  %v2434 = vld [vmem:[%s885 + $0x8] sm:$0xff]
  %v2435 = vld [vmem:[%s885 + $0x10] sm:$0xff]
  %v2436 = vld [vmem:[%s885 + $0x18] sm:$0xff]
  %v2437 = vpack.c.bf16 %v2431, %v2431
  %2438 = vmatprep.subr.bf16.mxu0 %v2149
  %2439 = vmatpush1.bf16.msra.mxu0 %v2148
  %2440 = vmatprep.subr.bf16.mxu0 %v2153
  %2441 = vmatpush1.bf16.msra.mxu0 %v2152
  %2442 = vmatprep.subr.bf16.mxu0 %v2157
  %2443 = vmatpush1.bf16.msra.mxu0 %v2156
  %2444 = vmatprep.subr.bf16.mxu0 %v2161
  %2445 = vmatpush1.bf16.msra.mxu0 %v2160
  %2446 = vmatprep.subr.bf16.mxu0 %v2165
  %2447 = vmatpush1.bf16.msra.mxu0 %v2164
  %2448 = vmatprep.subr.bf16.mxu0 %v2169
  %2449 = vmatpush1.bf16.msra.mxu0 %v2168
  %2450 = vmatprep.subr.bf16.mxu0 %v2173
  %2451 = vmatpush1.bf16.msra.mxu0 %v2172
  %2452 = vmatprep.subr.bf16.mxu0 %v2177
  %2453 = vmatpush1.bf16.msra.mxu0 %v2176
  %2454 = vmatprep.subr.bf16.mxu0 0
  %2455 = vmatpush1.bf16.msra.mxu0 0
  %2456 = vmatprep.subr.bf16.mxu0 0
  %2457 = vmatpush1.bf16.msra.mxu0 0
  %2458 = vmatprep.subr.bf16.mxu0 0
  %2459 = vmatpush1.bf16.msra.mxu0 0
  %2460 = vmatprep.subr.bf16.mxu0 0
  %2461 = vmatpush1.bf16.msra.mxu0 0
  %2462 = vmatprep.subr.bf16.mxu0 0
  %2463 = vmatpush1.bf16.msra.mxu0 0
  %2464 = vmatprep.subr.bf16.mxu0 0
  %2465 = vmatpush1.bf16.msra.mxu0 0
  %2466 = vmatprep.subr.bf16.mxu0 0
  %2467 = vmatpush1.bf16.msra.mxu0 0
  %2468 = vmatprep.subr.bf16.mxu0 0
  %2469 = vmatpush1.bf16.msra.mxu0 0
  %2470 = vmatprep.mubr.bf16.mxu0 0
  %2471 = vmatmul.mubr.bf16.gmra.mrb[0].mxu0 %v2437
  %v2472 = vpop.f32.mrb[0].mxu0
  %v2473 = vadd.f32 0.0, %v2472
  %v2474 = vpop.f32.mrb[0].mxu0
  %v2475 = vadd.f32 0.0, %v2474
  %v2476 = vpop.f32.mrb[0].mxu0
  %v2477 = vpop.f32.mrb[0].mxu0
  %2478 = vdwg.mxu0
  %2479 = vmatprep.subr.bf16.mxu0 %v2151
  %2480 = vmatpush1.bf16.msra.mxu0 %v2150
  %2481 = vmatprep.subr.bf16.mxu0 %v2155
  %2482 = vmatpush1.bf16.msra.mxu0 %v2154
  %2483 = vmatprep.subr.bf16.mxu0 %v2159
  %2484 = vmatpush1.bf16.msra.mxu0 %v2158
  %2485 = vmatprep.subr.bf16.mxu0 %v2163
  %2486 = vmatpush1.bf16.msra.mxu0 %v2162
  %2487 = vmatprep.subr.bf16.mxu0 %v2167
  %2488 = vmatpush1.bf16.msra.mxu0 %v2166
  %2489 = vmatprep.subr.bf16.mxu0 %v2171
  %2490 = vmatpush1.bf16.msra.mxu0 %v2170
  %2491 = vmatprep.subr.bf16.mxu0 %v2175
  %2492 = vmatpush1.bf16.msra.mxu0 %v2174
  %2493 = vmatprep.subr.bf16.mxu0 %v2179
  %2494 = vmatpush1.bf16.msra.mxu0 %v2178
  %2495 = vmatprep.subr.bf16.mxu0 0
  %2496 = vmatpush1.bf16.msra.mxu0 0
  %2497 = vmatprep.subr.bf16.mxu0 0
  %2498 = vmatpush1.bf16.msra.mxu0 0
  %2499 = vmatprep.subr.bf16.mxu0 0
  %2500 = vmatpush1.bf16.msra.mxu0 0
  %2501 = vmatprep.subr.bf16.mxu0 0
  %2502 = vmatpush1.bf16.msra.mxu0 0
  %2503 = vmatprep.subr.bf16.mxu0 0
  %2504 = vmatpush1.bf16.msra.mxu0 0
  %2505 = vmatprep.subr.bf16.mxu0 0
  %2506 = vmatpush1.bf16.msra.mxu0 0
  %2507 = vmatprep.subr.bf16.mxu0 0
  %2508 = vmatpush1.bf16.msra.mxu0 0
  %2509 = vmatprep.subr.bf16.mxu0 0
  %2510 = vmatpush1.bf16.msra.mxu0 0
  %2511 = vmatprep.mubr.bf16.mxu0 0
  %2512 = vmatmul.mubr.bf16.gmra.mrb[0].mxu0 %v2437
  %v2513 = vpop.f32.mrb[0].mxu0
  %v2514 = vadd.f32 0.0, %v2513
  %v2515 = vpop.f32.mrb[0].mxu0
  %v2516 = vadd.f32 0.0, %v2515
  %v2517 = vpop.f32.mrb[0].mxu0
  %v2518 = vpop.f32.mrb[0].mxu0
  %2519 = vdwg.mxu0
  %v2520 = vadd.f32 %v2433, %v2473
  %v2521 = vadd.f32 %v2434, %v2475
  %v2522 = vadd.f32 %v2435, %v2514
  %v2523 = vadd.f32 %v2436, %v2516
  %v2524 = vmul.f32 %v2520, 0.5
  %v2525 = vtanh.pop %v2524
  %v2526 = vmul.f32 %v2525, 0.5
  %v2527 = vadd.f32 %v2526, 0.5
  %v2528 = vmul.f32 %v2521, 0.5
  %v2529 = vtanh.pop %v2528
  %v2530 = vmul.f32 %v2529, 0.5
  %v2531 = vadd.f32 %v2530, 0.5
  %v2532 = vtanh.pop %v2522
  %v2533 = vmul.f32 %v2523, 0.5
  %v2534 = vtanh.pop %v2533
  %v2535 = vmul.f32 %v2534, 0.5
  %v2536 = vadd.f32 %v2535, 0.5
  %v2537 = vmul.f32 %v2531, %v2432
  %v2538 = vmul.f32 %v2527, %v2532
  %v2539 = vadd.f32 %v2537, %v2538
  %v2540 = vtanh.pop %v2539
  %v2541 = vmul.f32 %v2536, %v2540
  %2542 = vst [vmem:[%s2045] sm:$0xff] %v2539
  %2543 = vst [vmem:[%s2043] sm:$0xff] %v2541
  %v2544 = vld [vmem:[%s2043] sm:$0xff]
  %v2545 = vld [vmem:[%s2045] sm:$0xff]
  %v2546 = vld [vmem:[%s1002] sm:$0xff]
  %v2547 = vld [vmem:[%s1002 + $0x8] sm:$0xff]
  %v2548 = vld [vmem:[%s1002 + $0x10] sm:$0xff]
  %v2549 = vld [vmem:[%s1002 + $0x18] sm:$0xff]
  %v2550 = vpack.c.bf16 %v2544, %v2544
  %2551 = vmatprep.subr.bf16.mxu0 %v2149
  %2552 = vmatpush1.bf16.msra.mxu0 %v2148
  %2553 = vmatprep.subr.bf16.mxu0 %v2153
  %2554 = vmatpush1.bf16.msra.mxu0 %v2152
  %2555 = vmatprep.subr.bf16.mxu0 %v2157
  %2556 = vmatpush1.bf16.msra.mxu0 %v2156
  %2557 = vmatprep.subr.bf16.mxu0 %v2161
  %2558 = vmatpush1.bf16.msra.mxu0 %v2160
  %2559 = vmatprep.subr.bf16.mxu0 %v2165
  %2560 = vmatpush1.bf16.msra.mxu0 %v2164
  %2561 = vmatprep.subr.bf16.mxu0 %v2169
  %2562 = vmatpush1.bf16.msra.mxu0 %v2168
  %2563 = vmatprep.subr.bf16.mxu0 %v2173
  %2564 = vmatpush1.bf16.msra.mxu0 %v2172
  %2565 = vmatprep.subr.bf16.mxu0 %v2177
  %2566 = vmatpush1.bf16.msra.mxu0 %v2176
  %2567 = vmatprep.subr.bf16.mxu0 0
  %2568 = vmatpush1.bf16.msra.mxu0 0
  %2569 = vmatprep.subr.bf16.mxu0 0
  %2570 = vmatpush1.bf16.msra.mxu0 0
  %2571 = vmatprep.subr.bf16.mxu0 0
  %2572 = vmatpush1.bf16.msra.mxu0 0
  %2573 = vmatprep.subr.bf16.mxu0 0
  %2574 = vmatpush1.bf16.msra.mxu0 0
  %2575 = vmatprep.subr.bf16.mxu0 0
  %2576 = vmatpush1.bf16.msra.mxu0 0
  %2577 = vmatprep.subr.bf16.mxu0 0
  %2578 = vmatpush1.bf16.msra.mxu0 0
  %2579 = vmatprep.subr.bf16.mxu0 0
  %2580 = vmatpush1.bf16.msra.mxu0 0
  %2581 = vmatprep.subr.bf16.mxu0 0
  %2582 = vmatpush1.bf16.msra.mxu0 0
  %2583 = vmatprep.mubr.bf16.mxu0 0
  %2584 = vmatmul.mubr.bf16.gmra.mrb[0].mxu0 %v2550
  %v2585 = vpop.f32.mrb[0].mxu0
  %v2586 = vadd.f32 0.0, %v2585
  %v2587 = vpop.f32.mrb[0].mxu0
  %v2588 = vadd.f32 0.0, %v2587
  %v2589 = vpop.f32.mrb[0].mxu0
  %v2590 = vpop.f32.mrb[0].mxu0
  %2591 = vdwg.mxu0
  %2592 = vmatprep.subr.bf16.mxu0 %v2151
  %2593 = vmatpush1.bf16.msra.mxu0 %v2150
  %2594 = vmatprep.subr.bf16.mxu0 %v2155
  %2595 = vmatpush1.bf16.msra.mxu0 %v2154
  %2596 = vmatprep.subr.bf16.mxu0 %v2159
  %2597 = vmatpush1.bf16.msra.mxu0 %v2158
  %2598 = vmatprep.subr.bf16.mxu0 %v2163
  %2599 = vmatpush1.bf16.msra.mxu0 %v2162
  %2600 = vmatprep.subr.bf16.mxu0 %v2167
  %2601 = vmatpush1.bf16.msra.mxu0 %v2166
  %2602 = vmatprep.subr.bf16.mxu0 %v2171
  %2603 = vmatpush1.bf16.msra.mxu0 %v2170
  %2604 = vmatprep.subr.bf16.mxu0 %v2175
  %2605 = vmatpush1.bf16.msra.mxu0 %v2174
  %2606 = vmatprep.subr.bf16.mxu0 %v2179
  %2607 = vmatpush1.bf16.msra.mxu0 %v2178
  %2608 = vmatprep.subr.bf16.mxu0 0
  %2609 = vmatpush1.bf16.msra.mxu0 0
  %2610 = vmatprep.subr.bf16.mxu0 0
  %2611 = vmatpush1.bf16.msra.mxu0 0
  %2612 = vmatprep.subr.bf16.mxu0 0
  %2613 = vmatpush1.bf16.msra.mxu0 0
  %2614 = vmatprep.subr.bf16.mxu0 0
  %2615 = vmatpush1.bf16.msra.mxu0 0
  %2616 = vmatprep.subr.bf16.mxu0 0
  %2617 = vmatpush1.bf16.msra.mxu0 0
  %2618 = vmatprep.subr.bf16.mxu0 0
  %2619 = vmatpush1.bf16.msra.mxu0 0
  %2620 = vmatprep.subr.bf16.mxu0 0
  %2621 = vmatpush1.bf16.msra.mxu0 0
  %2622 = vmatprep.subr.bf16.mxu0 0
  %2623 = vmatpush1.bf16.msra.mxu0 0
  %2624 = vmatprep.mubr.bf16.mxu0 0
  %2625 = vmatmul.mubr.bf16.gmra.mrb[0].mxu0 %v2550
  %v2626 = vpop.f32.mrb[0].mxu0
  %v2627 = vadd.f32 0.0, %v2626
  %v2628 = vpop.f32.mrb[0].mxu0
  %v2629 = vadd.f32 0.0, %v2628
  %v2630 = vpop.f32.mrb[0].mxu0
  %v2631 = vpop.f32.mrb[0].mxu0
  %2632 = vdwg.mxu0
  %v2633 = vadd.f32 %v2546, %v2586
  %v2634 = vadd.f32 %v2547, %v2588
  %v2635 = vadd.f32 %v2548, %v2627
  %v2636 = vadd.f32 %v2549, %v2629
  %v2637 = vmul.f32 %v2633, 0.5
  %v2638 = vtanh.pop %v2637
  %v2639 = vmul.f32 %v2638, 0.5
  %v2640 = vadd.f32 %v2639, 0.5
  %v2641 = vmul.f32 %v2634, 0.5
  %v2642 = vtanh.pop %v2641
  %v2643 = vmul.f32 %v2642, 0.5
  %v2644 = vadd.f32 %v2643, 0.5
  %v2645 = vtanh.pop %v2635
  %v2646 = vmul.f32 %v2636, 0.5
  %v2647 = vtanh.pop %v2646
  %v2648 = vmul.f32 %v2647, 0.5
  %v2649 = vadd.f32 %v2648, 0.5
  %v2650 = vmul.f32 %v2644, %v2545
  %v2651 = vmul.f32 %v2640, %v2645
  %v2652 = vadd.f32 %v2650, %v2651
  %v2653 = vtanh.pop %v2652
  %v2654 = vmul.f32 %v2649, %v2653
  %2655 = vst [vmem:[%s2045] sm:$0xff] %v2652
  %2656 = vst [vmem:[%s2043] sm:$0xff] %v2654
  %v2657 = vld [vmem:[%s2043] sm:$0xff]
  %v2658 = vld [vmem:[%s2045] sm:$0xff]
  %v2659 = vld [vmem:[%s1119] sm:$0xff]
  %v2660 = vld [vmem:[%s1119 + $0x8] sm:$0xff]
  %v2661 = vld [vmem:[%s1119 + $0x10] sm:$0xff]
  %v2662 = vld [vmem:[%s1119 + $0x18] sm:$0xff]
  %v2663 = vpack.c.bf16 %v2657, %v2657
  %2664 = vmatprep.subr.bf16.mxu0 %v2149
  %2665 = vmatpush1.bf16.msra.mxu0 %v2148
  %2666 = vmatprep.subr.bf16.mxu0 %v2153
  %2667 = vmatpush1.bf16.msra.mxu0 %v2152
  %2668 = vmatprep.subr.bf16.mxu0 %v2157
  %2669 = vmatpush1.bf16.msra.mxu0 %v2156
  %2670 = vmatprep.subr.bf16.mxu0 %v2161
  %2671 = vmatpush1.bf16.msra.mxu0 %v2160
  %2672 = vmatprep.subr.bf16.mxu0 %v2165
  %2673 = vmatpush1.bf16.msra.mxu0 %v2164
  %2674 = vmatprep.subr.bf16.mxu0 %v2169
  %2675 = vmatpush1.bf16.msra.mxu0 %v2168
  %2676 = vmatprep.subr.bf16.mxu0 %v2173
  %2677 = vmatpush1.bf16.msra.mxu0 %v2172
  %2678 = vmatprep.subr.bf16.mxu0 %v2177
  %2679 = vmatpush1.bf16.msra.mxu0 %v2176
  %2680 = vmatprep.subr.bf16.mxu0 0
  %2681 = vmatpush1.bf16.msra.mxu0 0
  %2682 = vmatprep.subr.bf16.mxu0 0
  %2683 = vmatpush1.bf16.msra.mxu0 0
  %2684 = vmatprep.subr.bf16.mxu0 0
  %2685 = vmatpush1.bf16.msra.mxu0 0
  %2686 = vmatprep.subr.bf16.mxu0 0
  %2687 = vmatpush1.bf16.msra.mxu0 0
  %2688 = vmatprep.subr.bf16.mxu0 0
  %2689 = vmatpush1.bf16.msra.mxu0 0
  %2690 = vmatprep.subr.bf16.mxu0 0
  %2691 = vmatpush1.bf16.msra.mxu0 0
  %2692 = vmatprep.subr.bf16.mxu0 0
  %2693 = vmatpush1.bf16.msra.mxu0 0
  %2694 = vmatprep.subr.bf16.mxu0 0
  %2695 = vmatpush1.bf16.msra.mxu0 0
  %2696 = vmatprep.mubr.bf16.mxu0 0
  %2697 = vmatmul.mubr.bf16.gmra.mrb[0].mxu0 %v2663
  %v2698 = vpop.f32.mrb[0].mxu0
  %v2699 = vadd.f32 0.0, %v2698
  %v2700 = vpop.f32.mrb[0].mxu0
  %v2701 = vadd.f32 0.0, %v2700
  %v2702 = vpop.f32.mrb[0].mxu0
  %v2703 = vpop.f32.mrb[0].mxu0
  %2704 = vdwg.mxu0
  %2705 = vmatprep.subr.bf16.mxu0 %v2151
  %2706 = vmatpush1.bf16.msra.mxu0 %v2150
  %2707 = vmatprep.subr.bf16.mxu0 %v2155
  %2708 = vmatpush1.bf16.msra.mxu0 %v2154
  %2709 = vmatprep.subr.bf16.mxu0 %v2159
  %2710 = vmatpush1.bf16.msra.mxu0 %v2158
  %2711 = vmatprep.subr.bf16.mxu0 %v2163
  %2712 = vmatpush1.bf16.msra.mxu0 %v2162
  %2713 = vmatprep.subr.bf16.mxu0 %v2167
  %2714 = vmatpush1.bf16.msra.mxu0 %v2166
  %2715 = vmatprep.subr.bf16.mxu0 %v2171
  %2716 = vmatpush1.bf16.msra.mxu0 %v2170
  %2717 = vmatprep.subr.bf16.mxu0 %v2175
  %2718 = vmatpush1.bf16.msra.mxu0 %v2174
  %2719 = vmatprep.subr.bf16.mxu0 %v2179
  %2720 = vmatpush1.bf16.msra.mxu0 %v2178
  %2721 = vmatprep.subr.bf16.mxu0 0
  %2722 = vmatpush1.bf16.msra.mxu0 0
  %2723 = vmatprep.subr.bf16.mxu0 0
  %2724 = vmatpush1.bf16.msra.mxu0 0
  %2725 = vmatprep.subr.bf16.mxu0 0
  %2726 = vmatpush1.bf16.msra.mxu0 0
  %2727 = vmatprep.subr.bf16.mxu0 0
  %2728 = vmatpush1.bf16.msra.mxu0 0
  %2729 = vmatprep.subr.bf16.mxu0 0
  %2730 = vmatpush1.bf16.msra.mxu0 0
  %2731 = vmatprep.subr.bf16.mxu0 0
  %2732 = vmatpush1.bf16.msra.mxu0 0
  %2733 = vmatprep.subr.bf16.mxu0 0
  %2734 = vmatpush1.bf16.msra.mxu0 0
  %2735 = vmatprep.subr.bf16.mxu0 0
  %2736 = vmatpush1.bf16.msra.mxu0 0
  %2737 = vmatprep.mubr.bf16.mxu0 0
  %2738 = vmatmul.mubr.bf16.gmra.mrb[0].mxu0 %v2663
  %v2739 = vpop.f32.mrb[0].mxu0
  %v2740 = vadd.f32 0.0, %v2739
  %v2741 = vpop.f32.mrb[0].mxu0
  %v2742 = vadd.f32 0.0, %v2741
  %v2743 = vpop.f32.mrb[0].mxu0
  %v2744 = vpop.f32.mrb[0].mxu0
  %2745 = vdwg.mxu0
  %v2746 = vadd.f32 %v2659, %v2699
  %v2747 = vadd.f32 %v2660, %v2701
  %v2748 = vadd.f32 %v2661, %v2740
  %v2749 = vadd.f32 %v2662, %v2742
  %v2750 = vmul.f32 %v2746, 0.5
  %v2751 = vtanh.pop %v2750
  %v2752 = vmul.f32 %v2751, 0.5
  %v2753 = vadd.f32 %v2752, 0.5
  %v2754 = vmul.f32 %v2747, 0.5
  %v2755 = vtanh.pop %v2754
  %v2756 = vmul.f32 %v2755, 0.5
  %v2757 = vadd.f32 %v2756, 0.5
  %v2758 = vtanh.pop %v2748
  %v2759 = vmul.f32 %v2749, 0.5
  %v2760 = vtanh.pop %v2759
  %v2761 = vmul.f32 %v2760, 0.5
  %v2762 = vadd.f32 %v2761, 0.5
  %v2763 = vmul.f32 %v2757, %v2658
  %v2764 = vmul.f32 %v2753, %v2758
  %v2765 = vadd.f32 %v2763, %v2764
  %v2766 = vtanh.pop %v2765
  %v2767 = vmul.f32 %v2762, %v2766
  %2768 = vst [vmem:[%s2045] sm:$0xff] %v2765
  %2769 = vst [vmem:[%s2043] sm:$0xff] %v2767
  %v2770 = vld [vmem:[%s2043] sm:$0xff]
  %v2771 = vld [vmem:[%s2045] sm:$0xff]
  %v2772 = vld [vmem:[%s1236] sm:$0xff]
  %v2773 = vld [vmem:[%s1236 + $0x8] sm:$0xff]
  %v2774 = vld [vmem:[%s1236 + $0x10] sm:$0xff]
  %v2775 = vld [vmem:[%s1236 + $0x18] sm:$0xff]
  %v2776 = vpack.c.bf16 %v2770, %v2770
  %2777 = vmatprep.subr.bf16.mxu0 %v2149
  %2778 = vmatpush1.bf16.msra.mxu0 %v2148
  %2779 = vmatprep.subr.bf16.mxu0 %v2153
  %2780 = vmatpush1.bf16.msra.mxu0 %v2152
  %2781 = vmatprep.subr.bf16.mxu0 %v2157
  %2782 = vmatpush1.bf16.msra.mxu0 %v2156
  %2783 = vmatprep.subr.bf16.mxu0 %v2161
  %2784 = vmatpush1.bf16.msra.mxu0 %v2160
  %2785 = vmatprep.subr.bf16.mxu0 %v2165
  %2786 = vmatpush1.bf16.msra.mxu0 %v2164
  %2787 = vmatprep.subr.bf16.mxu0 %v2169
  %2788 = vmatpush1.bf16.msra.mxu0 %v2168
  %2789 = vmatprep.subr.bf16.mxu0 %v2173
  %2790 = vmatpush1.bf16.msra.mxu0 %v2172
  %2791 = vmatprep.subr.bf16.mxu0 %v2177
  %2792 = vmatpush1.bf16.msra.mxu0 %v2176
  %2793 = vmatprep.subr.bf16.mxu0 0
  %2794 = vmatpush1.bf16.msra.mxu0 0
  %2795 = vmatprep.subr.bf16.mxu0 0
  %2796 = vmatpush1.bf16.msra.mxu0 0
  %2797 = vmatprep.subr.bf16.mxu0 0
  %2798 = vmatpush1.bf16.msra.mxu0 0
  %2799 = vmatprep.subr.bf16.mxu0 0
  %2800 = vmatpush1.bf16.msra.mxu0 0
  %2801 = vmatprep.subr.bf16.mxu0 0
  %2802 = vmatpush1.bf16.msra.mxu0 0
  %2803 = vmatprep.subr.bf16.mxu0 0
  %2804 = vmatpush1.bf16.msra.mxu0 0
  %2805 = vmatprep.subr.bf16.mxu0 0
  %2806 = vmatpush1.bf16.msra.mxu0 0
  %2807 = vmatprep.subr.bf16.mxu0 0
  %2808 = vmatpush1.bf16.msra.mxu0 0
  %2809 = vmatprep.mubr.bf16.mxu0 0
  %2810 = vmatmul.mubr.bf16.gmra.mrb[0].mxu0 %v2776
  %v2811 = vpop.f32.mrb[0].mxu0
  %v2812 = vadd.f32 0.0, %v2811
  %v2813 = vpop.f32.mrb[0].mxu0
  %v2814 = vadd.f32 0.0, %v2813
  %v2815 = vpop.f32.mrb[0].mxu0
  %v2816 = vpop.f32.mrb[0].mxu0
  %2817 = vdwg.mxu0
  %2818 = vmatprep.subr.bf16.mxu0 %v2151
  %2819 = vmatpush1.bf16.msra.mxu0 %v2150
  %2820 = vmatprep.subr.bf16.mxu0 %v2155
  %2821 = vmatpush1.bf16.msra.mxu0 %v2154
  %2822 = vmatprep.subr.bf16.mxu0 %v2159
  %2823 = vmatpush1.bf16.msra.mxu0 %v2158
  %2824 = vmatprep.subr.bf16.mxu0 %v2163
  %2825 = vmatpush1.bf16.msra.mxu0 %v2162
  %2826 = vmatprep.subr.bf16.mxu0 %v2167
  %2827 = vmatpush1.bf16.msra.mxu0 %v2166
  %2828 = vmatprep.subr.bf16.mxu0 %v2171
  %2829 = vmatpush1.bf16.msra.mxu0 %v2170
  %2830 = vmatprep.subr.bf16.mxu0 %v2175
  %2831 = vmatpush1.bf16.msra.mxu0 %v2174
  %2832 = vmatprep.subr.bf16.mxu0 %v2179
  %2833 = vmatpush1.bf16.msra.mxu0 %v2178
  %2834 = vmatprep.subr.bf16.mxu0 0
  %2835 = vmatpush1.bf16.msra.mxu0 0
  %2836 = vmatprep.subr.bf16.mxu0 0
  %2837 = vmatpush1.bf16.msra.mxu0 0
  %2838 = vmatprep.subr.bf16.mxu0 0
  %2839 = vmatpush1.bf16.msra.mxu0 0
  %2840 = vmatprep.subr.bf16.mxu0 0
  %2841 = vmatpush1.bf16.msra.mxu0 0
  %2842 = vmatprep.subr.bf16.mxu0 0
  %2843 = vmatpush1.bf16.msra.mxu0 0
  %2844 = vmatprep.subr.bf16.mxu0 0
  %2845 = vmatpush1.bf16.msra.mxu0 0
  %2846 = vmatprep.subr.bf16.mxu0 0
  %2847 = vmatpush1.bf16.msra.mxu0 0
  %2848 = vmatprep.subr.bf16.mxu0 0
  %2849 = vmatpush1.bf16.msra.mxu0 0
  %2850 = vmatprep.mubr.bf16.mxu0 0
  %2851 = vmatmul.mubr.bf16.gmra.mrb[0].mxu0 %v2776
  %v2852 = vpop.f32.mrb[0].mxu0
  %v2853 = vadd.f32 0.0, %v2852
  %v2854 = vpop.f32.mrb[0].mxu0
  %v2855 = vadd.f32 0.0, %v2854
  %v2856 = vpop.f32.mrb[0].mxu0
  %v2857 = vpop.f32.mrb[0].mxu0
  %2858 = vdwg.mxu0
  %v2859 = vadd.f32 %v2772, %v2812
  %v2860 = vadd.f32 %v2773, %v2814
  %v2861 = vadd.f32 %v2774, %v2853
  %v2862 = vadd.f32 %v2775, %v2855
  %v2863 = vmul.f32 %v2859, 0.5
  %v2864 = vtanh.pop %v2863
  %v2865 = vmul.f32 %v2864, 0.5
  %v2866 = vadd.f32 %v2865, 0.5
  %v2867 = vmul.f32 %v2860, 0.5
  %v2868 = vtanh.pop %v2867
  %v2869 = vmul.f32 %v2868, 0.5
  %v2870 = vadd.f32 %v2869, 0.5
  %v2871 = vtanh.pop %v2861
  %v2872 = vmul.f32 %v2862, 0.5
  %v2873 = vtanh.pop %v2872
  %v2874 = vmul.f32 %v2873, 0.5
  %v2875 = vadd.f32 %v2874, 0.5
  %v2876 = vmul.f32 %v2870, %v2771
  %v2877 = vmul.f32 %v2866, %v2871
  %v2878 = vadd.f32 %v2876, %v2877
  %v2879 = vtanh.pop %v2878
  %v2880 = vmul.f32 %v2875, %v2879
  %2881 = vst [vmem:[%s2045] sm:$0xff] %v2878
  %2882 = vst [vmem:[%s2043] sm:$0xff] %v2880
  %v2883 = vld [vmem:[%s2043] sm:$0xff]
  %v2884 = vld [vmem:[%s2045] sm:$0xff]
  %v2885 = vld [vmem:[%s1353] sm:$0xff]
  %v2886 = vld [vmem:[%s1353 + $0x8] sm:$0xff]
  %v2887 = vld [vmem:[%s1353 + $0x10] sm:$0xff]
  %v2888 = vld [vmem:[%s1353 + $0x18] sm:$0xff]
  %v2889 = vpack.c.bf16 %v2883, %v2883
  %2890 = vmatprep.subr.bf16.mxu0 %v2149
  %2891 = vmatpush1.bf16.msra.mxu0 %v2148
  %2892 = vmatprep.subr.bf16.mxu0 %v2153
  %2893 = vmatpush1.bf16.msra.mxu0 %v2152
  %2894 = vmatprep.subr.bf16.mxu0 %v2157
  %2895 = vmatpush1.bf16.msra.mxu0 %v2156
  %2896 = vmatprep.subr.bf16.mxu0 %v2161
  %2897 = vmatpush1.bf16.msra.mxu0 %v2160
  %2898 = vmatprep.subr.bf16.mxu0 %v2165
  %2899 = vmatpush1.bf16.msra.mxu0 %v2164
  %2900 = vmatprep.subr.bf16.mxu0 %v2169
  %2901 = vmatpush1.bf16.msra.mxu0 %v2168
  %2902 = vmatprep.subr.bf16.mxu0 %v2173
  %2903 = vmatpush1.bf16.msra.mxu0 %v2172
  %2904 = vmatprep.subr.bf16.mxu0 %v2177
  %2905 = vmatpush1.bf16.msra.mxu0 %v2176
  %2906 = vmatprep.subr.bf16.mxu0 0
  %2907 = vmatpush1.bf16.msra.mxu0 0
  %2908 = vmatprep.subr.bf16.mxu0 0
  %2909 = vmatpush1.bf16.msra.mxu0 0
  %2910 = vmatprep.subr.bf16.mxu0 0
  %2911 = vmatpush1.bf16.msra.mxu0 0
  %2912 = vmatprep.subr.bf16.mxu0 0
  %2913 = vmatpush1.bf16.msra.mxu0 0
  %2914 = vmatprep.subr.bf16.mxu0 0
  %2915 = vmatpush1.bf16.msra.mxu0 0
  %2916 = vmatprep.subr.bf16.mxu0 0
  %2917 = vmatpush1.bf16.msra.mxu0 0
  %2918 = vmatprep.subr.bf16.mxu0 0
  %2919 = vmatpush1.bf16.msra.mxu0 0
  %2920 = vmatprep.subr.bf16.mxu0 0
  %2921 = vmatpush1.bf16.msra.mxu0 0
  %2922 = vmatprep.mubr.bf16.mxu0 0
  %2923 = vmatmul.mubr.bf16.gmra.mrb[0].mxu0 %v2889
  %v2924 = vpop.f32.mrb[0].mxu0
  %v2925 = vadd.f32 0.0, %v2924
  %v2926 = vpop.f32.mrb[0].mxu0
  %v2927 = vadd.f32 0.0, %v2926
  %v2928 = vpop.f32.mrb[0].mxu0
  %v2929 = vpop.f32.mrb[0].mxu0
  %2930 = vdwg.mxu0
  %2931 = vmatprep.subr.bf16.mxu0 %v2151
  %2932 = vmatpush1.bf16.msra.mxu0 %v2150
  %2933 = vmatprep.subr.bf16.mxu0 %v2155
  %2934 = vmatpush1.bf16.msra.mxu0 %v2154
  %2935 = vmatprep.subr.bf16.mxu0 %v2159
  %2936 = vmatpush1.bf16.msra.mxu0 %v2158
  %2937 = vmatprep.subr.bf16.mxu0 %v2163
  %2938 = vmatpush1.bf16.msra.mxu0 %v2162
  %2939 = vmatprep.subr.bf16.mxu0 %v2167
  %2940 = vmatpush1.bf16.msra.mxu0 %v2166
  %2941 = vmatprep.subr.bf16.mxu0 %v2171
  %2942 = vmatpush1.bf16.msra.mxu0 %v2170
  %2943 = vmatprep.subr.bf16.mxu0 %v2175
  %2944 = vmatpush1.bf16.msra.mxu0 %v2174
  %2945 = vmatprep.subr.bf16.mxu0 %v2179
  %2946 = vmatpush1.bf16.msra.mxu0 %v2178
  %2947 = vmatprep.subr.bf16.mxu0 0
  %2948 = vmatpush1.bf16.msra.mxu0 0
  %2949 = vmatprep.subr.bf16.mxu0 0
  %2950 = vmatpush1.bf16.msra.mxu0 0
  %2951 = vmatprep.subr.bf16.mxu0 0
  %2952 = vmatpush1.bf16.msra.mxu0 0
  %2953 = vmatprep.subr.bf16.mxu0 0
  %2954 = vmatpush1.bf16.msra.mxu0 0
  %2955 = vmatprep.subr.bf16.mxu0 0
  %2956 = vmatpush1.bf16.msra.mxu0 0
  %2957 = vmatprep.subr.bf16.mxu0 0
  %2958 = vmatpush1.bf16.msra.mxu0 0
  %2959 = vmatprep.subr.bf16.mxu0 0
  %2960 = vmatpush1.bf16.msra.mxu0 0
  %2961 = vmatprep.subr.bf16.mxu0 0
  %2962 = vmatpush1.bf16.msra.mxu0 0
  %2963 = vmatprep.mubr.bf16.mxu0 0
  %2964 = vmatmul.mubr.bf16.gmra.mrb[0].mxu0 %v2889
  %v2965 = vpop.f32.mrb[0].mxu0
  %v2966 = vadd.f32 0.0, %v2965
  %v2967 = vpop.f32.mrb[0].mxu0
  %v2968 = vadd.f32 0.0, %v2967
  %v2969 = vpop.f32.mrb[0].mxu0
  %v2970 = vpop.f32.mrb[0].mxu0
  %2971 = vdwg.mxu0
  %v2972 = vadd.f32 %v2885, %v2925
  %v2973 = vadd.f32 %v2886, %v2927
  %v2974 = vadd.f32 %v2887, %v2966
  %v2975 = vadd.f32 %v2888, %v2968
  %v2976 = vmul.f32 %v2972, 0.5
  %v2977 = vtanh.pop %v2976
  %v2978 = vmul.f32 %v2977, 0.5
  %v2979 = vadd.f32 %v2978, 0.5
  %v2980 = vmul.f32 %v2973, 0.5
  %v2981 = vtanh.pop %v2980
  %v2982 = vmul.f32 %v2981, 0.5
  %v2983 = vadd.f32 %v2982, 0.5
  %v2984 = vtanh.pop %v2974
  %v2985 = vmul.f32 %v2975, 0.5
  %v2986 = vtanh.pop %v2985
  %v2987 = vmul.f32 %v2986, 0.5
  %v2988 = vadd.f32 %v2987, 0.5
  %v2989 = vmul.f32 %v2983, %v2884
  %v2990 = vmul.f32 %v2979, %v2984
  %v2991 = vadd.f32 %v2989, %v2990
  %v2992 = vtanh.pop %v2991
  %v2993 = vmul.f32 %v2988, %v2992
  %2994 = vst [vmem:[%s2045] sm:$0xff] %v2991
  %2995 = vst [vmem:[%s2043] sm:$0xff] %v2993
  %v2996 = vld [vmem:[%s2043] sm:$0xff]
  %v2997 = vld [vmem:[%s2045] sm:$0xff]
  %v2998 = vld [vmem:[%s1470] sm:$0xff]
  %v2999 = vld [vmem:[%s1470 + $0x8] sm:$0xff]
  %v3000 = vld [vmem:[%s1470 + $0x10] sm:$0xff]
  %v3001 = vld [vmem:[%s1470 + $0x18] sm:$0xff]
  %v3002 = vpack.c.bf16 %v2996, %v2996
  %3003 = vmatprep.subr.bf16.mxu0 %v2149
  %3004 = vmatpush1.bf16.msra.mxu0 %v2148
  %3005 = vmatprep.subr.bf16.mxu0 %v2153
  %3006 = vmatpush1.bf16.msra.mxu0 %v2152
  %3007 = vmatprep.subr.bf16.mxu0 %v2157
  %3008 = vmatpush1.bf16.msra.mxu0 %v2156
  %3009 = vmatprep.subr.bf16.mxu0 %v2161
  %3010 = vmatpush1.bf16.msra.mxu0 %v2160
  %3011 = vmatprep.subr.bf16.mxu0 %v2165
  %3012 = vmatpush1.bf16.msra.mxu0 %v2164
  %3013 = vmatprep.subr.bf16.mxu0 %v2169
  %3014 = vmatpush1.bf16.msra.mxu0 %v2168
  %3015 = vmatprep.subr.bf16.mxu0 %v2173
  %3016 = vmatpush1.bf16.msra.mxu0 %v2172
  %3017 = vmatprep.subr.bf16.mxu0 %v2177
  %3018 = vmatpush1.bf16.msra.mxu0 %v2176
  %3019 = vmatprep.subr.bf16.mxu0 0
  %3020 = vmatpush1.bf16.msra.mxu0 0
  %3021 = vmatprep.subr.bf16.mxu0 0
  %3022 = vmatpush1.bf16.msra.mxu0 0
  %3023 = vmatprep.subr.bf16.mxu0 0
  %3024 = vmatpush1.bf16.msra.mxu0 0
  %3025 = vmatprep.subr.bf16.mxu0 0
  %3026 = vmatpush1.bf16.msra.mxu0 0
  %3027 = vmatprep.subr.bf16.mxu0 0
  %3028 = vmatpush1.bf16.msra.mxu0 0
  %3029 = vmatprep.subr.bf16.mxu0 0
  %3030 = vmatpush1.bf16.msra.mxu0 0
  %3031 = vmatprep.subr.bf16.mxu0 0
  %3032 = vmatpush1.bf16.msra.mxu0 0
  %3033 = vmatprep.subr.bf16.mxu0 0
  %3034 = vmatpush1.bf16.msra.mxu0 0
  %3035 = vmatprep.mubr.bf16.mxu0 0
  %3036 = vmatmul.mubr.bf16.gmra.mrb[0].mxu0 %v3002
  %v3037 = vpop.f32.mrb[0].mxu0
  %v3038 = vadd.f32 0.0, %v3037
  %v3039 = vpop.f32.mrb[0].mxu0
  %v3040 = vadd.f32 0.0, %v3039
  %v3041 = vpop.f32.mrb[0].mxu0
  %v3042 = vpop.f32.mrb[0].mxu0
  %3043 = vdwg.mxu0
  %3044 = vmatprep.subr.bf16.mxu0 %v2151
  %3045 = vmatpush1.bf16.msra.mxu0 %v2150
  %3046 = vmatprep.subr.bf16.mxu0 %v2155
  %3047 = vmatpush1.bf16.msra.mxu0 %v2154
  %3048 = vmatprep.subr.bf16.mxu0 %v2159
  %3049 = vmatpush1.bf16.msra.mxu0 %v2158
  %3050 = vmatprep.subr.bf16.mxu0 %v2163
  %3051 = vmatpush1.bf16.msra.mxu0 %v2162
  %3052 = vmatprep.subr.bf16.mxu0 %v2167
  %3053 = vmatpush1.bf16.msra.mxu0 %v2166
  %3054 = vmatprep.subr.bf16.mxu0 %v2171
  %3055 = vmatpush1.bf16.msra.mxu0 %v2170
  %3056 = vmatprep.subr.bf16.mxu0 %v2175
  %3057 = vmatpush1.bf16.msra.mxu0 %v2174
  %3058 = vmatprep.subr.bf16.mxu0 %v2179
  %3059 = vmatpush1.bf16.msra.mxu0 %v2178
  %3060 = vmatprep.subr.bf16.mxu0 0
  %3061 = vmatpush1.bf16.msra.mxu0 0
  %3062 = vmatprep.subr.bf16.mxu0 0
  %3063 = vmatpush1.bf16.msra.mxu0 0
  %3064 = vmatprep.subr.bf16.mxu0 0
  %3065 = vmatpush1.bf16.msra.mxu0 0
  %3066 = vmatprep.subr.bf16.mxu0 0
  %3067 = vmatpush1.bf16.msra.mxu0 0
  %3068 = vmatprep.subr.bf16.mxu0 0
  %3069 = vmatpush1.bf16.msra.mxu0 0
  %3070 = vmatprep.subr.bf16.mxu0 0
  %3071 = vmatpush1.bf16.msra.mxu0 0
  %3072 = vmatprep.subr.bf16.mxu0 0
  %3073 = vmatpush1.bf16.msra.mxu0 0
  %3074 = vmatprep.subr.bf16.mxu0 0
  %3075 = vmatpush1.bf16.msra.mxu0 0
  %3076 = vmatprep.mubr.bf16.mxu0 0
  %3077 = vmatmul.mubr.bf16.gmra.mrb[0].mxu0 %v3002
  %v3078 = vpop.f32.mrb[0].mxu0
  %v3079 = vadd.f32 0.0, %v3078
  %v3080 = vpop.f32.mrb[0].mxu0
  %v3081 = vadd.f32 0.0, %v3080
  %v3082 = vpop.f32.mrb[0].mxu0
  %v3083 = vpop.f32.mrb[0].mxu0
  %3084 = vdwg.mxu0
  %v3085 = vadd.f32 %v2998, %v3038
  %v3086 = vadd.f32 %v2999, %v3040
  %v3087 = vadd.f32 %v3000, %v3079
  %v3088 = vadd.f32 %v3001, %v3081
  %v3089 = vmul.f32 %v3085, 0.5
  %v3090 = vtanh.pop %v3089
  %v3091 = vmul.f32 %v3090, 0.5
  %v3092 = vadd.f32 %v3091, 0.5
  %v3093 = vmul.f32 %v3086, 0.5
  %v3094 = vtanh.pop %v3093
  %v3095 = vmul.f32 %v3094, 0.5
  %v3096 = vadd.f32 %v3095, 0.5
  %v3097 = vtanh.pop %v3087
  %v3098 = vmul.f32 %v3088, 0.5
  %v3099 = vtanh.pop %v3098
  %v3100 = vmul.f32 %v3099, 0.5
  %v3101 = vadd.f32 %v3100, 0.5
  %v3102 = vmul.f32 %v3096, %v2997
  %v3103 = vmul.f32 %v3092, %v3097
  %v3104 = vadd.f32 %v3102, %v3103
  %v3105 = vtanh.pop %v3104
  %v3106 = vmul.f32 %v3101, %v3105
  %3107 = vst [vmem:[%s2045] sm:$0xff] %v3104
  %3108 = vst [vmem:[%s2043] sm:$0xff] %v3106
  // Predicated region
  $region34: #{rnn_forward.1} parent=0 // pred_check
    %p3109 = pneg %p27
  $region35: #{rnn_forward.1} parent=0 // pred_check_branch
    %3111 = sbr.rel (%p3109) target = $region37
  $region36: #{rnn_forward.1} parent=0 // pred_region
    %v3112 = vld [vmem:[%s2043] sm:$0xff]
    %v3113 = vpack.c.bf16 %v3112, %v3112
    %v3114 = vld [vmem:[%s5] sm:$0xf]
    %v3115 = vld [vmem:[%s5 + $0x4] sm:$0xf]
    %v3116 = vld [vmem:[%s5 + $0x8] sm:$0xf]
    %v3117 = vld [vmem:[%s5 + $0xc] sm:$0xf]
    %v3118 = vld [vmem:[%s5 + $0x10] sm:$0xf]
    %v3119 = vld [vmem:[%s5 + $0x14] sm:$0xf]
    %v3120 = vld [vmem:[%s5 + $0x18] sm:$0xf]
    %v3121 = vld [vmem:[%s5 + $0x1c] sm:$0xf]
    %v3122 = vld [vmem:[%s5 + $0x20] sm:$0xf]
    %v3123 = vld [vmem:[%s5 + $0x24] sm:$0xf]
    %v3124 = vld [vmem:[%s5 + $0x28] sm:$0xf]
    %v3125 = vld [vmem:[%s5 + $0x2c] sm:$0xf]
    %v3126 = vld [vmem:[%s5 + $0x30] sm:$0xf]
    %v3127 = vld [vmem:[%s5 + $0x34] sm:$0xf]
    %v3128 = vld [vmem:[%s5 + $0x38] sm:$0xf]
    %v3129 = vld [vmem:[%s5 + $0x3c] sm:$0xf]
    %v3130 = vld [vmem:[%s6] sm:$0x1]
    %v3132 = vlaneseq
    %v3133 = vshrl.u32 %v3132, 7
    %v3134 = vsub.s32 0, %v3133
    %v3135 = vrot.slane %v3130, %v3134
    %v3153 = vunpack.c.l.b16 %v3114
    %v3154 = vunpack.c.l.b16 %v3115
    %v3155 = vunpack.c.l.b16 %v3116
    %v3156 = vunpack.c.l.b16 %v3117
    %v3157 = vunpack.c.l.b16 %v3118
    %v3158 = vunpack.c.l.b16 %v3119
    %v3159 = vunpack.c.l.b16 %v3120
    %v3160 = vunpack.c.l.b16 %v3121
    %v3161 = vunpack.c.l.b16 %v3122
    %v3162 = vunpack.c.l.b16 %v3123
    %v3163 = vunpack.c.l.b16 %v3124
    %v3164 = vunpack.c.l.b16 %v3125
    %v3165 = vunpack.c.l.b16 %v3126
    %v3166 = vunpack.c.l.b16 %v3127
    %v3167 = vunpack.c.l.b16 %v3128
    %v3168 = vunpack.c.l.b16 %v3129
    %v3169 = vpack.c.b16 %v3154, %v3153
    %v3170 = vpack.c.b16 %v3156, %v3155
    %v3171 = vpack.c.b16 %v3158, %v3157
    %v3172 = vpack.c.b16 %v3160, %v3159
    %v3173 = vpack.c.b16 %v3162, %v3161
    %v3174 = vpack.c.b16 %v3164, %v3163
    %v3175 = vpack.c.b16 %v3166, %v3165
    %v3176 = vpack.c.b16 %v3168, %v3167
    %3185 = vmatprep.subr.bf16.mxu0 0
    %3186 = vmatpush1.bf16.msra.mxu0 %v3169
    %3187 = vmatprep.subr.bf16.mxu0 0
    %3188 = vmatpush1.bf16.msra.mxu0 %v3170
    %3189 = vmatprep.subr.bf16.mxu0 0
    %3190 = vmatpush1.bf16.msra.mxu0 %v3171
    %3191 = vmatprep.subr.bf16.mxu0 0
    %3192 = vmatpush1.bf16.msra.mxu0 %v3172
    %3193 = vmatprep.subr.bf16.mxu0 0
    %3194 = vmatpush1.bf16.msra.mxu0 %v3173
    %3195 = vmatprep.subr.bf16.mxu0 0
    %3196 = vmatpush1.bf16.msra.mxu0 %v3174
    %3197 = vmatprep.subr.bf16.mxu0 0
    %3198 = vmatpush1.bf16.msra.mxu0 %v3175
    %3199 = vmatprep.subr.bf16.mxu0 0
    %3200 = vmatpush1.bf16.msra.mxu0 %v3176
    %3201 = vmatprep.subr.bf16.mxu0 0
    %3202 = vmatpush1.bf16.msra.mxu0 0
    %3203 = vmatprep.subr.bf16.mxu0 0
    %3204 = vmatpush1.bf16.msra.mxu0 0
    %3205 = vmatprep.subr.bf16.mxu0 0
    %3206 = vmatpush1.bf16.msra.mxu0 0
    %3207 = vmatprep.subr.bf16.mxu0 0
    %3208 = vmatpush1.bf16.msra.mxu0 0
    %3209 = vmatprep.subr.bf16.mxu0 0
    %3210 = vmatpush1.bf16.msra.mxu0 0
    %3211 = vmatprep.subr.bf16.mxu0 0
    %3212 = vmatpush1.bf16.msra.mxu0 0
    %3213 = vmatprep.subr.bf16.mxu0 0
    %3214 = vmatpush1.bf16.msra.mxu0 0
    %3215 = vmatprep.subr.bf16.mxu0 0
    %3216 = vmatpush1.bf16.msra.mxu0 0
    %3217 = vmatprep.mubr.bf16.mxu0 0
    %3218 = vmatmul.mubr.bf16.gmra.mrb[0].mxu0 %v3113
    %v3219 = vpop.f32.mrb[0].mxu0
    %v3220 = vadd.f32 %v3135, %v3219
    %v3221 = vpop.f32.mrb[0].mxu0
    %v3222 = vpop.f32.mrb[0].mxu0
    %v3223 = vpop.f32.mrb[0].mxu0
    %3224 = vdwg.mxu0
    %3225 = vst [vmem:[%s7] sm:$0xff] %v3220
  $region37: #{rnn_forward.1} parent=0 // pred_fallthru
    _
  // Predicated region
  $region38: #{rnn_forward.1} parent=0 // pred_check
    _
  $region39: #{rnn_forward.1} parent=0 // pred_check_branch
    %3227 = sbr.rel (0) target = $region41
  $region40: #{rnn_forward.1} parent=0 // pred_region
    _
  $region41: #{rnn_forward.1} parent=0 // pred_fallthru
    _
  // Predicated region
  $region42: #{rnn_forward.1} parent=0 // pred_check
    _
  $region43: #{rnn_forward.1} parent=0 // pred_check_branch
    %3229 = sbr.rel (0) target = $region45
  $region44: #{rnn_forward.1} parent=0 // pred_region
    _
  $region45: #{rnn_forward.1} parent=0 // pred_fallthru
    _

</llo_original>
